<compile_context>
chip_gen: v6e
topology: v6e:2x2x1
jax: 0.10.0
libtpu: 0.0.40
codegen_flags: <defaults>
</compile_context>

<pallas_src>
import functools

import jax
import jax.numpy as jnp
from jax import lax
from jax.experimental import pallas as pl
from jax.experimental.pallas import tpu as pltpu

# --------------------------------------------------------------------------
# Global knobs
# --------------------------------------------------------------------------
MATMUL_DTYPE = jnp.bfloat16       # MXU operand dtype (accumulation stays f32)
ROW_TILE = 1024                   # M-tile for 2-D point-wise MLP kernels
WIDE_ROW_TILE = 512               # N-tile for fused feature/offset / sq-dist kernels
ATTN_ROW_TILE = 128               # N-tile for the attention kernel (K*TN rows batched)


def _vmem_limit_bytes():
    """Generation-aware VMEM cap: ~100 MiB on v5e/v6e (128 MiB), 48 MiB on v7x (64 MiB)."""
    try:
        cap = int(pltpu.get_tpu_info().vmem_capacity_bytes)
    except Exception:
        cap = 64 * 1024 * 1024
    return int(min(cap - 16 * 1024 * 1024, 100 * 1024 * 1024))


VMEM_LIMIT = _vmem_limit_bytes()


def _dot(a, b):
    """MXU matmul: bf16 operands (weights are pre-cast), f32 accumulation."""
    return jnp.dot(a.astype(MATMUL_DTYPE), b.astype(MATMUL_DTYPE),
                   preferred_element_type=jnp.float32)


def _bf(w):
    return w.astype(MATMUL_DTYPE)


def _bias(b):
    return b.reshape(1, -1).astype(jnp.float32)


def _row_tile(m, target=ROW_TILE):
    return m if m <= target else target


def _mosaic(sem):
    return pltpu.CompilerParams(dimension_semantics=sem,
                                vmem_limit_bytes=VMEM_LIMIT)


def _full_spec(arr, n_grid_axes):
    zeros = (0,) * arr.ndim
    shape = arr.shape
    if n_grid_axes == 1:
        return pl.BlockSpec(shape, lambda i: zeros)
    return pl.BlockSpec(shape, lambda b, t: zeros)


# --------------------------------------------------------------------------
# Generic 2-layer point-wise MLP (row-tiled, parallel grid)
# --------------------------------------------------------------------------
def _mlp2_kernel(x_ref, w1_ref, b1_ref, w2_ref, b2_ref, o_ref):
    h = jnp.maximum(_dot(x_ref[...], w1_ref[...]) + b1_ref[...], 0.0)
    o_ref[...] = (_dot(h, w2_ref[...]) + b2_ref[...]).astype(o_ref.dtype)


def pallas_mlp2(x2d, p, out_dtype=MATMUL_DTYPE):
    m, cin = x2d.shape
    cout = p["w2"].shape[1]
    tm = _row_tile(m)
    weights = [_bf(p["w1"]), _bias(p["b1"]), _bf(p["w2"]), _bias(p["b2"])]
    return pl.pallas_call(
        _mlp2_kernel,
        out_shape=jax.ShapeDtypeStruct((m, cout), out_dtype),
        grid=(pl.cdiv(m, tm),),
        in_specs=[pl.BlockSpec((tm, cin), lambda i: (i, 0))]
                 + [_full_spec(w, 1) for w in weights],
        out_specs=pl.BlockSpec((tm, cout), lambda i: (i, 0)),
        compiler_params=_mosaic(("parallel",)),
    )(x2d, *weights)


# --------------------------------------------------------------------------
# mlp2 with the cat([features, max(features), interp]) folded into the kernel
# (weight rows are split; the global max is a tiny [B, 1, C] side input).
# --------------------------------------------------------------------------
def _mlp2_fused_kernel(f_ref, itp_ref, fmax_ref,
                       w1a_ref, w1b_ref, w1c_ref, b1_ref, w2_ref, b2_ref, o_ref):
    f = f_ref[0]
    itp = itp_ref[0]
    gmax = _dot(fmax_ref[0], w1b_ref[...])                   # [1, hidden], shared
    h = jnp.maximum(_dot(f, w1a_ref[...]) + gmax
                    + _dot(itp, w1c_ref[...]) + b1_ref[...], 0.0)
    o_ref[0] = (_dot(h, w2_ref[...]) + b2_ref[...]).astype(o_ref.dtype)


def pallas_mlp2_fused(feats0, interp, fmax, p):
    bsz, n, c = feats0.shape
    ci = interp.shape[-1]
    cout = p["w2"].shape[1]
    w1a, w1b, w1c = p["w1"][:c], p["w1"][c:2 * c], p["w1"][2 * c:]
    weights = [_bf(w1a), _bf(w1b), _bf(w1c), _bias(p["b1"]),
               _bf(p["w2"]), _bias(p["b2"])]
    tn = min(n, ROW_TILE)
    return pl.pallas_call(
        _mlp2_fused_kernel,
        out_shape=jax.ShapeDtypeStruct((bsz, n, cout), MATMUL_DTYPE),
        grid=(bsz, pl.cdiv(n, tn)),
        in_specs=[pl.BlockSpec((1, tn, c), lambda b, t: (b, t, 0)),
                  pl.BlockSpec((1, tn, ci), lambda b, t: (b, t, 0)),
                  pl.BlockSpec((1, 1, c), lambda b, t: (b, 0, 0))]
                 + [_full_spec(w, 2) for w in weights],
        out_specs=pl.BlockSpec((1, tn, cout), lambda b, t: (b, t, 0)),
        compiler_params=_mosaic(("parallel", "parallel")),
    )(feats0, interp, fmax, *weights)


# --------------------------------------------------------------------------
# Pairwise squared distances (exact difference form; contraction dim is 3)
# --------------------------------------------------------------------------
def _sqdist_kernel(a_ref, bt_ref, o_ref):
    a = a_ref[0]              # [TN, 3]
    bt = bt_ref[0]            # [3, M]
    d = None
    for c in range(3):
        diff = a[:, c:c + 1] - bt[c:c + 1, :]
        d = diff * diff if d is None else d + diff * diff
    o_ref[0] = d


def pallas_sqdist(a, b):
    # TODO(synk): fusing the top-k selection into this kernel (running in-VMEM
    # top-k per N-tile) would remove the O(N^2) HBM round trip entirely.
    bsz, n, _ = a.shape
    m = b.shape[1]
    bt = jnp.transpose(b, (0, 2, 1))          # tiny [B, 3, M]
    tn = min(n, WIDE_ROW_TILE)
    return pl.pallas_call(
        _sqdist_kernel,
        out_shape=jax.ShapeDtypeStruct((bsz, n, m), jnp.float32),
        grid=(bsz, pl.cdiv(n, tn)),
        in_specs=[pl.BlockSpec((1, tn, 3), lambda b_, t: (b_, t, 0)),
                  pl.BlockSpec((1, 3, m), lambda b_, t: (b_, 0, 0))],
        out_specs=pl.BlockSpec((1, tn, m), lambda b_, t: (b_, t, 0)),
        compiler_params=_mosaic(("parallel", "parallel")),
    )(a, bt)


# --------------------------------------------------------------------------
# UpsampleTransformer "pre" kernel:
#   value = MLP_Res(cat(key, query))   (concat folded via split weight rows)
#   q / k / v / upfeat 1x1 projections
# all fused in one pallas_call with 5 bf16 outputs.
# --------------------------------------------------------------------------
def _uptrans_pre_kernel(k_ref, q_ref, u_ref,
                        w1k_ref, w1q_ref, b1_ref, w2_ref, b2_ref,
                        wsk_ref, wsq_ref, bs_ref,
                        wq_ref, bq_ref, wk_ref, bk_ref,
                        wv_ref, bv_ref, wu_ref, bu_ref,
                        val_o, q_o, k_o, v_o, u_o):
    kf = k_ref[...]
    qf = q_ref[...]
    uf = u_ref[...]
    h = jnp.maximum(_dot(kf, w1k_ref[...]) + _dot(qf, w1q_ref[...]) + b1_ref[...], 0.0)
    val = (_dot(h, w2_ref[...]) + b2_ref[...]
           + _dot(kf, wsk_ref[...]) + _dot(qf, wsq_ref[...]) + bs_ref[...])
    val_o[...] = val.astype(val_o.dtype)
    q_o[...] = (_dot(qf, wq_ref[...]) + bq_ref[...]).astype(q_o.dtype)
    k_o[...] = (_dot(kf, wk_ref[...]) + bk_ref[...]).astype(k_o.dtype)
    v_o[...] = (_dot(val, wv_ref[...]) + bv_ref[...]).astype(v_o.dtype)
    u_o[...] = (_dot(uf, wu_ref[...]) + bu_ref[...]).astype(u_o.dtype)


def pallas_uptrans_pre(key_f, query_f, upfeat, p):
    bsz, n, cin = key_f.shape
    dim = p["wq"].shape[1]
    m = bsz * n
    tm = _row_tile(m)
    mv = p["mlp_v"]
    w1k, w1q = mv["w1"][:cin], mv["w1"][cin:]
    wsk, wsq = mv["ws"][:cin], mv["ws"][cin:]
    weights = [_bf(w1k), _bf(w1q), _bias(mv["b1"]), _bf(mv["w2"]), _bias(mv["b2"]),
               _bf(wsk), _bf(wsq), _bias(mv["bs"]),
               _bf(p["wq"]), _bias(p["bq"]), _bf(p["wk"]), _bias(p["bk"]),
               _bf(p["wv"]), _bias(p["bv"]), _bf(p["wu"]), _bias(p["bu"])]
    key2d = key_f.reshape(m, -1)
    query2d = query_f.reshape(m, -1)
    up2d = upfeat.reshape(m, -1)
    outs = pl.pallas_call(
        _uptrans_pre_kernel,
        out_shape=(jax.ShapeDtypeStruct((m, cin), MATMUL_DTYPE),   # value
                   jax.ShapeDtypeStruct((m, dim), MATMUL_DTYPE),   # q
                   jax.ShapeDtypeStruct((m, dim), MATMUL_DTYPE),   # k proj
                   jax.ShapeDtypeStruct((m, dim), MATMUL_DTYPE),   # v proj
                   jax.ShapeDtypeStruct((m, dim), MATMUL_DTYPE)),  # upfeat proj
        grid=(pl.cdiv(m, tm),),
        in_specs=[pl.BlockSpec((tm, key2d.shape[1]), lambda i: (i, 0)),
                  pl.BlockSpec((tm, query2d.shape[1]), lambda i: (i, 0)),
                  pl.BlockSpec((tm, up2d.shape[1]), lambda i: (i, 0))]
                 + [_full_spec(w, 1) for w in weights],
        out_specs=(pl.BlockSpec((tm, cin), lambda i: (i, 0)),
                   pl.BlockSpec((tm, dim), lambda i: (i, 0)),
                   pl.BlockSpec((tm, dim), lambda i: (i, 0)),
                   pl.BlockSpec((tm, dim), lambda i: (i, 0)),
                   pl.BlockSpec((tm, dim), lambda i: (i, 0))),
        compiler_params=_mosaic(("parallel",)),
    )(key2d, query2d, up2d, *weights)
    return tuple(o.reshape(bsz, n, -1) for o in outs)


# --------------------------------------------------------------------------
# UpsampleTransformer attention kernel.
# Grid = (batch, N tiles), both parallel.  The K neighbors are row-stacked
# into [K*TN, *] operands so each MLP stage is one large MXU dot; the softmax
# over K runs in a single pass on [K, TN, up*dim] arrays.  conv_end and the
# upsampled identity residual are fused into the epilogue.
# --------------------------------------------------------------------------
def _uptrans_attn_kernel(q_ref, kg_ref, vg_ref, ug_ref, pg_ref, pos_ref, uf_ref,
                         id_ref,
                         wp1_ref, bp1_ref, wp2_ref, bp2_ref,
                         wa1_ref, ba1_ref, wa2_ref, ba2_ref,
                         wend_ref, bend_ref, o_ref, *, dim, up, n_knn):
    tn = q_ref.shape[1]
    kt = n_knn * tn

    q = q_ref[0].astype(jnp.float32)        # [TN, dim]
    pos = pos_ref[0]                        # [TN, 3]  f32
    uf = uf_ref[0].astype(jnp.float32)      # [TN, dim]
    ident = id_ref[0].astype(jnp.float32)   # [TN, out_dim]

    kg = kg_ref[0].astype(jnp.float32)      # [K, TN, dim]
    vg = vg_ref[0].astype(jnp.float32)
    ug = ug_ref[0].astype(jnp.float32)
    pg = pg_ref[0]                          # [K, TN, 3] f32

    # neighbor-batched relative position / relative upfeat -> [K*TN, *]
    pos_rel = (pos[None, :, :] - pg).reshape(kt, 3)
    uf_rel = (uf[None, :, :] - ug).reshape(kt, dim)

    # positional MLP (3 -> pos_hidden -> dim), one MXU dot over all K*TN rows
    ph = jnp.maximum(_dot(pos_rel, wp1_ref[...]) + bp1_ref[...], 0.0)
    pe = _dot(ph, wp2_ref[...]) + bp2_ref[...]               # [K*TN, dim]

    per = pe + uf_rel
    hidden = (q[None, :, :] - kg).reshape(kt, dim) + per
    a1 = jnp.maximum(_dot(hidden, wa1_ref[...]) + ba1_ref[...], 0.0)
    logits = (_dot(a1, wa2_ref[...]) + ba2_ref[...]).reshape(n_knn, tn, up * dim)
    value = (vg.reshape(kt, dim) + per).reshape(n_knn, tn, dim)

    # per-channel softmax over the K neighbors (single pass)
    m = jnp.max(logits, axis=0)                              # [TN, up*dim]
    p = jnp.exp(logits - m[None, :, :])                      # [K, TN, up*dim]
    inv = pl.reciprocal(jnp.sum(p, axis=0), approx=True)     # [TN, up*dim]

    # fused conv_end (dim -> out_dim) per up-copy + repeat(identity, up) residual
    outs = []
    for u in range(up):
        agg = jnp.sum(p[:, :, u * dim:(u + 1) * dim] * value, axis=0)   # [TN, dim]
        attn_u = agg * inv[:, u * dim:(u + 1) * dim]
        outs.append(_dot(attn_u, wend_ref[...]) + bend_ref[...] + ident)
    out = outs[0] if up == 1 else jnp.concatenate(outs, axis=-1)
    o_ref[0] = out.astype(o_ref.dtype)


def pallas_uptrans_attention(q, kg, vg, ug, pos_g, pos, uf, identity, p, up):
    bsz, n, dim = q.shape
    n_knn = kg.shape[1]
    out_dim = p["wend"].shape[1]
    hdim = p["wa1"].shape[1]
    wa2 = p["wa2"].reshape(hdim, up * dim)                 # [hdim, up, dim] -> flat
    ba2 = jnp.tile(p["ba2"].reshape(1, dim), (1, up))      # bias shared across up
    weights = [_bf(p["wp1"]), _bias(p["bp1"]), _bf(p["wp2"]), _bias(p["bp2"]),
               _bf(p["wa1"]), _bias(p["ba1"]), _bf(wa2), ba2.astype(jnp.float32),
               _bf(p["wend"]), _bias(p["bend"])]
    tn = min(n, ATTN_ROW_TILE)
    return pl.pallas_call(
        functools.partial(_uptrans_attn_kernel, dim=dim, up=up, n_knn=n_knn),
        out_shape=jax.ShapeDtypeStruct((bsz, n, up * out_dim), MATMUL_DTYPE),
        grid=(bsz, pl.cdiv(n, tn)),
        in_specs=[pl.BlockSpec((1, tn, dim), lambda b, t: (b, t, 0)),            # q
                  pl.BlockSpec((1, n_knn, tn, dim), lambda b, t: (b, 0, t, 0)),  # key grp
                  pl.BlockSpec((1, n_knn, tn, dim), lambda b, t: (b, 0, t, 0)),  # val grp
                  pl.BlockSpec((1, n_knn, tn, dim), lambda b, t: (b, 0, t, 0)),  # upf grp
                  pl.BlockSpec((1, n_knn, tn, 3), lambda b, t: (b, 0, t, 0)),    # pos grp
                  pl.BlockSpec((1, tn, 3), lambda b, t: (b, t, 0)),              # pos
                  pl.BlockSpec((1, tn, dim), lambda b, t: (b, t, 0)),            # upfeat q-side
                  pl.BlockSpec((1, tn, out_dim), lambda b, t: (b, t, 0))]        # identity
                 + [_full_spec(w, 2) for w in weights],
        out_specs=pl.BlockSpec((1, tn, up * out_dim), lambda b, t: (b, t, 0)),
        compiler_params=_mosaic(("parallel", "parallel")),
    )(q, kg, vg, ug, pos_g, pos, uf, identity, *weights)


# --------------------------------------------------------------------------
# feature_mlp (MLP_Res on cat(up_attn, repeat(features, up))) + offset_mlp +
# tanh(offset)/radius**i + xyz upsample, fused into ONE kernel.
# The repeat lives in lane slices; xyz / features are read un-repeated.
# --------------------------------------------------------------------------
def _feature_offset_kernel(x_ref, f_ref, xyz_ref,
                           w1a_ref, w1b_ref, b1_ref, w2_ref, b2_ref,
                           wsa_ref, wsb_ref, bs_ref,
                           wo1_ref, bo1_ref, wo2_ref, bo2_ref,
                           feat_o, xyz_o, *, up, cdim, inv_r):
    xw = x_ref[0]                  # [TN, up*C]   (upsample-attention features)
    f = f_ref[0]                   # [TN, C]      (pre-upsample features)
    xyz = xyz_ref[0]               # [TN, 3]
    g1 = _dot(f, w1b_ref[...])     # repeat(features) contribution to layer 1
    gs = _dot(f, wsb_ref[...])     # repeat(features) contribution to shortcut
    feat_outs, xyz_outs = [], []
    for u in range(up):
        xu = xw[:, u * cdim:(u + 1) * cdim]
        h = jnp.maximum(_dot(xu, w1a_ref[...]) + g1 + b1_ref[...], 0.0)
        feat_u = (_dot(h, w2_ref[...]) + b2_ref[...]
                  + _dot(xu, wsa_ref[...]) + gs + bs_ref[...])
        lr = jnp.where(feat_u > 0, feat_u, 0.2 * feat_u)      # F.leaky_relu(., 0.2)
        ho = jnp.maximum(_dot(lr, wo1_ref[...]) + bo1_ref[...], 0.0)
        off = _dot(ho, wo2_ref[...]) + bo2_ref[...]           # [TN, 3]
        feat_outs.append(feat_u)
        xyz_outs.append(xyz + jnp.tanh(off) * inv_r)
    feat_o[0] = (feat_outs[0] if up == 1
                 else jnp.concatenate(feat_outs, axis=-1)).astype(feat_o.dtype)
    xyz_o[0] = (xyz_outs[0] if up == 1
                else jnp.concatenate(xyz_outs, axis=-1)).astype(xyz_o.dtype)


def pallas_feature_offset(up_attn, feats, xyz, pf, po, up, inv_r):
    bsz, n, c = feats.shape
    w1a, w1b = pf["w1"][:c], pf["w1"][c:]
    wsa, wsb = pf["ws"][:c], pf["ws"][c:]
    weights = [_bf(w1a), _bf(w1b), _bias(pf["b1"]), _bf(pf["w2"]), _bias(pf["b2"]),
               _bf(wsa), _bf(wsb), _bias(pf["bs"]),
               _bf(po["w1"]), _bias(po["b1"]), _bf(po["w2"]), _bias(po["b2"])]
    tn = min(n, WIDE_ROW_TILE)
    feat_out, xyz_out = pl.pallas_call(
        functools.partial(_feature_offset_kernel, up=up, cdim=c, inv_r=inv_r),
        out_shape=(jax.ShapeDtypeStruct((bsz, n, up * c), jnp.float32),
                   jax.ShapeDtypeStruct((bsz, n, up * 3), jnp.float32)),
        grid=(bsz, pl.cdiv(n, tn)),
        in_specs=[pl.BlockSpec((1, tn, up * c), lambda b, t: (b, t, 0)),
                  pl.BlockSpec((1, tn, c), lambda b, t: (b, t, 0)),
                  pl.BlockSpec((1, tn, 3), lambda b, t: (b, t, 0))]
                 + [_full_spec(w, 2) for w in weights],
        out_specs=(pl.BlockSpec((1, tn, up * c), lambda b, t: (b, t, 0)),
                   pl.BlockSpec((1, tn, up * 3), lambda b, t: (b, t, 0))),
        compiler_params=_mosaic(("parallel", "parallel")),
    )(up_attn, feats, xyz, *weights)
    # [B, N, up*C] -> [B, N*up, C] is a pure reshape (copies are consecutive).
    return xyz_out.reshape(bsz, n * up, 3), feat_out.reshape(bsz, n * up, c)


# --------------------------------------------------------------------------
# Sub-module forwards (JAX glue around the Pallas kernels)
# --------------------------------------------------------------------------
def _gather(feat, idx):
    # feat: [B, N, C], idx: [B, ..., K] -> [B, ..., K, C]
    # TODO(synk): data-dependent neighbor gather kept in plain JAX (XLA gather);
    # per-row in-kernel DMAs (tile_N x K tiny copies) would be slower here.
    return jax.vmap(lambda f, i: f[i])(feat, idx)


def seed_interpolation_forward(seed_xyz, seed_feat, xyz, p):
    """BottleneckInterpPointConv: 3-NN inverse-distance interpolation of seed
    features onto xyz, followed by a bottleneck point MLP."""
    bsz, n, _ = xyz.shape
    d = pallas_sqdist(xyz, seed_xyz)                    # [B, N, N1]
    # TODO(synk): top-k neighbor selection stays in XLA (no Pallas top-k on TPU).
    neg_d, idx = lax.top_k(-d, 3)
    dist = jnp.maximum(-neg_d, 1e-10)
    w = 1.0 / dist
    w = w / jnp.sum(w, axis=-1, keepdims=True)
    gathered = _gather(seed_feat, idx)                  # [B, N, 3, C]
    interp = jnp.sum(w[..., None] * gathered, axis=2)   # [B, N, C]
    return pallas_mlp2(interp.reshape(bsz * n, -1), p).reshape(bsz, n, -1)


def up_transformer_forward(xyz, pos_g, key_f, query_f, upfeat, idx_t, p, up):
    # fused value-branch + q/k/v/upfeat projections (bf16 outputs)
    value, q, kproj, vproj, uproj = pallas_uptrans_pre(key_f, query_f, upfeat, p)
    # separate lane-aligned gathers per field (no concatenated grouped tensor)
    kg = _gather(kproj, idx_t)                          # [B, K, N, dim]
    vg = _gather(vproj, idx_t)
    ug = _gather(uproj, idx_t)
    # attention with fused conv_end and upsampled identity residual
    return pallas_uptrans_attention(q, kg, vg, ug, pos_g, xyz, uproj, value, p, up)


def upsampler_forward(params, xyz, prev_features, seed_xyz, seed_features, *,
                      i, radius, up_factor, k):
    bsz, n, _ = xyz.shape

    interp = seed_interpolation_forward(seed_xyz, seed_features, xyz,
                                        params["seed_interp"])

    feats0 = pallas_mlp2(xyz.reshape(bsz * n, 3),
                         params["mlp1"]).reshape(bsz, n, -1)
    fmax = jnp.max(feats0, axis=1, keepdims=True)       # [B, 1, C]
    feats = pallas_mlp2_fused(feats0, interp, fmax, params["mlp2"])

    # kNN on positions is identical for both transformer layers -> compute once
    d = pallas_sqdist(xyz, xyz)
    # TODO(synk): top-k selection in plain JAX (no Pallas top-k on TPU).
    _, idx = lax.top_k(-d, k)                           # [B, N, K]
    idx_t = jnp.swapaxes(idx, 1, 2)                     # [B, K, N]
    pos_g = _gather(xyz, idx_t)                         # [B, K, N, 3] shared

    key_f = prev_features if prev_features is not None else feats
    feats = up_transformer_forward(xyz, pos_g, key_f, feats, interp, idx_t,
                                   params["attn"], 1)
    key_f = prev_features if prev_features is not None else feats
    up_attn = up_transformer_forward(xyz, pos_g, key_f, feats, interp, idx_t,
                                     params["up_attn"], up_factor)

    # feature_mlp + offset_mlp + tanh/radius + xyz upsample in one fused kernel
    inv_r = 1.0 / float(radius ** i)
    upsampled_xyz, upsampled_features = pallas_feature_offset(
        up_attn, feats, xyz, params["feature_mlp"], params["offset_mlp"],
        up_factor, inv_r)
    return upsampled_xyz, upsampled_features


# --------------------------------------------------------------------------
# Deterministic parameter construction
# --------------------------------------------------------------------------
class KeyGen:
    def __init__(self, key):
        self._key = key

    def __call__(self):
        self._key, sub = jax.random.split(self._key)
        return sub


def _w(kg, shape, scale=0.1):
    return jax.random.normal(kg(), shape, dtype=jnp.float32) * scale


def _mlp2_params(kg, cin, chid, cout):
    return {"w1": _w(kg, (cin, chid)), "b1": _w(kg, (chid,), 0.01),
            "w2": _w(kg, (chid, cout)), "b2": _w(kg, (cout,), 0.01)}


def _mlp_res_params(kg, cin, chid, cout):
    return {"w1": _w(kg, (cin, chid)), "b1": _w(kg, (chid,), 0.01),
            "w2": _w(kg, (chid, cout)), "b2": _w(kg, (cout,), 0.01),
            "ws": _w(kg, (cin, cout)), "bs": _w(kg, (cout,), 0.01)}


def _uptrans_params(kg, in_dim, out_dim, dim, up, pos_hidden=32, attn_mult=4):
    hdim = dim * attn_mult
    return {
        "mlp_v": _mlp_res_params(kg, 2 * in_dim, in_dim, in_dim),
        "wq": _w(kg, (in_dim, dim)), "bq": _w(kg, (dim,), 0.01),
        "wk": _w(kg, (in_dim, dim)), "bk": _w(kg, (dim,), 0.01),
        "wv": _w(kg, (in_dim, dim)), "bv": _w(kg, (dim,), 0.01),
        "wu": _w(kg, (in_dim, dim)), "bu": _w(kg, (dim,), 0.01),
        "wp1": _w(kg, (3, pos_hidden)), "bp1": _w(kg, (pos_hidden,), 0.01),
        "wp2": _w(kg, (pos_hidden, dim)), "bp2": _w(kg, (dim,), 0.01),
        "wa1": _w(kg, (dim, hdim)), "ba1": _w(kg, (hdim,), 0.01),
        "wa2": _w(kg, (hdim, up, dim)), "ba2": _w(kg, (dim,), 0.01),
        "wend": _w(kg, (dim, out_dim)), "bend": _w(kg, (out_dim,), 0.01),
    }


def init_upsampler_params(key, in_dim, out_dim, attn_dim, up_factor):
    assert in_dim == out_dim, "conv_residual is identity only when in_dim == out_dim"
    kg = KeyGen(key)
    return {
        "seed_interp": _mlp2_params(kg, in_dim, in_dim // 2, out_dim),
        "mlp1": _mlp2_params(kg, 3, out_dim // 2, out_dim),
        "mlp2": _mlp2_params(kg, 3 * out_dim, 2 * out_dim, out_dim),
        "attn": _uptrans_params(kg, in_dim, out_dim, attn_dim, 1),
        "up_attn": _uptrans_params(kg, in_dim, out_dim, attn_dim, up_factor),
        "feature_mlp": _mlp_res_params(kg, 2 * out_dim, out_dim, out_dim),
        "offset_mlp": _mlp2_params(kg, out_dim, out_dim // 2, 3),
    }


# --------------------------------------------------------------------------
if __name__ == "__main__":
    B, N, N1 = 2, 16, 8
    IN_DIM = OUT_DIM = 32
    ATTN_DIM = 32
    UP = 2
    K = 4            # n_knn (small since N is small)
    LAYER_I = 1
    RADIUS = 1

    key = jax.random.PRNGKey(0)
    k1, k2, k3, k4 = jax.random.split(key, 4)
    xyz = jax.random.normal(k1, (B, N, 3), jnp.float32)
    prev_features = jax.random.normal(k2, (B, N, IN_DIM), jnp.float32)
    seed_xyz = jax.random.normal(k3, (B, N1, 3), jnp.float32)
    seed_features = jax.random.normal(k4, (B, N1, IN_DIM), jnp.float32)

    params = init_upsampler_params(jax.random.PRNGKey(42),
                                   IN_DIM, OUT_DIM, ATTN_DIM, UP)

    fwd = jax.jit(functools.partial(upsampler_forward, i=LAYER_I,
                                    radius=RADIUS, up_factor=UP, k=K))
    up_xyz, up_feat = fwd(params, xyz, prev_features, seed_xyz, seed_features)
    jax.block_until_ready((up_xyz, up_feat))

    assert up_xyz.shape == (B, N * UP, 3), up_xyz.shape
    assert up_feat.shape == (B, N * UP, OUT_DIM), up_feat.shape
    assert bool(jnp.all(jnp.isfinite(up_xyz))) and bool(jnp.all(jnp.isfinite(up_feat)))
    print("KERNEL_OK")
</pallas_src>

<mosaic_0001>
module attributes {stable_mosaic.version = 11 : i64} {
  func.func @_sqdist_kernel(%arg0: i32, %arg1: i32, %arg2: memref<1x16x3xf32, #tpu.memory_space<vmem>>, %arg3: memref<1x3x8xf32, #tpu.memory_space<vmem>>, %arg4: memref<1x16x8xf32, #tpu.memory_space<vmem>>) attributes {dimension_semantics = [#tpu.dimension_semantics<parallel>, #tpu.dimension_semantics<parallel>], iteration_bounds = array<i64: 2, 1>, scalar_prefetch = 0 : i64, scratch_operands = 0 : i64, tpu.core_type = #tpu.core_type<tc>, window_params = [{transform_indices = @transform_0, window_bounds = array<i64: 1, 16, 3>}, {transform_indices = @transform_1, window_bounds = array<i64: 1, 3, 8>}, {transform_indices = @transform_2, window_bounds = array<i64: 1, 16, 8>}]} {
    %c0 = arith.constant 0 : index
    %c0_0 = arith.constant 0 : index
    %c0_1 = arith.constant 0 : index
    %0 = vector.load %arg2[%c0, %c0_0, %c0_1] : memref<1x16x3xf32, #tpu.memory_space<vmem>>, vector<1x16x3xf32>
    %1 = vector.shape_cast %0 : vector<1x16x3xf32> to vector<16x3xf32>
    %c0_2 = arith.constant 0 : index
    %c0_3 = arith.constant 0 : index
    %c0_4 = arith.constant 0 : index
    %2 = vector.load %arg3[%c0_2, %c0_3, %c0_4] : memref<1x3x8xf32, #tpu.memory_space<vmem>>, vector<1x3x8xf32>
    %3 = vector.shape_cast %2 : vector<1x3x8xf32> to vector<3x8xf32>
    %4 = vector.extract_strided_slice %1 {offsets = [0, 0], sizes = [16, 1], strides = [1, 1]} : vector<16x3xf32> to vector<16x1xf32>
    %5 = vector.extract_strided_slice %3 {offsets = [0, 0], sizes = [1, 8], strides = [1, 1]} : vector<3x8xf32> to vector<1x8xf32>
    %6 = vector.broadcast %4 : vector<16x1xf32> to vector<16x8xf32>
    %7 = vector.broadcast %5 : vector<1x8xf32> to vector<16x8xf32>
    %8 = arith.subf %6, %7 : vector<16x8xf32>
    %9 = arith.mulf %8, %8 : vector<16x8xf32>
    %10 = vector.extract_strided_slice %1 {offsets = [0, 1], sizes = [16, 1], strides = [1, 1]} : vector<16x3xf32> to vector<16x1xf32>
    %11 = vector.extract_strided_slice %3 {offsets = [1, 0], sizes = [1, 8], strides = [1, 1]} : vector<3x8xf32> to vector<1x8xf32>
    %12 = vector.broadcast %10 : vector<16x1xf32> to vector<16x8xf32>
    %13 = vector.broadcast %11 : vector<1x8xf32> to vector<16x8xf32>
    %14 = arith.subf %12, %13 : vector<16x8xf32>
    %15 = arith.mulf %14, %14 : vector<16x8xf32>
    %16 = arith.addf %9, %15 : vector<16x8xf32>
    %17 = vector.extract_strided_slice %1 {offsets = [0, 2], sizes = [16, 1], strides = [1, 1]} : vector<16x3xf32> to vector<16x1xf32>
    %18 = vector.extract_strided_slice %3 {offsets = [2, 0], sizes = [1, 8], strides = [1, 1]} : vector<3x8xf32> to vector<1x8xf32>
    %19 = vector.broadcast %17 : vector<16x1xf32> to vector<16x8xf32>
    %20 = vector.broadcast %18 : vector<1x8xf32> to vector<16x8xf32>
    %21 = arith.subf %19, %20 : vector<16x8xf32>
    %22 = arith.mulf %21, %21 : vector<16x8xf32>
    %23 = arith.addf %16, %22 : vector<16x8xf32>
    %c0_5 = arith.constant 0 : index
    %c0_6 = arith.constant 0 : index
    %c0_7 = arith.constant 0 : index
    %24 = vector.load %arg4[%c0_5, %c0_6, %c0_7] : memref<1x16x8xf32, #tpu.memory_space<vmem>>, vector<1x16x8xf32>
    %25 = vector.shape_cast %24 : vector<1x16x8xf32> to vector<16x8xf32>
    %26 = vector.shape_cast %23 : vector<16x8xf32> to vector<1x16x8xf32>
    tpu.vector_store %arg4[%c0_5, %c0_6, %c0_7], %26 {strides = array<i32>} : memref<1x16x8xf32, #tpu.memory_space<vmem>>, vector<1x16x8xf32>,
    return
  }
  func.func @transform_0(%arg0: i32, %arg1: i32) -> (i32, i32, i32) {
    %c0_i32 = arith.constant 0 : i32
    %c0_i32_0 = arith.constant 0 : i32
    return %arg0, %arg1, %c0_i32 : i32, i32, i32
  }
  func.func @transform_1(%arg0: i32, %arg1: i32) -> (i32, i32, i32) {
    %c0_i32 = arith.constant 0 : i32
    %c0_i32_0 = arith.constant 0 : i32
    %c0_i32_1 = arith.constant 0 : i32
    return %arg0, %c0_i32, %c0_i32_0 : i32, i32, i32
  }
  func.func @transform_2(%arg0: i32, %arg1: i32) -> (i32, i32, i32) {
    %c0_i32 = arith.constant 0 : i32
    %c0_i32_0 = arith.constant 0 : i32
    return %arg0, %arg1, %c0_i32 : i32, i32, i32
  }
}

module attributes {stable_mosaic.version = 11 : i64} {
  func.func @_mlp2_kernel(%arg0: i32, %arg1: memref<32x32xf32, #tpu.memory_space<vmem>>, %arg2: memref<32x16xbf16, #tpu.memory_space<vmem>>, %arg3: memref<1x16xf32, #tpu.memory_space<vmem>>, %arg4: memref<16x32xbf16, #tpu.memory_space<vmem>>, %arg5: memref<1x32xf32, #tpu.memory_space<vmem>>, %arg6: memref<32x32xbf16, #tpu.memory_space<vmem>>) attributes {dimension_semantics = [#tpu.dimension_semantics<parallel>], iteration_bounds = array<i64: 1>, scalar_prefetch = 0 : i64, scratch_operands = 0 : i64, tpu.core_type = #tpu.core_type<tc>, window_params = [{transform_indices = @transform_0, window_bounds = array<i64: 32, 32>}, {pipeline_mode = #tpu.pipeline_mode<synchronous>, transform_indices = @transform_1, window_bounds = array<i64: 32, 16>}, {pipeline_mode = #tpu.pipeline_mode<synchronous>, transform_indices = @transform_2, window_bounds = array<i64: 1, 16>}, {pipeline_mode = #tpu.pipeline_mode<synchronous>, transform_indices = @transform_3, window_bounds = array<i64: 16, 32>}, {pipeline_mode = #tpu.pipeline_mode<synchronous>, transform_indices = @transform_4, window_bounds = array<i64: 1, 32>}, {transform_indices = @transform_5, window_bounds = array<i64: 32, 32>}]} {
    %c0 = arith.constant 0 : index
    %c0_0 = arith.constant 0 : index
    %0 = vector.load %arg1[%c0, %c0_0] : memref<32x32xf32, #tpu.memory_space<vmem>>, vector<32x32xf32>
    %c0_1 = arith.constant 0 : index
    %c0_2 = arith.constant 0 : index
    %1 = vector.load %arg2[%c0_1, %c0_2] : memref<32x16xbf16, #tpu.memory_space<vmem>>, vector<32x16xbf16>
    %2 = arith.truncf %0 : vector<32x32xf32> to vector<32x32xbf16>
    %cst = arith.constant dense<0.000000e+00> : vector<32x16xf32>
    %3 = tpu.matmul %2, %1, %cst {dimension_numbers = #tpu.dot_dimension_numbers<[1], [0], [0], [1], [0, 0, 1, 1], [], []>} : vector<32x32xbf16>, vector<32x16xbf16>, vector<32x16xf32> -> vector<32x16xf32>
    %c0_3 = arith.constant 0 : index
    %c0_4 = arith.constant 0 : index
    %4 = vector.load %arg3[%c0_3, %c0_4] : memref<1x16xf32, #tpu.memory_space<vmem>>, vector<1x16xf32>
    %5 = vector.broadcast %4 : vector<1x16xf32> to vector<32x16xf32>
    %6 = arith.addf %3, %5 : vector<32x16xf32>
    %cst_5 = arith.constant 0.000000e+00 : f32
    %7 = vector.broadcast %cst_5 : f32 to vector<32x16xf32>
    %8 = arith.maximumf %6, %7 : vector<32x16xf32>
    %c0_6 = arith.constant 0 : index
    %c0_7 = arith.constant 0 : index
    %9 = vector.load %arg4[%c0_6, %c0_7] : memref<16x32xbf16, #tpu.memory_space<vmem>>, vector<16x32xbf16>
    %10 = arith.truncf %8 : vector<32x16xf32> to vector<32x16xbf16>
    %cst_8 = arith.constant dense<0.000000e+00> : vector<32x32xf32>
    %11 = tpu.matmul %10, %9, %cst_8 {dimension_numbers = #tpu.dot_dimension_numbers<[1], [0], [0], [1], [0, 0, 1, 1], [], []>} : vector<32x16xbf16>, vector<16x32xbf16>, vector<32x32xf32> -> vector<32x32xf32>
    %c0_9 = arith.constant 0 : index
    %c0_10 = arith.constant 0 : index
    %12 = vector.load %arg5[%c0_9, %c0_10] : memref<1x32xf32, #tpu.memory_space<vmem>>, vector<1x32xf32>
    %13 = vector.broadcast %12 : vector<1x32xf32> to vector<32x32xf32>
    %14 = arith.addf %11, %13 : vector<32x32xf32>
    %15 = arith.truncf %14 : vector<32x32xf32> to vector<32x32xbf16>
    %c0_11 = arith.constant 0 : index
    %c0_12 = arith.constant 0 : index
    %16 = vector.load %arg6[%c0_11, %c0_12] : memref<32x32xbf16, #tpu.memory_space<vmem>>, vector<32x32xbf16>
    tpu.vector_store %arg6[%c0_11, %c0_12], %15 {strides = array<i32>} : memref<32x32xbf16, #tpu.memory_space<vmem>>, vector<32x32xbf16>,
    return
  }
  func.func @transform_0(%arg0: i32) -> (i32, i32) {
    %c0_i32 = arith.constant 0 : i32
    %c0_i32_0 = arith.constant 0 : i32
    return %arg0, %c0_i32 : i32, i32
  }
  func.func @transform_1(%arg0: i32) -> (i32, i32) {
    %c0_i32 = arith.constant 0 : i32
    %c0_i32_0 = arith.constant 0 : i32
    %c0_i32_1 = arith.constant 0 : i32
    return %c0_i32, %c0_i32_0 : i32, i32
  }
  func.func @transform_2(%arg0: i32) -> (i32, i32) {
    %c0_i32 = arith.constant 0 : i32
    %c0_i32_0 = arith.constant 0 : i32
    %c0_i32_1 = arith.constant 0 : i32
    return %c0_i32, %c0_i32_0 : i32, i32
  }
  func.func @transform_3(%arg0: i32) -> (i32, i32) {
    %c0_i32 = arith.constant 0 : i32
    %c0_i32_0 = arith.constant 0 : i32
    %c0_i32_1 = arith.constant 0 : i32
    return %c0_i32, %c0_i32_0 : i32, i32
  }
  func.func @transform_4(%arg0: i32) -> (i32, i32) {
    %c0_i32 = arith.constant 0 : i32
    %c0_i32_0 = arith.constant 0 : i32
    %c0_i32_1 = arith.constant 0 : i32
    return %c0_i32, %c0_i32_0 : i32, i32
  }
  func.func @transform_5(%arg0: i32) -> (i32, i32) {
    %c0_i32 = arith.constant 0 : i32
    %c0_i32_0 = arith.constant 0 : i32
    return %arg0, %c0_i32 : i32, i32
  }
}

module attributes {stable_mosaic.version = 11 : i64} {
  func.func @_mlp2_kernel(%arg0: i32, %arg1: memref<32x3xf32, #tpu.memory_space<vmem>>, %arg2: memref<3x16xbf16, #tpu.memory_space<vmem>>, %arg3: memref<1x16xf32, #tpu.memory_space<vmem>>, %arg4: memref<16x32xbf16, #tpu.memory_space<vmem>>, %arg5: memref<1x32xf32, #tpu.memory_space<vmem>>, %arg6: memref<32x32xbf16, #tpu.memory_space<vmem>>) attributes {dimension_semantics = [#tpu.dimension_semantics<parallel>], iteration_bounds = array<i64: 1>, scalar_prefetch = 0 : i64, scratch_operands = 0 : i64, tpu.core_type = #tpu.core_type<tc>, window_params = [{transform_indices = @transform_0, window_bounds = array<i64: 32, 3>}, {pipeline_mode = #tpu.pipeline_mode<synchronous>, transform_indices = @transform_1, window_bounds = array<i64: 3, 16>}, {pipeline_mode = #tpu.pipeline_mode<synchronous>, transform_indices = @transform_2, window_bounds = array<i64: 1, 16>}, {pipeline_mode = #tpu.pipeline_mode<synchronous>, transform_indices = @transform_3, window_bounds = array<i64: 16, 32>}, {pipeline_mode = #tpu.pipeline_mode<synchronous>, transform_indices = @transform_4, window_bounds = array<i64: 1, 32>}, {transform_indices = @transform_5, window_bounds = array<i64: 32, 32>}]} {
    %c0 = arith.constant 0 : index
    %c0_0 = arith.constant 0 : index
    %0 = vector.load %arg1[%c0, %c0_0] : memref<32x3xf32, #tpu.memory_space<vmem>>, vector<32x3xf32>
    %c0_1 = arith.constant 0 : index
    %c0_2 = arith.constant 0 : index
    %1 = vector.load %arg2[%c0_1, %c0_2] : memref<3x16xbf16, #tpu.memory_space<vmem>>, vector<3x16xbf16>
    %2 = arith.truncf %0 : vector<32x3xf32> to vector<32x3xbf16>
    %cst = arith.constant dense<0.000000e+00> : vector<32x16xf32>
    %3 = tpu.matmul %2, %1, %cst {dimension_numbers = #tpu.dot_dimension_numbers<[1], [0], [0], [1], [0, 0, 1, 1], [], []>} : vector<32x3xbf16>, vector<3x16xbf16>, vector<32x16xf32> -> vector<32x16xf32>
    %c0_3 = arith.constant 0 : index
    %c0_4 = arith.constant 0 : index
    %4 = vector.load %arg3[%c0_3, %c0_4] : memref<1x16xf32, #tpu.memory_space<vmem>>, vector<1x16xf32>
    %5 = vector.broadcast %4 : vector<1x16xf32> to vector<32x16xf32>
    %6 = arith.addf %3, %5 : vector<32x16xf32>
    %cst_5 = arith.constant 0.000000e+00 : f32
    %7 = vector.broadcast %cst_5 : f32 to vector<32x16xf32>
    %8 = arith.maximumf %6, %7 : vector<32x16xf32>
    %c0_6 = arith.constant 0 : index
    %c0_7 = arith.constant 0 : index
    %9 = vector.load %arg4[%c0_6, %c0_7] : memref<16x32xbf16, #tpu.memory_space<vmem>>, vector<16x32xbf16>
    %10 = arith.truncf %8 : vector<32x16xf32> to vector<32x16xbf16>
    %cst_8 = arith.constant dense<0.000000e+00> : vector<32x32xf32>
    %11 = tpu.matmul %10, %9, %cst_8 {dimension_numbers = #tpu.dot_dimension_numbers<[1], [0], [0], [1], [0, 0, 1, 1], [], []>} : vector<32x16xbf16>, vector<16x32xbf16>, vector<32x32xf32> -> vector<32x32xf32>
    %c0_9 = arith.constant 0 : index
    %c0_10 = arith.constant 0 : index
    %12 = vector.load %arg5[%c0_9, %c0_10] : memref<1x32xf32, #tpu.memory_space<vmem>>, vector<1x32xf32>
    %13 = vector.broadcast %12 : vector<1x32xf32> to vector<32x32xf32>
    %14 = arith.addf %11, %13 : vector<32x32xf32>
    %15 = arith.truncf %14 : vector<32x32xf32> to vector<32x32xbf16>
    %c0_11 = arith.constant 0 : index
    %c0_12 = arith.constant 0 : index
    %16 = vector.load %arg6[%c0_11, %c0_12] : memref<32x32xbf16, #tpu.memory_space<vmem>>, vector<32x32xbf16>
    tpu.vector_store %arg6[%c0_11, %c0_12], %15 {strides = array<i32>} : memref<32x32xbf16, #tpu.memory_space<vmem>>, vector<32x32xbf16>,
    return
  }
  func.func @transform_0(%arg0: i32) -> (i32, i32) {
    %c0_i32 = arith.constant 0 : i32
    %c0_i32_0 = arith.constant 0 : i32
    return %arg0, %c0_i32 : i32, i32
  }
  func.func @transform_1(%arg0: i32) -> (i32, i32) {
    %c0_i32 = arith.constant 0 : i32
    %c0_i32_0 = arith.constant 0 : i32
    %c0_i32_1 = arith.constant 0 : i32
    return %c0_i32, %c0_i32_0 : i32, i32
  }
  func.func @transform_2(%arg0: i32) -> (i32, i32) {
    %c0_i32 = arith.constant 0 : i32
    %c0_i32_0 = arith.constant 0 : i32
    %c0_i32_1 = arith.constant 0 : i32
    return %c0_i32, %c0_i32_0 : i32, i32
  }
  func.func @transform_3(%arg0: i32) -> (i32, i32) {
    %c0_i32 = arith.constant 0 : i32
    %c0_i32_0 = arith.constant 0 : i32
    %c0_i32_1 = arith.constant 0 : i32
    return %c0_i32, %c0_i32_0 : i32, i32
  }
  func.func @transform_4(%arg0: i32) -> (i32, i32) {
    %c0_i32 = arith.constant 0 : i32
    %c0_i32_0 = arith.constant 0 : i32
    %c0_i32_1 = arith.constant 0 : i32
    return %c0_i32, %c0_i32_0 : i32, i32
  }
  func.func @transform_5(%arg0: i32) -> (i32, i32) {
    %c0_i32 = arith.constant 0 : i32
    %c0_i32_0 = arith.constant 0 : i32
    return %arg0, %c0_i32 : i32, i32
  }
}

module attributes {stable_mosaic.version = 11 : i64} {
  func.func @_mlp2_fused_kernel(%arg0: i32, %arg1: i32, %arg2: memref<1x16x32xbf16, #tpu.memory_space<vmem>>, %arg3: memref<1x16x32xbf16, #tpu.memory_space<vmem>>, %arg4: memref<1x1x32xbf16, #tpu.memory_space<vmem>>, %arg5: memref<32x64xbf16, #tpu.memory_space<vmem>>, %arg6: memref<32x64xbf16, #tpu.memory_space<vmem>>, %arg7: memref<32x64xbf16, #tpu.memory_space<vmem>>, %arg8: memref<1x64xf32, #tpu.memory_space<vmem>>, %arg9: memref<64x32xbf16, #tpu.memory_space<vmem>>, %arg10: memref<1x32xf32, #tpu.memory_space<vmem>>, %arg11: memref<1x16x32xbf16, #tpu.memory_space<vmem>>) attributes {dimension_semantics = [#tpu.dimension_semantics<parallel>, #tpu.dimension_semantics<parallel>], iteration_bounds = array<i64: 2, 1>, scalar_prefetch = 0 : i64, scratch_operands = 0 : i64, tpu.core_type = #tpu.core_type<tc>, window_params = [{transform_indices = @transform_0, window_bounds = array<i64: 1, 16, 32>}, {transform_indices = @transform_1, window_bounds = array<i64: 1, 16, 32>}, {transform_indices = @transform_2, window_bounds = array<i64: 1, 1, 32>}, {pipeline_mode = #tpu.pipeline_mode<synchronous>, transform_indices = @transform_3, window_bounds = array<i64: 32, 64>}, {pipeline_mode = #tpu.pipeline_mode<synchronous>, transform_indices = @transform_4, window_bounds = array<i64: 32, 64>}, {pipeline_mode = #tpu.pipeline_mode<synchronous>, transform_indices = @transform_5, window_bounds = array<i64: 32, 64>}, {pipeline_mode = #tpu.pipeline_mode<synchronous>, transform_indices = @transform_6, window_bounds = array<i64: 1, 64>}, {pipeline_mode = #tpu.pipeline_mode<synchronous>, transform_indices = @transform_7, window_bounds = array<i64: 64, 32>}, {pipeline_mode = #tpu.pipeline_mode<synchronous>, transform_indices = @transform_8, window_bounds = array<i64: 1, 32>}, {transform_indices = @transform_9, window_bounds = array<i64: 1, 16, 32>}]} {
    %c0 = arith.constant 0 : index
    %c0_0 = arith.constant 0 : index
    %c0_1 = arith.constant 0 : index
    %0 = vector.load %arg2[%c0, %c0_0, %c0_1] : memref<1x16x32xbf16, #tpu.memory_space<vmem>>, vector<1x16x32xbf16>
    %1 = vector.shape_cast %0 : vector<1x16x32xbf16> to vector<16x32xbf16>
    %c0_2 = arith.constant 0 : index
    %c0_3 = arith.constant 0 : index
    %c0_4 = arith.constant 0 : index
    %2 = vector.load %arg3[%c0_2, %c0_3, %c0_4] : memref<1x16x32xbf16, #tpu.memory_space<vmem>>, vector<1x16x32xbf16>
    %3 = vector.shape_cast %2 : vector<1x16x32xbf16> to vector<16x32xbf16>
    %c0_5 = arith.constant 0 : index
    %c0_6 = arith.constant 0 : index
    %c0_7 = arith.constant 0 : index
    %4 = vector.load %arg4[%c0_5, %c0_6, %c0_7] : memref<1x1x32xbf16, #tpu.memory_space<vmem>>, vector<1x1x32xbf16>
    %5 = vector.shape_cast %4 : vector<1x1x32xbf16> to vector<1x32xbf16>
    %c0_8 = arith.constant 0 : index
    %c0_9 = arith.constant 0 : index
    %6 = vector.load %arg6[%c0_8, %c0_9] : memref<32x64xbf16, #tpu.memory_space<vmem>>, vector<32x64xbf16>
    %cst = arith.constant dense<0.000000e+00> : vector<1x64xf32>
    %7 = tpu.matmul %5, %6, %cst {dimension_numbers = #tpu.dot_dimension_numbers<[1], [0], [0], [1], [0, 0, 1, 1], [], []>} : vector<1x32xbf16>, vector<32x64xbf16>, vector<1x64xf32> -> vector<1x64xf32>
    %c0_10 = arith.constant 0 : index
    %c0_11 = arith.constant 0 : index
    %8 = vector.load %arg5[%c0_10, %c0_11] : memref<32x64xbf16, #tpu.memory_space<vmem>>, vector<32x64xbf16>
    %cst_12 = arith.constant dense<0.000000e+00> : vector<16x64xf32>
    %9 = tpu.matmul %1, %8, %cst_12 {dimension_numbers = #tpu.dot_dimension_numbers<[1], [0], [0], [1], [0, 0, 1, 1], [], []>} : vector<16x32xbf16>, vector<32x64xbf16>, vector<16x64xf32> -> vector<16x64xf32>
    %10 = vector.broadcast %7 : vector<1x64xf32> to vector<16x64xf32>
    %11 = arith.addf %9, %10 : vector<16x64xf32>
    %c0_13 = arith.constant 0 : index
    %c0_14 = arith.constant 0 : index
    %12 = vector.load %arg7[%c0_13, %c0_14] : memref<32x64xbf16, #tpu.memory_space<vmem>>, vector<32x64xbf16>
    %cst_15 = arith.constant dense<0.000000e+00> : vector<16x64xf32>
    %13 = tpu.matmul %3, %12, %cst_15 {dimension_numbers = #tpu.dot_dimension_numbers<[1], [0], [0], [1], [0, 0, 1, 1], [], []>} : vector<16x32xbf16>, vector<32x64xbf16>, vector<16x64xf32> -> vector<16x64xf32>
    %14 = arith.addf %11, %13 : vector<16x64xf32>
    %c0_16 = arith.constant 0 : index
    %c0_17 = arith.constant 0 : index
    %15 = vector.load %arg8[%c0_16, %c0_17] : memref<1x64xf32, #tpu.memory_space<vmem>>, vector<1x64xf32>
    %16 = vector.broadcast %15 : vector<1x64xf32> to vector<16x64xf32>
    %17 = arith.addf %14, %16 : vector<16x64xf32>
    %cst_18 = arith.constant 0.000000e+00 : f32
    %18 = vector.broadcast %cst_18 : f32 to vector<16x64xf32>
    %19 = arith.maximumf %17, %18 : vector<16x64xf32>
    %c0_19 = arith.constant 0 : index
    %c0_20 = arith.constant 0 : index
    %20 = vector.load %arg9[%c0_19, %c0_20] : memref<64x32xbf16, #tpu.memory_space<vmem>>, vector<64x32xbf16>
    %21 = arith.truncf %19 : vector<16x64xf32> to vector<16x64xbf16>
    %cst_21 = arith.constant dense<0.000000e+00> : vector<16x32xf32>
    %22 = tpu.matmul %21, %20, %cst_21 {dimension_numbers = #tpu.dot_dimension_numbers<[1], [0], [0], [1], [0, 0, 1, 1], [], []>} : vector<16x64xbf16>, vector<64x32xbf16>, vector<16x32xf32> -> vector<16x32xf32>
    %c0_22 = arith.constant 0 : index
    %c0_23 = arith.constant 0 : index
    %23 = vector.load %arg10[%c0_22, %c0_23] : memref<1x32xf32, #tpu.memory_space<vmem>>, vector<1x32xf32>
    %24 = vector.broadcast %23 : vector<1x32xf32> to vector<16x32xf32>
    %25 = arith.addf %22, %24 : vector<16x32xf32>
    %26 = arith.truncf %25 : vector<16x32xf32> to vector<16x32xbf16>
    %c0_24 = arith.constant 0 : index
    %c0_25 = arith.constant 0 : index
    %c0_26 = arith.constant 0 : index
    %27 = vector.load %arg11[%c0_24, %c0_25, %c0_26] : memref<1x16x32xbf16, #tpu.memory_space<vmem>>, vector<1x16x32xbf16>
    %28 = vector.shape_cast %27 : vector<1x16x32xbf16> to vector<16x32xbf16>
    %29 = vector.shape_cast %26 : vector<16x32xbf16> to vector<1x16x32xbf16>
    tpu.vector_store %arg11[%c0_24, %c0_25, %c0_26], %29 {strides = array<i32>} : memref<1x16x32xbf16, #tpu.memory_space<vmem>>, vector<1x16x32xbf16>,
    return
  }
  func.func @transform_0(%arg0: i32, %arg1: i32) -> (i32, i32, i32) {
    %c0_i32 = arith.constant 0 : i32
    %c0_i32_0 = arith.constant 0 : i32
    return %arg0, %arg1, %c0_i32 : i32, i32, i32
  }
  func.func @transform_1(%arg0: i32, %arg1: i32) -> (i32, i32, i32) {
    %c0_i32 = arith.constant 0 : i32
    %c0_i32_0 = arith.constant 0 : i32
    return %arg0, %arg1, %c0_i32 : i32, i32, i32
  }
  func.func @transform_2(%arg0: i32, %arg1: i32) -> (i32, i32, i32) {
    %c0_i32 = arith.constant 0 : i32
    %c0_i32_0 = arith.constant 0 : i32
    %c0_i32_1 = arith.constant 0 : i32
    return %arg0, %c0_i32, %c0_i32_0 : i32, i32, i32
  }
  func.func @transform_3(%arg0: i32, %arg1: i32) -> (i32, i32) {
    %c0_i32 = arith.constant 0 : i32
    %c0_i32_0 = arith.constant 0 : i32
    %c0_i32_1 = arith.constant 0 : i32
    return %c0_i32, %c0_i32_0 : i32, i32
  }
  func.func @transform_4(%arg0: i32, %arg1: i32) -> (i32, i32) {
    %c0_i32 = arith.constant 0 : i32
    %c0_i32_0 = arith.constant 0 : i32
    %c0_i32_1 = arith.constant 0 : i32
    return %c0_i32, %c0_i32_0 : i32, i32
  }
  func.func @transform_5(%arg0: i32, %arg1: i32) -> (i32, i32) {
    %c0_i32 = arith.constant 0 : i32
    %c0_i32_0 = arith.constant 0 : i32
    %c0_i32_1 = arith.constant 0 : i32
    return %c0_i32, %c0_i32_0 : i32, i32
  }
  func.func @transform_6(%arg0: i32, %arg1: i32) -> (i32, i32) {
    %c0_i32 = arith.constant 0 : i32
    %c0_i32_0 = arith.constant 0 : i32
    %c0_i32_1 = arith.constant 0 : i32
    return %c0_i32, %c0_i32_0 : i32, i32
  }
  func.func @transform_7(%arg0: i32, %arg1: i32) -> (i32, i32) {
    %c0_i32 = arith.constant 0 : i32
    %c0_i32_0 = arith.constant 0 : i32
    %c0_i32_1 = arith.constant 0 : i32
    return %c0_i32, %c0_i32_0 : i32, i32
  }
  func.func @transform_8(%arg0: i32, %arg1: i32) -> (i32, i32) {
    %c0_i32 = arith.constant 0 : i32
    %c0_i32_0 = arith.constant 0 : i32
    %c0_i32_1 = arith.constant 0 : i32
    return %c0_i32, %c0_i32_0 : i32, i32
  }
  func.func @transform_9(%arg0: i32, %arg1: i32) -> (i32, i32, i32) {
    %c0_i32 = arith.constant 0 : i32
    %c0_i32_0 = arith.constant 0 : i32
    return %arg0, %arg1, %c0_i32 : i32, i32, i32
  }
}

module attributes {stable_mosaic.version = 11 : i64} {
  func.func @_sqdist_kernel(%arg0: i32, %arg1: i32, %arg2: memref<1x16x3xf32, #tpu.memory_space<vmem>>, %arg3: memref<1x3x16xf32, #tpu.memory_space<vmem>>, %arg4: memref<1x16x16xf32, #tpu.memory_space<vmem>>) attributes {dimension_semantics = [#tpu.dimension_semantics<parallel>, #tpu.dimension_semantics<parallel>], iteration_bounds = array<i64: 2, 1>, scalar_prefetch = 0 : i64, scratch_operands = 0 : i64, tpu.core_type = #tpu.core_type<tc>, window_params = [{transform_indices = @transform_0, window_bounds = array<i64: 1, 16, 3>}, {transform_indices = @transform_1, window_bounds = array<i64: 1, 3, 16>}, {transform_indices = @transform_2, window_bounds = array<i64: 1, 16, 16>}]} {
    %c0 = arith.constant 0 : index
    %c0_0 = arith.constant 0 : index
    %c0_1 = arith.constant 0 : index
    %0 = vector.load %arg2[%c0, %c0_0, %c0_1] : memref<1x16x3xf32, #tpu.memory_space<vmem>>, vector<1x16x3xf32>
    %1 = vector.shape_cast %0 : vector<1x16x3xf32> to vector<16x3xf32>
    %c0_2 = arith.constant 0 : index
    %c0_3 = arith.constant 0 : index
    %c0_4 = arith.constant 0 : index
    %2 = vector.load %arg3[%c0_2, %c0_3, %c0_4] : memref<1x3x16xf32, #tpu.memory_space<vmem>>, vector<1x3x16xf32>
    %3 = vector.shape_cast %2 : vector<1x3x16xf32> to vector<3x16xf32>
    %4 = vector.extract_strided_slice %1 {offsets = [0, 0], sizes = [16, 1], strides = [1, 1]} : vector<16x3xf32> to vector<16x1xf32>
    %5 = vector.extract_strided_slice %3 {offsets = [0, 0], sizes = [1, 16], strides = [1, 1]} : vector<3x16xf32> to vector<1x16xf32>
    %6 = vector.broadcast %4 : vector<16x1xf32> to vector<16x16xf32>
    %7 = vector.broadcast %5 : vector<1x16xf32> to vector<16x16xf32>
    %8 = arith.subf %6, %7 : vector<16x16xf32>
    %9 = arith.mulf %8, %8 : vector<16x16xf32>
    %10 = vector.extract_strided_slice %1 {offsets = [0, 1], sizes = [16, 1], strides = [1, 1]} : vector<16x3xf32> to vector<16x1xf32>
    %11 = vector.extract_strided_slice %3 {offsets = [1, 0], sizes = [1, 16], strides = [1, 1]} : vector<3x16xf32> to vector<1x16xf32>
    %12 = vector.broadcast %10 : vector<16x1xf32> to vector<16x16xf32>
    %13 = vector.broadcast %11 : vector<1x16xf32> to vector<16x16xf32>
    %14 = arith.subf %12, %13 : vector<16x16xf32>
    %15 = arith.mulf %14, %14 : vector<16x16xf32>
    %16 = arith.addf %9, %15 : vector<16x16xf32>
    %17 = vector.extract_strided_slice %1 {offsets = [0, 2], sizes = [16, 1], strides = [1, 1]} : vector<16x3xf32> to vector<16x1xf32>
    %18 = vector.extract_strided_slice %3 {offsets = [2, 0], sizes = [1, 16], strides = [1, 1]} : vector<3x16xf32> to vector<1x16xf32>
    %19 = vector.broadcast %17 : vector<16x1xf32> to vector<16x16xf32>
    %20 = vector.broadcast %18 : vector<1x16xf32> to vector<16x16xf32>
    %21 = arith.subf %19, %20 : vector<16x16xf32>
    %22 = arith.mulf %21, %21 : vector<16x16xf32>
    %23 = arith.addf %16, %22 : vector<16x16xf32>
    %c0_5 = arith.constant 0 : index
    %c0_6 = arith.constant 0 : index
    %c0_7 = arith.constant 0 : index
    %24 = vector.load %arg4[%c0_5, %c0_6, %c0_7] : memref<1x16x16xf32, #tpu.memory_space<vmem>>, vector<1x16x16xf32>
    %25 = vector.shape_cast %24 : vector<1x16x16xf32> to vector<16x16xf32>
    %26 = vector.shape_cast %23 : vector<16x16xf32> to vector<1x16x16xf32>
    tpu.vector_store %arg4[%c0_5, %c0_6, %c0_7], %26 {strides = array<i32>} : memref<1x16x16xf32, #tpu.memory_space<vmem>>, vector<1x16x16xf32>,
    return
  }
  func.func @transform_0(%arg0: i32, %arg1: i32) -> (i32, i32, i32) {
    %c0_i32 = arith.constant 0 : i32
    %c0_i32_0 = arith.constant 0 : i32
    return %arg0, %arg1, %c0_i32 : i32, i32, i32
  }
  func.func @transform_1(%arg0: i32, %arg1: i32) -> (i32, i32, i32) {
    %c0_i32 = arith.constant 0 : i32
    %c0_i32_0 = arith.constant 0 : i32
    %c0_i32_1 = arith.constant 0 : i32
    return %arg0, %c0_i32, %c0_i32_0 : i32, i32, i32
  }
  func.func @transform_2(%arg0: i32, %arg1: i32) -> (i32, i32, i32) {
    %c0_i32 = arith.constant 0 : i32
    %c0_i32_0 = arith.constant 0 : i32
    return %arg0, %arg1, %c0_i32 : i32, i32, i32
  }
}

module attributes {stable_mosaic.version = 11 : i64} {
  func.func @_uptrans_pre_kernel(%arg0: i32, %arg1: memref<32x32xf32, #tpu.memory_space<vmem>>, %arg2: memref<32x32xbf16, #tpu.memory_space<vmem>>, %arg3: memref<32x32xbf16, #tpu.memory_space<vmem>>, %arg4: memref<32x32xbf16, #tpu.memory_space<vmem>>, %arg5: memref<32x32xbf16, #tpu.memory_space<vmem>>, %arg6: memref<1x32xf32, #tpu.memory_space<vmem>>, %arg7: memref<32x32xbf16, #tpu.memory_space<vmem>>, %arg8: memref<1x32xf32, #tpu.memory_space<vmem>>, %arg9: memref<32x32xbf16, #tpu.memory_space<vmem>>, %arg10: memref<32x32xbf16, #tpu.memory_space<vmem>>, %arg11: memref<1x32xf32, #tpu.memory_space<vmem>>, %arg12: memref<32x32xbf16, #tpu.memory_space<vmem>>, %arg13: memref<1x32xf32, #tpu.memory_space<vmem>>, %arg14: memref<32x32xbf16, #tpu.memory_space<vmem>>, %arg15: memref<1x32xf32, #tpu.memory_space<vmem>>, %arg16: memref<32x32xbf16, #tpu.memory_space<vmem>>, %arg17: memref<1x32xf32, #tpu.memory_space<vmem>>, %arg18: memref<32x32xbf16, #tpu.memory_space<vmem>>, %arg19: memref<1x32xf32, #tpu.memory_space<vmem>>, %arg20: memref<32x32xbf16, #tpu.memory_space<vmem>>, %arg21: memref<32x32xbf16, #tpu.memory_space<vmem>>, %arg22: memref<32x32xbf16, #tpu.memory_space<vmem>>, %arg23: memref<32x32xbf16, #tpu.memory_space<vmem>>, %arg24: memref<32x32xbf16, #tpu.memory_space<vmem>>) attributes {dimension_semantics = [#tpu.dimension_semantics<parallel>], iteration_bounds = array<i64: 1>, scalar_prefetch = 0 : i64, scratch_operands = 0 : i64, tpu.core_type = #tpu.core_type<tc>, window_params = [{transform_indices = @transform_0, window_bounds = array<i64: 32, 32>}, {transform_indices = @transform_1, window_bounds = array<i64: 32, 32>}, {transform_indices = @transform_2, window_bounds = array<i64: 32, 32>}, {pipeline_mode = #tpu.pipeline_mode<synchronous>, transform_indices = @transform_3, window_bounds = array<i64: 32, 32>}, {pipeline_mode = #tpu.pipeline_mode<synchronous>, transform_indices = @transform_4, window_bounds = array<i64: 32, 32>}, {pipeline_mode = #tpu.pipeline_mode<synchronous>, transform_indices = @transform_5, window_bounds = array<i64: 1, 32>}, {pipeline_mode = #tpu.pipeline_mode<synchronous>, transform_indices = @transform_6, window_bounds = array<i64: 32, 32>}, {pipeline_mode = #tpu.pipeline_mode<synchronous>, transform_indices = @transform_7, window_bounds = array<i64: 1, 32>}, {pipeline_mode = #tpu.pipeline_mode<synchronous>, transform_indices = @transform_8, window_bounds = array<i64: 32, 32>}, {pipeline_mode = #tpu.pipeline_mode<synchronous>, transform_indices = @transform_9, window_bounds = array<i64: 32, 32>}, {pipeline_mode = #tpu.pipeline_mode<synchronous>, transform_indices = @transform_10, window_bounds = array<i64: 1, 32>}, {pipeline_mode = #tpu.pipeline_mode<synchronous>, transform_indices = @transform_11, window_bounds = array<i64: 32, 32>}, {pipeline_mode = #tpu.pipeline_mode<synchronous>, transform_indices = @transform_12, window_bounds = array<i64: 1, 32>}, {pipeline_mode = #tpu.pipeline_mode<synchronous>, transform_indices = @transform_13, window_bounds = array<i64: 32, 32>}, {pipeline_mode = #tpu.pipeline_mode<synchronous>, transform_indices = @transform_14, window_bounds = array<i64: 1, 32>}, {pipeline_mode = #tpu.pipeline_mode<synchronous>, transform_indices = @transform_15, window_bounds = array<i64: 32, 32>}, {pipeline_mode = #tpu.pipeline_mode<synchronous>, transform_indices = @transform_16, window_bounds = array<i64: 1, 32>}, {pipeline_mode = #tpu.pipeline_mode<synchronous>, transform_indices = @transform_17, window_bounds = array<i64: 32, 32>}, {pipeline_mode = #tpu.pipeline_mode<synchronous>, transform_indices = @transform_18, window_bounds = array<i64: 1, 32>}, {transform_indices = @transform_19, window_bounds = array<i64: 32, 32>}, {transform_indices = @transform_20, window_bounds = array<i64: 32, 32>}, {transform_indices = @transform_21, window_bounds = array<i64: 32, 32>}, {transform_indices = @transform_22, window_bounds = array<i64: 32, 32>}, {transform_indices = @transform_23, window_bounds = array<i64: 32, 32>}]} {
    %c0 = arith.constant 0 : index
    %c0_0 = arith.constant 0 : index
    %0 = vector.load %arg1[%c0, %c0_0] : memref<32x32xf32, #tpu.memory_space<vmem>>, vector<32x32xf32>
    %c0_1 = arith.constant 0 : index
    %c0_2 = arith.constant 0 : index
    %1 = vector.load %arg2[%c0_1, %c0_2] : memref<32x32xbf16, #tpu.memory_space<vmem>>, vector<32x32xbf16>
    %c0_3 = arith.constant 0 : index
    %c0_4 = arith.constant 0 : index
    %2 = vector.load %arg3[%c0_3, %c0_4] : memref<32x32xbf16, #tpu.memory_space<vmem>>, vector<32x32xbf16>
    %c0_5 = arith.constant 0 : index
    %c0_6 = arith.constant 0 : index
    %3 = vector.load %arg4[%c0_5, %c0_6] : memref<32x32xbf16, #tpu.memory_space<vmem>>, vector<32x32xbf16>
    %4 = arith.truncf %0 : vector<32x32xf32> to vector<32x32xbf16>
    %cst = arith.constant dense<0.000000e+00> : vector<32x32xf32>
    %5 = tpu.matmul %4, %3, %cst {dimension_numbers = #tpu.dot_dimension_numbers<[1], [0], [0], [1], [0, 0, 1, 1], [], []>} : vector<32x32xbf16>, vector<32x32xbf16>, vector<32x32xf32> -> vector<32x32xf32>
    %c0_7 = arith.constant 0 : index
    %c0_8 = arith.constant 0 : index
    %6 = vector.load %arg5[%c0_7, %c0_8] : memref<32x32xbf16, #tpu.memory_space<vmem>>, vector<32x32xbf16>
    %cst_9 = arith.constant dense<0.000000e+00> : vector<32x32xf32>
    %7 = tpu.matmul %1, %6, %cst_9 {dimension_numbers = #tpu.dot_dimension_numbers<[1], [0], [0], [1], [0, 0, 1, 1], [], []>} : vector<32x32xbf16>, vector<32x32xbf16>, vector<32x32xf32> -> vector<32x32xf32>
    %8 = arith.addf %5, %7 : vector<32x32xf32>
    %c0_10 = arith.constant 0 : index
    %c0_11 = arith.constant 0 : index
    %9 = vector.load %arg6[%c0_10, %c0_11] : memref<1x32xf32, #tpu.memory_space<vmem>>, vector<1x32xf32>
    %10 = vector.broadcast %9 : vector<1x32xf32> to vector<32x32xf32>
    %11 = arith.addf %8, %10 : vector<32x32xf32>
    %cst_12 = arith.constant 0.000000e+00 : f32
    %12 = vector.broadcast %cst_12 : f32 to vector<32x32xf32>
    %13 = arith.maximumf %11, %12 : vector<32x32xf32>
    %c0_13 = arith.constant 0 : index
    %c0_14 = arith.constant 0 : index
    %14 = vector.load %arg7[%c0_13, %c0_14] : memref<32x32xbf16, #tpu.memory_space<vmem>>, vector<32x32xbf16>
    %15 = arith.truncf %13 : vector<32x32xf32> to vector<32x32xbf16>
    %cst_15 = arith.constant dense<0.000000e+00> : vector<32x32xf32>
    %16 = tpu.matmul %15, %14, %cst_15 {dimension_numbers = #tpu.dot_dimension_numbers<[1], [0], [0], [1], [0, 0, 1, 1], [], []>} : vector<32x32xbf16>, vector<32x32xbf16>, vector<32x32xf32> -> vector<32x32xf32>
    %c0_16 = arith.constant 0 : index
    %c0_17 = arith.constant 0 : index
    %17 = vector.load %arg8[%c0_16, %c0_17] : memref<1x32xf32, #tpu.memory_space<vmem>>, vector<1x32xf32>
    %18 = vector.broadcast %17 : vector<1x32xf32> to vector<32x32xf32>
    %19 = arith.addf %16, %18 : vector<32x32xf32>
    %c0_18 = arith.constant 0 : index
    %c0_19 = arith.constant 0 : index
    %20 = vector.load %arg9[%c0_18, %c0_19] : memref<32x32xbf16, #tpu.memory_space<vmem>>, vector<32x32xbf16>
    %21 = arith.truncf %0 : vector<32x32xf32> to vector<32x32xbf16>
    %cst_20 = arith.constant dense<0.000000e+00> : vector<32x32xf32>
    %22 = tpu.matmul %21, %20, %cst_20 {dimension_numbers = #tpu.dot_dimension_numbers<[1], [0], [0], [1], [0, 0, 1, 1], [], []>} : vector<32x32xbf16>, vector<32x32xbf16>, vector<32x32xf32> -> vector<32x32xf32>
    %23 = arith.addf %19, %22 : vector<32x32xf32>
    %c0_21 = arith.constant 0 : index
    %c0_22 = arith.constant 0 : index
    %24 = vector.load %arg10[%c0_21, %c0_22] : memref<32x32xbf16, #tpu.memory_space<vmem>>, vector<32x32xbf16>
    %cst_23 = arith.constant dense<0.000000e+00> : vector<32x32xf32>
    %25 = tpu.matmul %1, %24, %cst_23 {dimension_numbers = #tpu.dot_dimension_numbers<[1], [0], [0], [1], [0, 0, 1, 1], [], []>} : vector<32x32xbf16>, vector<32x32xbf16>, vector<32x32xf32> -> vector<32x32xf32>
    %26 = arith.addf %23, %25 : vector<32x32xf32>
    %c0_24 = arith.constant 0 : index
    %c0_25 = arith.constant 0 : index
    %27 = vector.load %arg11[%c0_24, %c0_25] : memref<1x32xf32, #tpu.memory_space<vmem>>, vector<1x32xf32>
    %28 = vector.broadcast %27 : vector<1x32xf32> to vector<32x32xf32>
    %29 = arith.addf %26, %28 : vector<32x32xf32>
    %30 = arith.truncf %29 : vector<32x32xf32> to vector<32x32xbf16>
    %c0_26 = arith.constant 0 : index
    %c0_27 = arith.constant 0 : index
    %31 = vector.load %arg20[%c0_26, %c0_27] : memref<32x32xbf16, #tpu.memory_space<vmem>>, vector<32x32xbf16>
    tpu.vector_store %arg20[%c0_26, %c0_27], %30 {strides = array<i32>} : memref<32x32xbf16, #tpu.memory_space<vmem>>, vector<32x32xbf16>,
    %c0_28 = arith.constant 0 : index
    %c0_29 = arith.constant 0 : index
    %32 = vector.load %arg12[%c0_28, %c0_29] : memref<32x32xbf16, #tpu.memory_space<vmem>>, vector<32x32xbf16>
    %cst_30 = arith.constant dense<0.000000e+00> : vector<32x32xf32>
    %33 = tpu.matmul %1, %32, %cst_30 {dimension_numbers = #tpu.dot_dimension_numbers<[1], [0], [0], [1], [0, 0, 1, 1], [], []>} : vector<32x32xbf16>, vector<32x32xbf16>, vector<32x32xf32> -> vector<32x32xf32>
    %c0_31 = arith.constant 0 : index
    %c0_32 = arith.constant 0 : index
    %34 = vector.load %arg13[%c0_31, %c0_32] : memref<1x32xf32, #tpu.memory_space<vmem>>, vector<1x32xf32>
    %35 = vector.broadcast %34 : vector<1x32xf32> to vector<32x32xf32>
    %36 = arith.addf %33, %35 : vector<32x32xf32>
    %37 = arith.truncf %36 : vector<32x32xf32> to vector<32x32xbf16>
    %c0_33 = arith.constant 0 : index
    %c0_34 = arith.constant 0 : index
    %38 = vector.load %arg21[%c0_33, %c0_34] : memref<32x32xbf16, #tpu.memory_space<vmem>>, vector<32x32xbf16>
    tpu.vector_store %arg21[%c0_33, %c0_34], %37 {strides = array<i32>} : memref<32x32xbf16, #tpu.memory_space<vmem>>, vector<32x32xbf16>,
    %c0_35 = arith.constant 0 : index
    %c0_36 = arith.constant 0 : index
    %39 = vector.load %arg14[%c0_35, %c0_36] : memref<32x32xbf16, #tpu.memory_space<vmem>>, vector<32x32xbf16>
    %40 = arith.truncf %0 : vector<32x32xf32> to vector<32x32xbf16>
    %cst_37 = arith.constant dense<0.000000e+00> : vector<32x32xf32>
    %41 = tpu.matmul %40, %39, %cst_37 {dimension_numbers = #tpu.dot_dimension_numbers<[1], [0], [0], [1], [0, 0, 1, 1], [], []>} : vector<32x32xbf16>, vector<32x32xbf16>, vector<32x32xf32> -> vector<32x32xf32>
    %c0_38 = arith.constant 0 : index
    %c0_39 = arith.constant 0 : index
    %42 = vector.load %arg15[%c0_38, %c0_39] : memref<1x32xf32, #tpu.memory_space<vmem>>, vector<1x32xf32>
    %43 = vector.broadcast %42 : vector<1x32xf32> to vector<32x32xf32>
    %44 = arith.addf %41, %43 : vector<32x32xf32>
    %45 = arith.truncf %44 : vector<32x32xf32> to vector<32x32xbf16>
    %c0_40 = arith.constant 0 : index
    %c0_41 = arith.constant 0 : index
    %46 = vector.load %arg22[%c0_40, %c0_41] : memref<32x32xbf16, #tpu.memory_space<vmem>>, vector<32x32xbf16>
    tpu.vector_store %arg22[%c0_40, %c0_41], %45 {strides = array<i32>} : memref<32x32xbf16, #tpu.memory_space<vmem>>, vector<32x32xbf16>,
    %c0_42 = arith.constant 0 : index
    %c0_43 = arith.constant 0 : index
    %47 = vector.load %arg16[%c0_42, %c0_43] : memref<32x32xbf16, #tpu.memory_space<vmem>>, vector<32x32xbf16>
    %48 = arith.truncf %29 : vector<32x32xf32> to vector<32x32xbf16>
    %cst_44 = arith.constant dense<0.000000e+00> : vector<32x32xf32>
    %49 = tpu.matmul %48, %47, %cst_44 {dimension_numbers = #tpu.dot_dimension_numbers<[1], [0], [0], [1], [0, 0, 1, 1], [], []>} : vector<32x32xbf16>, vector<32x32xbf16>, vector<32x32xf32> -> vector<32x32xf32>
    %c0_45 = arith.constant 0 : index
    %c0_46 = arith.constant 0 : index
    %50 = vector.load %arg17[%c0_45, %c0_46] : memref<1x32xf32, #tpu.memory_space<vmem>>, vector<1x32xf32>
    %51 = vector.broadcast %50 : vector<1x32xf32> to vector<32x32xf32>
    %52 = arith.addf %49, %51 : vector<32x32xf32>
    %53 = arith.truncf %52 : vector<32x32xf32> to vector<32x32xbf16>
    %c0_47 = arith.constant 0 : index
    %c0_48 = arith.constant 0 : index
    %54 = vector.load %arg23[%c0_47, %c0_48] : memref<32x32xbf16, #tpu.memory_space<vmem>>, vector<32x32xbf16>
    tpu.vector_store %arg23[%c0_47, %c0_48], %53 {strides = array<i32>} : memref<32x32xbf16, #tpu.memory_space<vmem>>, vector<32x32xbf16>,
    %c0_49 = arith.constant 0 : index
    %c0_50 = arith.constant 0 : index
    %55 = vector.load %arg18[%c0_49, %c0_50] : memref<32x32xbf16, #tpu.memory_space<vmem>>, vector<32x32xbf16>
    %cst_51 = arith.constant dense<0.000000e+00> : vector<32x32xf32>
    %56 = tpu.matmul %2, %55, %cst_51 {dimension_numbers = #tpu.dot_dimension_numbers<[1], [0], [0], [1], [0, 0, 1, 1], [], []>} : vector<32x32xbf16>, vector<32x32xbf16>, vector<32x32xf32> -> vector<32x32xf32>
    %c0_52 = arith.constant 0 : index
    %c0_53 = arith.constant 0 : index
    %57 = vector.load %arg19[%c0_52, %c0_53] : memref<1x32xf32, #tpu.memory_space<vmem>>, vector<1x32xf32>
    %58 = vector.broadcast %57 : vector<1x32xf32> to vector<32x32xf32>
    %59 = arith.addf %56, %58 : vector<32x32xf32>
    %60 = arith.truncf %59 : vector<32x32xf32> to vector<32x32xbf16>
    %c0_54 = arith.constant 0 : index
    %c0_55 = arith.constant 0 : index
    %61 = vector.load %arg24[%c0_54, %c0_55] : memref<32x32xbf16, #tpu.memory_space<vmem>>, vector<32x32xbf16>
    tpu.vector_store %arg24[%c0_54, %c0_55], %60 {strides = array<i32>} : memref<32x32xbf16, #tpu.memory_space<vmem>>, vector<32x32xbf16>,
    return
  }
  func.func @transform_0(%arg0: i32) -> (i32, i32) {
    %c0_i32 = arith.constant 0 : i32
    %c0_i32_0 = arith.constant 0 : i32
    return %arg0, %c0_i32 : i32, i32
  }
  func.func @transform_1(%arg0: i32) -> (i32, i32) {
    %c0_i32 = arith.constant 0 : i32
    %c0_i32_0 = arith.constant 0 : i32
    return %arg0, %c0_i32 : i32, i32
  }
  func.func @transform_2(%arg0: i32) -> (i32, i32) {
    %c0_i32 = arith.constant 0 : i32
    %c0_i32_0 = arith.constant 0 : i32
    return %arg0, %c0_i32 : i32, i32
  }
  func.func @transform_3(%arg0: i32) -> (i32, i32) {
    %c0_i32 = arith.constant 0 : i32
    %c0_i32_0 = arith.constant 0 : i32
    %c0_i32_1 = arith.constant 0 : i32
    return %c0_i32, %c0_i32_0 : i32, i32
  }
  func.func @transform_4(%arg0: i32) -> (i32, i32) {
    %c0_i32 = arith.constant 0 : i32
    %c0_i32_0 = arith.constant 0 : i32
    %c0_i32_1 = arith.constant 0 : i32
    return %c0_i32, %c0_i32_0 : i32, i32
  }
  func.func @transform_5(%arg0: i32) -> (i32, i32) {
    %c0_i32 = arith.constant 0 : i32
    %c0_i32_0 = arith.constant 0 : i32
    %c0_i32_1 = arith.constant 0 : i32
    return %c0_i32, %c0_i32_0 : i32, i32
  }
  func.func @transform_6(%arg0: i32) -> (i32, i32) {
    %c0_i32 = arith.constant 0 : i32
    %c0_i32_0 = arith.constant 0 : i32
    %c0_i32_1 = arith.constant 0 : i32
    return %c0_i32, %c0_i32_0 : i32, i32
  }
  func.func @transform_7(%arg0: i32) -> (i32, i32) {
    %c0_i32 = arith.constant 0 : i32
    %c0_i32_0 = arith.constant 0 : i32
    %c0_i32_1 = arith.constant 0 : i32
    return %c0_i32, %c0_i32_0 : i32, i32
  }
  func.func @transform_8(%arg0: i32) -> (i32, i32) {
    %c0_i32 = arith.constant 0 : i32
    %c0_i32_0 = arith.constant 0 : i32
    %c0_i32_1 = arith.constant 0 : i32
    return %c0_i32, %c0_i32_0 : i32, i32
  }
  func.func @transform_9(%arg0: i32) -> (i32, i32) {
    %c0_i32 = arith.constant 0 : i32
    %c0_i32_0 = arith.constant 0 : i32
    %c0_i32_1 = arith.constant 0 : i32
    return %c0_i32, %c0_i32_0 : i32, i32
  }
  func.func @transform_10(%arg0: i32) -> (i32, i32) {
    %c0_i32 = arith.constant 0 : i32
    %c0_i32_0 = arith.constant 0 : i32
    %c0_i32_1 = arith.constant 0 : i32
    return %c0_i32, %c0_i32_0 : i32, i32
  }
  func.func @transform_11(%arg0: i32) -> (i32, i32) {
    %c0_i32 = arith.constant 0 : i32
    %c0_i32_0 = arith.constant 0 : i32
    %c0_i32_1 = arith.constant 0 : i32
    return %c0_i32, %c0_i32_0 : i32, i32
  }
  func.func @transform_12(%arg0: i32) -> (i32, i32) {
    %c0_i32 = arith.constant 0 : i32
    %c0_i32_0 = arith.constant 0 : i32
    %c0_i32_1 = arith.constant 0 : i32
    return %c0_i32, %c0_i32_0 : i32, i32
  }
  func.func @transform_13(%arg0: i32) -> (i32, i32) {
    %c0_i32 = arith.constant 0 : i32
    %c0_i32_0 = arith.constant 0 : i32
    %c0_i32_1 = arith.constant 0 : i32
    return %c0_i32, %c0_i32_0 : i32, i32
  }
  func.func @transform_14(%arg0: i32) -> (i32, i32) {
    %c0_i32 = arith.constant 0 : i32
    %c0_i32_0 = arith.constant 0 : i32
    %c0_i32_1 = arith.constant 0 : i32
    return %c0_i32, %c0_i32_0 : i32, i32
  }
  func.func @transform_15(%arg0: i32) -> (i32, i32) {
    %c0_i32 = arith.constant 0 : i32
    %c0_i32_0 = arith.constant 0 : i32
    %c0_i32_1 = arith.constant 0 : i32
    return %c0_i32, %c0_i32_0 : i32, i32
  }
  func.func @transform_16(%arg0: i32) -> (i32, i32) {
    %c0_i32 = arith.constant 0 : i32
    %c0_i32_0 = arith.constant 0 : i32
    %c0_i32_1 = arith.constant 0 : i32
    return %c0_i32, %c0_i32_0 : i32, i32
  }
  func.func @transform_17(%arg0: i32) -> (i32, i32) {
    %c0_i32 = arith.constant 0 : i32
    %c0_i32_0 = arith.constant 0 : i32
    %c0_i32_1 = arith.constant 0 : i32
    return %c0_i32, %c0_i32_0 : i32, i32
  }
  func.func @transform_18(%arg0: i32) -> (i32, i32) {
    %c0_i32 = arith.constant 0 : i32
    %c0_i32_0 = arith.constant 0 : i32
    %c0_i32_1 = arith.constant 0 : i32
    return %c0_i32, %c0_i32_0 : i32, i32
  }
  func.func @transform_19(%arg0: i32) -> (i32, i32) {
    %c0_i32 = arith.constant 0 : i32
    %c0_i32_0 = arith.constant 0 : i32
    return %arg0, %c0_i32 : i32, i32
  }
  func.func @transform_20(%arg0: i32) -> (i32, i32) {
    %c0_i32 = arith.constant 0 : i32
    %c0_i32_0 = arith.constant 0 : i32
    return %arg0, %c0_i32 : i32, i32
  }
  func.func @transform_21(%arg0: i32) -> (i32, i32) {
    %c0_i32 = arith.constant 0 : i32
    %c0_i32_0 = arith.constant 0 : i32
    return %arg0, %c0_i32 : i32, i32
  }
  func.func @transform_22(%arg0: i32) -> (i32, i32) {
    %c0_i32 = arith.constant 0 : i32
    %c0_i32_0 = arith.constant 0 : i32
    return %arg0, %c0_i32 : i32, i32
  }
  func.func @transform_23(%arg0: i32) -> (i32, i32) {
    %c0_i32 = arith.constant 0 : i32
    %c0_i32_0 = arith.constant 0 : i32
    return %arg0, %c0_i32 : i32, i32
  }
}

module attributes {stable_mosaic.version = 11 : i64} {
  func.func @_uptrans_attn_kernel(%arg0: i32, %arg1: i32, %arg2: memref<1x16x32xbf16, #tpu.memory_space<vmem>>, %arg3: memref<1x4x16x32xbf16, #tpu.memory_space<vmem>>, %arg4: memref<1x4x16x32xbf16, #tpu.memory_space<vmem>>, %arg5: memref<1x4x16x32xbf16, #tpu.memory_space<vmem>>, %arg6: memref<1x4x16x3xf32, #tpu.memory_space<vmem>>, %arg7: memref<1x16x3xf32, #tpu.memory_space<vmem>>, %arg8: memref<1x16x32xbf16, #tpu.memory_space<vmem>>, %arg9: memref<1x16x32xbf16, #tpu.memory_space<vmem>>, %arg10: memref<3x32xbf16, #tpu.memory_space<vmem>>, %arg11: memref<1x32xf32, #tpu.memory_space<vmem>>, %arg12: memref<32x32xbf16, #tpu.memory_space<vmem>>, %arg13: memref<1x32xf32, #tpu.memory_space<vmem>>, %arg14: memref<32x128xbf16, #tpu.memory_space<vmem>>, %arg15: memref<1x128xf32, #tpu.memory_space<vmem>>, %arg16: memref<128x32xbf16, #tpu.memory_space<vmem>>, %arg17: memref<1x32xf32, #tpu.memory_space<vmem>>, %arg18: memref<32x32xbf16, #tpu.memory_space<vmem>>, %arg19: memref<1x32xf32, #tpu.memory_space<vmem>>, %arg20: memref<1x16x32xbf16, #tpu.memory_space<vmem>>) attributes {dimension_semantics = [#tpu.dimension_semantics<parallel>, #tpu.dimension_semantics<parallel>], iteration_bounds = array<i64: 2, 1>, scalar_prefetch = 0 : i64, scratch_operands = 0 : i64, tpu.core_type = #tpu.core_type<tc>, window_params = [{transform_indices = @transform_0, window_bounds = array<i64: 1, 16, 32>}, {transform_indices = @transform_1, window_bounds = array<i64: 1, 4, 16, 32>}, {transform_indices = @transform_2, window_bounds = array<i64: 1, 4, 16, 32>}, {transform_indices = @transform_3, window_bounds = array<i64: 1, 4, 16, 32>}, {transform_indices = @transform_4, window_bounds = array<i64: 1, 4, 16, 3>}, {transform_indices = @transform_5, window_bounds = array<i64: 1, 16, 3>}, {transform_indices = @transform_6, window_bounds = array<i64: 1, 16, 32>}, {transform_indices = @transform_7, window_bounds = array<i64: 1, 16, 32>}, {pipeline_mode = #tpu.pipeline_mode<synchronous>, transform_indices = @transform_8, window_bounds = array<i64: 3, 32>}, {pipeline_mode = #tpu.pipeline_mode<synchronous>, transform_indices = @transform_9, window_bounds = array<i64: 1, 32>}, {pipeline_mode = #tpu.pipeline_mode<synchronous>, transform_indices = @transform_10, window_bounds = array<i64: 32, 32>}, {pipeline_mode = #tpu.pipeline_mode<synchronous>, transform_indices = @transform_11, window_bounds = array<i64: 1, 32>}, {pipeline_mode = #tpu.pipeline_mode<synchronous>, transform_indices = @transform_12, window_bounds = array<i64: 32, 128>}, {pipeline_mode = #tpu.pipeline_mode<synchronous>, transform_indices = @transform_13, window_bounds = array<i64: 1, 128>}, {pipeline_mode = #tpu.pipeline_mode<synchronous>, transform_indices = @transform_14, window_bounds = array<i64: 128, 32>}, {pipeline_mode = #tpu.pipeline_mode<synchronous>, transform_indices = @transform_15, window_bounds = array<i64: 1, 32>}, {pipeline_mode = #tpu.pipeline_mode<synchronous>, transform_indices = @transform_16, window_bounds = array<i64: 32, 32>}, {pipeline_mode = #tpu.pipeline_mode<synchronous>, transform_indices = @transform_17, window_bounds = array<i64: 1, 32>}, {transform_indices = @transform_18, window_bounds = array<i64: 1, 16, 32>}]} {
    %c0 = arith.constant 0 : index
    %c0_0 = arith.constant 0 : index
    %c0_1 = arith.constant 0 : index
    %0 = vector.load %arg2[%c0, %c0_0, %c0_1] : memref<1x16x32xbf16, #tpu.memory_space<vmem>>, vector<1x16x32xbf16>
    %1 = vector.shape_cast %0 : vector<1x16x32xbf16> to vector<16x32xbf16>
    %2 = arith.extf %1 : vector<16x32xbf16> to vector<16x32xf32>
    %c0_2 = arith.constant 0 : index
    %c0_3 = arith.constant 0 : index
    %c0_4 = arith.constant 0 : index
    %3 = vector.load %arg7[%c0_2, %c0_3, %c0_4] : memref<1x16x3xf32, #tpu.memory_space<vmem>>, vector<1x16x3xf32>
    %4 = vector.shape_cast %3 : vector<1x16x3xf32> to vector<16x3xf32>
    %c0_5 = arith.constant 0 : index
    %c0_6 = arith.constant 0 : index
    %c0_7 = arith.constant 0 : index
    %5 = vector.load %arg8[%c0_5, %c0_6, %c0_7] : memref<1x16x32xbf16, #tpu.memory_space<vmem>>, vector<1x16x32xbf16>
    %6 = vector.shape_cast %5 : vector<1x16x32xbf16> to vector<16x32xbf16>
    %7 = arith.extf %6 : vector<16x32xbf16> to vector<16x32xf32>
    %c0_8 = arith.constant 0 : index
    %c0_9 = arith.constant 0 : index
    %c0_10 = arith.constant 0 : index
    %8 = vector.load %arg9[%c0_8, %c0_9, %c0_10] : memref<1x16x32xbf16, #tpu.memory_space<vmem>>, vector<1x16x32xbf16>
    %9 = vector.shape_cast %8 : vector<1x16x32xbf16> to vector<16x32xbf16>
    %10 = arith.extf %9 : vector<16x32xbf16> to vector<16x32xf32>
    %c0_11 = arith.constant 0 : index
    %c0_12 = arith.constant 0 : index
    %c0_13 = arith.constant 0 : index
    %c0_14 = arith.constant 0 : index
    %11 = vector.load %arg3[%c0_11, %c0_12, %c0_13, %c0_14] : memref<1x4x16x32xbf16, #tpu.memory_space<vmem>>, vector<1x4x16x32xbf16>
    %12 = vector.shape_cast %11 : vector<1x4x16x32xbf16> to vector<4x16x32xbf16>
    %13 = arith.extf %12 : vector<4x16x32xbf16> to vector<4x16x32xf32>
    %c0_15 = arith.constant 0 : index
    %c0_16 = arith.constant 0 : index
    %c0_17 = arith.constant 0 : index
    %c0_18 = arith.constant 0 : index
    %14 = vector.load %arg4[%c0_15, %c0_16, %c0_17, %c0_18] : memref<1x4x16x32xbf16, #tpu.memory_space<vmem>>, vector<1x4x16x32xbf16>
    %15 = vector.shape_cast %14 : vector<1x4x16x32xbf16> to vector<4x16x32xbf16>
    %16 = arith.extf %15 : vector<4x16x32xbf16> to vector<4x16x32xf32>
    %c0_19 = arith.constant 0 : index
    %c0_20 = arith.constant 0 : index
    %c0_21 = arith.constant 0 : index
    %c0_22 = arith.constant 0 : index
    %17 = vector.load %arg5[%c0_19, %c0_20, %c0_21, %c0_22] : memref<1x4x16x32xbf16, #tpu.memory_space<vmem>>, vector<1x4x16x32xbf16>
    %18 = vector.shape_cast %17 : vector<1x4x16x32xbf16> to vector<4x16x32xbf16>
    %19 = arith.extf %18 : vector<4x16x32xbf16> to vector<4x16x32xf32>
    %c0_23 = arith.constant 0 : index
    %c0_24 = arith.constant 0 : index
    %c0_25 = arith.constant 0 : index
    %c0_26 = arith.constant 0 : index
    %20 = vector.load %arg6[%c0_23, %c0_24, %c0_25, %c0_26] : memref<1x4x16x3xf32, #tpu.memory_space<vmem>>, vector<1x4x16x3xf32>
    %21 = vector.shape_cast %20 : vector<1x4x16x3xf32> to vector<4x16x3xf32>
    %22 = vector.shape_cast %4 : vector<16x3xf32> to vector<1x16x3xf32>
    %23 = vector.broadcast %22 : vector<1x16x3xf32> to vector<4x16x3xf32>
    %24 = arith.subf %23, %21 : vector<4x16x3xf32>
    %25 = vector.shape_cast %24 : vector<4x16x3xf32> to vector<64x3xf32>
    %26 = vector.shape_cast %7 : vector<16x32xf32> to vector<1x16x32xf32>
    %27 = vector.broadcast %26 : vector<1x16x32xf32> to vector<4x16x32xf32>
    %28 = arith.subf %27, %19 : vector<4x16x32xf32>
    %29 = vector.shape_cast %28 : vector<4x16x32xf32> to vector<64x32xf32>
    %c0_27 = arith.constant 0 : index
    %c0_28 = arith.constant 0 : index
    %30 = vector.load %arg10[%c0_27, %c0_28] : memref<3x32xbf16, #tpu.memory_space<vmem>>, vector<3x32xbf16>
    %31 = arith.truncf %25 : vector<64x3xf32> to vector<64x3xbf16>
    %cst = arith.constant dense<0.000000e+00> : vector<64x32xf32>
    %32 = tpu.matmul %31, %30, %cst {dimension_numbers = #tpu.dot_dimension_numbers<[1], [0], [0], [1], [0, 0, 1, 1], [], []>} : vector<64x3xbf16>, vector<3x32xbf16>, vector<64x32xf32> -> vector<64x32xf32>
    %c0_29 = arith.constant 0 : index
    %c0_30 = arith.constant 0 : index
    %33 = vector.load %arg11[%c0_29, %c0_30] : memref<1x32xf32, #tpu.memory_space<vmem>>, vector<1x32xf32>
    %34 = vector.broadcast %33 : vector<1x32xf32> to vector<64x32xf32>
    %35 = arith.addf %32, %34 : vector<64x32xf32>
    %cst_31 = arith.constant 0.000000e+00 : f32
    %36 = vector.broadcast %cst_31 : f32 to vector<64x32xf32>
    %37 = arith.maximumf %35, %36 : vector<64x32xf32>
    %c0_32 = arith.constant 0 : index
    %c0_33 = arith.constant 0 : index
    %38 = vector.load %arg12[%c0_32, %c0_33] : memref<32x32xbf16, #tpu.memory_space<vmem>>, vector<32x32xbf16>
    %39 = arith.truncf %37 : vector<64x32xf32> to vector<64x32xbf16>
    %cst_34 = arith.constant dense<0.000000e+00> : vector<64x32xf32>
    %40 = tpu.matmul %39, %38, %cst_34 {dimension_numbers = #tpu.dot_dimension_numbers<[1], [0], [0], [1], [0, 0, 1, 1], [], []>} : vector<64x32xbf16>, vector<32x32xbf16>, vector<64x32xf32> -> vector<64x32xf32>
    %c0_35 = arith.constant 0 : index
    %c0_36 = arith.constant 0 : index
    %41 = vector.load %arg13[%c0_35, %c0_36] : memref<1x32xf32, #tpu.memory_space<vmem>>, vector<1x32xf32>
    %42 = vector.broadcast %41 : vector<1x32xf32> to vector<64x32xf32>
    %43 = arith.addf %40, %42 : vector<64x32xf32>
    %44 = arith.addf %43, %29 : vector<64x32xf32>
    %45 = vector.shape_cast %2 : vector<16x32xf32> to vector<1x16x32xf32>
    %46 = vector.broadcast %45 : vector<1x16x32xf32> to vector<4x16x32xf32>
    %47 = arith.subf %46, %13 : vector<4x16x32xf32>
    %48 = vector.shape_cast %47 : vector<4x16x32xf32> to vector<64x32xf32>
    %49 = arith.addf %48, %44 : vector<64x32xf32>
    %c0_37 = arith.constant 0 : index
    %c0_38 = arith.constant 0 : index
    %50 = vector.load %arg14[%c0_37, %c0_38] : memref<32x128xbf16, #tpu.memory_space<vmem>>, vector<32x128xbf16>
    %51 = arith.truncf %49 : vector<64x32xf32> to vector<64x32xbf16>
    %cst_39 = arith.constant dense<0.000000e+00> : vector<64x128xf32>
    %52 = tpu.matmul %51, %50, %cst_39 {dimension_numbers = #tpu.dot_dimension_numbers<[1], [0], [0], [1], [0, 0, 1, 1], [], []>} : vector<64x32xbf16>, vector<32x128xbf16>, vector<64x128xf32> -> vector<64x128xf32>
    %c0_40 = arith.constant 0 : index
    %c0_41 = arith.constant 0 : index
    %53 = vector.load %arg15[%c0_40, %c0_41] : memref<1x128xf32, #tpu.memory_space<vmem>>, vector<1x128xf32>
    %54 = vector.broadcast %53 : vector<1x128xf32> to vector<64x128xf32>
    %55 = arith.addf %52, %54 : vector<64x128xf32>
    %cst_42 = arith.constant 0.000000e+00 : f32
    %56 = vector.broadcast %cst_42 : f32 to vector<64x128xf32>
    %57 = arith.maximumf %55, %56 : vector<64x128xf32>
    %c0_43 = arith.constant 0 : index
    %c0_44 = arith.constant 0 : index
    %58 = vector.load %arg16[%c0_43, %c0_44] : memref<128x32xbf16, #tpu.memory_space<vmem>>, vector<128x32xbf16>
    %59 = arith.truncf %57 : vector<64x128xf32> to vector<64x128xbf16>
    %cst_45 = arith.constant dense<0.000000e+00> : vector<64x32xf32>
    %60 = tpu.matmul %59, %58, %cst_45 {dimension_numbers = #tpu.dot_dimension_numbers<[1], [0], [0], [1], [0, 0, 1, 1], [], []>} : vector<64x128xbf16>, vector<128x32xbf16>, vector<64x32xf32> -> vector<64x32xf32>
    %c0_46 = arith.constant 0 : index
    %c0_47 = arith.constant 0 : index
    %61 = vector.load %arg17[%c0_46, %c0_47] : memref<1x32xf32, #tpu.memory_space<vmem>>, vector<1x32xf32>
    %62 = vector.broadcast %61 : vector<1x32xf32> to vector<64x32xf32>
    %63 = arith.addf %60, %62 : vector<64x32xf32>
    %64 = vector.shape_cast %63 : vector<64x32xf32> to vector<4x16x32xf32>
    %65 = vector.shape_cast %16 : vector<4x16x32xf32> to vector<64x32xf32>
    %66 = arith.addf %65, %44 : vector<64x32xf32>
    %67 = vector.shape_cast %66 : vector<64x32xf32> to vector<4x16x32xf32>
    %cst_48 = arith.constant dense<0xFF800000> : vector<16x32xf32>
    %68 = vector.multi_reduction <maximumf>, %64, %cst_48 [0] : vector<4x16x32xf32> to vector<16x32xf32>
    %69 = vector.shape_cast %68 : vector<16x32xf32> to vector<1x16x32xf32>
    %70 = vector.broadcast %69 : vector<1x16x32xf32> to vector<4x16x32xf32>
    %71 = arith.subf %64, %70 : vector<4x16x32xf32>
    %72 = math.exp %71 : vector<4x16x32xf32>
    %cst_49 = arith.constant dense<0.000000e+00> : vector<16x32xf32>
    %73 = vector.multi_reduction <add>, %72, %cst_49 [0] : vector<4x16x32xf32> to vector<16x32xf32>
    %74 = tpu.reciprocal %73 {approx = true} : vector<16x32xf32> -> vector<16x32xf32>
    %75 = arith.mulf %72, %67 : vector<4x16x32xf32>
    %cst_50 = arith.constant dense<0.000000e+00> : vector<16x32xf32>
    %76 = vector.multi_reduction <add>, %75, %cst_50 [0] : vector<4x16x32xf32> to vector<16x32xf32>
    %77 = arith.mulf %76, %74 : vector<16x32xf32>
    %c0_51 = arith.constant 0 : index
    %c0_52 = arith.constant 0 : index
    %78 = vector.load %arg18[%c0_51, %c0_52] : memref<32x32xbf16, #tpu.memory_space<vmem>>, vector<32x32xbf16>
    %79 = arith.truncf %77 : vector<16x32xf32> to vector<16x32xbf16>
    %cst_53 = arith.constant dense<0.000000e+00> : vector<16x32xf32>
    %80 = tpu.matmul %79, %78, %cst_53 {dimension_numbers = #tpu.dot_dimension_numbers<[1], [0], [0], [1], [0, 0, 1, 1], [], []>} : vector<16x32xbf16>, vector<32x32xbf16>, vector<16x32xf32> -> vector<16x32xf32>
    %c0_54 = arith.constant 0 : index
    %c0_55 = arith.constant 0 : index
    %81 = vector.load %arg19[%c0_54, %c0_55] : memref<1x32xf32, #tpu.memory_space<vmem>>, vector<1x32xf32>
    %82 = vector.broadcast %81 : vector<1x32xf32> to vector<16x32xf32>
    %83 = arith.addf %80, %82 : vector<16x32xf32>
    %84 = arith.addf %83, %10 : vector<16x32xf32>
    %85 = arith.truncf %84 : vector<16x32xf32> to vector<16x32xbf16>
    %c0_56 = arith.constant 0 : index
    %c0_57 = arith.constant 0 : index
    %c0_58 = arith.constant 0 : index
    %86 = vector.load %arg20[%c0_56, %c0_57, %c0_58] : memref<1x16x32xbf16, #tpu.memory_space<vmem>>, vector<1x16x32xbf16>
    %87 = vector.shape_cast %86 : vector<1x16x32xbf16> to vector<16x32xbf16>
    %88 = vector.shape_cast %85 : vector<16x32xbf16> to vector<1x16x32xbf16>
    tpu.vector_store %arg20[%c0_56, %c0_57, %c0_58], %88 {strides = array<i32>} : memref<1x16x32xbf16, #tpu.memory_space<vmem>>, vector<1x16x32xbf16>,
    return
  }
  func.func @transform_0(%arg0: i32, %arg1: i32) -> (i32, i32, i32) {
    %c0_i32 = arith.constant 0 : i32
    %c0_i32_0 = arith.constant 0 : i32
    return %arg0, %arg1, %c0_i32 : i32, i32, i32
  }
  func.func @transform_1(%arg0: i32, %arg1: i32) -> (i32, i32, i32, i32) {
    %c0_i32 = arith.constant 0 : i32
    %c0_i32_0 = arith.constant 0 : i32
    %c0_i32_1 = arith.constant 0 : i32
    return %arg0, %c0_i32, %arg1, %c0_i32_0 : i32, i32, i32, i32
  }
  func.func @transform_2(%arg0: i32, %arg1: i32) -> (i32, i32, i32, i32) {
    %c0_i32 = arith.constant 0 : i32
    %c0_i32_0 = arith.constant 0 : i32
    %c0_i32_1 = arith.constant 0 : i32
    return %arg0, %c0_i32, %arg1, %c0_i32_0 : i32, i32, i32, i32
  }
  func.func @transform_3(%arg0: i32, %arg1: i32) -> (i32, i32, i32, i32) {
    %c0_i32 = arith.constant 0 : i32
    %c0_i32_0 = arith.constant 0 : i32
    %c0_i32_1 = arith.constant 0 : i32
    return %arg0, %c0_i32, %arg1, %c0_i32_0 : i32, i32, i32, i32
  }
  func.func @transform_4(%arg0: i32, %arg1: i32) -> (i32, i32, i32, i32) {
    %c0_i32 = arith.constant 0 : i32
    %c0_i32_0 = arith.constant 0 : i32
    %c0_i32_1 = arith.constant 0 : i32
    return %arg0, %c0_i32, %arg1, %c0_i32_0 : i32, i32, i32, i32
  }
  func.func @transform_5(%arg0: i32, %arg1: i32) -> (i32, i32, i32) {
    %c0_i32 = arith.constant 0 : i32
    %c0_i32_0 = arith.constant 0 : i32
    return %arg0, %arg1, %c0_i32 : i32, i32, i32
  }
  func.func @transform_6(%arg0: i32, %arg1: i32) -> (i32, i32, i32) {
    %c0_i32 = arith.constant 0 : i32
    %c0_i32_0 = arith.constant 0 : i32
    return %arg0, %arg1, %c0_i32 : i32, i32, i32
  }
  func.func @transform_7(%arg0: i32, %arg1: i32) -> (i32, i32, i32) {
    %c0_i32 = arith.constant 0 : i32
    %c0_i32_0 = arith.constant 0 : i32
    return %arg0, %arg1, %c0_i32 : i32, i32, i32
  }
  func.func @transform_8(%arg0: i32, %arg1: i32) -> (i32, i32) {
    %c0_i32 = arith.constant 0 : i32
    %c0_i32_0 = arith.constant 0 : i32
    %c0_i32_1 = arith.constant 0 : i32
    return %c0_i32, %c0_i32_0 : i32, i32
  }
  func.func @transform_9(%arg0: i32, %arg1: i32) -> (i32, i32) {
    %c0_i32 = arith.constant 0 : i32
    %c0_i32_0 = arith.constant 0 : i32
    %c0_i32_1 = arith.constant 0 : i32
    return %c0_i32, %c0_i32_0 : i32, i32
  }
  func.func @transform_10(%arg0: i32, %arg1: i32) -> (i32, i32) {
    %c0_i32 = arith.constant 0 : i32
    %c0_i32_0 = arith.constant 0 : i32
    %c0_i32_1 = arith.constant 0 : i32
    return %c0_i32, %c0_i32_0 : i32, i32
  }
  func.func @transform_11(%arg0: i32, %arg1: i32) -> (i32, i32) {
    %c0_i32 = arith.constant 0 : i32
    %c0_i32_0 = arith.constant 0 : i32
    %c0_i32_1 = arith.constant 0 : i32
    return %c0_i32, %c0_i32_0 : i32, i32
  }
  func.func @transform_12(%arg0: i32, %arg1: i32) -> (i32, i32) {
    %c0_i32 = arith.constant 0 : i32
    %c0_i32_0 = arith.constant 0 : i32
    %c0_i32_1 = arith.constant 0 : i32
    return %c0_i32, %c0_i32_0 : i32, i32
  }
  func.func @transform_13(%arg0: i32, %arg1: i32) -> (i32, i32) {
    %c0_i32 = arith.constant 0 : i32
    %c0_i32_0 = arith.constant 0 : i32
    %c0_i32_1 = arith.constant 0 : i32
    return %c0_i32, %c0_i32_0 : i32, i32
  }
  func.func @transform_14(%arg0: i32, %arg1: i32) -> (i32, i32) {
    %c0_i32 = arith.constant 0 : i32
    %c0_i32_0 = arith.constant 0 : i32
    %c0_i32_1 = arith.constant 0 : i32
    return %c0_i32, %c0_i32_0 : i32, i32
  }
  func.func @transform_15(%arg0: i32, %arg1: i32) -> (i32, i32) {
    %c0_i32 = arith.constant 0 : i32
    %c0_i32_0 = arith.constant 0 : i32
    %c0_i32_1 = arith.constant 0 : i32
    return %c0_i32, %c0_i32_0 : i32, i32
  }
  func.func @transform_16(%arg0: i32, %arg1: i32) -> (i32, i32) {
    %c0_i32 = arith.constant 0 : i32
    %c0_i32_0 = arith.constant 0 : i32
    %c0_i32_1 = arith.constant 0 : i32
    return %c0_i32, %c0_i32_0 : i32, i32
  }
  func.func @transform_17(%arg0: i32, %arg1: i32) -> (i32, i32) {
    %c0_i32 = arith.constant 0 : i32
    %c0_i32_0 = arith.constant 0 : i32
    %c0_i32_1 = arith.constant 0 : i32
    return %c0_i32, %c0_i32_0 : i32, i32
  }
  func.func @transform_18(%arg0: i32, %arg1: i32) -> (i32, i32, i32) {
    %c0_i32 = arith.constant 0 : i32
    %c0_i32_0 = arith.constant 0 : i32
    return %arg0, %arg1, %c0_i32 : i32, i32, i32
  }
}

module attributes {stable_mosaic.version = 11 : i64} {
  func.func @_uptrans_attn_kernel(%arg0: i32, %arg1: i32, %arg2: memref<1x16x32xbf16, #tpu.memory_space<vmem>>, %arg3: memref<1x4x16x32xbf16, #tpu.memory_space<vmem>>, %arg4: memref<1x4x16x32xbf16, #tpu.memory_space<vmem>>, %arg5: memref<1x4x16x32xbf16, #tpu.memory_space<vmem>>, %arg6: memref<1x4x16x3xf32, #tpu.memory_space<vmem>>, %arg7: memref<1x16x3xf32, #tpu.memory_space<vmem>>, %arg8: memref<1x16x32xbf16, #tpu.memory_space<vmem>>, %arg9: memref<1x16x32xbf16, #tpu.memory_space<vmem>>, %arg10: memref<3x32xbf16, #tpu.memory_space<vmem>>, %arg11: memref<1x32xf32, #tpu.memory_space<vmem>>, %arg12: memref<32x32xbf16, #tpu.memory_space<vmem>>, %arg13: memref<1x32xf32, #tpu.memory_space<vmem>>, %arg14: memref<32x128xbf16, #tpu.memory_space<vmem>>, %arg15: memref<1x128xf32, #tpu.memory_space<vmem>>, %arg16: memref<128x64xbf16, #tpu.memory_space<vmem>>, %arg17: memref<1x64xf32, #tpu.memory_space<vmem>>, %arg18: memref<32x32xbf16, #tpu.memory_space<vmem>>, %arg19: memref<1x32xf32, #tpu.memory_space<vmem>>, %arg20: memref<1x16x64xbf16, #tpu.memory_space<vmem>>) attributes {dimension_semantics = [#tpu.dimension_semantics<parallel>, #tpu.dimension_semantics<parallel>], iteration_bounds = array<i64: 2, 1>, scalar_prefetch = 0 : i64, scratch_operands = 0 : i64, tpu.core_type = #tpu.core_type<tc>, window_params = [{transform_indices = @transform_0, window_bounds = array<i64: 1, 16, 32>}, {transform_indices = @transform_1, window_bounds = array<i64: 1, 4, 16, 32>}, {transform_indices = @transform_2, window_bounds = array<i64: 1, 4, 16, 32>}, {transform_indices = @transform_3, window_bounds = array<i64: 1, 4, 16, 32>}, {transform_indices = @transform_4, window_bounds = array<i64: 1, 4, 16, 3>}, {transform_indices = @transform_5, window_bounds = array<i64: 1, 16, 3>}, {transform_indices = @transform_6, window_bounds = array<i64: 1, 16, 32>}, {transform_indices = @transform_7, window_bounds = array<i64: 1, 16, 32>}, {pipeline_mode = #tpu.pipeline_mode<synchronous>, transform_indices = @transform_8, window_bounds = array<i64: 3, 32>}, {pipeline_mode = #tpu.pipeline_mode<synchronous>, transform_indices = @transform_9, window_bounds = array<i64: 1, 32>}, {pipeline_mode = #tpu.pipeline_mode<synchronous>, transform_indices = @transform_10, window_bounds = array<i64: 32, 32>}, {pipeline_mode = #tpu.pipeline_mode<synchronous>, transform_indices = @transform_11, window_bounds = array<i64: 1, 32>}, {pipeline_mode = #tpu.pipeline_mode<synchronous>, transform_indices = @transform_12, window_bounds = array<i64: 32, 128>}, {pipeline_mode = #tpu.pipeline_mode<synchronous>, transform_indices = @transform_13, window_bounds = array<i64: 1, 128>}, {pipeline_mode = #tpu.pipeline_mode<synchronous>, transform_indices = @transform_14, window_bounds = array<i64: 128, 64>}, {pipeline_mode = #tpu.pipeline_mode<synchronous>, transform_indices = @transform_15, window_bounds = array<i64: 1, 64>}, {pipeline_mode = #tpu.pipeline_mode<synchronous>, transform_indices = @transform_16, window_bounds = array<i64: 32, 32>}, {pipeline_mode = #tpu.pipeline_mode<synchronous>, transform_indices = @transform_17, window_bounds = array<i64: 1, 32>}, {transform_indices = @transform_18, window_bounds = array<i64: 1, 16, 64>}]} {
    %c0 = arith.constant 0 : index
    %c0_0 = arith.constant 0 : index
    %c0_1 = arith.constant 0 : index
    %0 = vector.load %arg2[%c0, %c0_0, %c0_1] : memref<1x16x32xbf16, #tpu.memory_space<vmem>>, vector<1x16x32xbf16>
    %1 = vector.shape_cast %0 : vector<1x16x32xbf16> to vector<16x32xbf16>
    %2 = arith.extf %1 : vector<16x32xbf16> to vector<16x32xf32>
    %c0_2 = arith.constant 0 : index
    %c0_3 = arith.constant 0 : index
    %c0_4 = arith.constant 0 : index
    %3 = vector.load %arg7[%c0_2, %c0_3, %c0_4] : memref<1x16x3xf32, #tpu.memory_space<vmem>>, vector<1x16x3xf32>
    %4 = vector.shape_cast %3 : vector<1x16x3xf32> to vector<16x3xf32>
    %c0_5 = arith.constant 0 : index
    %c0_6 = arith.constant 0 : index
    %c0_7 = arith.constant 0 : index
    %5 = vector.load %arg8[%c0_5, %c0_6, %c0_7] : memref<1x16x32xbf16, #tpu.memory_space<vmem>>, vector<1x16x32xbf16>
    %6 = vector.shape_cast %5 : vector<1x16x32xbf16> to vector<16x32xbf16>
    %7 = arith.extf %6 : vector<16x32xbf16> to vector<16x32xf32>
    %c0_8 = arith.constant 0 : index
    %c0_9 = arith.constant 0 : index
    %c0_10 = arith.constant 0 : index
    %8 = vector.load %arg9[%c0_8, %c0_9, %c0_10] : memref<1x16x32xbf16, #tpu.memory_space<vmem>>, vector<1x16x32xbf16>
    %9 = vector.shape_cast %8 : vector<1x16x32xbf16> to vector<16x32xbf16>
    %10 = arith.extf %9 : vector<16x32xbf16> to vector<16x32xf32>
    %c0_11 = arith.constant 0 : index
    %c0_12 = arith.constant 0 : index
    %c0_13 = arith.constant 0 : index
    %c0_14 = arith.constant 0 : index
    %11 = vector.load %arg3[%c0_11, %c0_12, %c0_13, %c0_14] : memref<1x4x16x32xbf16, #tpu.memory_space<vmem>>, vector<1x4x16x32xbf16>
    %12 = vector.shape_cast %11 : vector<1x4x16x32xbf16> to vector<4x16x32xbf16>
    %13 = arith.extf %12 : vector<4x16x32xbf16> to vector<4x16x32xf32>
    %c0_15 = arith.constant 0 : index
    %c0_16 = arith.constant 0 : index
    %c0_17 = arith.constant 0 : index
    %c0_18 = arith.constant 0 : index
    %14 = vector.load %arg4[%c0_15, %c0_16, %c0_17, %c0_18] : memref<1x4x16x32xbf16, #tpu.memory_space<vmem>>, vector<1x4x16x32xbf16>
    %15 = vector.shape_cast %14 : vector<1x4x16x32xbf16> to vector<4x16x32xbf16>
    %16 = arith.extf %15 : vector<4x16x32xbf16> to vector<4x16x32xf32>
    %c0_19 = arith.constant 0 : index
    %c0_20 = arith.constant 0 : index
    %c0_21 = arith.constant 0 : index
    %c0_22 = arith.constant 0 : index
    %17 = vector.load %arg5[%c0_19, %c0_20, %c0_21, %c0_22] : memref<1x4x16x32xbf16, #tpu.memory_space<vmem>>, vector<1x4x16x32xbf16>
    %18 = vector.shape_cast %17 : vector<1x4x16x32xbf16> to vector<4x16x32xbf16>
    %19 = arith.extf %18 : vector<4x16x32xbf16> to vector<4x16x32xf32>
    %c0_23 = arith.constant 0 : index
    %c0_24 = arith.constant 0 : index
    %c0_25 = arith.constant 0 : index
    %c0_26 = arith.constant 0 : index
    %20 = vector.load %arg6[%c0_23, %c0_24, %c0_25, %c0_26] : memref<1x4x16x3xf32, #tpu.memory_space<vmem>>, vector<1x4x16x3xf32>
    %21 = vector.shape_cast %20 : vector<1x4x16x3xf32> to vector<4x16x3xf32>
    %22 = vector.shape_cast %4 : vector<16x3xf32> to vector<1x16x3xf32>
    %23 = vector.broadcast %22 : vector<1x16x3xf32> to vector<4x16x3xf32>
    %24 = arith.subf %23, %21 : vector<4x16x3xf32>
    %25 = vector.shape_cast %24 : vector<4x16x3xf32> to vector<64x3xf32>
    %26 = vector.shape_cast %7 : vector<16x32xf32> to vector<1x16x32xf32>
    %27 = vector.broadcast %26 : vector<1x16x32xf32> to vector<4x16x32xf32>
    %28 = arith.subf %27, %19 : vector<4x16x32xf32>
    %29 = vector.shape_cast %28 : vector<4x16x32xf32> to vector<64x32xf32>
    %c0_27 = arith.constant 0 : index
    %c0_28 = arith.constant 0 : index
    %30 = vector.load %arg10[%c0_27, %c0_28] : memref<3x32xbf16, #tpu.memory_space<vmem>>, vector<3x32xbf16>
    %31 = arith.truncf %25 : vector<64x3xf32> to vector<64x3xbf16>
    %cst = arith.constant dense<0.000000e+00> : vector<64x32xf32>
    %32 = tpu.matmul %31, %30, %cst {dimension_numbers = #tpu.dot_dimension_numbers<[1], [0], [0], [1], [0, 0, 1, 1], [], []>} : vector<64x3xbf16>, vector<3x32xbf16>, vector<64x32xf32> -> vector<64x32xf32>
    %c0_29 = arith.constant 0 : index
    %c0_30 = arith.constant 0 : index
    %33 = vector.load %arg11[%c0_29, %c0_30] : memref<1x32xf32, #tpu.memory_space<vmem>>, vector<1x32xf32>
    %34 = vector.broadcast %33 : vector<1x32xf32> to vector<64x32xf32>
    %35 = arith.addf %32, %34 : vector<64x32xf32>
    %cst_31 = arith.constant 0.000000e+00 : f32
    %36 = vector.broadcast %cst_31 : f32 to vector<64x32xf32>
    %37 = arith.maximumf %35, %36 : vector<64x32xf32>
    %c0_32 = arith.constant 0 : index
    %c0_33 = arith.constant 0 : index
    %38 = vector.load %arg12[%c0_32, %c0_33] : memref<32x32xbf16, #tpu.memory_space<vmem>>, vector<32x32xbf16>
    %39 = arith.truncf %37 : vector<64x32xf32> to vector<64x32xbf16>
    %cst_34 = arith.constant dense<0.000000e+00> : vector<64x32xf32>
    %40 = tpu.matmul %39, %38, %cst_34 {dimension_numbers = #tpu.dot_dimension_numbers<[1], [0], [0], [1], [0, 0, 1, 1], [], []>} : vector<64x32xbf16>, vector<32x32xbf16>, vector<64x32xf32> -> vector<64x32xf32>
    %c0_35 = arith.constant 0 : index
    %c0_36 = arith.constant 0 : index
    %41 = vector.load %arg13[%c0_35, %c0_36] : memref<1x32xf32, #tpu.memory_space<vmem>>, vector<1x32xf32>
    %42 = vector.broadcast %41 : vector<1x32xf32> to vector<64x32xf32>
    %43 = arith.addf %40, %42 : vector<64x32xf32>
    %44 = arith.addf %43, %29 : vector<64x32xf32>
    %45 = vector.shape_cast %2 : vector<16x32xf32> to vector<1x16x32xf32>
    %46 = vector.broadcast %45 : vector<1x16x32xf32> to vector<4x16x32xf32>
    %47 = arith.subf %46, %13 : vector<4x16x32xf32>
    %48 = vector.shape_cast %47 : vector<4x16x32xf32> to vector<64x32xf32>
    %49 = arith.addf %48, %44 : vector<64x32xf32>
    %c0_37 = arith.constant 0 : index
    %c0_38 = arith.constant 0 : index
    %50 = vector.load %arg14[%c0_37, %c0_38] : memref<32x128xbf16, #tpu.memory_space<vmem>>, vector<32x128xbf16>
    %51 = arith.truncf %49 : vector<64x32xf32> to vector<64x32xbf16>
    %cst_39 = arith.constant dense<0.000000e+00> : vector<64x128xf32>
    %52 = tpu.matmul %51, %50, %cst_39 {dimension_numbers = #tpu.dot_dimension_numbers<[1], [0], [0], [1], [0, 0, 1, 1], [], []>} : vector<64x32xbf16>, vector<32x128xbf16>, vector<64x128xf32> -> vector<64x128xf32>
    %c0_40 = arith.constant 0 : index
    %c0_41 = arith.constant 0 : index
    %53 = vector.load %arg15[%c0_40, %c0_41] : memref<1x128xf32, #tpu.memory_space<vmem>>, vector<1x128xf32>
    %54 = vector.broadcast %53 : vector<1x128xf32> to vector<64x128xf32>
    %55 = arith.addf %52, %54 : vector<64x128xf32>
    %cst_42 = arith.constant 0.000000e+00 : f32
    %56 = vector.broadcast %cst_42 : f32 to vector<64x128xf32>
    %57 = arith.maximumf %55, %56 : vector<64x128xf32>
    %c0_43 = arith.constant 0 : index
    %c0_44 = arith.constant 0 : index
    %58 = vector.load %arg16[%c0_43, %c0_44] : memref<128x64xbf16, #tpu.memory_space<vmem>>, vector<128x64xbf16>
    %59 = arith.truncf %57 : vector<64x128xf32> to vector<64x128xbf16>
    %cst_45 = arith.constant dense<0.000000e+00> : vector<64x64xf32>
    %60 = tpu.matmul %59, %58, %cst_45 {dimension_numbers = #tpu.dot_dimension_numbers<[1], [0], [0], [1], [0, 0, 1, 1], [], []>} : vector<64x128xbf16>, vector<128x64xbf16>, vector<64x64xf32> -> vector<64x64xf32>
    %c0_46 = arith.constant 0 : index
    %c0_47 = arith.constant 0 : index
    %61 = vector.load %arg17[%c0_46, %c0_47] : memref<1x64xf32, #tpu.memory_space<vmem>>, vector<1x64xf32>
    %62 = vector.broadcast %61 : vector<1x64xf32> to vector<64x64xf32>
    %63 = arith.addf %60, %62 : vector<64x64xf32>
    %64 = vector.shape_cast %63 : vector<64x64xf32> to vector<4x16x64xf32>
    %65 = vector.shape_cast %16 : vector<4x16x32xf32> to vector<64x32xf32>
    %66 = arith.addf %65, %44 : vector<64x32xf32>
    %67 = vector.shape_cast %66 : vector<64x32xf32> to vector<4x16x32xf32>
    %cst_48 = arith.constant dense<0xFF800000> : vector<16x64xf32>
    %68 = vector.multi_reduction <maximumf>, %64, %cst_48 [0] : vector<4x16x64xf32> to vector<16x64xf32>
    %69 = vector.shape_cast %68 : vector<16x64xf32> to vector<1x16x64xf32>
    %70 = vector.broadcast %69 : vector<1x16x64xf32> to vector<4x16x64xf32>
    %71 = arith.subf %64, %70 : vector<4x16x64xf32>
    %72 = math.exp %71 : vector<4x16x64xf32>
    %cst_49 = arith.constant dense<0.000000e+00> : vector<16x64xf32>
    %73 = vector.multi_reduction <add>, %72, %cst_49 [0] : vector<4x16x64xf32> to vector<16x64xf32>
    %74 = tpu.reciprocal %73 {approx = true} : vector<16x64xf32> -> vector<16x64xf32>
    %75 = vector.extract_strided_slice %72 {offsets = [0, 0, 0], sizes = [4, 16, 32], strides = [1, 1, 1]} : vector<4x16x64xf32> to vector<4x16x32xf32>
    %76 = arith.mulf %75, %67 : vector<4x16x32xf32>
    %cst_50 = arith.constant dense<0.000000e+00> : vector<16x32xf32>
    %77 = vector.multi_reduction <add>, %76, %cst_50 [0] : vector<4x16x32xf32> to vector<16x32xf32>
    %78 = vector.extract_strided_slice %74 {offsets = [0, 0], sizes = [16, 32], strides = [1, 1]} : vector<16x64xf32> to vector<16x32xf32>
    %79 = arith.mulf %77, %78 : vector<16x32xf32>
    %c0_51 = arith.constant 0 : index
    %c0_52 = arith.constant 0 : index
    %80 = vector.load %arg18[%c0_51, %c0_52] : memref<32x32xbf16, #tpu.memory_space<vmem>>, vector<32x32xbf16>
    %81 = arith.truncf %79 : vector<16x32xf32> to vector<16x32xbf16>
    %cst_53 = arith.constant dense<0.000000e+00> : vector<16x32xf32>
    %82 = tpu.matmul %81, %80, %cst_53 {dimension_numbers = #tpu.dot_dimension_numbers<[1], [0], [0], [1], [0, 0, 1, 1], [], []>} : vector<16x32xbf16>, vector<32x32xbf16>, vector<16x32xf32> -> vector<16x32xf32>
    %c0_54 = arith.constant 0 : index
    %c0_55 = arith.constant 0 : index
    %83 = vector.load %arg19[%c0_54, %c0_55] : memref<1x32xf32, #tpu.memory_space<vmem>>, vector<1x32xf32>
    %84 = vector.broadcast %83 : vector<1x32xf32> to vector<16x32xf32>
    %85 = arith.addf %82, %84 : vector<16x32xf32>
    %86 = arith.addf %85, %10 : vector<16x32xf32>
    %87 = vector.extract_strided_slice %72 {offsets = [0, 0, 32], sizes = [4, 16, 32], strides = [1, 1, 1]} : vector<4x16x64xf32> to vector<4x16x32xf32>
    %88 = arith.mulf %87, %67 : vector<4x16x32xf32>
    %cst_56 = arith.constant dense<0.000000e+00> : vector<16x32xf32>
    %89 = vector.multi_reduction <add>, %88, %cst_56 [0] : vector<4x16x32xf32> to vector<16x32xf32>
    %90 = vector.extract_strided_slice %74 {offsets = [0, 32], sizes = [16, 32], strides = [1, 1]} : vector<16x64xf32> to vector<16x32xf32>
    %91 = arith.mulf %89, %90 : vector<16x32xf32>
    %c0_57 = arith.constant 0 : index
    %c0_58 = arith.constant 0 : index
    %92 = vector.load %arg18[%c0_57, %c0_58] : memref<32x32xbf16, #tpu.memory_space<vmem>>, vector<32x32xbf16>
    %93 = arith.truncf %91 : vector<16x32xf32> to vector<16x32xbf16>
    %cst_59 = arith.constant dense<0.000000e+00> : vector<16x32xf32>
    %94 = tpu.matmul %93, %92, %cst_59 {dimension_numbers = #tpu.dot_dimension_numbers<[1], [0], [0], [1], [0, 0, 1, 1], [], []>} : vector<16x32xbf16>, vector<32x32xbf16>, vector<16x32xf32> -> vector<16x32xf32>
    %c0_60 = arith.constant 0 : index
    %c0_61 = arith.constant 0 : index
    %95 = vector.load %arg19[%c0_60, %c0_61] : memref<1x32xf32, #tpu.memory_space<vmem>>, vector<1x32xf32>
    %96 = vector.broadcast %95 : vector<1x32xf32> to vector<16x32xf32>
    %97 = arith.addf %94, %96 : vector<16x32xf32>
    %98 = arith.addf %97, %10 : vector<16x32xf32>
    %99 = tpu.concatenate %86, %98 in 1 : vector<16x32xf32>, vector<16x32xf32> -> vector<16x64xf32>
    %100 = arith.truncf %99 : vector<16x64xf32> to vector<16x64xbf16>
    %c0_62 = arith.constant 0 : index
    %c0_63 = arith.constant 0 : index
    %c0_64 = arith.constant 0 : index
    %101 = vector.load %arg20[%c0_62, %c0_63, %c0_64] : memref<1x16x64xbf16, #tpu.memory_space<vmem>>, vector<1x16x64xbf16>
    %102 = vector.shape_cast %101 : vector<1x16x64xbf16> to vector<16x64xbf16>
    %103 = vector.shape_cast %100 : vector<16x64xbf16> to vector<1x16x64xbf16>
    tpu.vector_store %arg20[%c0_62, %c0_63, %c0_64], %103 {strides = array<i32>} : memref<1x16x64xbf16, #tpu.memory_space<vmem>>, vector<1x16x64xbf16>,
    return
  }
  func.func @transform_0(%arg0: i32, %arg1: i32) -> (i32, i32, i32) {
    %c0_i32 = arith.constant 0 : i32
    %c0_i32_0 = arith.constant 0 : i32
    return %arg0, %arg1, %c0_i32 : i32, i32, i32
  }
  func.func @transform_1(%arg0: i32, %arg1: i32) -> (i32, i32, i32, i32) {
    %c0_i32 = arith.constant 0 : i32
    %c0_i32_0 = arith.constant 0 : i32
    %c0_i32_1 = arith.constant 0 : i32
    return %arg0, %c0_i32, %arg1, %c0_i32_0 : i32, i32, i32, i32
  }
  func.func @transform_2(%arg0: i32, %arg1: i32) -> (i32, i32, i32, i32) {
    %c0_i32 = arith.constant 0 : i32
    %c0_i32_0 = arith.constant 0 : i32
    %c0_i32_1 = arith.constant 0 : i32
    return %arg0, %c0_i32, %arg1, %c0_i32_0 : i32, i32, i32, i32
  }
  func.func @transform_3(%arg0: i32, %arg1: i32) -> (i32, i32, i32, i32) {
    %c0_i32 = arith.constant 0 : i32
    %c0_i32_0 = arith.constant 0 : i32
    %c0_i32_1 = arith.constant 0 : i32
    return %arg0, %c0_i32, %arg1, %c0_i32_0 : i32, i32, i32, i32
  }
  func.func @transform_4(%arg0: i32, %arg1: i32) -> (i32, i32, i32, i32) {
    %c0_i32 = arith.constant 0 : i32
    %c0_i32_0 = arith.constant 0 : i32
    %c0_i32_1 = arith.constant 0 : i32
    return %arg0, %c0_i32, %arg1, %c0_i32_0 : i32, i32, i32, i32
  }
  func.func @transform_5(%arg0: i32, %arg1: i32) -> (i32, i32, i32) {
    %c0_i32 = arith.constant 0 : i32
    %c0_i32_0 = arith.constant 0 : i32
    return %arg0, %arg1, %c0_i32 : i32, i32, i32
  }
  func.func @transform_6(%arg0: i32, %arg1: i32) -> (i32, i32, i32) {
    %c0_i32 = arith.constant 0 : i32
    %c0_i32_0 = arith.constant 0 : i32
    return %arg0, %arg1, %c0_i32 : i32, i32, i32
  }
  func.func @transform_7(%arg0: i32, %arg1: i32) -> (i32, i32, i32) {
    %c0_i32 = arith.constant 0 : i32
    %c0_i32_0 = arith.constant 0 : i32
    return %arg0, %arg1, %c0_i32 : i32, i32, i32
  }
  func.func @transform_8(%arg0: i32, %arg1: i32) -> (i32, i32) {
    %c0_i32 = arith.constant 0 : i32
    %c0_i32_0 = arith.constant 0 : i32
    %c0_i32_1 = arith.constant 0 : i32
    return %c0_i32, %c0_i32_0 : i32, i32
  }
  func.func @transform_9(%arg0: i32, %arg1: i32) -> (i32, i32) {
    %c0_i32 = arith.constant 0 : i32
    %c0_i32_0 = arith.constant 0 : i32
    %c0_i32_1 = arith.constant 0 : i32
    return %c0_i32, %c0_i32_0 : i32, i32
  }
  func.func @transform_10(%arg0: i32, %arg1: i32) -> (i32, i32) {
    %c0_i32 = arith.constant 0 : i32
    %c0_i32_0 = arith.constant 0 : i32
    %c0_i32_1 = arith.constant 0 : i32
    return %c0_i32, %c0_i32_0 : i32, i32
  }
  func.func @transform_11(%arg0: i32, %arg1: i32) -> (i32, i32) {
    %c0_i32 = arith.constant 0 : i32
    %c0_i32_0 = arith.constant 0 : i32
    %c0_i32_1 = arith.constant 0 : i32
    return %c0_i32, %c0_i32_0 : i32, i32
  }
  func.func @transform_12(%arg0: i32, %arg1: i32) -> (i32, i32) {
    %c0_i32 = arith.constant 0 : i32
    %c0_i32_0 = arith.constant 0 : i32
    %c0_i32_1 = arith.constant 0 : i32
    return %c0_i32, %c0_i32_0 : i32, i32
  }
  func.func @transform_13(%arg0: i32, %arg1: i32) -> (i32, i32) {
    %c0_i32 = arith.constant 0 : i32
    %c0_i32_0 = arith.constant 0 : i32
    %c0_i32_1 = arith.constant 0 : i32
    return %c0_i32, %c0_i32_0 : i32, i32
  }
  func.func @transform_14(%arg0: i32, %arg1: i32) -> (i32, i32) {
    %c0_i32 = arith.constant 0 : i32
    %c0_i32_0 = arith.constant 0 : i32
    %c0_i32_1 = arith.constant 0 : i32
    return %c0_i32, %c0_i32_0 : i32, i32
  }
  func.func @transform_15(%arg0: i32, %arg1: i32) -> (i32, i32) {
    %c0_i32 = arith.constant 0 : i32
    %c0_i32_0 = arith.constant 0 : i32
    %c0_i32_1 = arith.constant 0 : i32
    return %c0_i32, %c0_i32_0 : i32, i32
  }
  func.func @transform_16(%arg0: i32, %arg1: i32) -> (i32, i32) {
    %c0_i32 = arith.constant 0 : i32
    %c0_i32_0 = arith.constant 0 : i32
    %c0_i32_1 = arith.constant 0 : i32
    return %c0_i32, %c0_i32_0 : i32, i32
  }
  func.func @transform_17(%arg0: i32, %arg1: i32) -> (i32, i32) {
    %c0_i32 = arith.constant 0 : i32
    %c0_i32_0 = arith.constant 0 : i32
    %c0_i32_1 = arith.constant 0 : i32
    return %c0_i32, %c0_i32_0 : i32, i32
  }
  func.func @transform_18(%arg0: i32, %arg1: i32) -> (i32, i32, i32) {
    %c0_i32 = arith.constant 0 : i32
    %c0_i32_0 = arith.constant 0 : i32
    return %arg0, %arg1, %c0_i32 : i32, i32, i32
  }
}

module attributes {stable_mosaic.version = 11 : i64} {
  func.func @_feature_offset_kernel(%arg0: i32, %arg1: i32, %arg2: memref<1x16x64xbf16, #tpu.memory_space<vmem>>, %arg3: memref<1x16x32xbf16, #tpu.memory_space<vmem>>, %arg4: memref<1x16x3xf32, #tpu.memory_space<vmem>>, %arg5: memref<32x32xbf16, #tpu.memory_space<vmem>>, %arg6: memref<32x32xbf16, #tpu.memory_space<vmem>>, %arg7: memref<1x32xf32, #tpu.memory_space<vmem>>, %arg8: memref<32x32xbf16, #tpu.memory_space<vmem>>, %arg9: memref<1x32xf32, #tpu.memory_space<vmem>>, %arg10: memref<32x32xbf16, #tpu.memory_space<vmem>>, %arg11: memref<32x32xbf16, #tpu.memory_space<vmem>>, %arg12: memref<1x32xf32, #tpu.memory_space<vmem>>, %arg13: memref<32x16xbf16, #tpu.memory_space<vmem>>, %arg14: memref<1x16xf32, #tpu.memory_space<vmem>>, %arg15: memref<16x3xbf16, #tpu.memory_space<vmem>>, %arg16: memref<1x3xf32, #tpu.memory_space<vmem>>, %arg17: memref<1x16x64xf32, #tpu.memory_space<vmem>>, %arg18: memref<1x16x6xf32, #tpu.memory_space<vmem>>) attributes {dimension_semantics = [#tpu.dimension_semantics<parallel>, #tpu.dimension_semantics<parallel>], iteration_bounds = array<i64: 2, 1>, scalar_prefetch = 0 : i64, scratch_operands = 0 : i64, tpu.core_type = #tpu.core_type<tc>, window_params = [{transform_indices = @transform_0, window_bounds = array<i64: 1, 16, 64>}, {transform_indices = @transform_1, window_bounds = array<i64: 1, 16, 32>}, {transform_indices = @transform_2, window_bounds = array<i64: 1, 16, 3>}, {pipeline_mode = #tpu.pipeline_mode<synchronous>, transform_indices = @transform_3, window_bounds = array<i64: 32, 32>}, {pipeline_mode = #tpu.pipeline_mode<synchronous>, transform_indices = @transform_4, window_bounds = array<i64: 32, 32>}, {pipeline_mode = #tpu.pipeline_mode<synchronous>, transform_indices = @transform_5, window_bounds = array<i64: 1, 32>}, {pipeline_mode = #tpu.pipeline_mode<synchronous>, transform_indices = @transform_6, window_bounds = array<i64: 32, 32>}, {pipeline_mode = #tpu.pipeline_mode<synchronous>, transform_indices = @transform_7, window_bounds = array<i64: 1, 32>}, {pipeline_mode = #tpu.pipeline_mode<synchronous>, transform_indices = @transform_8, window_bounds = array<i64: 32, 32>}, {pipeline_mode = #tpu.pipeline_mode<synchronous>, transform_indices = @transform_9, window_bounds = array<i64: 32, 32>}, {pipeline_mode = #tpu.pipeline_mode<synchronous>, transform_indices = @transform_10, window_bounds = array<i64: 1, 32>}, {pipeline_mode = #tpu.pipeline_mode<synchronous>, transform_indices = @transform_11, window_bounds = array<i64: 32, 16>}, {pipeline_mode = #tpu.pipeline_mode<synchronous>, transform_indices = @transform_12, window_bounds = array<i64: 1, 16>}, {pipeline_mode = #tpu.pipeline_mode<synchronous>, transform_indices = @transform_13, window_bounds = array<i64: 16, 3>}, {pipeline_mode = #tpu.pipeline_mode<synchronous>, transform_indices = @transform_14, window_bounds = array<i64: 1, 3>}, {transform_indices = @transform_15, window_bounds = array<i64: 1, 16, 64>}, {transform_indices = @transform_16, window_bounds = array<i64: 1, 16, 6>}]} {
    %c0 = arith.constant 0 : index
    %c0_0 = arith.constant 0 : index
    %c0_1 = arith.constant 0 : index
    %0 = vector.load %arg2[%c0, %c0_0, %c0_1] : memref<1x16x64xbf16, #tpu.memory_space<vmem>>, vector<1x16x64xbf16>
    %1 = vector.shape_cast %0 : vector<1x16x64xbf16> to vector<16x64xbf16>
    %c0_2 = arith.constant 0 : index
    %c0_3 = arith.constant 0 : index
    %c0_4 = arith.constant 0 : index
    %2 = vector.load %arg3[%c0_2, %c0_3, %c0_4] : memref<1x16x32xbf16, #tpu.memory_space<vmem>>, vector<1x16x32xbf16>
    %3 = vector.shape_cast %2 : vector<1x16x32xbf16> to vector<16x32xbf16>
    %c0_5 = arith.constant 0 : index
    %c0_6 = arith.constant 0 : index
    %c0_7 = arith.constant 0 : index
    %4 = vector.load %arg4[%c0_5, %c0_6, %c0_7] : memref<1x16x3xf32, #tpu.memory_space<vmem>>, vector<1x16x3xf32>
    %5 = vector.shape_cast %4 : vector<1x16x3xf32> to vector<16x3xf32>
    %c0_8 = arith.constant 0 : index
    %c0_9 = arith.constant 0 : index
    %6 = vector.load %arg6[%c0_8, %c0_9] : memref<32x32xbf16, #tpu.memory_space<vmem>>, vector<32x32xbf16>
    %cst = arith.constant dense<0.000000e+00> : vector<16x32xf32>
    %7 = tpu.matmul %3, %6, %cst {dimension_numbers = #tpu.dot_dimension_numbers<[1], [0], [0], [1], [0, 0, 1, 1], [], []>} : vector<16x32xbf16>, vector<32x32xbf16>, vector<16x32xf32> -> vector<16x32xf32>
    %c0_10 = arith.constant 0 : index
    %c0_11 = arith.constant 0 : index
    %8 = vector.load %arg11[%c0_10, %c0_11] : memref<32x32xbf16, #tpu.memory_space<vmem>>, vector<32x32xbf16>
    %cst_12 = arith.constant dense<0.000000e+00> : vector<16x32xf32>
    %9 = tpu.matmul %3, %8, %cst_12 {dimension_numbers = #tpu.dot_dimension_numbers<[1], [0], [0], [1], [0, 0, 1, 1], [], []>} : vector<16x32xbf16>, vector<32x32xbf16>, vector<16x32xf32> -> vector<16x32xf32>
    %10 = vector.extract_strided_slice %1 {offsets = [0, 0], sizes = [16, 32], strides = [1, 1]} : vector<16x64xbf16> to vector<16x32xbf16>
    %c0_13 = arith.constant 0 : index
    %c0_14 = arith.constant 0 : index
    %11 = vector.load %arg5[%c0_13, %c0_14] : memref<32x32xbf16, #tpu.memory_space<vmem>>, vector<32x32xbf16>
    %cst_15 = arith.constant dense<0.000000e+00> : vector<16x32xf32>
    %12 = tpu.matmul %10, %11, %cst_15 {dimension_numbers = #tpu.dot_dimension_numbers<[1], [0], [0], [1], [0, 0, 1, 1], [], []>} : vector<16x32xbf16>, vector<32x32xbf16>, vector<16x32xf32> -> vector<16x32xf32>
    %13 = arith.addf %12, %7 : vector<16x32xf32>
    %c0_16 = arith.constant 0 : index
    %c0_17 = arith.constant 0 : index
    %14 = vector.load %arg7[%c0_16, %c0_17] : memref<1x32xf32, #tpu.memory_space<vmem>>, vector<1x32xf32>
    %15 = vector.broadcast %14 : vector<1x32xf32> to vector<16x32xf32>
    %16 = arith.addf %13, %15 : vector<16x32xf32>
    %cst_18 = arith.constant 0.000000e+00 : f32
    %17 = vector.broadcast %cst_18 : f32 to vector<16x32xf32>
    %18 = arith.maximumf %16, %17 : vector<16x32xf32>
    %c0_19 = arith.constant 0 : index
    %c0_20 = arith.constant 0 : index
    %19 = vector.load %arg8[%c0_19, %c0_20] : memref<32x32xbf16, #tpu.memory_space<vmem>>, vector<32x32xbf16>
    %20 = arith.truncf %18 : vector<16x32xf32> to vector<16x32xbf16>
    %cst_21 = arith.constant dense<0.000000e+00> : vector<16x32xf32>
    %21 = tpu.matmul %20, %19, %cst_21 {dimension_numbers = #tpu.dot_dimension_numbers<[1], [0], [0], [1], [0, 0, 1, 1], [], []>} : vector<16x32xbf16>, vector<32x32xbf16>, vector<16x32xf32> -> vector<16x32xf32>
    %c0_22 = arith.constant 0 : index
    %c0_23 = arith.constant 0 : index
    %22 = vector.load %arg9[%c0_22, %c0_23] : memref<1x32xf32, #tpu.memory_space<vmem>>, vector<1x32xf32>
    %23 = vector.broadcast %22 : vector<1x32xf32> to vector<16x32xf32>
    %24 = arith.addf %21, %23 : vector<16x32xf32>
    %c0_24 = arith.constant 0 : index
    %c0_25 = arith.constant 0 : index
    %25 = vector.load %arg10[%c0_24, %c0_25] : memref<32x32xbf16, #tpu.memory_space<vmem>>, vector<32x32xbf16>
    %cst_26 = arith.constant dense<0.000000e+00> : vector<16x32xf32>
    %26 = tpu.matmul %10, %25, %cst_26 {dimension_numbers = #tpu.dot_dimension_numbers<[1], [0], [0], [1], [0, 0, 1, 1], [], []>} : vector<16x32xbf16>, vector<32x32xbf16>, vector<16x32xf32> -> vector<16x32xf32>
    %27 = arith.addf %24, %26 : vector<16x32xf32>
    %28 = arith.addf %27, %9 : vector<16x32xf32>
    %c0_27 = arith.constant 0 : index
    %c0_28 = arith.constant 0 : index
    %29 = vector.load %arg12[%c0_27, %c0_28] : memref<1x32xf32, #tpu.memory_space<vmem>>, vector<1x32xf32>
    %30 = vector.broadcast %29 : vector<1x32xf32> to vector<16x32xf32>
    %31 = arith.addf %28, %30 : vector<16x32xf32>
    %cst_29 = arith.constant 0.000000e+00 : f32
    %32 = vector.broadcast %cst_29 : f32 to vector<16x32xf32>
    %33 = arith.cmpf ogt, %31, %32 : vector<16x32xf32>
    %cst_30 = arith.constant 2.000000e-01 : f32
    %34 = vector.broadcast %cst_30 : f32 to vector<16x32xf32>
    %35 = arith.mulf %34, %31 : vector<16x32xf32>
    %36 = arith.select %33, %31, %35 : vector<16x32xi1>, vector<16x32xf32>
    %c0_31 = arith.constant 0 : index
    %c0_32 = arith.constant 0 : index
    %37 = vector.load %arg13[%c0_31, %c0_32] : memref<32x16xbf16, #tpu.memory_space<vmem>>, vector<32x16xbf16>
    %38 = arith.truncf %36 : vector<16x32xf32> to vector<16x32xbf16>
    %cst_33 = arith.constant dense<0.000000e+00> : vector<16x16xf32>
    %39 = tpu.matmul %38, %37, %cst_33 {dimension_numbers = #tpu.dot_dimension_numbers<[1], [0], [0], [1], [0, 0, 1, 1], [], []>} : vector<16x32xbf16>, vector<32x16xbf16>, vector<16x16xf32> -> vector<16x16xf32>
    %c0_34 = arith.constant 0 : index
    %c0_35 = arith.constant 0 : index
    %40 = vector.load %arg14[%c0_34, %c0_35] : memref<1x16xf32, #tpu.memory_space<vmem>>, vector<1x16xf32>
    %41 = vector.broadcast %40 : vector<1x16xf32> to vector<16x16xf32>
    %42 = arith.addf %39, %41 : vector<16x16xf32>
    %cst_36 = arith.constant 0.000000e+00 : f32
    %43 = vector.broadcast %cst_36 : f32 to vector<16x16xf32>
    %44 = arith.maximumf %42, %43 : vector<16x16xf32>
    %c0_37 = arith.constant 0 : index
    %c0_38 = arith.constant 0 : index
    %45 = vector.load %arg15[%c0_37, %c0_38] : memref<16x3xbf16, #tpu.memory_space<vmem>>, vector<16x3xbf16>
    %46 = arith.truncf %44 : vector<16x16xf32> to vector<16x16xbf16>
    %cst_39 = arith.constant dense<0.000000e+00> : vector<16x3xf32>
    %47 = tpu.matmul %46, %45, %cst_39 {dimension_numbers = #tpu.dot_dimension_numbers<[1], [0], [0], [1], [0, 0, 1, 1], [], []>} : vector<16x16xbf16>, vector<16x3xbf16>, vector<16x3xf32> -> vector<16x3xf32>
    %c0_40 = arith.constant 0 : index
    %c0_41 = arith.constant 0 : index
    %48 = vector.load %arg16[%c0_40, %c0_41] : memref<1x3xf32, #tpu.memory_space<vmem>>, vector<1x3xf32>
    %49 = vector.broadcast %48 : vector<1x3xf32> to vector<16x3xf32>
    %50 = arith.addf %47, %49 : vector<16x3xf32>
    %51 = math.tanh %50 : vector<16x3xf32>
    %cst_42 = arith.constant 1.000000e+00 : f32
    %52 = vector.broadcast %cst_42 : f32 to vector<16x3xf32>
    %53 = arith.mulf %51, %52 : vector<16x3xf32>
    %54 = arith.addf %5, %53 : vector<16x3xf32>
    %55 = vector.extract_strided_slice %1 {offsets = [0, 32], sizes = [16, 32], strides = [1, 1]} : vector<16x64xbf16> to vector<16x32xbf16>
    %c0_43 = arith.constant 0 : index
    %c0_44 = arith.constant 0 : index
    %56 = vector.load %arg5[%c0_43, %c0_44] : memref<32x32xbf16, #tpu.memory_space<vmem>>, vector<32x32xbf16>
    %cst_45 = arith.constant dense<0.000000e+00> : vector<16x32xf32>
    %57 = tpu.matmul %55, %56, %cst_45 {dimension_numbers = #tpu.dot_dimension_numbers<[1], [0], [0], [1], [0, 0, 1, 1], [], []>} : vector<16x32xbf16>, vector<32x32xbf16>, vector<16x32xf32> -> vector<16x32xf32>
    %58 = arith.addf %57, %7 : vector<16x32xf32>
    %c0_46 = arith.constant 0 : index
    %c0_47 = arith.constant 0 : index
    %59 = vector.load %arg7[%c0_46, %c0_47] : memref<1x32xf32, #tpu.memory_space<vmem>>, vector<1x32xf32>
    %60 = vector.broadcast %59 : vector<1x32xf32> to vector<16x32xf32>
    %61 = arith.addf %58, %60 : vector<16x32xf32>
    %cst_48 = arith.constant 0.000000e+00 : f32
    %62 = vector.broadcast %cst_48 : f32 to vector<16x32xf32>
    %63 = arith.maximumf %61, %62 : vector<16x32xf32>
    %c0_49 = arith.constant 0 : index
    %c0_50 = arith.constant 0 : index
    %64 = vector.load %arg8[%c0_49, %c0_50] : memref<32x32xbf16, #tpu.memory_space<vmem>>, vector<32x32xbf16>
    %65 = arith.truncf %63 : vector<16x32xf32> to vector<16x32xbf16>
    %cst_51 = arith.constant dense<0.000000e+00> : vector<16x32xf32>
    %66 = tpu.matmul %65, %64, %cst_51 {dimension_numbers = #tpu.dot_dimension_numbers<[1], [0], [0], [1], [0, 0, 1, 1], [], []>} : vector<16x32xbf16>, vector<32x32xbf16>, vector<16x32xf32> -> vector<16x32xf32>
    %c0_52 = arith.constant 0 : index
    %c0_53 = arith.constant 0 : index
    %67 = vector.load %arg9[%c0_52, %c0_53] : memref<1x32xf32, #tpu.memory_space<vmem>>, vector<1x32xf32>
    %68 = vector.broadcast %67 : vector<1x32xf32> to vector<16x32xf32>
    %69 = arith.addf %66, %68 : vector<16x32xf32>
    %c0_54 = arith.constant 0 : index
    %c0_55 = arith.constant 0 : index
    %70 = vector.load %arg10[%c0_54, %c0_55] : memref<32x32xbf16, #tpu.memory_space<vmem>>, vector<32x32xbf16>
    %cst_56 = arith.constant dense<0.000000e+00> : vector<16x32xf32>
    %71 = tpu.matmul %55, %70, %cst_56 {dimension_numbers = #tpu.dot_dimension_numbers<[1], [0], [0], [1], [0, 0, 1, 1], [], []>} : vector<16x32xbf16>, vector<32x32xbf16>, vector<16x32xf32> -> vector<16x32xf32>
    %72 = arith.addf %69, %71 : vector<16x32xf32>
    %73 = arith.addf %72, %9 : vector<16x32xf32>
    %c0_57 = arith.constant 0 : index
    %c0_58 = arith.constant 0 : index
    %74 = vector.load %arg12[%c0_57, %c0_58] : memref<1x32xf32, #tpu.memory_space<vmem>>, vector<1x32xf32>
    %75 = vector.broadcast %74 : vector<1x32xf32> to vector<16x32xf32>
    %76 = arith.addf %73, %75 : vector<16x32xf32>
    %cst_59 = arith.constant 0.000000e+00 : f32
    %77 = vector.broadcast %cst_59 : f32 to vector<16x32xf32>
    %78 = arith.cmpf ogt, %76, %77 : vector<16x32xf32>
    %cst_60 = arith.constant 2.000000e-01 : f32
    %79 = vector.broadcast %cst_60 : f32 to vector<16x32xf32>
    %80 = arith.mulf %79, %76 : vector<16x32xf32>
    %81 = arith.select %78, %76, %80 : vector<16x32xi1>, vector<16x32xf32>
    %c0_61 = arith.constant 0 : index
    %c0_62 = arith.constant 0 : index
    %82 = vector.load %arg13[%c0_61, %c0_62] : memref<32x16xbf16, #tpu.memory_space<vmem>>, vector<32x16xbf16>
    %83 = arith.truncf %81 : vector<16x32xf32> to vector<16x32xbf16>
    %cst_63 = arith.constant dense<0.000000e+00> : vector<16x16xf32>
    %84 = tpu.matmul %83, %82, %cst_63 {dimension_numbers = #tpu.dot_dimension_numbers<[1], [0], [0], [1], [0, 0, 1, 1], [], []>} : vector<16x32xbf16>, vector<32x16xbf16>, vector<16x16xf32> -> vector<16x16xf32>
    %c0_64 = arith.constant 0 : index
    %c0_65 = arith.constant 0 : index
    %85 = vector.load %arg14[%c0_64, %c0_65] : memref<1x16xf32, #tpu.memory_space<vmem>>, vector<1x16xf32>
    %86 = vector.broadcast %85 : vector<1x16xf32> to vector<16x16xf32>
    %87 = arith.addf %84, %86 : vector<16x16xf32>
    %cst_66 = arith.constant 0.000000e+00 : f32
    %88 = vector.broadcast %cst_66 : f32 to vector<16x16xf32>
    %89 = arith.maximumf %87, %88 : vector<16x16xf32>
    %c0_67 = arith.constant 0 : index
    %c0_68 = arith.constant 0 : index
    %90 = vector.load %arg15[%c0_67, %c0_68] : memref<16x3xbf16, #tpu.memory_space<vmem>>, vector<16x3xbf16>
    %91 = arith.truncf %89 : vector<16x16xf32> to vector<16x16xbf16>
    %cst_69 = arith.constant dense<0.000000e+00> : vector<16x3xf32>
    %92 = tpu.matmul %91, %90, %cst_69 {dimension_numbers = #tpu.dot_dimension_numbers<[1], [0], [0], [1], [0, 0, 1, 1], [], []>} : vector<16x16xbf16>, vector<16x3xbf16>, vector<16x3xf32> -> vector<16x3xf32>
    %c0_70 = arith.constant 0 : index
    %c0_71 = arith.constant 0 : index
    %93 = vector.load %arg16[%c0_70, %c0_71] : memref<1x3xf32, #tpu.memory_space<vmem>>, vector<1x3xf32>
    %94 = vector.broadcast %93 : vector<1x3xf32> to vector<16x3xf32>
    %95 = arith.addf %92, %94 : vector<16x3xf32>
    %96 = math.tanh %95 : vector<16x3xf32>
    %cst_72 = arith.constant 1.000000e+00 : f32
    %97 = vector.broadcast %cst_72 : f32 to vector<16x3xf32>
    %98 = arith.mulf %96, %97 : vector<16x3xf32>
    %99 = arith.addf %5, %98 : vector<16x3xf32>
    %100 = tpu.concatenate %31, %76 in 1 : vector<16x32xf32>, vector<16x32xf32> -> vector<16x64xf32>
    %c0_73 = arith.constant 0 : index
    %c0_74 = arith.constant 0 : index
    %c0_75 = arith.constant 0 : index
    %101 = vector.load %arg17[%c0_73, %c0_74, %c0_75] : memref<1x16x64xf32, #tpu.memory_space<vmem>>, vector<1x16x64xf32>
    %102 = vector.shape_cast %101 : vector<1x16x64xf32> to vector<16x64xf32>
    %103 = vector.shape_cast %100 : vector<16x64xf32> to vector<1x16x64xf32>
    tpu.vector_store %arg17[%c0_73, %c0_74, %c0_75], %103 {strides = array<i32>} : memref<1x16x64xf32, #tpu.memory_space<vmem>>, vector<1x16x64xf32>,
    %104 = tpu.concatenate %54, %99 in 1 : vector<16x3xf32>, vector<16x3xf32> -> vector<16x6xf32>
    %c0_76 = arith.constant 0 : index
    %c0_77 = arith.constant 0 : index
    %c0_78 = arith.constant 0 : index
    %105 = vector.load %arg18[%c0_76, %c0_77, %c0_78] : memref<1x16x6xf32, #tpu.memory_space<vmem>>, vector<1x16x6xf32>
    %106 = vector.shape_cast %105 : vector<1x16x6xf32> to vector<16x6xf32>
    %107 = vector.shape_cast %104 : vector<16x6xf32> to vector<1x16x6xf32>
    tpu.vector_store %arg18[%c0_76, %c0_77, %c0_78], %107 {strides = array<i32>} : memref<1x16x6xf32, #tpu.memory_space<vmem>>, vector<1x16x6xf32>,
    return
  }
  func.func @transform_0(%arg0: i32, %arg1: i32) -> (i32, i32, i32) {
    %c0_i32 = arith.constant 0 : i32
    %c0_i32_0 = arith.constant 0 : i32
    return %arg0, %arg1, %c0_i32 : i32, i32, i32
  }
  func.func @transform_1(%arg0: i32, %arg1: i32) -> (i32, i32, i32) {
    %c0_i32 = arith.constant 0 : i32
    %c0_i32_0 = arith.constant 0 : i32
    return %arg0, %arg1, %c0_i32 : i32, i32, i32
  }
  func.func @transform_2(%arg0: i32, %arg1: i32) -> (i32, i32, i32) {
    %c0_i32 = arith.constant 0 : i32
    %c0_i32_0 = arith.constant 0 : i32
    return %arg0, %arg1, %c0_i32 : i32, i32, i32
  }
  func.func @transform_3(%arg0: i32, %arg1: i32) -> (i32, i32) {
    %c0_i32 = arith.constant 0 : i32
    %c0_i32_0 = arith.constant 0 : i32
    %c0_i32_1 = arith.constant 0 : i32
    return %c0_i32, %c0_i32_0 : i32, i32
  }
  func.func @transform_4(%arg0: i32, %arg1: i32) -> (i32, i32) {
    %c0_i32 = arith.constant 0 : i32
    %c0_i32_0 = arith.constant 0 : i32
    %c0_i32_1 = arith.constant 0 : i32
    return %c0_i32, %c0_i32_0 : i32, i32
  }
  func.func @transform_5(%arg0: i32, %arg1: i32) -> (i32, i32) {
    %c0_i32 = arith.constant 0 : i32
    %c0_i32_0 = arith.constant 0 : i32
    %c0_i32_1 = arith.constant 0 : i32
    return %c0_i32, %c0_i32_0 : i32, i32
  }
  func.func @transform_6(%arg0: i32, %arg1: i32) -> (i32, i32) {
    %c0_i32 = arith.constant 0 : i32
    %c0_i32_0 = arith.constant 0 : i32
    %c0_i32_1 = arith.constant 0 : i32
    return %c0_i32, %c0_i32_0 : i32, i32
  }
  func.func @transform_7(%arg0: i32, %arg1: i32) -> (i32, i32) {
    %c0_i32 = arith.constant 0 : i32
    %c0_i32_0 = arith.constant 0 : i32
    %c0_i32_1 = arith.constant 0 : i32
    return %c0_i32, %c0_i32_0 : i32, i32
  }
  func.func @transform_8(%arg0: i32, %arg1: i32) -> (i32, i32) {
    %c0_i32 = arith.constant 0 : i32
    %c0_i32_0 = arith.constant 0 : i32
    %c0_i32_1 = arith.constant 0 : i32
    return %c0_i32, %c0_i32_0 : i32, i32
  }
  func.func @transform_9(%arg0: i32, %arg1: i32) -> (i32, i32) {
    %c0_i32 = arith.constant 0 : i32
    %c0_i32_0 = arith.constant 0 : i32
    %c0_i32_1 = arith.constant 0 : i32
    return %c0_i32, %c0_i32_0 : i32, i32
  }
  func.func @transform_10(%arg0: i32, %arg1: i32) -> (i32, i32) {
    %c0_i32 = arith.constant 0 : i32
    %c0_i32_0 = arith.constant 0 : i32
    %c0_i32_1 = arith.constant 0 : i32
    return %c0_i32, %c0_i32_0 : i32, i32
  }
  func.func @transform_11(%arg0: i32, %arg1: i32) -> (i32, i32) {
    %c0_i32 = arith.constant 0 : i32
    %c0_i32_0 = arith.constant 0 : i32
    %c0_i32_1 = arith.constant 0 : i32
    return %c0_i32, %c0_i32_0 : i32, i32
  }
  func.func @transform_12(%arg0: i32, %arg1: i32) -> (i32, i32) {
    %c0_i32 = arith.constant 0 : i32
    %c0_i32_0 = arith.constant 0 : i32
    %c0_i32_1 = arith.constant 0 : i32
    return %c0_i32, %c0_i32_0 : i32, i32
  }
  func.func @transform_13(%arg0: i32, %arg1: i32) -> (i32, i32) {
    %c0_i32 = arith.constant 0 : i32
    %c0_i32_0 = arith.constant 0 : i32
    %c0_i32_1 = arith.constant 0 : i32
    return %c0_i32, %c0_i32_0 : i32, i32
  }
  func.func @transform_14(%arg0: i32, %arg1: i32) -> (i32, i32) {
    %c0_i32 = arith.constant 0 : i32
    %c0_i32_0 = arith.constant 0 : i32
    %c0_i32_1 = arith.constant 0 : i32
    return %c0_i32, %c0_i32_0 : i32, i32
  }
  func.func @transform_15(%arg0: i32, %arg1: i32) -> (i32, i32, i32) {
    %c0_i32 = arith.constant 0 : i32
    %c0_i32_0 = arith.constant 0 : i32
    return %arg0, %arg1, %c0_i32 : i32, i32, i32
  }
  func.func @transform_16(%arg0: i32, %arg1: i32) -> (i32, i32, i32) {
    %c0_i32 = arith.constant 0 : i32
    %c0_i32_0 = arith.constant 0 : i32
    return %arg0, %arg1, %c0_i32 : i32, i32, i32
  }
}

</mosaic_0001>

<llo_original>
// kernel: neg.3
$region0: #{neg.3}
  #allocation0 [shape = 's32[1]{0}', space=sflag, size = 0x4, scoped, tag = 'scoped memory for neg.3']
  %s0 = inlined_call_operand.vmem [shape: f32[2,16,8], index: 0, kind: input, shape index: {}]
  %s1 = inlined_call_operand.vmem [shape: f32[2,16,8], index: 1, kind: output, shape index: {}]
  %v2 = vld [vmem:[%s0] sm:$0xff]
  %3 = xla_tuple %v2
  %4 = xla_tuple %3
  %v5 = vxor.u32 %v2, 2147483648
  %6 = xla_tuple %v5
  %7 = vst [vmem:[%s1] sm:$0xff] %v5
  %s8 = scalar_lea.vmem %s0, 16
  %v9 = vld [vmem:[%s8] sm:$0xff]
  %10 = xla_tuple %v9
  %11 = xla_tuple %10
  %v12 = vxor.u32 %v9, 2147483648
  %13 = xla_tuple %v12
  %s14 = scalar_lea.vmem %s1, 16
  %15 = vst [vmem:[%s14] sm:$0xff] %v12
  %s16 = scalar_lea.vmem %s0, 8
  %v17 = vld [vmem:[%s16] sm:$0xff]
  %18 = xla_tuple %v17
  %19 = xla_tuple %18
  %v20 = vxor.u32 %v17, 2147483648
  %21 = xla_tuple %v20
  %s22 = scalar_lea.vmem %s1, 8
  %23 = vst [vmem:[%s22] sm:$0xff] %v20
  %s24 = scalar_lea.vmem %s0, 24
  %v25 = vld [vmem:[%s24] sm:$0xff]
  %26 = xla_tuple %v25
  %27 = xla_tuple %26
  %v28 = vxor.u32 %v25, 2147483648
  %29 = xla_tuple %v28
  %s30 = scalar_lea.vmem %s1, 24
  %31 = vst [vmem:[%s30] sm:$0xff] %v28

// kernel: upsampler_forward.10
$region0: #{upsampler_forward.10}
  #allocation0 [shape = 'u32[]', space=smem, size = 0x4, offset = 0x4, fixed_abs, tag = 'smem constant byte address 0x4 - core index']
  #allocation1 [shape = 'u32[144,128]{1,0:T(1,128)}', space=vmem, size = 0x12000, scoped, tag = 'internal scratch']
  %s0 = inlined_call_operand.vmem [shape: f32[2,16,3], index: 0, kind: input, shape index: {}]
  %s1 = inlined_call_operand.vmem [shape: f32[2,3,8], index: 1, kind: input, shape index: {}]
  %s2 = inlined_call_operand.vmem [shape: f32[2,16,8], index: 2, kind: output, shape index: {}]
  %s3 = sld [smem:[#allocation0]]
  $region41: #{upsampler_forward.10} parent=0
    _
  %s5 = ssub.s32 1, %s3
  %s6 = scalar_select 0, %s5, %s3
  loop: start=0, step=1, limit=4
  $region2: #{upsampler_forward.10} parent=0 // loop_pre_header
    _
  $region3: #{upsampler_forward.10} parent=0 // loop_header
    %s8 = sphi 0, %s12
    %p9 = scmp.ge.s32.totalorder %s8, 4
    %s15 = sphi 0, %s27
    %s16 = sphi 0, %s23
    %s17 = sphi 0, %s15
    %s18 = sphi 0, %s16
    %s19 = sphi 0, %s17
    %s20 = sphi 0, %s18
    %s32 = sphi 0, %s34
    %s35 = sphi 0, %s32
    %s36 = sphi 0, %s35
    %s52 = sphi 0, %s36
    %s58 = sphi 0, %s60
    %s61 = sphi 0, %s58
    %s62 = sphi 0, %s61
    %s78 = sphi 0, %s62
    %s86 = sphi 0, %s88
    %s89 = sphi 0, %s86
    %s90 = sphi 0, %s89
    %s106 = sphi 0, %s90
  $region4: #{upsampler_forward.10} parent=0 // loop_header_branch
    %11 = sbr.rel (%p9) target = $region8
  $region5: #{upsampler_forward.10} parent=0 // loop_body
    %s13 = ssub.s32 %s8, 1
    %s14 = ssub.s32 %s8, 2
    %s21 = sadd.s32 1, %s16
    %p22 = scmp.ge.s32.totalorder %s21, 1
    %s23 = scalar_select %p22, 0, %s21
    %s24 = sadd.s32 1, %s15
    %s25 = scalar_select %p22, %s24, %s15
    %p26 = scmp.ge.s32.totalorder %s25, 2
    %s27 = scalar_select %p26, 0, %s25
    %s28 = ssub.s32 %s15, %s27
    %s29 = ssub.s32 %s16, %s23
    %s30 = sor.u32 %s28, %s29
    %p31 = scmp.eq.s32.totalorder %s30, 0
    %s33 = sadd.s32 %s32, 1
    %s34 = scalar_select %p31, %s32, %s33
    %p37 = pneg %p31
    %p38 = scmp.eq.s32.totalorder %s8, 1
    %p39 = por %p37, %p38
    %p40 = scmp.ne.s32.totalorder %s32, %s35
    %p41 = scmp.eq.s32.totalorder %s8, 0
    %p42 = por %p40, %p41
    %p43 = scmp.ne.s32.totalorder %s32, %s35
    %p44 = scmp.eq.s32.totalorder %s13, 1
    %p45 = por %p43, %p44
    %p46 = scmp.ne.s32.totalorder %s35, %s36
    %p47 = scmp.eq.s32.totalorder %s13, 0
    %p48 = por %p46, %p47
    %p49 = scmp.ne.s32.totalorder %s35, %s36
    %p50 = scmp.eq.s32.totalorder %s14, 1
    %p51 = por %p49, %p50
    %p53 = scmp.ne.s32.totalorder %s36, %s52
    %p54 = scmp.eq.s32.totalorder %s14, 0
    %p55 = por %p53, %p54
    %s56 = ssub.s32 %s15, %s27
    %p57 = scmp.eq.s32.totalorder %s56, 0
    %s59 = sadd.s32 %s58, 1
    %s60 = scalar_select %p57, %s58, %s59
    %p63 = pneg %p57
    %p64 = scmp.eq.s32.totalorder %s8, 1
    %p65 = por %p63, %p64
    %p66 = scmp.ne.s32.totalorder %s58, %s61
    %p67 = scmp.eq.s32.totalorder %s8, 0
    %p68 = por %p66, %p67
    %p69 = scmp.ne.s32.totalorder %s58, %s61
    %p70 = scmp.eq.s32.totalorder %s13, 1
    %p71 = por %p69, %p70
    %p72 = scmp.ne.s32.totalorder %s61, %s62
    %p73 = scmp.eq.s32.totalorder %s13, 0
    %p74 = por %p72, %p73
    %p75 = scmp.ne.s32.totalorder %s61, %s62
    %p76 = scmp.eq.s32.totalorder %s14, 1
    %p77 = por %p75, %p76
    %p79 = scmp.ne.s32.totalorder %s62, %s78
    %p80 = scmp.eq.s32.totalorder %s14, 0
    %p81 = por %p79, %p80
    %s82 = ssub.s32 %s15, %s27
    %s83 = ssub.s32 %s16, %s23
    %s84 = sor.u32 %s82, %s83
    %p85 = scmp.eq.s32.totalorder %s84, 0
    %s87 = sadd.s32 %s86, 1
    %s88 = scalar_select %p85, %s86, %s87
    %p91 = pneg %p85
    %p92 = scmp.eq.s32.totalorder %s8, 1
    %p93 = por %p91, %p92
    %p94 = scmp.ne.s32.totalorder %s86, %s89
    %p95 = scmp.eq.s32.totalorder %s8, 0
    %p96 = por %p94, %p95
    %p97 = scmp.ne.s32.totalorder %s86, %s89
    %p98 = scmp.eq.s32.totalorder %s13, 1
    %p99 = por %p97, %p98
    %p100 = scmp.ne.s32.totalorder %s89, %s90
    %p101 = scmp.eq.s32.totalorder %s13, 0
    %p102 = por %p100, %p101
    %p103 = scmp.ne.s32.totalorder %s89, %s90
    %p104 = scmp.eq.s32.totalorder %s14, 1
    %p105 = por %p103, %p104
    %p107 = scmp.ne.s32.totalorder %s90, %s106
    %p108 = scmp.eq.s32.totalorder %s14, 0
    %p109 = por %p107, %p108
    %p110 = scmp.le.s32.totalorder 1, %s8
    %p111 = scmp.lt.s32.totalorder %s8, 3
    %p112 = pnand %p110, %p111
    %p113 = pneg %p112
    // Predicated region
    $region9: #{upsampler_forward.10} parent=5 // pred_check
      _
    $region10: #{upsampler_forward.10} parent=5 // pred_check_branch
      %115 = sbr.rel (%p112) target = $region12
    $region11: #{upsampler_forward.10} parent=5 // pred_region
      %s116 = ssub.s32 %s8, 1
    $region12: #{upsampler_forward.10} parent=5 // pred_fallthru
      _
    %p117 = scmp.lt.s32.totalorder %s8, 2
    // Predicated region
    $region13: #{upsampler_forward.10} parent=5 // pred_check
      %p118 = pneg %p117
    $region14: #{upsampler_forward.10} parent=5 // pred_check_branch
      %120 = sbr.rel (%p118) target = $region16
    $region15: #{upsampler_forward.10} parent=5 // pred_region
      // Predicated region
      $region17: #{upsampler_forward.10} parent=15 // pred_check
        %p121 = pneg %p42
      $region18: #{upsampler_forward.10} parent=15 // pred_check_branch
        %123 = sbr.rel (%p121) target = $region20
      $region19: #{upsampler_forward.10} parent=15 // pred_region
        %s124 = smul.u32 2, %s16
        %p125 = scmp.lt.s32.totalorder %s15, 1
        %s126 = scalar_select %p125, %s15, 1
        %p127 = scmp.lt.s32.totalorder %s124, 1
        %s128 = scalar_select %p127, %s124, 1
        %s129 = smul.addr %s126, 2
        %s130 = sadd.s32 %s128, %s129
        %s131 = smul.addr %s130, 8
        %s132 = scalar_lea.vmem %s0, %s131
        %s133 = smul.u32 2, %s16
      $region20: #{upsampler_forward.10} parent=15 // pred_fallthru
        _
      // Predicated region
      $region21: #{upsampler_forward.10} parent=15 // pred_check
        %p134 = pneg %p68
      $region22: #{upsampler_forward.10} parent=15 // pred_check_branch
        %136 = sbr.rel (%p134) target = $region24
      $region23: #{upsampler_forward.10} parent=15 // pred_region
        %p137 = scmp.lt.s32.totalorder %s15, 1
        %s138 = scalar_select %p137, %s15, 1
        %s139 = smul.addr %s138, 4
        %s140 = scalar_lea.vmem %s1, %s139
      $region24: #{upsampler_forward.10} parent=15 // pred_fallthru
        _
    $region16: #{upsampler_forward.10} parent=5 // pred_fallthru
      _
    %p141 = scmp.le.s32.totalorder 1, %s8
    %p142 = scmp.lt.s32.totalorder %s8, 3
    %p143 = pnand %p141, %p142
    %p144 = pneg %p143
    // Predicated region
    $region25: #{upsampler_forward.10} parent=5 // pred_check
      _
    $region26: #{upsampler_forward.10} parent=5 // pred_check_branch
      %146 = sbr.rel (%p143) target = $region28
    $region27: #{upsampler_forward.10} parent=5 // pred_region
      %s147 = ssub.s32 %s8, 1
      %s148 = smul.u32 2, %s18
      %p149 = scmp.lt.s32.totalorder %s17, 1
      %s150 = scalar_select %p149, %s17, 1
      %p151 = scmp.lt.s32.totalorder %s148, 1
      %s152 = scalar_select %p151, %s148, 1
      %s153 = smul.addr %s150, 2
      %s154 = sadd.s32 %s152, %s153
      %s155 = smul.addr %s154, 8
      %s156 = scalar_lea.vmem %s0, %s155
      %p157 = pneg %p48
      %p158 = pneg %p45
      %p159 = scmp.lt.s32.totalorder %s17, 1
      %s160 = scalar_select %p159, %s17, 1
      %s161 = smul.addr %s160, 4
      %s162 = scalar_lea.vmem %s1, %s161
      %p163 = pneg %p74
      %p164 = pneg %p71
      %p165 = pneg %p102
      %p166 = pneg %p99
      %s167 = smul.u32 2, %s18
      %p168 = scmp.lt.s32.totalorder %s17, 1
      %s169 = scalar_select %p168, %s17, 1
      %p170 = scmp.lt.s32.totalorder %s167, 1
      %s171 = scalar_select %p170, %s167, 1
      %s172 = smul.addr %s169, 2
      %s173 = sadd.s32 %s171, %s172
      %s174 = smul.addr %s173, 8
      %s175 = scalar_lea.vmem %s2, %s174
      %s176 = smul.u32 2, %s18
      %p177 = scmp.lt.s32.totalorder %s17, 1
      %s178 = scalar_select %p177, %s17, 1
      %p179 = scmp.lt.s32.totalorder %s176, 1
      %s180 = scalar_select %p179, %s176, 1
      %s181 = smul.addr %s178, 2
      %s182 = sadd.s32 %s180, %s181
      %s183 = smul.addr %s182, 8
      %s184 = scalar_lea.vmem %s0, %s183
      %s185 = smul.u32 2, %s18
      %p186 = scmp.lt.s32.totalorder %s17, 1
      %s187 = scalar_select %p186, %s17, 1
      %s188 = smul.addr %s187, 4
      %s189 = scalar_lea.vmem %s1, %s188
      %s190 = smul.u32 2, %s18
      %p191 = scmp.lt.s32.totalorder %s17, 1
      %s192 = scalar_select %p191, %s17, 1
      %p193 = scmp.lt.s32.totalorder %s190, 1
      %s194 = scalar_select %p193, %s190, 1
      %s195 = smul.addr %s192, 2
      %s196 = sadd.s32 %s194, %s195
      %s197 = smul.addr %s196, 8
      %s198 = scalar_lea.vmem %s2, %s197
      %s199 = smul.u32 2, %s18
      %v200 = vld [vmem:[%s184] sm:$0xff]
      %v201 = vld [vmem:[%s184 + $0x8] sm:$0xff]
      %v202 = vld [vmem:[%s189] sm:$0x7]
      %204 = vset.pattern.permute.xlu0 0
      %205 = vperm.xlu0 %204, %v200
      %v206 = vpop.permute.xlu0 %205
      %209 = vset.pattern.permute.xlu0 0
      %210 = vperm.xlu0 %209, %v201
      %v211 = vpop.permute.xlu0 %210
      %v213 = vlaneseq
      %v214 = vshrl.u32 %v213, 7
      %v215 = vsub.s32 0, %v214
      %v216 = vrot.slane %v202, %v215
      %v217 = vsub.f32 %v206, %v216
      %v218 = vsub.f32 %v211, %v216
      %v219 = vmul.f32 %v217, %v217
      %v220 = vmul.f32 %v218, %v218
      %221 = vset.pattern.permute.xlu0 1
      %222 = vperm.xlu0 %221, %v200
      %v223 = vpop.permute.xlu0 %222
      %225 = vset.pattern.permute.xlu0 1
      %226 = vperm.xlu0 %225, %v201
      %v227 = vpop.permute.xlu0 %226
      %v229 = vlaneseq
      %v230 = vshrl.u32 %v229, 7
      %v231 = vsub.s32 1, %v230
      %v232 = vrot.slane %v202, %v231
      %v233 = vsub.f32 %v223, %v232
      %v234 = vsub.f32 %v227, %v232
      %v235 = vmul.f32 %v233, %v233
      %v236 = vmul.f32 %v234, %v234
      %v237 = vadd.f32 %v219, %v235
      %v238 = vadd.f32 %v220, %v236
      %239 = vset.pattern.permute.xlu0 2
      %240 = vperm.xlu0 %239, %v200
      %v241 = vpop.permute.xlu0 %240
      %243 = vset.pattern.permute.xlu0 2
      %244 = vperm.xlu0 %243, %v201
      %v245 = vpop.permute.xlu0 %244
      %v247 = vlaneseq
      %v248 = vshrl.u32 %v247, 7
      %v249 = vsub.s32 2, %v248
      %v250 = vrot.slane %v202, %v249
      %v251 = vsub.f32 %v241, %v250
      %v252 = vsub.f32 %v245, %v250
      %v253 = vmul.f32 %v251, %v251
      %v254 = vmul.f32 %v252, %v252
      %v255 = vadd.f32 %v237, %v253
      %v256 = vadd.f32 %v238, %v254
      %vm257 = vcmask 64512
      %258 = vst.msk [vmem:[%s198] sm:$0xff] %vm257, %v255
      %259 = vst.msk [vmem:[%s198 + $0x8] sm:$0xff] %vm257, %v256
      %s260 = smul.u32 2, %s18
      %p261 = scmp.lt.s32.totalorder %s17, 1
      %s262 = scalar_select %p261, %s17, 1
      %p263 = scmp.lt.s32.totalorder %s260, 1
      %s264 = scalar_select %p263, %s260, 1
      %s265 = smul.addr %s262, 2
      %s266 = sadd.s32 %s264, %s265
      %s267 = smul.addr %s266, 8
      %s268 = scalar_lea.vmem %s2, %s267
      // Predicated region
      $region29: #{upsampler_forward.10} parent=27 // pred_check
        %p269 = pneg %p99
      $region30: #{upsampler_forward.10} parent=27 // pred_check_branch
        %271 = sbr.rel (%p269) target = $region32
      $region31: #{upsampler_forward.10} parent=27 // pred_region
        %s272 = smul.u32 2, %s18
      $region32: #{upsampler_forward.10} parent=27 // pred_fallthru
        _
    $region28: #{upsampler_forward.10} parent=5 // pred_fallthru
      _
    %p273 = scmp.le.s32.totalorder 2, %s8
    // Predicated region
    $region33: #{upsampler_forward.10} parent=5 // pred_check
      %p274 = pneg %p273
    $region34: #{upsampler_forward.10} parent=5 // pred_check_branch
      %276 = sbr.rel (%p274) target = $region36
    $region35: #{upsampler_forward.10} parent=5 // pred_region
      %s277 = ssub.s32 %s8, 2
      // Predicated region
      $region37: #{upsampler_forward.10} parent=35 // pred_check
        %p278 = pneg %p105
      $region38: #{upsampler_forward.10} parent=35 // pred_check_branch
        %280 = sbr.rel (%p278) target = $region40
      $region39: #{upsampler_forward.10} parent=35 // pred_region
        %s281 = smul.u32 2, %s20
        %p282 = scmp.lt.s32.totalorder %s19, 1
        %s283 = scalar_select %p282, %s19, 1
        %p284 = scmp.lt.s32.totalorder %s281, 1
        %s285 = scalar_select %p284, %s281, 1
        %s286 = smul.addr %s283, 2
        %s287 = sadd.s32 %s285, %s286
        %s288 = smul.addr %s287, 8
        %s289 = scalar_lea.vmem %s2, %s288
      $region40: #{upsampler_forward.10} parent=35 // pred_fallthru
        _
    $region36: #{upsampler_forward.10} parent=5 // pred_fallthru
      _
  $region6: #{upsampler_forward.10} parent=0 // loop_footer
    %s12 = sadd.s32 1, %s8
  $region7: #{upsampler_forward.10} parent=0 // loop_footer_branch
    %7 = sbr.rel target = $region3
  $region8: #{upsampler_forward.10} parent=0 // loop_exit
    _

// kernel: upsampler_forward.11
$region0: #{upsampler_forward.11}
  #allocation0 [shape = 'u32[]', space=smem, size = 0x4, offset = 0x4, fixed_abs, tag = 'smem constant byte address 0x4 - core index']
  #allocation1 [shape = 'u32[144,128]{1,0:T(1,128)}', space=vmem, size = 0x12000, scoped, tag = 'internal scratch']
  %s0 = inlined_call_operand.vmem [shape: f32[32,32], index: 0, kind: input, shape index: {}]
  %s1 = inlined_call_operand.vmem [shape: bf16[32,16], index: 1, kind: input, shape index: {}]
  %s2 = inlined_call_operand.vmem [shape: f32[1,16], index: 2, kind: input, shape index: {}]
  %s3 = inlined_call_operand.vmem [shape: bf16[16,32], index: 3, kind: input, shape index: {}]
  %s4 = inlined_call_operand.vmem [shape: f32[1,32], index: 4, kind: input, shape index: {}]
  %s5 = inlined_call_operand.vmem [shape: bf16[32,32], index: 5, kind: output, shape index: {}]
  %s6 = sld [smem:[#allocation0]]
  $region30: #{upsampler_forward.11} parent=0
    _
  %s8 = ssub.s32 1, %s6
  %s9 = scalar_select 0, %s8, %s6
  // Predicated region
  $region2: #{upsampler_forward.11} parent=0 // pred_check
    _
  $region3: #{upsampler_forward.11} parent=0 // pred_check_branch
    %11 = sbr.rel (0) target = $region5
  $region4: #{upsampler_forward.11} parent=0 // pred_region
    _
  $region5: #{upsampler_forward.11} parent=0 // pred_fallthru
    _
  // Predicated region
  $region6: #{upsampler_forward.11} parent=0 // pred_check
    _
  $region7: #{upsampler_forward.11} parent=0 // pred_check_branch
    %13 = sbr.rel (0) target = $region9
  $region8: #{upsampler_forward.11} parent=0 // pred_region
    _
  $region9: #{upsampler_forward.11} parent=0 // pred_fallthru
    _
  // Predicated region
  $region10: #{upsampler_forward.11} parent=0 // pred_check
    _
  $region11: #{upsampler_forward.11} parent=0 // pred_check_branch
    %15 = sbr.rel (0) target = $region13
  $region12: #{upsampler_forward.11} parent=0 // pred_region
    _
  $region13: #{upsampler_forward.11} parent=0 // pred_fallthru
    _
  // Predicated region
  $region14: #{upsampler_forward.11} parent=0 // pred_check
    _
  $region15: #{upsampler_forward.11} parent=0 // pred_check_branch
    %17 = sbr.rel (0) target = $region17
  $region16: #{upsampler_forward.11} parent=0 // pred_region
    _
  $region17: #{upsampler_forward.11} parent=0 // pred_fallthru
    _
  // Predicated region
  $region18: #{upsampler_forward.11} parent=0 // pred_check
    _
  $region19: #{upsampler_forward.11} parent=0 // pred_check_branch
    %19 = sbr.rel (0) target = $region21
  $region20: #{upsampler_forward.11} parent=0 // pred_region
    _
  $region21: #{upsampler_forward.11} parent=0 // pred_fallthru
    _
  %v21 = vld [vmem:[%s0] sm:$0xff]
  %v22 = vld [vmem:[%s0 + $0x8] sm:$0xff]
  %v23 = vld [vmem:[%s0 + $0x10] sm:$0xff]
  %v24 = vld [vmem:[%s0 + $0x18] sm:$0xff]
  %v25 = vld [vmem:[%s1] sm:$0xf]
  %v26 = vld [vmem:[%s1 + $0x4] sm:$0xf]
  %v27 = vld [vmem:[%s1 + $0x8] sm:$0xf]
  %v28 = vld [vmem:[%s1 + $0xc] sm:$0xf]
  %v29 = vpack.c.bf16 %v22, %v21
  %v30 = vpack.c.bf16 %v24, %v23
  %v31 = vld [vmem:[%s2] sm:$0x1]
  %v33 = vlaneseq
  %v34 = vshrl.u32 %v33, 7
  %v35 = vsub.s32 0, %v34
  %v36 = vrot.slane %v31, %v35
  %v42 = vunpack.c.l.b16 %v25
  %v43 = vunpack.c.l.b16 %v26
  %v44 = vunpack.c.l.b16 %v27
  %v45 = vunpack.c.l.b16 %v28
  %v46 = vpack.c.b16 %v43, %v42
  %v47 = vpack.c.b16 %v45, %v44
  %vm50 = vcmask 261120
  %v52 = vsel %vm50, %v29, 0
  %v55 = vsel %vm50, %v30, 0
  %57 = vmatprep.subr.bf16.mxu0 0
  %58 = vmatpush1.bf16.msra.mxu0 0
  %59 = vmatprep.subr.bf16.mxu0 0
  %60 = vmatpush1.bf16.msra.mxu0 0
  %61 = vmatprep.subr.bf16.mxu0 0
  %62 = vmatpush1.bf16.msra.mxu0 0
  %63 = vmatprep.subr.bf16.mxu0 0
  %64 = vmatpush1.bf16.msra.mxu0 0
  %65 = vmatprep.subr.bf16.mxu0 0
  %66 = vmatpush1.bf16.msra.mxu0 0
  %67 = vmatprep.subr.bf16.mxu0 0
  %68 = vmatpush1.bf16.msra.mxu0 0
  %69 = vmatprep.subr.bf16.mxu0 0
  %70 = vmatpush1.bf16.msra.mxu0 %v47
  %71 = vmatprep.subr.bf16.mxu0 0
  %72 = vmatpush1.bf16.msra.mxu0 %v46
  %73 = vmatprep.subr.bf16.mxu0 0
  %74 = vmatpush2.bf16.msra.mxu0 0
  %75 = vmatprep.subr.bf16.mxu0 0
  %76 = vmatpush2.bf16.msra.mxu0 0
  %77 = vmatprep.subr.bf16.mxu0 0
  %78 = vmatpush2.bf16.msra.mxu0 0
  %79 = vmatprep.subr.bf16.mxu0 0
  %80 = vmatpush2.bf16.msra.mxu0 0
  %81 = vmatprep.subr.bf16.mxu0 0
  %82 = vmatpush2.bf16.msra.mxu0 0
  %83 = vmatprep.subr.bf16.mxu0 0
  %84 = vmatpush2.bf16.msra.mxu0 0
  %85 = vmatprep.subr.bf16.mxu0 0
  %86 = vmatpush2.bf16.msra.mxu0 0
  %87 = vmatprep.subr.bf16.mxu0 0
  %88 = vmatpush2.bf16.msra.mxu0 0
  %89 = vmatprep.mubr.bf16.mxu0 0
  %90 = vmatmul.mubr.bf16.gmra.mxu0 %v52
  %v91 = vpop.f32.mrf.mxu0
  %v92 = vadd.f32 %v36, %v91
  %v93 = vpop.f32.mrf.mxu0
  %v94 = vpop.f32.mrf.mxu0
  %v95 = vadd.f32 %v36, %v94
  %v96 = vpop.f32.mrf.mxu0
  %97 = vmatprep.mubr.bf16.mxu0 0
  %98 = vmatmul.mubr.bf16.gmra.mxu0 %v55
  %v99 = vpop.f32.mrf.mxu0
  %v100 = vadd.f32 %v36, %v99
  %v101 = vpop.f32.mrf.mxu0
  %v102 = vpop.f32.mrf.mxu0
  %v103 = vadd.f32 %v36, %v102
  %v104 = vpop.f32.mrf.mxu0
  %105 = vdwg.mxu0
  %v106 = vmax.f32 %v92, 0.0
  %v107 = vmax.f32 %v95, 0.0
  %v108 = vmax.f32 %v100, 0.0
  %v109 = vmax.f32 %v103, 0.0
  %v110 = vld [vmem:[%s3] sm:$0xf]
  %v111 = vld [vmem:[%s3 + $0x4] sm:$0xf]
  %v112 = vpack.c.bf16 %v107, %v106
  %v113 = vpack.c.bf16 %v109, %v108
  %v114 = vld [vmem:[%s4] sm:$0x1]
  %v116 = vlaneseq
  %v117 = vshrl.u32 %v116, 7
  %v118 = vsub.s32 0, %v117
  %v119 = vrot.slane %v114, %v118
  %v123 = vunpack.c.l.b16 %v110
  %v124 = vunpack.c.l.b16 %v111
  %v125 = vpack.c.b16 %v124, %v123
  %vm127 = vcmask 130048
  %v129 = vsel %vm127, %v112, 0
  %v132 = vsel %vm127, %v113, 0
  %134 = vmatprep.subr.bf16.mxu0 0
  %135 = vmatpush1.bf16.msra.mxu0 0
  %136 = vmatprep.subr.bf16.mxu0 0
  %137 = vmatpush1.bf16.msra.mxu0 0
  %138 = vmatprep.subr.bf16.mxu0 0
  %139 = vmatpush1.bf16.msra.mxu0 0
  %140 = vmatprep.subr.bf16.mxu0 0
  %141 = vmatpush1.bf16.msra.mxu0 0
  %142 = vmatprep.subr.bf16.mxu0 0
  %143 = vmatpush1.bf16.msra.mxu0 0
  %144 = vmatprep.subr.bf16.mxu0 0
  %145 = vmatpush1.bf16.msra.mxu0 0
  %146 = vmatprep.subr.bf16.mxu0 0
  %147 = vmatpush1.bf16.msra.mxu0 0
  %148 = vmatprep.subr.bf16.mxu0 0
  %149 = vmatpush1.bf16.msra.mxu0 %v125
  %150 = vmatprep.subr.bf16.mxu0 0
  %151 = vmatpush2.bf16.msra.mxu0 0
  %152 = vmatprep.subr.bf16.mxu0 0
  %153 = vmatpush2.bf16.msra.mxu0 0
  %154 = vmatprep.subr.bf16.mxu0 0
  %155 = vmatpush2.bf16.msra.mxu0 0
  %156 = vmatprep.subr.bf16.mxu0 0
  %157 = vmatpush2.bf16.msra.mxu0 0
  %158 = vmatprep.subr.bf16.mxu0 0
  %159 = vmatpush2.bf16.msra.mxu0 0
  %160 = vmatprep.subr.bf16.mxu0 0
  %161 = vmatpush2.bf16.msra.mxu0 0
  %162 = vmatprep.subr.bf16.mxu0 0
  %163 = vmatpush2.bf16.msra.mxu0 0
  %164 = vmatprep.subr.bf16.mxu0 0
  %165 = vmatpush2.bf16.msra.mxu0 0
  %166 = vmatprep.mubr.bf16.mxu0 0
  %167 = vmatmul.mubr.bf16.gmra.mxu0 %v129
  %v168 = vpop.f32.mrf.mxu0
  %v169 = vadd.f32 %v119, %v168
  %v170 = vpop.f32.mrf.mxu0
  %v171 = vpop.f32.mrf.mxu0
  %v172 = vadd.f32 %v119, %v171
  %v173 = vpop.f32.mrf.mxu0
  %174 = vmatprep.mubr.bf16.mxu0 0
  %175 = vmatmul.mubr.bf16.gmra.mxu0 %v132
  %v176 = vpop.f32.mrf.mxu0
  %v177 = vadd.f32 %v119, %v176
  %v178 = vpop.f32.mrf.mxu0
  %v179 = vpop.f32.mrf.mxu0
  %v180 = vadd.f32 %v119, %v179
  %v181 = vpop.f32.mrf.mxu0
  %182 = vdwg.mxu0
  %v183 = vpack.c.bf16 %v172, %v169
  %v184 = vpack.c.bf16 %v180, %v177
  %v187 = vunpack.c.l.b16 %v183
  %v188 = vunpack.c.h.b16 %v183
  %v189 = vunpack.c.l.b16 %v184
  %v190 = vunpack.c.h.b16 %v184
  %v191 = vpack.c.b16 %v187, %v187
  %v192 = vpack.c.b16 %v188, %v188
  %v193 = vpack.c.b16 %v189, %v189
  %v194 = vpack.c.b16 %v190, %v190
  %vm199 = vcmask 257024
  %200 = vst.msk [vmem:[%s5] sm:$0xf] %vm199, %v191
  %201 = vst.msk [vmem:[%s5 + $0x4] sm:$0xf] %vm199, %v192
  %202 = vst.msk [vmem:[%s5 + $0x8] sm:$0xf] %vm199, %v193
  %203 = vst.msk [vmem:[%s5 + $0xc] sm:$0xf] %vm199, %v194
  // Predicated region
  $region22: #{upsampler_forward.11} parent=0 // pred_check
    _
  $region23: #{upsampler_forward.11} parent=0 // pred_check_branch
    %205 = sbr.rel (0) target = $region25
  $region24: #{upsampler_forward.11} parent=0 // pred_region
    _
  $region25: #{upsampler_forward.11} parent=0 // pred_fallthru
    _
  // Predicated region
  $region26: #{upsampler_forward.11} parent=0 // pred_check
    _
  $region27: #{upsampler_forward.11} parent=0 // pred_check_branch
    %207 = sbr.rel (0) target = $region29
  $region28: #{upsampler_forward.11} parent=0 // pred_region
    _
  $region29: #{upsampler_forward.11} parent=0 // pred_fallthru
    _

// kernel: upsampler_forward.12
$region0: #{upsampler_forward.12}
  #allocation0 [shape = 'u32[]', space=smem, size = 0x4, offset = 0x4, fixed_abs, tag = 'smem constant byte address 0x4 - core index']
  #allocation1 [shape = 'u32[144,128]{1,0:T(1,128)}', space=vmem, size = 0x12000, scoped, tag = 'internal scratch']
  %s0 = inlined_call_operand.vmem [shape: f32[32,3], index: 0, kind: input, shape index: {}]
  %s1 = inlined_call_operand.vmem [shape: bf16[3,16], index: 1, kind: input, shape index: {}]
  %s2 = inlined_call_operand.vmem [shape: f32[1,16], index: 2, kind: input, shape index: {}]
  %s3 = inlined_call_operand.vmem [shape: bf16[16,32], index: 3, kind: input, shape index: {}]
  %s4 = inlined_call_operand.vmem [shape: f32[1,32], index: 4, kind: input, shape index: {}]
  %s5 = inlined_call_operand.vmem [shape: bf16[32,32], index: 5, kind: output, shape index: {}]
  %s6 = sld [smem:[#allocation0]]
  $region30: #{upsampler_forward.12} parent=0
    _
  %s8 = ssub.s32 1, %s6
  %s9 = scalar_select 0, %s8, %s6
  // Predicated region
  $region2: #{upsampler_forward.12} parent=0 // pred_check
    _
  $region3: #{upsampler_forward.12} parent=0 // pred_check_branch
    %11 = sbr.rel (0) target = $region5
  $region4: #{upsampler_forward.12} parent=0 // pred_region
    _
  $region5: #{upsampler_forward.12} parent=0 // pred_fallthru
    _
  // Predicated region
  $region6: #{upsampler_forward.12} parent=0 // pred_check
    _
  $region7: #{upsampler_forward.12} parent=0 // pred_check_branch
    %13 = sbr.rel (0) target = $region9
  $region8: #{upsampler_forward.12} parent=0 // pred_region
    _
  $region9: #{upsampler_forward.12} parent=0 // pred_fallthru
    _
  // Predicated region
  $region10: #{upsampler_forward.12} parent=0 // pred_check
    _
  $region11: #{upsampler_forward.12} parent=0 // pred_check_branch
    %15 = sbr.rel (0) target = $region13
  $region12: #{upsampler_forward.12} parent=0 // pred_region
    _
  $region13: #{upsampler_forward.12} parent=0 // pred_fallthru
    _
  // Predicated region
  $region14: #{upsampler_forward.12} parent=0 // pred_check
    _
  $region15: #{upsampler_forward.12} parent=0 // pred_check_branch
    %17 = sbr.rel (0) target = $region17
  $region16: #{upsampler_forward.12} parent=0 // pred_region
    _
  $region17: #{upsampler_forward.12} parent=0 // pred_fallthru
    _
  // Predicated region
  $region18: #{upsampler_forward.12} parent=0 // pred_check
    _
  $region19: #{upsampler_forward.12} parent=0 // pred_check_branch
    %19 = sbr.rel (0) target = $region21
  $region20: #{upsampler_forward.12} parent=0 // pred_region
    _
  $region21: #{upsampler_forward.12} parent=0 // pred_fallthru
    _
  %v21 = vld [vmem:[%s0] sm:$0xff]
  %v22 = vld [vmem:[%s0 + $0x8] sm:$0xff]
  %v23 = vld [vmem:[%s0 + $0x10] sm:$0xff]
  %v24 = vld [vmem:[%s0 + $0x18] sm:$0xff]
  %v25 = vld [vmem:[%s1] sm:$0x3]
  %v26 = vpack.c.bf16 %v22, %v21
  %v27 = vpack.c.bf16 %v24, %v23
  %v28 = vld [vmem:[%s2] sm:$0x1]
  %v30 = vlaneseq
  %v31 = vshrl.u32 %v30, 7
  %v32 = vsub.s32 0, %v31
  %v33 = vrot.slane %v28, %v32
  %vm35 = vcmask 23552
  %v37 = vsel %vm35, %v26, 0
  %v40 = vsel %vm35, %v27, 0
  %vm42 = vcmask 1040384
  %vm43 = vcmask 1041408
  %v44 = vsel %vm42, 4294967295, 65535
  %v45 = vsel %vm43, %v44, 0
  %v47 = vand.u32 %v25, %v45
  %49 = vmatprep.subr.bf16.mxu0 0
  %50 = vmatpush1.bf16.msra.mxu0 0
  %51 = vmatprep.subr.bf16.mxu0 0
  %52 = vmatpush1.bf16.msra.mxu0 0
  %53 = vmatprep.subr.bf16.mxu0 0
  %54 = vmatpush1.bf16.msra.mxu0 0
  %55 = vmatprep.subr.bf16.mxu0 0
  %56 = vmatpush1.bf16.msra.mxu0 0
  %57 = vmatprep.subr.bf16.mxu0 0
  %58 = vmatpush1.bf16.msra.mxu0 0
  %59 = vmatprep.subr.bf16.mxu0 0
  %60 = vmatpush1.bf16.msra.mxu0 0
  %61 = vmatprep.subr.bf16.mxu0 0
  %62 = vmatpush1.bf16.msra.mxu0 0
  %63 = vmatprep.subr.bf16.mxu0 0
  %64 = vmatpush1.bf16.msra.mxu0 %v47
  %65 = vmatprep.subr.bf16.mxu0 0
  %66 = vmatpush2.bf16.msra.mxu0 0
  %67 = vmatprep.subr.bf16.mxu0 0
  %68 = vmatpush2.bf16.msra.mxu0 0
  %69 = vmatprep.subr.bf16.mxu0 0
  %70 = vmatpush2.bf16.msra.mxu0 0
  %71 = vmatprep.subr.bf16.mxu0 0
  %72 = vmatpush2.bf16.msra.mxu0 0
  %73 = vmatprep.subr.bf16.mxu0 0
  %74 = vmatpush2.bf16.msra.mxu0 0
  %75 = vmatprep.subr.bf16.mxu0 0
  %76 = vmatpush2.bf16.msra.mxu0 0
  %77 = vmatprep.subr.bf16.mxu0 0
  %78 = vmatpush2.bf16.msra.mxu0 0
  %79 = vmatprep.subr.bf16.mxu0 0
  %80 = vmatpush2.bf16.msra.mxu0 0
  %81 = vmatprep.mubr.bf16.mxu0 0
  %82 = vmatmul.mubr.bf16.gmra.mxu0 %v37
  %v83 = vpop.f32.mrf.mxu0
  %v84 = vadd.f32 %v33, %v83
  %v85 = vpop.f32.mrf.mxu0
  %v86 = vpop.f32.mrf.mxu0
  %v87 = vadd.f32 %v33, %v86
  %v88 = vpop.f32.mrf.mxu0
  %89 = vmatprep.mubr.bf16.mxu0 0
  %90 = vmatmul.mubr.bf16.gmra.mxu0 %v40
  %v91 = vpop.f32.mrf.mxu0
  %v92 = vadd.f32 %v33, %v91
  %v93 = vpop.f32.mrf.mxu0
  %v94 = vpop.f32.mrf.mxu0
  %v95 = vadd.f32 %v33, %v94
  %v96 = vpop.f32.mrf.mxu0
  %97 = vdwg.mxu0
  %v98 = vmax.f32 %v84, 0.0
  %v99 = vmax.f32 %v87, 0.0
  %v100 = vmax.f32 %v92, 0.0
  %v101 = vmax.f32 %v95, 0.0
  %v102 = vld [vmem:[%s3] sm:$0xf]
  %v103 = vld [vmem:[%s3 + $0x4] sm:$0xf]
  %v104 = vpack.c.bf16 %v99, %v98
  %v105 = vpack.c.bf16 %v101, %v100
  %v106 = vld [vmem:[%s4] sm:$0x1]
  %v108 = vlaneseq
  %v109 = vshrl.u32 %v108, 7
  %v110 = vsub.s32 0, %v109
  %v111 = vrot.slane %v106, %v110
  %v115 = vunpack.c.l.b16 %v102
  %v116 = vunpack.c.l.b16 %v103
  %v117 = vpack.c.b16 %v116, %v115
  %vm119 = vcmask 130048
  %v121 = vsel %vm119, %v104, 0
  %v124 = vsel %vm119, %v105, 0
  %126 = vmatprep.subr.bf16.mxu0 0
  %127 = vmatpush1.bf16.msra.mxu0 0
  %128 = vmatprep.subr.bf16.mxu0 0
  %129 = vmatpush1.bf16.msra.mxu0 0
  %130 = vmatprep.subr.bf16.mxu0 0
  %131 = vmatpush1.bf16.msra.mxu0 0
  %132 = vmatprep.subr.bf16.mxu0 0
  %133 = vmatpush1.bf16.msra.mxu0 0
  %134 = vmatprep.subr.bf16.mxu0 0
  %135 = vmatpush1.bf16.msra.mxu0 0
  %136 = vmatprep.subr.bf16.mxu0 0
  %137 = vmatpush1.bf16.msra.mxu0 0
  %138 = vmatprep.subr.bf16.mxu0 0
  %139 = vmatpush1.bf16.msra.mxu0 0
  %140 = vmatprep.subr.bf16.mxu0 0
  %141 = vmatpush1.bf16.msra.mxu0 %v117
  %142 = vmatprep.subr.bf16.mxu0 0
  %143 = vmatpush2.bf16.msra.mxu0 0
  %144 = vmatprep.subr.bf16.mxu0 0
  %145 = vmatpush2.bf16.msra.mxu0 0
  %146 = vmatprep.subr.bf16.mxu0 0
  %147 = vmatpush2.bf16.msra.mxu0 0
  %148 = vmatprep.subr.bf16.mxu0 0
  %149 = vmatpush2.bf16.msra.mxu0 0
  %150 = vmatprep.subr.bf16.mxu0 0
  %151 = vmatpush2.bf16.msra.mxu0 0
  %152 = vmatprep.subr.bf16.mxu0 0
  %153 = vmatpush2.bf16.msra.mxu0 0
  %154 = vmatprep.subr.bf16.mxu0 0
  %155 = vmatpush2.bf16.msra.mxu0 0
  %156 = vmatprep.subr.bf16.mxu0 0
  %157 = vmatpush2.bf16.msra.mxu0 0
  %158 = vmatprep.mubr.bf16.mxu0 0
  %159 = vmatmul.mubr.bf16.gmra.mxu0 %v121
  %v160 = vpop.f32.mrf.mxu0
  %v161 = vadd.f32 %v111, %v160
  %v162 = vpop.f32.mrf.mxu0
  %v163 = vpop.f32.mrf.mxu0
  %v164 = vadd.f32 %v111, %v163
  %v165 = vpop.f32.mrf.mxu0
  %166 = vmatprep.mubr.bf16.mxu0 0
  %167 = vmatmul.mubr.bf16.gmra.mxu0 %v124
  %v168 = vpop.f32.mrf.mxu0
  %v169 = vadd.f32 %v111, %v168
  %v170 = vpop.f32.mrf.mxu0
  %v171 = vpop.f32.mrf.mxu0
  %v172 = vadd.f32 %v111, %v171
  %v173 = vpop.f32.mrf.mxu0
  %174 = vdwg.mxu0
  %v175 = vpack.c.bf16 %v164, %v161
  %v176 = vpack.c.bf16 %v172, %v169
  %v179 = vunpack.c.l.b16 %v175
  %v180 = vunpack.c.h.b16 %v175
  %v181 = vunpack.c.l.b16 %v176
  %v182 = vunpack.c.h.b16 %v176
  %v183 = vpack.c.b16 %v179, %v179
  %v184 = vpack.c.b16 %v180, %v180
  %v185 = vpack.c.b16 %v181, %v181
  %v186 = vpack.c.b16 %v182, %v182
  %vm191 = vcmask 257024
  %192 = vst.msk [vmem:[%s5] sm:$0xf] %vm191, %v183
  %193 = vst.msk [vmem:[%s5 + $0x4] sm:$0xf] %vm191, %v184
  %194 = vst.msk [vmem:[%s5 + $0x8] sm:$0xf] %vm191, %v185
  %195 = vst.msk [vmem:[%s5 + $0xc] sm:$0xf] %vm191, %v186
  // Predicated region
  $region22: #{upsampler_forward.12} parent=0 // pred_check
    _
  $region23: #{upsampler_forward.12} parent=0 // pred_check_branch
    %197 = sbr.rel (0) target = $region25
  $region24: #{upsampler_forward.12} parent=0 // pred_region
    _
  $region25: #{upsampler_forward.12} parent=0 // pred_fallthru
    _
  // Predicated region
  $region26: #{upsampler_forward.12} parent=0 // pred_check
    _
  $region27: #{upsampler_forward.12} parent=0 // pred_check_branch
    %199 = sbr.rel (0) target = $region29
  $region28: #{upsampler_forward.12} parent=0 // pred_region
    _
  $region29: #{upsampler_forward.12} parent=0 // pred_fallthru
    _

// kernel: neg.5
$region0: #{neg.5}
  #allocation0 [shape = 's32[1]{0}', space=sflag, size = 0x4, scoped, tag = 'scoped memory for neg.5']
  %s0 = inlined_call_operand.vmem [shape: f32[2,16,16], index: 0, kind: input, shape index: {}]
  %s1 = inlined_call_operand.vmem [shape: f32[2,16,16], index: 1, kind: output, shape index: {}]
  %v2 = vld [vmem:[%s0] sm:$0xff]
  %3 = xla_tuple %v2
  %4 = xla_tuple %3
  %v5 = vxor.u32 %v2, 2147483648
  %6 = xla_tuple %v5
  %7 = vst [vmem:[%s1] sm:$0xff] %v5
  %s8 = scalar_lea.vmem %s0, 16
  %v9 = vld [vmem:[%s8] sm:$0xff]
  %10 = xla_tuple %v9
  %11 = xla_tuple %10
  %v12 = vxor.u32 %v9, 2147483648
  %13 = xla_tuple %v12
  %s14 = scalar_lea.vmem %s1, 16
  %15 = vst [vmem:[%s14] sm:$0xff] %v12
  %s16 = scalar_lea.vmem %s0, 8
  %v17 = vld [vmem:[%s16] sm:$0xff]
  %18 = xla_tuple %v17
  %19 = xla_tuple %18
  %v20 = vxor.u32 %v17, 2147483648
  %21 = xla_tuple %v20
  %s22 = scalar_lea.vmem %s1, 8
  %23 = vst [vmem:[%s22] sm:$0xff] %v20
  %s24 = scalar_lea.vmem %s0, 24
  %v25 = vld [vmem:[%s24] sm:$0xff]
  %26 = xla_tuple %v25
  %27 = xla_tuple %26
  %v28 = vxor.u32 %v25, 2147483648
  %29 = xla_tuple %v28
  %s30 = scalar_lea.vmem %s1, 24
  %31 = vst [vmem:[%s30] sm:$0xff] %v28

// kernel: upsampler_forward.14
$region0: #{upsampler_forward.14}
  #allocation0 [shape = 'u32[]', space=smem, size = 0x4, offset = 0x4, fixed_abs, tag = 'smem constant byte address 0x4 - core index']
  #allocation1 [shape = 'u32[144,128]{1,0:T(1,128)}', space=vmem, size = 0x12000, scoped, tag = 'internal scratch']
  %s0 = inlined_call_operand.vmem [shape: f32[2,16,3], index: 0, kind: input, shape index: {}]
  %s1 = inlined_call_operand.vmem [shape: f32[2,3,16], index: 1, kind: input, shape index: {}]
  %s2 = inlined_call_operand.vmem [shape: f32[2,16,16], index: 2, kind: output, shape index: {}]
  %s3 = sld [smem:[#allocation0]]
  $region41: #{upsampler_forward.14} parent=0
    _
  %s5 = ssub.s32 1, %s3
  %s6 = scalar_select 0, %s5, %s3
  loop: start=0, step=1, limit=4
  $region2: #{upsampler_forward.14} parent=0 // loop_pre_header
    _
  $region3: #{upsampler_forward.14} parent=0 // loop_header
    %s8 = sphi 0, %s12
    %p9 = scmp.ge.s32.totalorder %s8, 4
    %s15 = sphi 0, %s27
    %s16 = sphi 0, %s23
    %s17 = sphi 0, %s15
    %s18 = sphi 0, %s16
    %s19 = sphi 0, %s17
    %s20 = sphi 0, %s18
    %s32 = sphi 0, %s34
    %s35 = sphi 0, %s32
    %s36 = sphi 0, %s35
    %s52 = sphi 0, %s36
    %s58 = sphi 0, %s60
    %s61 = sphi 0, %s58
    %s62 = sphi 0, %s61
    %s78 = sphi 0, %s62
    %s86 = sphi 0, %s88
    %s89 = sphi 0, %s86
    %s90 = sphi 0, %s89
    %s106 = sphi 0, %s90
  $region4: #{upsampler_forward.14} parent=0 // loop_header_branch
    %11 = sbr.rel (%p9) target = $region8
  $region5: #{upsampler_forward.14} parent=0 // loop_body
    %s13 = ssub.s32 %s8, 1
    %s14 = ssub.s32 %s8, 2
    %s21 = sadd.s32 1, %s16
    %p22 = scmp.ge.s32.totalorder %s21, 1
    %s23 = scalar_select %p22, 0, %s21
    %s24 = sadd.s32 1, %s15
    %s25 = scalar_select %p22, %s24, %s15
    %p26 = scmp.ge.s32.totalorder %s25, 2
    %s27 = scalar_select %p26, 0, %s25
    %s28 = ssub.s32 %s15, %s27
    %s29 = ssub.s32 %s16, %s23
    %s30 = sor.u32 %s28, %s29
    %p31 = scmp.eq.s32.totalorder %s30, 0
    %s33 = sadd.s32 %s32, 1
    %s34 = scalar_select %p31, %s32, %s33
    %p37 = pneg %p31
    %p38 = scmp.eq.s32.totalorder %s8, 1
    %p39 = por %p37, %p38
    %p40 = scmp.ne.s32.totalorder %s32, %s35
    %p41 = scmp.eq.s32.totalorder %s8, 0
    %p42 = por %p40, %p41
    %p43 = scmp.ne.s32.totalorder %s32, %s35
    %p44 = scmp.eq.s32.totalorder %s13, 1
    %p45 = por %p43, %p44
    %p46 = scmp.ne.s32.totalorder %s35, %s36
    %p47 = scmp.eq.s32.totalorder %s13, 0
    %p48 = por %p46, %p47
    %p49 = scmp.ne.s32.totalorder %s35, %s36
    %p50 = scmp.eq.s32.totalorder %s14, 1
    %p51 = por %p49, %p50
    %p53 = scmp.ne.s32.totalorder %s36, %s52
    %p54 = scmp.eq.s32.totalorder %s14, 0
    %p55 = por %p53, %p54
    %s56 = ssub.s32 %s15, %s27
    %p57 = scmp.eq.s32.totalorder %s56, 0
    %s59 = sadd.s32 %s58, 1
    %s60 = scalar_select %p57, %s58, %s59
    %p63 = pneg %p57
    %p64 = scmp.eq.s32.totalorder %s8, 1
    %p65 = por %p63, %p64
    %p66 = scmp.ne.s32.totalorder %s58, %s61
    %p67 = scmp.eq.s32.totalorder %s8, 0
    %p68 = por %p66, %p67
    %p69 = scmp.ne.s32.totalorder %s58, %s61
    %p70 = scmp.eq.s32.totalorder %s13, 1
    %p71 = por %p69, %p70
    %p72 = scmp.ne.s32.totalorder %s61, %s62
    %p73 = scmp.eq.s32.totalorder %s13, 0
    %p74 = por %p72, %p73
    %p75 = scmp.ne.s32.totalorder %s61, %s62
    %p76 = scmp.eq.s32.totalorder %s14, 1
    %p77 = por %p75, %p76
    %p79 = scmp.ne.s32.totalorder %s62, %s78
    %p80 = scmp.eq.s32.totalorder %s14, 0
    %p81 = por %p79, %p80
    %s82 = ssub.s32 %s15, %s27
    %s83 = ssub.s32 %s16, %s23
    %s84 = sor.u32 %s82, %s83
    %p85 = scmp.eq.s32.totalorder %s84, 0
    %s87 = sadd.s32 %s86, 1
    %s88 = scalar_select %p85, %s86, %s87
    %p91 = pneg %p85
    %p92 = scmp.eq.s32.totalorder %s8, 1
    %p93 = por %p91, %p92
    %p94 = scmp.ne.s32.totalorder %s86, %s89
    %p95 = scmp.eq.s32.totalorder %s8, 0
    %p96 = por %p94, %p95
    %p97 = scmp.ne.s32.totalorder %s86, %s89
    %p98 = scmp.eq.s32.totalorder %s13, 1
    %p99 = por %p97, %p98
    %p100 = scmp.ne.s32.totalorder %s89, %s90
    %p101 = scmp.eq.s32.totalorder %s13, 0
    %p102 = por %p100, %p101
    %p103 = scmp.ne.s32.totalorder %s89, %s90
    %p104 = scmp.eq.s32.totalorder %s14, 1
    %p105 = por %p103, %p104
    %p107 = scmp.ne.s32.totalorder %s90, %s106
    %p108 = scmp.eq.s32.totalorder %s14, 0
    %p109 = por %p107, %p108
    %p110 = scmp.le.s32.totalorder 1, %s8
    %p111 = scmp.lt.s32.totalorder %s8, 3
    %p112 = pnand %p110, %p111
    %p113 = pneg %p112
    // Predicated region
    $region9: #{upsampler_forward.14} parent=5 // pred_check
      _
    $region10: #{upsampler_forward.14} parent=5 // pred_check_branch
      %115 = sbr.rel (%p112) target = $region12
    $region11: #{upsampler_forward.14} parent=5 // pred_region
      %s116 = ssub.s32 %s8, 1
    $region12: #{upsampler_forward.14} parent=5 // pred_fallthru
      _
    %p117 = scmp.lt.s32.totalorder %s8, 2
    // Predicated region
    $region13: #{upsampler_forward.14} parent=5 // pred_check
      %p118 = pneg %p117
    $region14: #{upsampler_forward.14} parent=5 // pred_check_branch
      %120 = sbr.rel (%p118) target = $region16
    $region15: #{upsampler_forward.14} parent=5 // pred_region
      // Predicated region
      $region17: #{upsampler_forward.14} parent=15 // pred_check
        %p121 = pneg %p42
      $region18: #{upsampler_forward.14} parent=15 // pred_check_branch
        %123 = sbr.rel (%p121) target = $region20
      $region19: #{upsampler_forward.14} parent=15 // pred_region
        %s124 = smul.u32 2, %s16
        %p125 = scmp.lt.s32.totalorder %s15, 1
        %s126 = scalar_select %p125, %s15, 1
        %p127 = scmp.lt.s32.totalorder %s124, 1
        %s128 = scalar_select %p127, %s124, 1
        %s129 = smul.addr %s126, 2
        %s130 = sadd.s32 %s128, %s129
        %s131 = smul.addr %s130, 8
        %s132 = scalar_lea.vmem %s0, %s131
        %s133 = smul.u32 2, %s16
      $region20: #{upsampler_forward.14} parent=15 // pred_fallthru
        _
      // Predicated region
      $region21: #{upsampler_forward.14} parent=15 // pred_check
        %p134 = pneg %p68
      $region22: #{upsampler_forward.14} parent=15 // pred_check_branch
        %136 = sbr.rel (%p134) target = $region24
      $region23: #{upsampler_forward.14} parent=15 // pred_region
        %p137 = scmp.lt.s32.totalorder %s15, 1
        %s138 = scalar_select %p137, %s15, 1
        %s139 = smul.addr %s138, 4
        %s140 = scalar_lea.vmem %s1, %s139
      $region24: #{upsampler_forward.14} parent=15 // pred_fallthru
        _
    $region16: #{upsampler_forward.14} parent=5 // pred_fallthru
      _
    %p141 = scmp.le.s32.totalorder 1, %s8
    %p142 = scmp.lt.s32.totalorder %s8, 3
    %p143 = pnand %p141, %p142
    %p144 = pneg %p143
    // Predicated region
    $region25: #{upsampler_forward.14} parent=5 // pred_check
      _
    $region26: #{upsampler_forward.14} parent=5 // pred_check_branch
      %146 = sbr.rel (%p143) target = $region28
    $region27: #{upsampler_forward.14} parent=5 // pred_region
      %s147 = ssub.s32 %s8, 1
      %s148 = smul.u32 2, %s18
      %p149 = scmp.lt.s32.totalorder %s17, 1
      %s150 = scalar_select %p149, %s17, 1
      %p151 = scmp.lt.s32.totalorder %s148, 1
      %s152 = scalar_select %p151, %s148, 1
      %s153 = smul.addr %s150, 2
      %s154 = sadd.s32 %s152, %s153
      %s155 = smul.addr %s154, 8
      %s156 = scalar_lea.vmem %s0, %s155
      %p157 = pneg %p48
      %p158 = pneg %p45
      %p159 = scmp.lt.s32.totalorder %s17, 1
      %s160 = scalar_select %p159, %s17, 1
      %s161 = smul.addr %s160, 4
      %s162 = scalar_lea.vmem %s1, %s161
      %p163 = pneg %p74
      %p164 = pneg %p71
      %p165 = pneg %p102
      %p166 = pneg %p99
      %s167 = smul.u32 2, %s18
      %p168 = scmp.lt.s32.totalorder %s17, 1
      %s169 = scalar_select %p168, %s17, 1
      %p170 = scmp.lt.s32.totalorder %s167, 1
      %s171 = scalar_select %p170, %s167, 1
      %s172 = smul.addr %s169, 2
      %s173 = sadd.s32 %s171, %s172
      %s174 = smul.addr %s173, 8
      %s175 = scalar_lea.vmem %s2, %s174
      %s176 = smul.u32 2, %s18
      %p177 = scmp.lt.s32.totalorder %s17, 1
      %s178 = scalar_select %p177, %s17, 1
      %p179 = scmp.lt.s32.totalorder %s176, 1
      %s180 = scalar_select %p179, %s176, 1
      %s181 = smul.addr %s178, 2
      %s182 = sadd.s32 %s180, %s181
      %s183 = smul.addr %s182, 8
      %s184 = scalar_lea.vmem %s0, %s183
      %s185 = smul.u32 2, %s18
      %p186 = scmp.lt.s32.totalorder %s17, 1
      %s187 = scalar_select %p186, %s17, 1
      %s188 = smul.addr %s187, 4
      %s189 = scalar_lea.vmem %s1, %s188
      %s190 = smul.u32 2, %s18
      %p191 = scmp.lt.s32.totalorder %s17, 1
      %s192 = scalar_select %p191, %s17, 1
      %p193 = scmp.lt.s32.totalorder %s190, 1
      %s194 = scalar_select %p193, %s190, 1
      %s195 = smul.addr %s192, 2
      %s196 = sadd.s32 %s194, %s195
      %s197 = smul.addr %s196, 8
      %s198 = scalar_lea.vmem %s2, %s197
      %s199 = smul.u32 2, %s18
      %v200 = vld [vmem:[%s184] sm:$0xff]
      %v201 = vld [vmem:[%s184 + $0x8] sm:$0xff]
      %v202 = vld [vmem:[%s189] sm:$0x7]
      %204 = vset.pattern.permute.xlu0 0
      %205 = vperm.xlu0 %204, %v200
      %v206 = vpop.permute.xlu0 %205
      %209 = vset.pattern.permute.xlu0 0
      %210 = vperm.xlu0 %209, %v201
      %v211 = vpop.permute.xlu0 %210
      %v213 = vlaneseq
      %v214 = vshrl.u32 %v213, 7
      %v215 = vsub.s32 0, %v214
      %v216 = vrot.slane %v202, %v215
      %v217 = vsub.f32 %v206, %v216
      %v218 = vsub.f32 %v211, %v216
      %v219 = vmul.f32 %v217, %v217
      %v220 = vmul.f32 %v218, %v218
      %221 = vset.pattern.permute.xlu0 1
      %222 = vperm.xlu0 %221, %v200
      %v223 = vpop.permute.xlu0 %222
      %225 = vset.pattern.permute.xlu0 1
      %226 = vperm.xlu0 %225, %v201
      %v227 = vpop.permute.xlu0 %226
      %v229 = vlaneseq
      %v230 = vshrl.u32 %v229, 7
      %v231 = vsub.s32 1, %v230
      %v232 = vrot.slane %v202, %v231
      %v233 = vsub.f32 %v223, %v232
      %v234 = vsub.f32 %v227, %v232
      %v235 = vmul.f32 %v233, %v233
      %v236 = vmul.f32 %v234, %v234
      %v237 = vadd.f32 %v219, %v235
      %v238 = vadd.f32 %v220, %v236
      %239 = vset.pattern.permute.xlu0 2
      %240 = vperm.xlu0 %239, %v200
      %v241 = vpop.permute.xlu0 %240
      %243 = vset.pattern.permute.xlu0 2
      %244 = vperm.xlu0 %243, %v201
      %v245 = vpop.permute.xlu0 %244
      %v247 = vlaneseq
      %v248 = vshrl.u32 %v247, 7
      %v249 = vsub.s32 2, %v248
      %v250 = vrot.slane %v202, %v249
      %v251 = vsub.f32 %v241, %v250
      %v252 = vsub.f32 %v245, %v250
      %v253 = vmul.f32 %v251, %v251
      %v254 = vmul.f32 %v252, %v252
      %v255 = vadd.f32 %v237, %v253
      %v256 = vadd.f32 %v238, %v254
      %vm257 = vcmask 130048
      %258 = vst.msk [vmem:[%s198] sm:$0xff] %vm257, %v255
      %259 = vst.msk [vmem:[%s198 + $0x8] sm:$0xff] %vm257, %v256
      %s260 = smul.u32 2, %s18
      %p261 = scmp.lt.s32.totalorder %s17, 1
      %s262 = scalar_select %p261, %s17, 1
      %p263 = scmp.lt.s32.totalorder %s260, 1
      %s264 = scalar_select %p263, %s260, 1
      %s265 = smul.addr %s262, 2
      %s266 = sadd.s32 %s264, %s265
      %s267 = smul.addr %s266, 8
      %s268 = scalar_lea.vmem %s2, %s267
      // Predicated region
      $region29: #{upsampler_forward.14} parent=27 // pred_check
        %p269 = pneg %p99
      $region30: #{upsampler_forward.14} parent=27 // pred_check_branch
        %271 = sbr.rel (%p269) target = $region32
      $region31: #{upsampler_forward.14} parent=27 // pred_region
        %s272 = smul.u32 2, %s18
      $region32: #{upsampler_forward.14} parent=27 // pred_fallthru
        _
    $region28: #{upsampler_forward.14} parent=5 // pred_fallthru
      _
    %p273 = scmp.le.s32.totalorder 2, %s8
    // Predicated region
    $region33: #{upsampler_forward.14} parent=5 // pred_check
      %p274 = pneg %p273
    $region34: #{upsampler_forward.14} parent=5 // pred_check_branch
      %276 = sbr.rel (%p274) target = $region36
    $region35: #{upsampler_forward.14} parent=5 // pred_region
      %s277 = ssub.s32 %s8, 2
      // Predicated region
      $region37: #{upsampler_forward.14} parent=35 // pred_check
        %p278 = pneg %p105
      $region38: #{upsampler_forward.14} parent=35 // pred_check_branch
        %280 = sbr.rel (%p278) target = $region40
      $region39: #{upsampler_forward.14} parent=35 // pred_region
        %s281 = smul.u32 2, %s20
        %p282 = scmp.lt.s32.totalorder %s19, 1
        %s283 = scalar_select %p282, %s19, 1
        %p284 = scmp.lt.s32.totalorder %s281, 1
        %s285 = scalar_select %p284, %s281, 1
        %s286 = smul.addr %s283, 2
        %s287 = sadd.s32 %s285, %s286
        %s288 = smul.addr %s287, 8
        %s289 = scalar_lea.vmem %s2, %s288
      $region40: #{upsampler_forward.14} parent=35 // pred_fallthru
        _
    $region36: #{upsampler_forward.14} parent=5 // pred_fallthru
      _
  $region6: #{upsampler_forward.14} parent=0 // loop_footer
    %s12 = sadd.s32 1, %s8
  $region7: #{upsampler_forward.14} parent=0 // loop_footer_branch
    %7 = sbr.rel target = $region3
  $region8: #{upsampler_forward.14} parent=0 // loop_exit
    _

// kernel: upsampler_forward.13
$region0: #{upsampler_forward.13}
  #allocation0 [shape = 'u32[]', space=smem, size = 0x4, offset = 0x4, fixed_abs, tag = 'smem constant byte address 0x4 - core index']
  #allocation1 [shape = 'u32[144,128]{1,0:T(1,128)}', space=vmem, size = 0x12000, scoped, tag = 'internal scratch']
  %s0 = inlined_call_operand.vmem [shape: bf16[2,16,32], index: 0, kind: input, shape index: {}]
  %s1 = inlined_call_operand.vmem [shape: bf16[2,16,32], index: 1, kind: input, shape index: {}]
  %s2 = inlined_call_operand.vmem [shape: bf16[2,1,32], index: 2, kind: input, shape index: {}]
  %s3 = inlined_call_operand.vmem [shape: bf16[32,64], index: 3, kind: input, shape index: {}]
  %s4 = inlined_call_operand.vmem [shape: bf16[32,64], index: 4, kind: input, shape index: {}]
  %s5 = inlined_call_operand.vmem [shape: bf16[32,64], index: 5, kind: input, shape index: {}]
  %s6 = inlined_call_operand.vmem [shape: f32[1,64], index: 6, kind: input, shape index: {}]
  %s7 = inlined_call_operand.vmem [shape: bf16[64,32], index: 7, kind: input, shape index: {}]
  %s8 = inlined_call_operand.vmem [shape: f32[1,32], index: 8, kind: input, shape index: {}]
  %s9 = inlined_call_operand.vmem [shape: bf16[2,16,32], index: 9, kind: output, shape index: {}]
  %s10 = sld [smem:[#allocation0]]
  $region69: #{upsampler_forward.13} parent=0
    _
  %s12 = ssub.s32 1, %s10
  %s13 = scalar_select 0, %s12, %s10
  loop: start=0, step=1, limit=4
  $region2: #{upsampler_forward.13} parent=0 // loop_pre_header
    _
  $region3: #{upsampler_forward.13} parent=0 // loop_header
    %s15 = sphi 0, %s19
    %p16 = scmp.ge.s32.totalorder %s15, 4
    %s22 = sphi 0, %s34
    %s23 = sphi 0, %s30
    %s24 = sphi 0, %s22
    %s25 = sphi 0, %s23
    %s26 = sphi 0, %s24
    %s27 = sphi 0, %s25
    %s39 = sphi 0, %s41
    %s42 = sphi 0, %s39
    %s43 = sphi 0, %s42
    %s59 = sphi 0, %s43
    %s67 = sphi 0, %s69
    %s70 = sphi 0, %s67
    %s71 = sphi 0, %s70
    %s87 = sphi 0, %s71
    %s93 = sphi 0, %s95
    %s96 = sphi 0, %s93
    %s97 = sphi 0, %s96
    %s113 = sphi 0, %s97
    %s117 = sphi 0, %s117
    %s119 = sphi 0, %s117
    %s120 = sphi 0, %s119
    %s134 = sphi 0, %s120
    %s138 = sphi 0, %s138
    %s140 = sphi 0, %s138
    %s141 = sphi 0, %s140
    %s155 = sphi 0, %s141
    %s159 = sphi 0, %s159
    %s161 = sphi 0, %s159
    %s162 = sphi 0, %s161
    %s176 = sphi 0, %s162
    %s180 = sphi 0, %s180
    %s182 = sphi 0, %s180
    %s183 = sphi 0, %s182
    %s197 = sphi 0, %s183
    %s201 = sphi 0, %s201
    %s203 = sphi 0, %s201
    %s204 = sphi 0, %s203
    %s218 = sphi 0, %s204
    %s222 = sphi 0, %s222
    %s224 = sphi 0, %s222
    %s225 = sphi 0, %s224
    %s239 = sphi 0, %s225
    %s247 = sphi 0, %s249
    %s250 = sphi 0, %s247
    %s251 = sphi 0, %s250
    %s267 = sphi 0, %s251
  $region4: #{upsampler_forward.13} parent=0 // loop_header_branch
    %18 = sbr.rel (%p16) target = $region8
  $region5: #{upsampler_forward.13} parent=0 // loop_body
    %s20 = ssub.s32 %s15, 1
    %s21 = ssub.s32 %s15, 2
    %s28 = sadd.s32 1, %s23
    %p29 = scmp.ge.s32.totalorder %s28, 1
    %s30 = scalar_select %p29, 0, %s28
    %s31 = sadd.s32 1, %s22
    %s32 = scalar_select %p29, %s31, %s22
    %p33 = scmp.ge.s32.totalorder %s32, 2
    %s34 = scalar_select %p33, 0, %s32
    %s35 = ssub.s32 %s22, %s34
    %s36 = ssub.s32 %s23, %s30
    %s37 = sor.u32 %s35, %s36
    %p38 = scmp.eq.s32.totalorder %s37, 0
    %s40 = sadd.s32 %s39, 1
    %s41 = scalar_select %p38, %s39, %s40
    %p44 = pneg %p38
    %p45 = scmp.eq.s32.totalorder %s15, 1
    %p46 = por %p44, %p45
    %p47 = scmp.ne.s32.totalorder %s39, %s42
    %p48 = scmp.eq.s32.totalorder %s15, 0
    %p49 = por %p47, %p48
    %p50 = scmp.ne.s32.totalorder %s39, %s42
    %p51 = scmp.eq.s32.totalorder %s20, 1
    %p52 = por %p50, %p51
    %p53 = scmp.ne.s32.totalorder %s42, %s43
    %p54 = scmp.eq.s32.totalorder %s20, 0
    %p55 = por %p53, %p54
    %p56 = scmp.ne.s32.totalorder %s42, %s43
    %p57 = scmp.eq.s32.totalorder %s21, 1
    %p58 = por %p56, %p57
    %p60 = scmp.ne.s32.totalorder %s43, %s59
    %p61 = scmp.eq.s32.totalorder %s21, 0
    %p62 = por %p60, %p61
    %s63 = ssub.s32 %s22, %s34
    %s64 = ssub.s32 %s23, %s30
    %s65 = sor.u32 %s63, %s64
    %p66 = scmp.eq.s32.totalorder %s65, 0
    %s68 = sadd.s32 %s67, 1
    %s69 = scalar_select %p66, %s67, %s68
    %p72 = pneg %p66
    %p73 = scmp.eq.s32.totalorder %s15, 1
    %p74 = por %p72, %p73
    %p75 = scmp.ne.s32.totalorder %s67, %s70
    %p76 = scmp.eq.s32.totalorder %s15, 0
    %p77 = por %p75, %p76
    %p78 = scmp.ne.s32.totalorder %s67, %s70
    %p79 = scmp.eq.s32.totalorder %s20, 1
    %p80 = por %p78, %p79
    %p81 = scmp.ne.s32.totalorder %s70, %s71
    %p82 = scmp.eq.s32.totalorder %s20, 0
    %p83 = por %p81, %p82
    %p84 = scmp.ne.s32.totalorder %s70, %s71
    %p85 = scmp.eq.s32.totalorder %s21, 1
    %p86 = por %p84, %p85
    %p88 = scmp.ne.s32.totalorder %s71, %s87
    %p89 = scmp.eq.s32.totalorder %s21, 0
    %p90 = por %p88, %p89
    %s91 = ssub.s32 %s22, %s34
    %p92 = scmp.eq.s32.totalorder %s91, 0
    %s94 = sadd.s32 %s93, 1
    %s95 = scalar_select %p92, %s93, %s94
    %p98 = pneg %p92
    %p99 = scmp.eq.s32.totalorder %s15, 1
    %p100 = por %p98, %p99
    %p101 = scmp.ne.s32.totalorder %s93, %s96
    %p102 = scmp.eq.s32.totalorder %s15, 0
    %p103 = por %p101, %p102
    %p104 = scmp.ne.s32.totalorder %s93, %s96
    %p105 = scmp.eq.s32.totalorder %s20, 1
    %p106 = por %p104, %p105
    %p107 = scmp.ne.s32.totalorder %s96, %s97
    %p108 = scmp.eq.s32.totalorder %s20, 0
    %p109 = por %p107, %p108
    %p110 = scmp.ne.s32.totalorder %s96, %s97
    %p111 = scmp.eq.s32.totalorder %s21, 1
    %p112 = por %p110, %p111
    %p114 = scmp.ne.s32.totalorder %s97, %s113
    %p115 = scmp.eq.s32.totalorder %s21, 0
    %p116 = por %p114, %p115
    %s118 = sadd.s32 %s117, 1
    %p121 = scmp.eq.s32.totalorder %s15, 1
    %p122 = scmp.ne.s32.totalorder %s117, %s119
    %p123 = scmp.eq.s32.totalorder %s15, 0
    %p124 = por %p122, %p123
    %p125 = scmp.ne.s32.totalorder %s117, %s119
    %p126 = scmp.eq.s32.totalorder %s20, 1
    %p127 = por %p125, %p126
    %p128 = scmp.ne.s32.totalorder %s119, %s120
    %p129 = scmp.eq.s32.totalorder %s20, 0
    %p130 = por %p128, %p129
    %p131 = scmp.ne.s32.totalorder %s119, %s120
    %p132 = scmp.eq.s32.totalorder %s21, 1
    %p133 = por %p131, %p132
    %p135 = scmp.ne.s32.totalorder %s120, %s134
    %p136 = scmp.eq.s32.totalorder %s21, 0
    %p137 = por %p135, %p136
    %s139 = sadd.s32 %s138, 1
    %p142 = scmp.eq.s32.totalorder %s15, 1
    %p143 = scmp.ne.s32.totalorder %s138, %s140
    %p144 = scmp.eq.s32.totalorder %s15, 0
    %p145 = por %p143, %p144
    %p146 = scmp.ne.s32.totalorder %s138, %s140
    %p147 = scmp.eq.s32.totalorder %s20, 1
    %p148 = por %p146, %p147
    %p149 = scmp.ne.s32.totalorder %s140, %s141
    %p150 = scmp.eq.s32.totalorder %s20, 0
    %p151 = por %p149, %p150
    %p152 = scmp.ne.s32.totalorder %s140, %s141
    %p153 = scmp.eq.s32.totalorder %s21, 1
    %p154 = por %p152, %p153
    %p156 = scmp.ne.s32.totalorder %s141, %s155
    %p157 = scmp.eq.s32.totalorder %s21, 0
    %p158 = por %p156, %p157
    %s160 = sadd.s32 %s159, 1
    %p163 = scmp.eq.s32.totalorder %s15, 1
    %p164 = scmp.ne.s32.totalorder %s159, %s161
    %p165 = scmp.eq.s32.totalorder %s15, 0
    %p166 = por %p164, %p165
    %p167 = scmp.ne.s32.totalorder %s159, %s161
    %p168 = scmp.eq.s32.totalorder %s20, 1
    %p169 = por %p167, %p168
    %p170 = scmp.ne.s32.totalorder %s161, %s162
    %p171 = scmp.eq.s32.totalorder %s20, 0
    %p172 = por %p170, %p171
    %p173 = scmp.ne.s32.totalorder %s161, %s162
    %p174 = scmp.eq.s32.totalorder %s21, 1
    %p175 = por %p173, %p174
    %p177 = scmp.ne.s32.totalorder %s162, %s176
    %p178 = scmp.eq.s32.totalorder %s21, 0
    %p179 = por %p177, %p178
    %s181 = sadd.s32 %s180, 1
    %p184 = scmp.eq.s32.totalorder %s15, 1
    %p185 = scmp.ne.s32.totalorder %s180, %s182
    %p186 = scmp.eq.s32.totalorder %s15, 0
    %p187 = por %p185, %p186
    %p188 = scmp.ne.s32.totalorder %s180, %s182
    %p189 = scmp.eq.s32.totalorder %s20, 1
    %p190 = por %p188, %p189
    %p191 = scmp.ne.s32.totalorder %s182, %s183
    %p192 = scmp.eq.s32.totalorder %s20, 0
    %p193 = por %p191, %p192
    %p194 = scmp.ne.s32.totalorder %s182, %s183
    %p195 = scmp.eq.s32.totalorder %s21, 1
    %p196 = por %p194, %p195
    %p198 = scmp.ne.s32.totalorder %s183, %s197
    %p199 = scmp.eq.s32.totalorder %s21, 0
    %p200 = por %p198, %p199
    %s202 = sadd.s32 %s201, 1
    %p205 = scmp.eq.s32.totalorder %s15, 1
    %p206 = scmp.ne.s32.totalorder %s201, %s203
    %p207 = scmp.eq.s32.totalorder %s15, 0
    %p208 = por %p206, %p207
    %p209 = scmp.ne.s32.totalorder %s201, %s203
    %p210 = scmp.eq.s32.totalorder %s20, 1
    %p211 = por %p209, %p210
    %p212 = scmp.ne.s32.totalorder %s203, %s204
    %p213 = scmp.eq.s32.totalorder %s20, 0
    %p214 = por %p212, %p213
    %p215 = scmp.ne.s32.totalorder %s203, %s204
    %p216 = scmp.eq.s32.totalorder %s21, 1
    %p217 = por %p215, %p216
    %p219 = scmp.ne.s32.totalorder %s204, %s218
    %p220 = scmp.eq.s32.totalorder %s21, 0
    %p221 = por %p219, %p220
    %s223 = sadd.s32 %s222, 1
    %p226 = scmp.eq.s32.totalorder %s15, 1
    %p227 = scmp.ne.s32.totalorder %s222, %s224
    %p228 = scmp.eq.s32.totalorder %s15, 0
    %p229 = por %p227, %p228
    %p230 = scmp.ne.s32.totalorder %s222, %s224
    %p231 = scmp.eq.s32.totalorder %s20, 1
    %p232 = por %p230, %p231
    %p233 = scmp.ne.s32.totalorder %s224, %s225
    %p234 = scmp.eq.s32.totalorder %s20, 0
    %p235 = por %p233, %p234
    %p236 = scmp.ne.s32.totalorder %s224, %s225
    %p237 = scmp.eq.s32.totalorder %s21, 1
    %p238 = por %p236, %p237
    %p240 = scmp.ne.s32.totalorder %s225, %s239
    %p241 = scmp.eq.s32.totalorder %s21, 0
    %p242 = por %p240, %p241
    %s243 = ssub.s32 %s22, %s34
    %s244 = ssub.s32 %s23, %s30
    %s245 = sor.u32 %s243, %s244
    %p246 = scmp.eq.s32.totalorder %s245, 0
    %s248 = sadd.s32 %s247, 1
    %s249 = scalar_select %p246, %s247, %s248
    %p252 = pneg %p246
    %p253 = scmp.eq.s32.totalorder %s15, 1
    %p254 = por %p252, %p253
    %p255 = scmp.ne.s32.totalorder %s247, %s250
    %p256 = scmp.eq.s32.totalorder %s15, 0
    %p257 = por %p255, %p256
    %p258 = scmp.ne.s32.totalorder %s247, %s250
    %p259 = scmp.eq.s32.totalorder %s20, 1
    %p260 = por %p258, %p259
    %p261 = scmp.ne.s32.totalorder %s250, %s251
    %p262 = scmp.eq.s32.totalorder %s20, 0
    %p263 = por %p261, %p262
    %p264 = scmp.ne.s32.totalorder %s250, %s251
    %p265 = scmp.eq.s32.totalorder %s21, 1
    %p266 = por %p264, %p265
    %p268 = scmp.ne.s32.totalorder %s251, %s267
    %p269 = scmp.eq.s32.totalorder %s21, 0
    %p270 = por %p268, %p269
    %p271 = scmp.le.s32.totalorder 1, %s15
    %p272 = scmp.lt.s32.totalorder %s15, 3
    %p273 = pnand %p271, %p272
    %p274 = pneg %p273
    // Predicated region
    $region9: #{upsampler_forward.13} parent=5 // pred_check
      _
    $region10: #{upsampler_forward.13} parent=5 // pred_check_branch
      %276 = sbr.rel (%p273) target = $region12
    $region11: #{upsampler_forward.13} parent=5 // pred_region
      %s277 = ssub.s32 %s15, 1
      // Predicated region
      $region13: #{upsampler_forward.13} parent=11 // pred_check
        %p278 = pneg %p130
      $region14: #{upsampler_forward.13} parent=11 // pred_check_branch
        %280 = sbr.rel (%p278) target = $region16
      $region15: #{upsampler_forward.13} parent=11 // pred_region
        _
      $region16: #{upsampler_forward.13} parent=11 // pred_fallthru
        _
      // Predicated region
      $region17: #{upsampler_forward.13} parent=11 // pred_check
        %p281 = pneg %p151
      $region18: #{upsampler_forward.13} parent=11 // pred_check_branch
        %283 = sbr.rel (%p281) target = $region20
      $region19: #{upsampler_forward.13} parent=11 // pred_region
        _
      $region20: #{upsampler_forward.13} parent=11 // pred_fallthru
        _
      // Predicated region
      $region21: #{upsampler_forward.13} parent=11 // pred_check
        %p284 = pneg %p172
      $region22: #{upsampler_forward.13} parent=11 // pred_check_branch
        %286 = sbr.rel (%p284) target = $region24
      $region23: #{upsampler_forward.13} parent=11 // pred_region
        _
      $region24: #{upsampler_forward.13} parent=11 // pred_fallthru
        _
      // Predicated region
      $region25: #{upsampler_forward.13} parent=11 // pred_check
        %p287 = pneg %p193
      $region26: #{upsampler_forward.13} parent=11 // pred_check_branch
        %289 = sbr.rel (%p287) target = $region28
      $region27: #{upsampler_forward.13} parent=11 // pred_region
        _
      $region28: #{upsampler_forward.13} parent=11 // pred_fallthru
        _
      // Predicated region
      $region29: #{upsampler_forward.13} parent=11 // pred_check
        %p290 = pneg %p214
      $region30: #{upsampler_forward.13} parent=11 // pred_check_branch
        %292 = sbr.rel (%p290) target = $region32
      $region31: #{upsampler_forward.13} parent=11 // pred_region
        _
      $region32: #{upsampler_forward.13} parent=11 // pred_fallthru
        _
      // Predicated region
      $region33: #{upsampler_forward.13} parent=11 // pred_check
        %p293 = pneg %p235
      $region34: #{upsampler_forward.13} parent=11 // pred_check_branch
        %295 = sbr.rel (%p293) target = $region36
      $region35: #{upsampler_forward.13} parent=11 // pred_region
        _
      $region36: #{upsampler_forward.13} parent=11 // pred_fallthru
        _
    $region12: #{upsampler_forward.13} parent=5 // pred_fallthru
      _
    %p296 = scmp.lt.s32.totalorder %s15, 2
    // Predicated region
    $region37: #{upsampler_forward.13} parent=5 // pred_check
      %p297 = pneg %p296
    $region38: #{upsampler_forward.13} parent=5 // pred_check_branch
      %299 = sbr.rel (%p297) target = $region40
    $region39: #{upsampler_forward.13} parent=5 // pred_region
      // Predicated region
      $region41: #{upsampler_forward.13} parent=39 // pred_check
        %p300 = pneg %p49
      $region42: #{upsampler_forward.13} parent=39 // pred_check_branch
        %302 = sbr.rel (%p300) target = $region44
      $region43: #{upsampler_forward.13} parent=39 // pred_region
        %s303 = smul.u32 2, %s23
        %p304 = scmp.lt.s32.totalorder %s22, 1
        %s305 = scalar_select %p304, %s22, 1
        %p306 = scmp.lt.s32.totalorder %s303, 1
        %s307 = scalar_select %p306, %s303, 1
        %s308 = smul.addr %s305, 2
        %s309 = sadd.s32 %s307, %s308
        %s310 = smul.addr %s309, 4
        %s311 = scalar_lea.vmem %s0, %s310
        %s312 = smul.u32 2, %s23
      $region44: #{upsampler_forward.13} parent=39 // pred_fallthru
        _
      // Predicated region
      $region45: #{upsampler_forward.13} parent=39 // pred_check
        %p313 = pneg %p77
      $region46: #{upsampler_forward.13} parent=39 // pred_check_branch
        %315 = sbr.rel (%p313) target = $region48
      $region47: #{upsampler_forward.13} parent=39 // pred_region
        %s316 = smul.u32 2, %s23
        %p317 = scmp.lt.s32.totalorder %s22, 1
        %s318 = scalar_select %p317, %s22, 1
        %p319 = scmp.lt.s32.totalorder %s316, 1
        %s320 = scalar_select %p319, %s316, 1
        %s321 = smul.addr %s318, 2
        %s322 = sadd.s32 %s320, %s321
        %s323 = smul.addr %s322, 4
        %s324 = scalar_lea.vmem %s1, %s323
        %s325 = smul.u32 2, %s23
      $region48: #{upsampler_forward.13} parent=39 // pred_fallthru
        _
      // Predicated region
      $region49: #{upsampler_forward.13} parent=39 // pred_check
        %p326 = pneg %p103
      $region50: #{upsampler_forward.13} parent=39 // pred_check_branch
        %328 = sbr.rel (%p326) target = $region52
      $region51: #{upsampler_forward.13} parent=39 // pred_region
        %p329 = scmp.lt.s32.totalorder %s22, 1
        %s330 = scalar_select %p329, %s22, 1
        %s331 = scalar_lea.vmem %s2, %s330
      $region52: #{upsampler_forward.13} parent=39 // pred_fallthru
        _
    $region40: #{upsampler_forward.13} parent=5 // pred_fallthru
      _
    %p332 = scmp.le.s32.totalorder 1, %s15
    %p333 = scmp.lt.s32.totalorder %s15, 3
    %p334 = pnand %p332, %p333
    %p335 = pneg %p334
    // Predicated region
    $region53: #{upsampler_forward.13} parent=5 // pred_check
      _
    $region54: #{upsampler_forward.13} parent=5 // pred_check_branch
      %337 = sbr.rel (%p334) target = $region56
    $region55: #{upsampler_forward.13} parent=5 // pred_region
      %s338 = ssub.s32 %s15, 1
      %s339 = smul.u32 2, %s25
      %p340 = scmp.lt.s32.totalorder %s24, 1
      %s341 = scalar_select %p340, %s24, 1
      %p342 = scmp.lt.s32.totalorder %s339, 1
      %s343 = scalar_select %p342, %s339, 1
      %s344 = smul.addr %s341, 2
      %s345 = sadd.s32 %s343, %s344
      %s346 = smul.addr %s345, 4
      %s347 = scalar_lea.vmem %s0, %s346
      %p348 = pneg %p55
      %p349 = pneg %p52
      %s350 = smul.u32 2, %s25
      %p351 = scmp.lt.s32.totalorder %s24, 1
      %s352 = scalar_select %p351, %s24, 1
      %p353 = scmp.lt.s32.totalorder %s350, 1
      %s354 = scalar_select %p353, %s350, 1
      %s355 = smul.addr %s352, 2
      %s356 = sadd.s32 %s354, %s355
      %s357 = smul.addr %s356, 4
      %s358 = scalar_lea.vmem %s1, %s357
      %p359 = pneg %p83
      %p360 = pneg %p80
      %p361 = scmp.lt.s32.totalorder %s24, 1
      %s362 = scalar_select %p361, %s24, 1
      %s363 = scalar_lea.vmem %s2, %s362
      %p364 = pneg %p109
      %p365 = pneg %p106
      %p366 = pneg %p130
      %p367 = pneg %p127
      %p368 = pneg %p151
      %p369 = pneg %p148
      %p370 = pneg %p172
      %p371 = pneg %p169
      %p372 = pneg %p193
      %p373 = pneg %p190
      %p374 = pneg %p214
      %p375 = pneg %p211
      %p376 = pneg %p235
      %p377 = pneg %p232
      %p378 = pneg %p263
      %p379 = pneg %p260
      %s380 = smul.u32 2, %s25
      %p381 = scmp.lt.s32.totalorder %s24, 1
      %s382 = scalar_select %p381, %s24, 1
      %p383 = scmp.lt.s32.totalorder %s380, 1
      %s384 = scalar_select %p383, %s380, 1
      %s385 = smul.addr %s382, 2
      %s386 = sadd.s32 %s384, %s385
      %s387 = smul.addr %s386, 4
      %s388 = scalar_lea.vmem %s9, %s387
      %s389 = smul.u32 2, %s25
      %p390 = scmp.lt.s32.totalorder %s24, 1
      %s391 = scalar_select %p390, %s24, 1
      %p392 = scmp.lt.s32.totalorder %s389, 1
      %s393 = scalar_select %p392, %s389, 1
      %s394 = smul.addr %s391, 2
      %s395 = sadd.s32 %s393, %s394
      %s396 = smul.addr %s395, 4
      %s397 = scalar_lea.vmem %s0, %s396
      %s398 = smul.u32 2, %s25
      %s399 = smul.u32 2, %s25
      %p400 = scmp.lt.s32.totalorder %s24, 1
      %s401 = scalar_select %p400, %s24, 1
      %p402 = scmp.lt.s32.totalorder %s399, 1
      %s403 = scalar_select %p402, %s399, 1
      %s404 = smul.addr %s401, 2
      %s405 = sadd.s32 %s403, %s404
      %s406 = smul.addr %s405, 4
      %s407 = scalar_lea.vmem %s1, %s406
      %s408 = smul.u32 2, %s25
      %p409 = scmp.lt.s32.totalorder %s24, 1
      %s410 = scalar_select %p409, %s24, 1
      %s411 = scalar_lea.vmem %s2, %s410
      %s412 = smul.u32 2, %s25
      %p413 = scmp.lt.s32.totalorder %s24, 1
      %s414 = scalar_select %p413, %s24, 1
      %p415 = scmp.lt.s32.totalorder %s412, 1
      %s416 = scalar_select %p415, %s412, 1
      %s417 = smul.addr %s414, 2
      %s418 = sadd.s32 %s416, %s417
      %s419 = smul.addr %s418, 4
      %s420 = scalar_lea.vmem %s9, %s419
      %s421 = smul.u32 2, %s25
      %v423 = vld [vmem:[%s397] sm:$0xf]
      %v424 = vld [vmem:[%s397 + $0x4] sm:$0xf]
      %v425 = vld [vmem:[%s407] sm:$0xf]
      %v426 = vld [vmem:[%s407 + $0x4] sm:$0xf]
      %v427 = vld [vmem:[%s411] sm:$0x1]
      %v428 = vld [vmem:[%s4] sm:$0xf]
      %v429 = vld [vmem:[%s4 + $0x4] sm:$0xf]
      %v430 = vld [vmem:[%s4 + $0x8] sm:$0xf]
      %v431 = vld [vmem:[%s4 + $0xc] sm:$0xf]
      %v436 = vunpack.c.l.b16 %v428
      %v437 = vunpack.c.l.b16 %v429
      %v438 = vunpack.c.l.b16 %v430
      %v439 = vunpack.c.l.b16 %v431
      %v440 = vpack.c.b16 %v437, %v436
      %v441 = vpack.c.b16 %v439, %v438
      %vm444 = vcmask 261120
      %v446 = vsel %vm444, %v427, 0
      %448 = vmatprep.subr.bf16.mxu0 0
      %449 = vmatpush1.bf16.msra.mxu0 0
      %450 = vmatprep.subr.bf16.mxu0 0
      %451 = vmatpush1.bf16.msra.mxu0 0
      %452 = vmatprep.subr.bf16.mxu0 0
      %453 = vmatpush1.bf16.msra.mxu0 0
      %454 = vmatprep.subr.bf16.mxu0 0
      %455 = vmatpush1.bf16.msra.mxu0 0
      %456 = vmatprep.subr.bf16.mxu0 0
      %457 = vmatpush1.bf16.msra.mxu0 0
      %458 = vmatprep.subr.bf16.mxu0 0
      %459 = vmatpush1.bf16.msra.mxu0 0
      %460 = vmatprep.subr.bf16.mxu0 0
      %461 = vmatpush1.bf16.msra.mxu0 %v441
      %462 = vmatprep.subr.bf16.mxu0 0
      %463 = vmatpush1.bf16.msra.mxu0 %v440
      %464 = vmatprep.subr.bf16.mxu0 0
      %465 = vmatpush2.bf16.msra.mxu0 0
      %466 = vmatprep.subr.bf16.mxu0 0
      %467 = vmatpush2.bf16.msra.mxu0 0
      %468 = vmatprep.subr.bf16.mxu0 0
      %469 = vmatpush2.bf16.msra.mxu0 0
      %470 = vmatprep.subr.bf16.mxu0 0
      %471 = vmatpush2.bf16.msra.mxu0 0
      %472 = vmatprep.subr.bf16.mxu0 0
      %473 = vmatpush2.bf16.msra.mxu0 0
      %474 = vmatprep.subr.bf16.mxu0 0
      %475 = vmatpush2.bf16.msra.mxu0 0
      %476 = vmatprep.subr.bf16.mxu0 0
      %477 = vmatpush2.bf16.msra.mxu0 0
      %478 = vmatprep.subr.bf16.mxu0 0
      %479 = vmatpush2.bf16.msra.mxu0 0
      %480 = vmatprep.mubr.bf16.mxu0 0
      %481 = vmatmul.mubr.bf16.gmra.mxu0 %v446
      %v482 = vpop.f32.mrf.mxu0
      %v483 = vadd.f32 0.0, %v482
      %v484 = vpop.f32.mrf.mxu0
      %v485 = vpop.f32.mrf.mxu0
      %v486 = vpop.f32.mrf.mxu0
      %487 = vdwg.mxu0
      %v488 = vld [vmem:[%s3] sm:$0xf]
      %v489 = vld [vmem:[%s3 + $0x4] sm:$0xf]
      %v490 = vld [vmem:[%s3 + $0x8] sm:$0xf]
      %v491 = vld [vmem:[%s3 + $0xc] sm:$0xf]
      %v492 = vlaneseq
      %v493 = vshrl.u32 %v492, 7
      %v494 = vsub.s32 0, %v493
      %v495 = vrot.slane %v483, %v494
      %v498 = vunpack.c.l.b16 %v423
      %v499 = vunpack.c.l.b16 %v424
      %v500 = vpack.c.b16 %v499, %v498
      %v505 = vunpack.c.l.b16 %v488
      %v506 = vunpack.c.l.b16 %v489
      %v507 = vunpack.c.l.b16 %v490
      %v508 = vunpack.c.l.b16 %v491
      %v509 = vpack.c.b16 %v506, %v505
      %v510 = vpack.c.b16 %v508, %v507
      %v514 = vsel %vm444, %v500, 0
      %516 = vmatprep.subr.bf16.mxu0 0
      %517 = vmatpush1.bf16.msra.mxu0 0
      %518 = vmatprep.subr.bf16.mxu0 0
      %519 = vmatpush1.bf16.msra.mxu0 0
      %520 = vmatprep.subr.bf16.mxu0 0
      %521 = vmatpush1.bf16.msra.mxu0 0
      %522 = vmatprep.subr.bf16.mxu0 0
      %523 = vmatpush1.bf16.msra.mxu0 0
      %524 = vmatprep.subr.bf16.mxu0 0
      %525 = vmatpush1.bf16.msra.mxu0 0
      %526 = vmatprep.subr.bf16.mxu0 0
      %527 = vmatpush1.bf16.msra.mxu0 0
      %528 = vmatprep.subr.bf16.mxu0 0
      %529 = vmatpush1.bf16.msra.mxu0 %v510
      %530 = vmatprep.subr.bf16.mxu0 0
      %531 = vmatpush1.bf16.msra.mxu0 %v509
      %532 = vmatprep.subr.bf16.mxu0 0
      %533 = vmatpush2.bf16.msra.mxu0 0
      %534 = vmatprep.subr.bf16.mxu0 0
      %535 = vmatpush2.bf16.msra.mxu0 0
      %536 = vmatprep.subr.bf16.mxu0 0
      %537 = vmatpush2.bf16.msra.mxu0 0
      %538 = vmatprep.subr.bf16.mxu0 0
      %539 = vmatpush2.bf16.msra.mxu0 0
      %540 = vmatprep.subr.bf16.mxu0 0
      %541 = vmatpush2.bf16.msra.mxu0 0
      %542 = vmatprep.subr.bf16.mxu0 0
      %543 = vmatpush2.bf16.msra.mxu0 0
      %544 = vmatprep.subr.bf16.mxu0 0
      %545 = vmatpush2.bf16.msra.mxu0 0
      %546 = vmatprep.subr.bf16.mxu0 0
      %547 = vmatpush2.bf16.msra.mxu0 0
      %548 = vmatprep.mubr.bf16.mxu0 0
      %549 = vmatmul.mubr.bf16.gmra.mxu0 %v514
      %v550 = vpop.f32.mrf.mxu0
      %v551 = vadd.f32 %v495, %v550
      %v552 = vpop.f32.mrf.mxu0
      %v553 = vpop.f32.mrf.mxu0
      %v554 = vadd.f32 %v495, %v553
      %v555 = vpop.f32.mrf.mxu0
      %556 = vdwg.mxu0
      %v557 = vld [vmem:[%s5] sm:$0xf]
      %v558 = vld [vmem:[%s5 + $0x4] sm:$0xf]
      %v559 = vld [vmem:[%s5 + $0x8] sm:$0xf]
      %v560 = vld [vmem:[%s5 + $0xc] sm:$0xf]
      %v563 = vunpack.c.l.b16 %v425
      %v564 = vunpack.c.l.b16 %v426
      %v565 = vpack.c.b16 %v564, %v563
      %v570 = vunpack.c.l.b16 %v557
      %v571 = vunpack.c.l.b16 %v558
      %v572 = vunpack.c.l.b16 %v559
      %v573 = vunpack.c.l.b16 %v560
      %v574 = vpack.c.b16 %v571, %v570
      %v575 = vpack.c.b16 %v573, %v572
      %v579 = vsel %vm444, %v565, 0
      %581 = vmatprep.subr.bf16.mxu0 0
      %582 = vmatpush1.bf16.msra.mxu0 0
      %583 = vmatprep.subr.bf16.mxu0 0
      %584 = vmatpush1.bf16.msra.mxu0 0
      %585 = vmatprep.subr.bf16.mxu0 0
      %586 = vmatpush1.bf16.msra.mxu0 0
      %587 = vmatprep.subr.bf16.mxu0 0
      %588 = vmatpush1.bf16.msra.mxu0 0
      %589 = vmatprep.subr.bf16.mxu0 0
      %590 = vmatpush1.bf16.msra.mxu0 0
      %591 = vmatprep.subr.bf16.mxu0 0
      %592 = vmatpush1.bf16.msra.mxu0 0
      %593 = vmatprep.subr.bf16.mxu0 0
      %594 = vmatpush1.bf16.msra.mxu0 %v575
      %595 = vmatprep.subr.bf16.mxu0 0
      %596 = vmatpush1.bf16.msra.mxu0 %v574
      %597 = vmatprep.subr.bf16.mxu0 0
      %598 = vmatpush2.bf16.msra.mxu0 0
      %599 = vmatprep.subr.bf16.mxu0 0
      %600 = vmatpush2.bf16.msra.mxu0 0
      %601 = vmatprep.subr.bf16.mxu0 0
      %602 = vmatpush2.bf16.msra.mxu0 0
      %603 = vmatprep.subr.bf16.mxu0 0
      %604 = vmatpush2.bf16.msra.mxu0 0
      %605 = vmatprep.subr.bf16.mxu0 0
      %606 = vmatpush2.bf16.msra.mxu0 0
      %607 = vmatprep.subr.bf16.mxu0 0
      %608 = vmatpush2.bf16.msra.mxu0 0
      %609 = vmatprep.subr.bf16.mxu0 0
      %610 = vmatpush2.bf16.msra.mxu0 0
      %611 = vmatprep.subr.bf16.mxu0 0
      %612 = vmatpush2.bf16.msra.mxu0 0
      %613 = vmatprep.mubr.bf16.mxu0 0
      %614 = vmatmul.mubr.bf16.gmra.mxu0 %v579
      %v615 = vpop.f32.mrf.mxu0
      %v616 = vadd.f32 0.0, %v615
      %v617 = vpop.f32.mrf.mxu0
      %v618 = vpop.f32.mrf.mxu0
      %v619 = vadd.f32 0.0, %v618
      %v620 = vpop.f32.mrf.mxu0
      %621 = vdwg.mxu0
      %v622 = vadd.f32 %v551, %v616
      %v623 = vadd.f32 %v554, %v619
      %v624 = vld [vmem:[%s6] sm:$0x1]
      %v626 = vlaneseq
      %v627 = vshrl.u32 %v626, 7
      %v628 = vsub.s32 0, %v627
      %v629 = vrot.slane %v624, %v628
      %v631 = vadd.f32 %v622, %v629
      %v632 = vadd.f32 %v623, %v629
      %v633 = vmax.f32 %v631, 0.0
      %v634 = vmax.f32 %v632, 0.0
      %v635 = vld [vmem:[%s7] sm:$0xf]
      %v636 = vld [vmem:[%s7 + $0x4] sm:$0xf]
      %v637 = vld [vmem:[%s7 + $0x8] sm:$0xf]
      %v638 = vld [vmem:[%s7 + $0xc] sm:$0xf]
      %v639 = vld [vmem:[%s7 + $0x10] sm:$0xf]
      %v640 = vld [vmem:[%s7 + $0x14] sm:$0xf]
      %v641 = vld [vmem:[%s7 + $0x18] sm:$0xf]
      %v642 = vld [vmem:[%s7 + $0x1c] sm:$0xf]
      %v643 = vpack.c.bf16 %v634, %v633
      %v644 = vld [vmem:[%s8] sm:$0x1]
      %v646 = vlaneseq
      %v647 = vshrl.u32 %v646, 7
      %v648 = vsub.s32 0, %v647
      %v649 = vrot.slane %v644, %v648
      %v659 = vunpack.c.l.b16 %v635
      %v660 = vunpack.c.l.b16 %v636
      %v661 = vunpack.c.l.b16 %v637
      %v662 = vunpack.c.l.b16 %v638
      %v663 = vunpack.c.l.b16 %v639
      %v664 = vunpack.c.l.b16 %v640
      %v665 = vunpack.c.l.b16 %v641
      %v666 = vunpack.c.l.b16 %v642
      %v667 = vpack.c.b16 %v660, %v659
      %v668 = vpack.c.b16 %v662, %v661
      %v669 = vpack.c.b16 %v664, %v663
      %v670 = vpack.c.b16 %v666, %v665
      %vm675 = vcmask 523264
      %v677 = vsel %vm675, %v643, 0
      %679 = vmatprep.subr.bf16.mxu0 0
      %680 = vmatpush1.bf16.msra.mxu0 0
      %681 = vmatprep.subr.bf16.mxu0 0
      %682 = vmatpush1.bf16.msra.mxu0 0
      %683 = vmatprep.subr.bf16.mxu0 0
      %684 = vmatpush1.bf16.msra.mxu0 0
      %685 = vmatprep.subr.bf16.mxu0 0
      %686 = vmatpush1.bf16.msra.mxu0 0
      %687 = vmatprep.subr.bf16.mxu0 0
      %688 = vmatpush1.bf16.msra.mxu0 %v670
      %689 = vmatprep.subr.bf16.mxu0 0
      %690 = vmatpush1.bf16.msra.mxu0 %v669
      %691 = vmatprep.subr.bf16.mxu0 0
      %692 = vmatpush1.bf16.msra.mxu0 %v668
      %693 = vmatprep.subr.bf16.mxu0 0
      %694 = vmatpush1.bf16.msra.mxu0 %v667
      %695 = vmatprep.subr.bf16.mxu0 0
      %696 = vmatpush2.bf16.msra.mxu0 0
      %697 = vmatprep.subr.bf16.mxu0 0
      %698 = vmatpush2.bf16.msra.mxu0 0
      %699 = vmatprep.subr.bf16.mxu0 0
      %700 = vmatpush2.bf16.msra.mxu0 0
      %701 = vmatprep.subr.bf16.mxu0 0
      %702 = vmatpush2.bf16.msra.mxu0 0
      %703 = vmatprep.subr.bf16.mxu0 0
      %704 = vmatpush2.bf16.msra.mxu0 0
      %705 = vmatprep.subr.bf16.mxu0 0
      %706 = vmatpush2.bf16.msra.mxu0 0
      %707 = vmatprep.subr.bf16.mxu0 0
      %708 = vmatpush2.bf16.msra.mxu0 0
      %709 = vmatprep.subr.bf16.mxu0 0
      %710 = vmatpush2.bf16.msra.mxu0 0
      %711 = vmatprep.mubr.bf16.mxu0 0
      %712 = vmatmul.mubr.bf16.gmra.mxu0 %v677
      %v713 = vpop.f32.mrf.mxu0
      %v714 = vadd.f32 %v649, %v713
      %v715 = vpop.f32.mrf.mxu0
      %v716 = vpop.f32.mrf.mxu0
      %v717 = vadd.f32 %v649, %v716
      %v718 = vpop.f32.mrf.mxu0
      %719 = vdwg.mxu0
      %v720 = vpack.c.bf16 %v717, %v714
      %v722 = vunpack.c.l.b16 %v720
      %v723 = vunpack.c.h.b16 %v720
      %v724 = vpack.c.b16 %v722, %v722
      %v725 = vpack.c.b16 %v723, %v723
      %vm728 = vcmask 257024
      %729 = vst.msk [vmem:[%s420] sm:$0xf] %vm728, %v724
      %730 = vst.msk [vmem:[%s420 + $0x4] sm:$0xf] %vm728, %v725
      %s731 = smul.u32 2, %s25
      %p732 = scmp.lt.s32.totalorder %s24, 1
      %s733 = scalar_select %p732, %s24, 1
      %p734 = scmp.lt.s32.totalorder %s731, 1
      %s735 = scalar_select %p734, %s731, 1
      %s736 = smul.addr %s733, 2
      %s737 = sadd.s32 %s735, %s736
      %s738 = smul.addr %s737, 4
      %s739 = scalar_lea.vmem %s9, %s738
      // Predicated region
      $region57: #{upsampler_forward.13} parent=55 // pred_check
        %p740 = pneg %p260
      $region58: #{upsampler_forward.13} parent=55 // pred_check_branch
        %742 = sbr.rel (%p740) target = $region60
      $region59: #{upsampler_forward.13} parent=55 // pred_region
        %s743 = smul.u32 2, %s25
      $region60: #{upsampler_forward.13} parent=55 // pred_fallthru
        _
    $region56: #{upsampler_forward.13} parent=5 // pred_fallthru
      _
    %p744 = scmp.le.s32.totalorder 2, %s15
    // Predicated region
    $region61: #{upsampler_forward.13} parent=5 // pred_check
      %p745 = pneg %p744
    $region62: #{upsampler_forward.13} parent=5 // pred_check_branch
      %747 = sbr.rel (%p745) target = $region64
    $region63: #{upsampler_forward.13} parent=5 // pred_region
      %s748 = ssub.s32 %s15, 2
      // Predicated region
      $region65: #{upsampler_forward.13} parent=63 // pred_check
        %p749 = pneg %p266
      $region66: #{upsampler_forward.13} parent=63 // pred_check_branch
        %751 = sbr.rel (%p749) target = $region68
      $region67: #{upsampler_forward.13} parent=63 // pred_region
        %s752 = smul.u32 2, %s27
        %p753 = scmp.lt.s32.totalorder %s26, 1
        %s754 = scalar_select %p753, %s26, 1
        %p755 = scmp.lt.s32.totalorder %s752, 1
        %s756 = scalar_select %p755, %s752, 1
        %s757 = smul.addr %s754, 2
        %s758 = sadd.s32 %s756, %s757
        %s759 = smul.addr %s758, 4
        %s760 = scalar_lea.vmem %s9, %s759
      $region68: #{upsampler_forward.13} parent=63 // pred_fallthru
        _
    $region64: #{upsampler_forward.13} parent=5 // pred_fallthru
      _
  $region6: #{upsampler_forward.13} parent=0 // loop_footer
    %s19 = sadd.s32 1, %s15
  $region7: #{upsampler_forward.13} parent=0 // loop_footer_branch
    %14 = sbr.rel target = $region3
  $region8: #{upsampler_forward.13} parent=0 // loop_exit
    _

// kernel: upsampler_forward.15
$region0: #{upsampler_forward.15}
  #allocation0 [shape = 'u32[]', space=smem, size = 0x4, offset = 0x4, fixed_abs, tag = 'smem constant byte address 0x4 - core index']
  #allocation1 [shape = 'u32[144,128]{1,0:T(1,128)}', space=vmem, size = 0x12000, scoped, tag = 'internal scratch']
  %s0 = inlined_call_operand.vmem [shape: f32[32,32], index: 0, kind: input, shape index: {}]
  %s1 = inlined_call_operand.vmem [shape: bf16[32,32], index: 1, kind: input, shape index: {}]
  %s2 = inlined_call_operand.vmem [shape: bf16[32,32], index: 2, kind: input, shape index: {}]
  %s3 = inlined_call_operand.vmem [shape: bf16[32,32], index: 3, kind: input, shape index: {}]
  %s4 = inlined_call_operand.vmem [shape: bf16[32,32], index: 4, kind: input, shape index: {}]
  %s5 = inlined_call_operand.vmem [shape: f32[1,32], index: 5, kind: input, shape index: {}]
  %s6 = inlined_call_operand.vmem [shape: bf16[32,32], index: 6, kind: input, shape index: {}]
  %s7 = inlined_call_operand.vmem [shape: f32[1,32], index: 7, kind: input, shape index: {}]
  %s8 = inlined_call_operand.vmem [shape: bf16[32,32], index: 8, kind: input, shape index: {}]
  %s9 = inlined_call_operand.vmem [shape: bf16[32,32], index: 9, kind: input, shape index: {}]
  %s10 = inlined_call_operand.vmem [shape: f32[1,32], index: 10, kind: input, shape index: {}]
  %s11 = inlined_call_operand.vmem [shape: bf16[32,32], index: 11, kind: input, shape index: {}]
  %s12 = inlined_call_operand.vmem [shape: f32[1,32], index: 12, kind: input, shape index: {}]
  %s13 = inlined_call_operand.vmem [shape: bf16[32,32], index: 13, kind: input, shape index: {}]
  %s14 = inlined_call_operand.vmem [shape: f32[1,32], index: 14, kind: input, shape index: {}]
  %s15 = inlined_call_operand.vmem [shape: bf16[32,32], index: 15, kind: input, shape index: {}]
  %s16 = inlined_call_operand.vmem [shape: f32[1,32], index: 16, kind: input, shape index: {}]
  %s17 = inlined_call_operand.vmem [shape: bf16[32,32], index: 17, kind: input, shape index: {}]
  %s18 = inlined_call_operand.vmem [shape: f32[1,32], index: 18, kind: input, shape index: {}]
  %s19 = inlined_call_operand.vmem [shape: bf16[32,32], index: 19, kind: output, shape index: {0}]
  %s20 = inlined_call_operand.vmem [shape: bf16[32,32], index: 20, kind: output, shape index: {1}]
  %s21 = inlined_call_operand.vmem [shape: bf16[32,32], index: 21, kind: output, shape index: {2}]
  %s22 = inlined_call_operand.vmem [shape: bf16[32,32], index: 22, kind: output, shape index: {3}]
  %s23 = inlined_call_operand.vmem [shape: bf16[32,32], index: 23, kind: output, shape index: {4}]
  %24 = xla_tuple %s19, %s20, %s21, %s22, %s23
  %s25 = sld [smem:[#allocation0]]
  $region118: #{upsampler_forward.15} parent=0
    _
  %s27 = ssub.s32 1, %s25
  %s28 = scalar_select 0, %s27, %s25
  // Predicated region
  $region2: #{upsampler_forward.15} parent=0 // pred_check
    _
  $region3: #{upsampler_forward.15} parent=0 // pred_check_branch
    %30 = sbr.rel (0) target = $region5
  $region4: #{upsampler_forward.15} parent=0 // pred_region
    _
  $region5: #{upsampler_forward.15} parent=0 // pred_fallthru
    _
  // Predicated region
  $region6: #{upsampler_forward.15} parent=0 // pred_check
    _
  $region7: #{upsampler_forward.15} parent=0 // pred_check_branch
    %32 = sbr.rel (0) target = $region9
  $region8: #{upsampler_forward.15} parent=0 // pred_region
    _
  $region9: #{upsampler_forward.15} parent=0 // pred_fallthru
    _
  // Predicated region
  $region10: #{upsampler_forward.15} parent=0 // pred_check
    _
  $region11: #{upsampler_forward.15} parent=0 // pred_check_branch
    %34 = sbr.rel (0) target = $region13
  $region12: #{upsampler_forward.15} parent=0 // pred_region
    _
  $region13: #{upsampler_forward.15} parent=0 // pred_fallthru
    _
  // Predicated region
  $region14: #{upsampler_forward.15} parent=0 // pred_check
    _
  $region15: #{upsampler_forward.15} parent=0 // pred_check_branch
    %36 = sbr.rel (0) target = $region17
  $region16: #{upsampler_forward.15} parent=0 // pred_region
    _
  $region17: #{upsampler_forward.15} parent=0 // pred_fallthru
    _
  // Predicated region
  $region18: #{upsampler_forward.15} parent=0 // pred_check
    _
  $region19: #{upsampler_forward.15} parent=0 // pred_check_branch
    %38 = sbr.rel (0) target = $region21
  $region20: #{upsampler_forward.15} parent=0 // pred_region
    _
  $region21: #{upsampler_forward.15} parent=0 // pred_fallthru
    _
  // Predicated region
  $region22: #{upsampler_forward.15} parent=0 // pred_check
    _
  $region23: #{upsampler_forward.15} parent=0 // pred_check_branch
    %40 = sbr.rel (0) target = $region25
  $region24: #{upsampler_forward.15} parent=0 // pred_region
    _
  $region25: #{upsampler_forward.15} parent=0 // pred_fallthru
    _
  // Predicated region
  $region26: #{upsampler_forward.15} parent=0 // pred_check
    _
  $region27: #{upsampler_forward.15} parent=0 // pred_check_branch
    %42 = sbr.rel (0) target = $region29
  $region28: #{upsampler_forward.15} parent=0 // pred_region
    _
  $region29: #{upsampler_forward.15} parent=0 // pred_fallthru
    _
  // Predicated region
  $region30: #{upsampler_forward.15} parent=0 // pred_check
    _
  $region31: #{upsampler_forward.15} parent=0 // pred_check_branch
    %44 = sbr.rel (0) target = $region33
  $region32: #{upsampler_forward.15} parent=0 // pred_region
    _
  $region33: #{upsampler_forward.15} parent=0 // pred_fallthru
    _
  // Predicated region
  $region34: #{upsampler_forward.15} parent=0 // pred_check
    _
  $region35: #{upsampler_forward.15} parent=0 // pred_check_branch
    %46 = sbr.rel (0) target = $region37
  $region36: #{upsampler_forward.15} parent=0 // pred_region
    _
  $region37: #{upsampler_forward.15} parent=0 // pred_fallthru
    _
  // Predicated region
  $region38: #{upsampler_forward.15} parent=0 // pred_check
    _
  $region39: #{upsampler_forward.15} parent=0 // pred_check_branch
    %48 = sbr.rel (0) target = $region41
  $region40: #{upsampler_forward.15} parent=0 // pred_region
    _
  $region41: #{upsampler_forward.15} parent=0 // pred_fallthru
    _
  // Predicated region
  $region42: #{upsampler_forward.15} parent=0 // pred_check
    _
  $region43: #{upsampler_forward.15} parent=0 // pred_check_branch
    %50 = sbr.rel (0) target = $region45
  $region44: #{upsampler_forward.15} parent=0 // pred_region
    _
  $region45: #{upsampler_forward.15} parent=0 // pred_fallthru
    _
  // Predicated region
  $region46: #{upsampler_forward.15} parent=0 // pred_check
    _
  $region47: #{upsampler_forward.15} parent=0 // pred_check_branch
    %52 = sbr.rel (0) target = $region49
  $region48: #{upsampler_forward.15} parent=0 // pred_region
    _
  $region49: #{upsampler_forward.15} parent=0 // pred_fallthru
    _
  // Predicated region
  $region50: #{upsampler_forward.15} parent=0 // pred_check
    _
  $region51: #{upsampler_forward.15} parent=0 // pred_check_branch
    %54 = sbr.rel (0) target = $region53
  $region52: #{upsampler_forward.15} parent=0 // pred_region
    _
  $region53: #{upsampler_forward.15} parent=0 // pred_fallthru
    _
  // Predicated region
  $region54: #{upsampler_forward.15} parent=0 // pred_check
    _
  $region55: #{upsampler_forward.15} parent=0 // pred_check_branch
    %56 = sbr.rel (0) target = $region57
  $region56: #{upsampler_forward.15} parent=0 // pred_region
    _
  $region57: #{upsampler_forward.15} parent=0 // pred_fallthru
    _
  // Predicated region
  $region58: #{upsampler_forward.15} parent=0 // pred_check
    _
  $region59: #{upsampler_forward.15} parent=0 // pred_check_branch
    %58 = sbr.rel (0) target = $region61
  $region60: #{upsampler_forward.15} parent=0 // pred_region
    _
  $region61: #{upsampler_forward.15} parent=0 // pred_fallthru
    _
  // Predicated region
  $region62: #{upsampler_forward.15} parent=0 // pred_check
    _
  $region63: #{upsampler_forward.15} parent=0 // pred_check_branch
    %60 = sbr.rel (0) target = $region65
  $region64: #{upsampler_forward.15} parent=0 // pred_region
    _
  $region65: #{upsampler_forward.15} parent=0 // pred_fallthru
    _
  // Predicated region
  $region66: #{upsampler_forward.15} parent=0 // pred_check
    _
  $region67: #{upsampler_forward.15} parent=0 // pred_check_branch
    %62 = sbr.rel (0) target = $region69
  $region68: #{upsampler_forward.15} parent=0 // pred_region
    _
  $region69: #{upsampler_forward.15} parent=0 // pred_fallthru
    _
  // Predicated region
  $region70: #{upsampler_forward.15} parent=0 // pred_check
    _
  $region71: #{upsampler_forward.15} parent=0 // pred_check_branch
    %64 = sbr.rel (0) target = $region73
  $region72: #{upsampler_forward.15} parent=0 // pred_region
    _
  $region73: #{upsampler_forward.15} parent=0 // pred_fallthru
    _
  // Predicated region
  $region74: #{upsampler_forward.15} parent=0 // pred_check
    _
  $region75: #{upsampler_forward.15} parent=0 // pred_check_branch
    %66 = sbr.rel (0) target = $region77
  $region76: #{upsampler_forward.15} parent=0 // pred_region
    _
  $region77: #{upsampler_forward.15} parent=0 // pred_fallthru
    _
  %v68 = vld [vmem:[%s0] sm:$0xff]
  %v69 = vld [vmem:[%s0 + $0x8] sm:$0xff]
  %v70 = vld [vmem:[%s0 + $0x10] sm:$0xff]
  %v71 = vld [vmem:[%s0 + $0x18] sm:$0xff]
  %v72 = vld [vmem:[%s1] sm:$0xf]
  %v73 = vld [vmem:[%s1 + $0x4] sm:$0xf]
  %v74 = vld [vmem:[%s1 + $0x8] sm:$0xf]
  %v75 = vld [vmem:[%s1 + $0xc] sm:$0xf]
  %v76 = vld [vmem:[%s2] sm:$0xf]
  %v77 = vld [vmem:[%s2 + $0x4] sm:$0xf]
  %v78 = vld [vmem:[%s2 + $0x8] sm:$0xf]
  %v79 = vld [vmem:[%s2 + $0xc] sm:$0xf]
  %v80 = vld [vmem:[%s3] sm:$0xf]
  %v81 = vld [vmem:[%s3 + $0x4] sm:$0xf]
  %v82 = vld [vmem:[%s3 + $0x8] sm:$0xf]
  %v83 = vld [vmem:[%s3 + $0xc] sm:$0xf]
  %v84 = vpack.c.bf16 %v69, %v68
  %v85 = vpack.c.bf16 %v71, %v70
  %v86 = vld [vmem:[%s4] sm:$0xf]
  %v87 = vld [vmem:[%s4 + $0x4] sm:$0xf]
  %v88 = vld [vmem:[%s4 + $0x8] sm:$0xf]
  %v89 = vld [vmem:[%s4 + $0xc] sm:$0xf]
  %v94 = vunpack.c.l.b16 %v72
  %v95 = vunpack.c.l.b16 %v73
  %v96 = vunpack.c.l.b16 %v74
  %v97 = vunpack.c.l.b16 %v75
  %v98 = vpack.c.b16 %v95, %v94
  %v99 = vpack.c.b16 %v97, %v96
  %v104 = vunpack.c.l.b16 %v86
  %v105 = vunpack.c.l.b16 %v87
  %v106 = vunpack.c.l.b16 %v88
  %v107 = vunpack.c.l.b16 %v89
  %v108 = vpack.c.b16 %v105, %v104
  %v109 = vpack.c.b16 %v107, %v106
  %vm112 = vcmask 261120
  %v114 = vsel %vm112, %v98, 0
  %v117 = vsel %vm112, %v99, 0
  %119 = vmatprep.subr.bf16.mxu0 0
  %120 = vmatpush1.bf16.msra.mxu0 0
  %121 = vmatprep.subr.bf16.mxu0 0
  %122 = vmatpush1.bf16.msra.mxu0 0
  %123 = vmatprep.subr.bf16.mxu0 0
  %124 = vmatpush1.bf16.msra.mxu0 0
  %125 = vmatprep.subr.bf16.mxu0 0
  %126 = vmatpush1.bf16.msra.mxu0 0
  %127 = vmatprep.subr.bf16.mxu0 0
  %128 = vmatpush1.bf16.msra.mxu0 0
  %129 = vmatprep.subr.bf16.mxu0 0
  %130 = vmatpush1.bf16.msra.mxu0 0
  %131 = vmatprep.subr.bf16.mxu0 0
  %132 = vmatpush1.bf16.msra.mxu0 %v109
  %133 = vmatprep.subr.bf16.mxu0 0
  %134 = vmatpush1.bf16.msra.mxu0 %v108
  %135 = vmatprep.subr.bf16.mxu0 0
  %136 = vmatpush2.bf16.msra.mxu0 0
  %137 = vmatprep.subr.bf16.mxu0 0
  %138 = vmatpush2.bf16.msra.mxu0 0
  %139 = vmatprep.subr.bf16.mxu0 0
  %140 = vmatpush2.bf16.msra.mxu0 0
  %141 = vmatprep.subr.bf16.mxu0 0
  %142 = vmatpush2.bf16.msra.mxu0 0
  %143 = vmatprep.subr.bf16.mxu0 0
  %144 = vmatpush2.bf16.msra.mxu0 0
  %145 = vmatprep.subr.bf16.mxu0 0
  %146 = vmatpush2.bf16.msra.mxu0 0
  %147 = vmatprep.subr.bf16.mxu0 0
  %148 = vmatpush2.bf16.msra.mxu0 0
  %149 = vmatprep.subr.bf16.mxu0 0
  %150 = vmatpush2.bf16.msra.mxu0 0
  %151 = vmatprep.mubr.bf16.mxu0 0
  %152 = vmatmul.mubr.bf16.gmra.mxu0 %v114
  %v153 = vpop.f32.mrf.mxu0
  %v154 = vadd.f32 0.0, %v153
  %v155 = vpop.f32.mrf.mxu0
  %v156 = vpop.f32.mrf.mxu0
  %v157 = vadd.f32 0.0, %v156
  %v158 = vpop.f32.mrf.mxu0
  %159 = vmatprep.mubr.bf16.mxu0 0
  %160 = vmatmul.mubr.bf16.gmra.mxu0 %v117
  %v161 = vpop.f32.mrf.mxu0
  %v162 = vadd.f32 0.0, %v161
  %v163 = vpop.f32.mrf.mxu0
  %v164 = vpop.f32.mrf.mxu0
  %v165 = vadd.f32 0.0, %v164
  %v166 = vpop.f32.mrf.mxu0
  %167 = vdwg.mxu0
  %v172 = vunpack.c.l.b16 %v80
  %v173 = vunpack.c.l.b16 %v81
  %v174 = vunpack.c.l.b16 %v82
  %v175 = vunpack.c.l.b16 %v83
  %v176 = vpack.c.b16 %v173, %v172
  %v177 = vpack.c.b16 %v175, %v174
  %v181 = vsel %vm112, %v84, 0
  %v184 = vsel %vm112, %v85, 0
  %186 = vmatprep.subr.bf16.mxu0 0
  %187 = vmatpush1.bf16.msra.mxu0 0
  %188 = vmatprep.subr.bf16.mxu0 0
  %189 = vmatpush1.bf16.msra.mxu0 0
  %190 = vmatprep.subr.bf16.mxu0 0
  %191 = vmatpush1.bf16.msra.mxu0 0
  %192 = vmatprep.subr.bf16.mxu0 0
  %193 = vmatpush1.bf16.msra.mxu0 0
  %194 = vmatprep.subr.bf16.mxu0 0
  %195 = vmatpush1.bf16.msra.mxu0 0
  %196 = vmatprep.subr.bf16.mxu0 0
  %197 = vmatpush1.bf16.msra.mxu0 0
  %198 = vmatprep.subr.bf16.mxu0 0
  %199 = vmatpush1.bf16.msra.mxu0 %v177
  %200 = vmatprep.subr.bf16.mxu0 0
  %201 = vmatpush1.bf16.msra.mxu0 %v176
  %202 = vmatprep.subr.bf16.mxu0 0
  %203 = vmatpush2.bf16.msra.mxu0 0
  %204 = vmatprep.subr.bf16.mxu0 0
  %205 = vmatpush2.bf16.msra.mxu0 0
  %206 = vmatprep.subr.bf16.mxu0 0
  %207 = vmatpush2.bf16.msra.mxu0 0
  %208 = vmatprep.subr.bf16.mxu0 0
  %209 = vmatpush2.bf16.msra.mxu0 0
  %210 = vmatprep.subr.bf16.mxu0 0
  %211 = vmatpush2.bf16.msra.mxu0 0
  %212 = vmatprep.subr.bf16.mxu0 0
  %213 = vmatpush2.bf16.msra.mxu0 0
  %214 = vmatprep.subr.bf16.mxu0 0
  %215 = vmatpush2.bf16.msra.mxu0 0
  %216 = vmatprep.subr.bf16.mxu0 0
  %217 = vmatpush2.bf16.msra.mxu0 0
  %218 = vmatprep.mubr.bf16.mxu0 0
  %219 = vmatmul.mubr.bf16.gmra.mxu0 %v181
  %v220 = vpop.f32.mrf.mxu0
  %v221 = vadd.f32 %v154, %v220
  %v222 = vpop.f32.mrf.mxu0
  %v223 = vpop.f32.mrf.mxu0
  %v224 = vadd.f32 %v157, %v223
  %v225 = vpop.f32.mrf.mxu0
  %226 = vmatprep.mubr.bf16.mxu0 0
  %227 = vmatmul.mubr.bf16.gmra.mxu0 %v184
  %v228 = vpop.f32.mrf.mxu0
  %v229 = vadd.f32 %v162, %v228
  %v230 = vpop.f32.mrf.mxu0
  %v231 = vpop.f32.mrf.mxu0
  %v232 = vadd.f32 %v165, %v231
  %v233 = vpop.f32.mrf.mxu0
  %234 = vdwg.mxu0
  %v235 = vld [vmem:[%s5] sm:$0x1]
  %v237 = vlaneseq
  %v238 = vshrl.u32 %v237, 7
  %v239 = vsub.s32 0, %v238
  %v240 = vrot.slane %v235, %v239
  %v242 = vadd.f32 %v221, %v240
  %v243 = vadd.f32 %v224, %v240
  %v244 = vadd.f32 %v229, %v240
  %v245 = vadd.f32 %v232, %v240
  %v246 = vmax.f32 %v242, 0.0
  %v247 = vmax.f32 %v243, 0.0
  %v248 = vmax.f32 %v244, 0.0
  %v249 = vmax.f32 %v245, 0.0
  %v250 = vld [vmem:[%s6] sm:$0xf]
  %v251 = vld [vmem:[%s6 + $0x4] sm:$0xf]
  %v252 = vld [vmem:[%s6 + $0x8] sm:$0xf]
  %v253 = vld [vmem:[%s6 + $0xc] sm:$0xf]
  %v254 = vpack.c.bf16 %v247, %v246
  %v255 = vpack.c.bf16 %v249, %v248
  %v256 = vld [vmem:[%s7] sm:$0x1]
  %v258 = vlaneseq
  %v259 = vshrl.u32 %v258, 7
  %v260 = vsub.s32 0, %v259
  %v261 = vrot.slane %v256, %v260
  %v267 = vunpack.c.l.b16 %v250
  %v268 = vunpack.c.l.b16 %v251
  %v269 = vunpack.c.l.b16 %v252
  %v270 = vunpack.c.l.b16 %v253
  %v271 = vpack.c.b16 %v268, %v267
  %v272 = vpack.c.b16 %v270, %v269
  %v276 = vsel %vm112, %v254, 0
  %v279 = vsel %vm112, %v255, 0
  %281 = vmatprep.subr.bf16.mxu0 0
  %282 = vmatpush1.bf16.msra.mxu0 0
  %283 = vmatprep.subr.bf16.mxu0 0
  %284 = vmatpush1.bf16.msra.mxu0 0
  %285 = vmatprep.subr.bf16.mxu0 0
  %286 = vmatpush1.bf16.msra.mxu0 0
  %287 = vmatprep.subr.bf16.mxu0 0
  %288 = vmatpush1.bf16.msra.mxu0 0
  %289 = vmatprep.subr.bf16.mxu0 0
  %290 = vmatpush1.bf16.msra.mxu0 0
  %291 = vmatprep.subr.bf16.mxu0 0
  %292 = vmatpush1.bf16.msra.mxu0 0
  %293 = vmatprep.subr.bf16.mxu0 0
  %294 = vmatpush1.bf16.msra.mxu0 %v272
  %295 = vmatprep.subr.bf16.mxu0 0
  %296 = vmatpush1.bf16.msra.mxu0 %v271
  %297 = vmatprep.subr.bf16.mxu0 0
  %298 = vmatpush2.bf16.msra.mxu0 0
  %299 = vmatprep.subr.bf16.mxu0 0
  %300 = vmatpush2.bf16.msra.mxu0 0
  %301 = vmatprep.subr.bf16.mxu0 0
  %302 = vmatpush2.bf16.msra.mxu0 0
  %303 = vmatprep.subr.bf16.mxu0 0
  %304 = vmatpush2.bf16.msra.mxu0 0
  %305 = vmatprep.subr.bf16.mxu0 0
  %306 = vmatpush2.bf16.msra.mxu0 0
  %307 = vmatprep.subr.bf16.mxu0 0
  %308 = vmatpush2.bf16.msra.mxu0 0
  %309 = vmatprep.subr.bf16.mxu0 0
  %310 = vmatpush2.bf16.msra.mxu0 0
  %311 = vmatprep.subr.bf16.mxu0 0
  %312 = vmatpush2.bf16.msra.mxu0 0
  %313 = vmatprep.mubr.bf16.mxu0 0
  %314 = vmatmul.mubr.bf16.gmra.mxu0 %v276
  %v315 = vpop.f32.mrf.mxu0
  %v316 = vadd.f32 %v261, %v315
  %v317 = vpop.f32.mrf.mxu0
  %v318 = vpop.f32.mrf.mxu0
  %v319 = vadd.f32 %v261, %v318
  %v320 = vpop.f32.mrf.mxu0
  %321 = vmatprep.mubr.bf16.mxu0 0
  %322 = vmatmul.mubr.bf16.gmra.mxu0 %v279
  %v323 = vpop.f32.mrf.mxu0
  %v324 = vadd.f32 %v261, %v323
  %v325 = vpop.f32.mrf.mxu0
  %v326 = vpop.f32.mrf.mxu0
  %v327 = vadd.f32 %v261, %v326
  %v328 = vpop.f32.mrf.mxu0
  %329 = vdwg.mxu0
  %v330 = vld [vmem:[%s8] sm:$0xf]
  %v331 = vld [vmem:[%s8 + $0x4] sm:$0xf]
  %v332 = vld [vmem:[%s8 + $0x8] sm:$0xf]
  %v333 = vld [vmem:[%s8 + $0xc] sm:$0xf]
  %v338 = vunpack.c.l.b16 %v330
  %v339 = vunpack.c.l.b16 %v331
  %v340 = vunpack.c.l.b16 %v332
  %v341 = vunpack.c.l.b16 %v333
  %v342 = vpack.c.b16 %v339, %v338
  %v343 = vpack.c.b16 %v341, %v340
  %346 = vmatprep.subr.bf16.mxu0 0
  %347 = vmatpush1.bf16.msra.mxu0 0
  %348 = vmatprep.subr.bf16.mxu0 0
  %349 = vmatpush1.bf16.msra.mxu0 0
  %350 = vmatprep.subr.bf16.mxu0 0
  %351 = vmatpush1.bf16.msra.mxu0 0
  %352 = vmatprep.subr.bf16.mxu0 0
  %353 = vmatpush1.bf16.msra.mxu0 0
  %354 = vmatprep.subr.bf16.mxu0 0
  %355 = vmatpush1.bf16.msra.mxu0 0
  %356 = vmatprep.subr.bf16.mxu0 0
  %357 = vmatpush1.bf16.msra.mxu0 0
  %358 = vmatprep.subr.bf16.mxu0 0
  %359 = vmatpush1.bf16.msra.mxu0 %v343
  %360 = vmatprep.subr.bf16.mxu0 0
  %361 = vmatpush1.bf16.msra.mxu0 %v342
  %362 = vmatprep.subr.bf16.mxu0 0
  %363 = vmatpush2.bf16.msra.mxu0 0
  %364 = vmatprep.subr.bf16.mxu0 0
  %365 = vmatpush2.bf16.msra.mxu0 0
  %366 = vmatprep.subr.bf16.mxu0 0
  %367 = vmatpush2.bf16.msra.mxu0 0
  %368 = vmatprep.subr.bf16.mxu0 0
  %369 = vmatpush2.bf16.msra.mxu0 0
  %370 = vmatprep.subr.bf16.mxu0 0
  %371 = vmatpush2.bf16.msra.mxu0 0
  %372 = vmatprep.subr.bf16.mxu0 0
  %373 = vmatpush2.bf16.msra.mxu0 0
  %374 = vmatprep.subr.bf16.mxu0 0
  %375 = vmatpush2.bf16.msra.mxu0 0
  %376 = vmatprep.subr.bf16.mxu0 0
  %377 = vmatpush2.bf16.msra.mxu0 0
  %378 = vmatprep.mubr.bf16.mxu0 0
  %379 = vmatmul.mubr.bf16.gmra.mxu0 %v181
  %v380 = vpop.f32.mrf.mxu0
  %v381 = vadd.f32 0.0, %v380
  %v382 = vpop.f32.mrf.mxu0
  %v383 = vpop.f32.mrf.mxu0
  %v384 = vadd.f32 0.0, %v383
  %v385 = vpop.f32.mrf.mxu0
  %386 = vmatprep.mubr.bf16.mxu0 0
  %387 = vmatmul.mubr.bf16.gmra.mxu0 %v184
  %v388 = vpop.f32.mrf.mxu0
  %v389 = vadd.f32 0.0, %v388
  %v390 = vpop.f32.mrf.mxu0
  %v391 = vpop.f32.mrf.mxu0
  %v392 = vadd.f32 0.0, %v391
  %v393 = vpop.f32.mrf.mxu0
  %394 = vdwg.mxu0
  %v395 = vadd.f32 %v316, %v381
  %v396 = vadd.f32 %v319, %v384
  %v397 = vadd.f32 %v324, %v389
  %v398 = vadd.f32 %v327, %v392
  %v399 = vld [vmem:[%s9] sm:$0xf]
  %v400 = vld [vmem:[%s9 + $0x4] sm:$0xf]
  %v401 = vld [vmem:[%s9 + $0x8] sm:$0xf]
  %v402 = vld [vmem:[%s9 + $0xc] sm:$0xf]
  %v407 = vunpack.c.l.b16 %v399
  %v408 = vunpack.c.l.b16 %v400
  %v409 = vunpack.c.l.b16 %v401
  %v410 = vunpack.c.l.b16 %v402
  %v411 = vpack.c.b16 %v408, %v407
  %v412 = vpack.c.b16 %v410, %v409
  %415 = vmatprep.subr.bf16.mxu0 0
  %416 = vmatpush1.bf16.msra.mxu0 0
  %417 = vmatprep.subr.bf16.mxu0 0
  %418 = vmatpush1.bf16.msra.mxu0 0
  %419 = vmatprep.subr.bf16.mxu0 0
  %420 = vmatpush1.bf16.msra.mxu0 0
  %421 = vmatprep.subr.bf16.mxu0 0
  %422 = vmatpush1.bf16.msra.mxu0 0
  %423 = vmatprep.subr.bf16.mxu0 0
  %424 = vmatpush1.bf16.msra.mxu0 0
  %425 = vmatprep.subr.bf16.mxu0 0
  %426 = vmatpush1.bf16.msra.mxu0 0
  %427 = vmatprep.subr.bf16.mxu0 0
  %428 = vmatpush1.bf16.msra.mxu0 %v412
  %429 = vmatprep.subr.bf16.mxu0 0
  %430 = vmatpush1.bf16.msra.mxu0 %v411
  %431 = vmatprep.subr.bf16.mxu0 0
  %432 = vmatpush2.bf16.msra.mxu0 0
  %433 = vmatprep.subr.bf16.mxu0 0
  %434 = vmatpush2.bf16.msra.mxu0 0
  %435 = vmatprep.subr.bf16.mxu0 0
  %436 = vmatpush2.bf16.msra.mxu0 0
  %437 = vmatprep.subr.bf16.mxu0 0
  %438 = vmatpush2.bf16.msra.mxu0 0
  %439 = vmatprep.subr.bf16.mxu0 0
  %440 = vmatpush2.bf16.msra.mxu0 0
  %441 = vmatprep.subr.bf16.mxu0 0
  %442 = vmatpush2.bf16.msra.mxu0 0
  %443 = vmatprep.subr.bf16.mxu0 0
  %444 = vmatpush2.bf16.msra.mxu0 0
  %445 = vmatprep.subr.bf16.mxu0 0
  %446 = vmatpush2.bf16.msra.mxu0 0
  %447 = vmatprep.mubr.bf16.mxu0 0
  %448 = vmatmul.mubr.bf16.gmra.mxu0 %v114
  %v449 = vpop.f32.mrf.mxu0
  %v450 = vadd.f32 0.0, %v449
  %v451 = vpop.f32.mrf.mxu0
  %v452 = vpop.f32.mrf.mxu0
  %v453 = vadd.f32 0.0, %v452
  %v454 = vpop.f32.mrf.mxu0
  %455 = vmatprep.mubr.bf16.mxu0 0
  %456 = vmatmul.mubr.bf16.gmra.mxu0 %v117
  %v457 = vpop.f32.mrf.mxu0
  %v458 = vadd.f32 0.0, %v457
  %v459 = vpop.f32.mrf.mxu0
  %v460 = vpop.f32.mrf.mxu0
  %v461 = vadd.f32 0.0, %v460
  %v462 = vpop.f32.mrf.mxu0
  %463 = vdwg.mxu0
  %v464 = vadd.f32 %v395, %v450
  %v465 = vadd.f32 %v396, %v453
  %v466 = vadd.f32 %v397, %v458
  %v467 = vadd.f32 %v398, %v461
  %v468 = vld [vmem:[%s10] sm:$0x1]
  %v470 = vlaneseq
  %v471 = vshrl.u32 %v470, 7
  %v472 = vsub.s32 0, %v471
  %v473 = vrot.slane %v468, %v472
  %v475 = vadd.f32 %v464, %v473
  %v476 = vadd.f32 %v465, %v473
  %v477 = vadd.f32 %v466, %v473
  %v478 = vadd.f32 %v467, %v473
  %v479 = vpack.c.bf16 %v476, %v475
  %v480 = vpack.c.bf16 %v478, %v477
  %v483 = vunpack.c.l.b16 %v479
  %v484 = vunpack.c.h.b16 %v479
  %v485 = vunpack.c.l.b16 %v480
  %v486 = vunpack.c.h.b16 %v480
  %v487 = vpack.c.b16 %v483, %v483
  %v488 = vpack.c.b16 %v484, %v484
  %v489 = vpack.c.b16 %v485, %v485
  %v490 = vpack.c.b16 %v486, %v486
  %vm495 = vcmask 257024
  %496 = vst.msk [vmem:[%s19] sm:$0xf] %vm495, %v487
  %497 = vst.msk [vmem:[%s19 + $0x4] sm:$0xf] %vm495, %v488
  %498 = vst.msk [vmem:[%s19 + $0x8] sm:$0xf] %vm495, %v489
  %499 = vst.msk [vmem:[%s19 + $0xc] sm:$0xf] %vm495, %v490
  %v500 = vld [vmem:[%s11] sm:$0xf]
  %v501 = vld [vmem:[%s11 + $0x4] sm:$0xf]
  %v502 = vld [vmem:[%s11 + $0x8] sm:$0xf]
  %v503 = vld [vmem:[%s11 + $0xc] sm:$0xf]
  %v504 = vld [vmem:[%s12] sm:$0x1]
  %v506 = vlaneseq
  %v507 = vshrl.u32 %v506, 7
  %v508 = vsub.s32 0, %v507
  %v509 = vrot.slane %v504, %v508
  %v515 = vunpack.c.l.b16 %v500
  %v516 = vunpack.c.l.b16 %v501
  %v517 = vunpack.c.l.b16 %v502
  %v518 = vunpack.c.l.b16 %v503
  %v519 = vpack.c.b16 %v516, %v515
  %v520 = vpack.c.b16 %v518, %v517
  %523 = vmatprep.subr.bf16.mxu0 0
  %524 = vmatpush1.bf16.msra.mxu0 0
  %525 = vmatprep.subr.bf16.mxu0 0
  %526 = vmatpush1.bf16.msra.mxu0 0
  %527 = vmatprep.subr.bf16.mxu0 0
  %528 = vmatpush1.bf16.msra.mxu0 0
  %529 = vmatprep.subr.bf16.mxu0 0
  %530 = vmatpush1.bf16.msra.mxu0 0
  %531 = vmatprep.subr.bf16.mxu0 0
  %532 = vmatpush1.bf16.msra.mxu0 0
  %533 = vmatprep.subr.bf16.mxu0 0
  %534 = vmatpush1.bf16.msra.mxu0 0
  %535 = vmatprep.subr.bf16.mxu0 0
  %536 = vmatpush1.bf16.msra.mxu0 %v520
  %537 = vmatprep.subr.bf16.mxu0 0
  %538 = vmatpush1.bf16.msra.mxu0 %v519
  %539 = vmatprep.subr.bf16.mxu0 0
  %540 = vmatpush2.bf16.msra.mxu0 0
  %541 = vmatprep.subr.bf16.mxu0 0
  %542 = vmatpush2.bf16.msra.mxu0 0
  %543 = vmatprep.subr.bf16.mxu0 0
  %544 = vmatpush2.bf16.msra.mxu0 0
  %545 = vmatprep.subr.bf16.mxu0 0
  %546 = vmatpush2.bf16.msra.mxu0 0
  %547 = vmatprep.subr.bf16.mxu0 0
  %548 = vmatpush2.bf16.msra.mxu0 0
  %549 = vmatprep.subr.bf16.mxu0 0
  %550 = vmatpush2.bf16.msra.mxu0 0
  %551 = vmatprep.subr.bf16.mxu0 0
  %552 = vmatpush2.bf16.msra.mxu0 0
  %553 = vmatprep.subr.bf16.mxu0 0
  %554 = vmatpush2.bf16.msra.mxu0 0
  %555 = vmatprep.mubr.bf16.mxu0 0
  %556 = vmatmul.mubr.bf16.gmra.mxu0 %v114
  %v557 = vpop.f32.mrf.mxu0
  %v558 = vadd.f32 %v509, %v557
  %v559 = vpop.f32.mrf.mxu0
  %v560 = vpop.f32.mrf.mxu0
  %v561 = vadd.f32 %v509, %v560
  %v562 = vpop.f32.mrf.mxu0
  %563 = vmatprep.mubr.bf16.mxu0 0
  %564 = vmatmul.mubr.bf16.gmra.mxu0 %v117
  %v565 = vpop.f32.mrf.mxu0
  %v566 = vadd.f32 %v509, %v565
  %v567 = vpop.f32.mrf.mxu0
  %v568 = vpop.f32.mrf.mxu0
  %v569 = vadd.f32 %v509, %v568
  %v570 = vpop.f32.mrf.mxu0
  %571 = vdwg.mxu0
  %v572 = vpack.c.bf16 %v561, %v558
  %v573 = vpack.c.bf16 %v569, %v566
  %v576 = vunpack.c.l.b16 %v572
  %v577 = vunpack.c.h.b16 %v572
  %v578 = vunpack.c.l.b16 %v573
  %v579 = vunpack.c.h.b16 %v573
  %v580 = vpack.c.b16 %v576, %v576
  %v581 = vpack.c.b16 %v577, %v577
  %v582 = vpack.c.b16 %v578, %v578
  %v583 = vpack.c.b16 %v579, %v579
  %588 = vst.msk [vmem:[%s20] sm:$0xf] %vm495, %v580
  %589 = vst.msk [vmem:[%s20 + $0x4] sm:$0xf] %vm495, %v581
  %590 = vst.msk [vmem:[%s20 + $0x8] sm:$0xf] %vm495, %v582
  %591 = vst.msk [vmem:[%s20 + $0xc] sm:$0xf] %vm495, %v583
  %v592 = vld [vmem:[%s13] sm:$0xf]
  %v593 = vld [vmem:[%s13 + $0x4] sm:$0xf]
  %v594 = vld [vmem:[%s13 + $0x8] sm:$0xf]
  %v595 = vld [vmem:[%s13 + $0xc] sm:$0xf]
  %v596 = vld [vmem:[%s14] sm:$0x1]
  %v598 = vlaneseq
  %v599 = vshrl.u32 %v598, 7
  %v600 = vsub.s32 0, %v599
  %v601 = vrot.slane %v596, %v600
  %v607 = vunpack.c.l.b16 %v592
  %v608 = vunpack.c.l.b16 %v593
  %v609 = vunpack.c.l.b16 %v594
  %v610 = vunpack.c.l.b16 %v595
  %v611 = vpack.c.b16 %v608, %v607
  %v612 = vpack.c.b16 %v610, %v609
  %615 = vmatprep.subr.bf16.mxu0 0
  %616 = vmatpush1.bf16.msra.mxu0 0
  %617 = vmatprep.subr.bf16.mxu0 0
  %618 = vmatpush1.bf16.msra.mxu0 0
  %619 = vmatprep.subr.bf16.mxu0 0
  %620 = vmatpush1.bf16.msra.mxu0 0
  %621 = vmatprep.subr.bf16.mxu0 0
  %622 = vmatpush1.bf16.msra.mxu0 0
  %623 = vmatprep.subr.bf16.mxu0 0
  %624 = vmatpush1.bf16.msra.mxu0 0
  %625 = vmatprep.subr.bf16.mxu0 0
  %626 = vmatpush1.bf16.msra.mxu0 0
  %627 = vmatprep.subr.bf16.mxu0 0
  %628 = vmatpush1.bf16.msra.mxu0 %v612
  %629 = vmatprep.subr.bf16.mxu0 0
  %630 = vmatpush1.bf16.msra.mxu0 %v611
  %631 = vmatprep.subr.bf16.mxu0 0
  %632 = vmatpush2.bf16.msra.mxu0 0
  %633 = vmatprep.subr.bf16.mxu0 0
  %634 = vmatpush2.bf16.msra.mxu0 0
  %635 = vmatprep.subr.bf16.mxu0 0
  %636 = vmatpush2.bf16.msra.mxu0 0
  %637 = vmatprep.subr.bf16.mxu0 0
  %638 = vmatpush2.bf16.msra.mxu0 0
  %639 = vmatprep.subr.bf16.mxu0 0
  %640 = vmatpush2.bf16.msra.mxu0 0
  %641 = vmatprep.subr.bf16.mxu0 0
  %642 = vmatpush2.bf16.msra.mxu0 0
  %643 = vmatprep.subr.bf16.mxu0 0
  %644 = vmatpush2.bf16.msra.mxu0 0
  %645 = vmatprep.subr.bf16.mxu0 0
  %646 = vmatpush2.bf16.msra.mxu0 0
  %647 = vmatprep.mubr.bf16.mxu0 0
  %648 = vmatmul.mubr.bf16.gmra.mxu0 %v181
  %v649 = vpop.f32.mrf.mxu0
  %v650 = vadd.f32 %v601, %v649
  %v651 = vpop.f32.mrf.mxu0
  %v652 = vpop.f32.mrf.mxu0
  %v653 = vadd.f32 %v601, %v652
  %v654 = vpop.f32.mrf.mxu0
  %655 = vmatprep.mubr.bf16.mxu0 0
  %656 = vmatmul.mubr.bf16.gmra.mxu0 %v184
  %v657 = vpop.f32.mrf.mxu0
  %v658 = vadd.f32 %v601, %v657
  %v659 = vpop.f32.mrf.mxu0
  %v660 = vpop.f32.mrf.mxu0
  %v661 = vadd.f32 %v601, %v660
  %v662 = vpop.f32.mrf.mxu0
  %663 = vdwg.mxu0
  %v664 = vpack.c.bf16 %v653, %v650
  %v665 = vpack.c.bf16 %v661, %v658
  %v668 = vunpack.c.l.b16 %v664
  %v669 = vunpack.c.h.b16 %v664
  %v670 = vunpack.c.l.b16 %v665
  %v671 = vunpack.c.h.b16 %v665
  %v672 = vpack.c.b16 %v668, %v668
  %v673 = vpack.c.b16 %v669, %v669
  %v674 = vpack.c.b16 %v670, %v670
  %v675 = vpack.c.b16 %v671, %v671
  %680 = vst.msk [vmem:[%s21] sm:$0xf] %vm495, %v672
  %681 = vst.msk [vmem:[%s21 + $0x4] sm:$0xf] %vm495, %v673
  %682 = vst.msk [vmem:[%s21 + $0x8] sm:$0xf] %vm495, %v674
  %683 = vst.msk [vmem:[%s21 + $0xc] sm:$0xf] %vm495, %v675
  %v684 = vld [vmem:[%s15] sm:$0xf]
  %v685 = vld [vmem:[%s15 + $0x4] sm:$0xf]
  %v686 = vld [vmem:[%s15 + $0x8] sm:$0xf]
  %v687 = vld [vmem:[%s15 + $0xc] sm:$0xf]
  %v688 = vld [vmem:[%s16] sm:$0x1]
  %v690 = vlaneseq
  %v691 = vshrl.u32 %v690, 7
  %v692 = vsub.s32 0, %v691
  %v693 = vrot.slane %v688, %v692
  %v699 = vunpack.c.l.b16 %v684
  %v700 = vunpack.c.l.b16 %v685
  %v701 = vunpack.c.l.b16 %v686
  %v702 = vunpack.c.l.b16 %v687
  %v703 = vpack.c.b16 %v700, %v699
  %v704 = vpack.c.b16 %v702, %v701
  %v708 = vsel %vm112, %v479, 0
  %v711 = vsel %vm112, %v480, 0
  %713 = vmatprep.subr.bf16.mxu0 0
  %714 = vmatpush1.bf16.msra.mxu0 0
  %715 = vmatprep.subr.bf16.mxu0 0
  %716 = vmatpush1.bf16.msra.mxu0 0
  %717 = vmatprep.subr.bf16.mxu0 0
  %718 = vmatpush1.bf16.msra.mxu0 0
  %719 = vmatprep.subr.bf16.mxu0 0
  %720 = vmatpush1.bf16.msra.mxu0 0
  %721 = vmatprep.subr.bf16.mxu0 0
  %722 = vmatpush1.bf16.msra.mxu0 0
  %723 = vmatprep.subr.bf16.mxu0 0
  %724 = vmatpush1.bf16.msra.mxu0 0
  %725 = vmatprep.subr.bf16.mxu0 0
  %726 = vmatpush1.bf16.msra.mxu0 %v704
  %727 = vmatprep.subr.bf16.mxu0 0
  %728 = vmatpush1.bf16.msra.mxu0 %v703
  %729 = vmatprep.subr.bf16.mxu0 0
  %730 = vmatpush2.bf16.msra.mxu0 0
  %731 = vmatprep.subr.bf16.mxu0 0
  %732 = vmatpush2.bf16.msra.mxu0 0
  %733 = vmatprep.subr.bf16.mxu0 0
  %734 = vmatpush2.bf16.msra.mxu0 0
  %735 = vmatprep.subr.bf16.mxu0 0
  %736 = vmatpush2.bf16.msra.mxu0 0
  %737 = vmatprep.subr.bf16.mxu0 0
  %738 = vmatpush2.bf16.msra.mxu0 0
  %739 = vmatprep.subr.bf16.mxu0 0
  %740 = vmatpush2.bf16.msra.mxu0 0
  %741 = vmatprep.subr.bf16.mxu0 0
  %742 = vmatpush2.bf16.msra.mxu0 0
  %743 = vmatprep.subr.bf16.mxu0 0
  %744 = vmatpush2.bf16.msra.mxu0 0
  %745 = vmatprep.mubr.bf16.mxu0 0
  %746 = vmatmul.mubr.bf16.gmra.mxu0 %v708
  %v747 = vpop.f32.mrf.mxu0
  %v748 = vadd.f32 %v693, %v747
  %v749 = vpop.f32.mrf.mxu0
  %v750 = vpop.f32.mrf.mxu0
  %v751 = vadd.f32 %v693, %v750
  %v752 = vpop.f32.mrf.mxu0
  %753 = vmatprep.mubr.bf16.mxu0 0
  %754 = vmatmul.mubr.bf16.gmra.mxu0 %v711
  %v755 = vpop.f32.mrf.mxu0
  %v756 = vadd.f32 %v693, %v755
  %v757 = vpop.f32.mrf.mxu0
  %v758 = vpop.f32.mrf.mxu0
  %v759 = vadd.f32 %v693, %v758
  %v760 = vpop.f32.mrf.mxu0
  %761 = vdwg.mxu0
  %v762 = vpack.c.bf16 %v751, %v748
  %v763 = vpack.c.bf16 %v759, %v756
  %v766 = vunpack.c.l.b16 %v762
  %v767 = vunpack.c.h.b16 %v762
  %v768 = vunpack.c.l.b16 %v763
  %v769 = vunpack.c.h.b16 %v763
  %v770 = vpack.c.b16 %v766, %v766
  %v771 = vpack.c.b16 %v767, %v767
  %v772 = vpack.c.b16 %v768, %v768
  %v773 = vpack.c.b16 %v769, %v769
  %778 = vst.msk [vmem:[%s22] sm:$0xf] %vm495, %v770
  %779 = vst.msk [vmem:[%s22 + $0x4] sm:$0xf] %vm495, %v771
  %780 = vst.msk [vmem:[%s22 + $0x8] sm:$0xf] %vm495, %v772
  %781 = vst.msk [vmem:[%s22 + $0xc] sm:$0xf] %vm495, %v773
  %v782 = vld [vmem:[%s17] sm:$0xf]
  %v783 = vld [vmem:[%s17 + $0x4] sm:$0xf]
  %v784 = vld [vmem:[%s17 + $0x8] sm:$0xf]
  %v785 = vld [vmem:[%s17 + $0xc] sm:$0xf]
  %v786 = vld [vmem:[%s18] sm:$0x1]
  %v788 = vlaneseq
  %v789 = vshrl.u32 %v788, 7
  %v790 = vsub.s32 0, %v789
  %v791 = vrot.slane %v786, %v790
  %v797 = vunpack.c.l.b16 %v76
  %v798 = vunpack.c.l.b16 %v77
  %v799 = vunpack.c.l.b16 %v78
  %v800 = vunpack.c.l.b16 %v79
  %v801 = vpack.c.b16 %v798, %v797
  %v802 = vpack.c.b16 %v800, %v799
  %v807 = vunpack.c.l.b16 %v782
  %v808 = vunpack.c.l.b16 %v783
  %v809 = vunpack.c.l.b16 %v784
  %v810 = vunpack.c.l.b16 %v785
  %v811 = vpack.c.b16 %v808, %v807
  %v812 = vpack.c.b16 %v810, %v809
  %v816 = vsel %vm112, %v801, 0
  %v819 = vsel %vm112, %v802, 0
  %821 = vmatprep.subr.bf16.mxu0 0
  %822 = vmatpush1.bf16.msra.mxu0 0
  %823 = vmatprep.subr.bf16.mxu0 0
  %824 = vmatpush1.bf16.msra.mxu0 0
  %825 = vmatprep.subr.bf16.mxu0 0
  %826 = vmatpush1.bf16.msra.mxu0 0
  %827 = vmatprep.subr.bf16.mxu0 0
  %828 = vmatpush1.bf16.msra.mxu0 0
  %829 = vmatprep.subr.bf16.mxu0 0
  %830 = vmatpush1.bf16.msra.mxu0 0
  %831 = vmatprep.subr.bf16.mxu0 0
  %832 = vmatpush1.bf16.msra.mxu0 0
  %833 = vmatprep.subr.bf16.mxu0 0
  %834 = vmatpush1.bf16.msra.mxu0 %v812
  %835 = vmatprep.subr.bf16.mxu0 0
  %836 = vmatpush1.bf16.msra.mxu0 %v811
  %837 = vmatprep.subr.bf16.mxu0 0
  %838 = vmatpush2.bf16.msra.mxu0 0
  %839 = vmatprep.subr.bf16.mxu0 0
  %840 = vmatpush2.bf16.msra.mxu0 0
  %841 = vmatprep.subr.bf16.mxu0 0
  %842 = vmatpush2.bf16.msra.mxu0 0
  %843 = vmatprep.subr.bf16.mxu0 0
  %844 = vmatpush2.bf16.msra.mxu0 0
  %845 = vmatprep.subr.bf16.mxu0 0
  %846 = vmatpush2.bf16.msra.mxu0 0
  %847 = vmatprep.subr.bf16.mxu0 0
  %848 = vmatpush2.bf16.msra.mxu0 0
  %849 = vmatprep.subr.bf16.mxu0 0
  %850 = vmatpush2.bf16.msra.mxu0 0
  %851 = vmatprep.subr.bf16.mxu0 0
  %852 = vmatpush2.bf16.msra.mxu0 0
  %853 = vmatprep.mubr.bf16.mxu0 0
  %854 = vmatmul.mubr.bf16.gmra.mxu0 %v816
  %v855 = vpop.f32.mrf.mxu0
  %v856 = vadd.f32 %v791, %v855
  %v857 = vpop.f32.mrf.mxu0
  %v858 = vpop.f32.mrf.mxu0
  %v859 = vadd.f32 %v791, %v858
  %v860 = vpop.f32.mrf.mxu0
  %861 = vmatprep.mubr.bf16.mxu0 0
  %862 = vmatmul.mubr.bf16.gmra.mxu0 %v819
  %v863 = vpop.f32.mrf.mxu0
  %v864 = vadd.f32 %v791, %v863
  %v865 = vpop.f32.mrf.mxu0
  %v866 = vpop.f32.mrf.mxu0
  %v867 = vadd.f32 %v791, %v866
  %v868 = vpop.f32.mrf.mxu0
  %869 = vdwg.mxu0
  %v870 = vpack.c.bf16 %v859, %v856
  %v871 = vpack.c.bf16 %v867, %v864
  %v874 = vunpack.c.l.b16 %v870
  %v875 = vunpack.c.h.b16 %v870
  %v876 = vunpack.c.l.b16 %v871
  %v877 = vunpack.c.h.b16 %v871
  %v878 = vpack.c.b16 %v874, %v874
  %v879 = vpack.c.b16 %v875, %v875
  %v880 = vpack.c.b16 %v876, %v876
  %v881 = vpack.c.b16 %v877, %v877
  %886 = vst.msk [vmem:[%s23] sm:$0xf] %vm495, %v878
  %887 = vst.msk [vmem:[%s23 + $0x4] sm:$0xf] %vm495, %v879
  %888 = vst.msk [vmem:[%s23 + $0x8] sm:$0xf] %vm495, %v880
  %889 = vst.msk [vmem:[%s23 + $0xc] sm:$0xf] %vm495, %v881
  // Predicated region
  $region78: #{upsampler_forward.15} parent=0 // pred_check
    _
  $region79: #{upsampler_forward.15} parent=0 // pred_check_branch
    %891 = sbr.rel (0) target = $region81
  $region80: #{upsampler_forward.15} parent=0 // pred_region
    _
  $region81: #{upsampler_forward.15} parent=0 // pred_fallthru
    _
  // Predicated region
  $region82: #{upsampler_forward.15} parent=0 // pred_check
    _
  $region83: #{upsampler_forward.15} parent=0 // pred_check_branch
    %893 = sbr.rel (0) target = $region85
  $region84: #{upsampler_forward.15} parent=0 // pred_region
    _
  $region85: #{upsampler_forward.15} parent=0 // pred_fallthru
    _
  // Predicated region
  $region86: #{upsampler_forward.15} parent=0 // pred_check
    _
  $region87: #{upsampler_forward.15} parent=0 // pred_check_branch
    %895 = sbr.rel (0) target = $region89
  $region88: #{upsampler_forward.15} parent=0 // pred_region
    _
  $region89: #{upsampler_forward.15} parent=0 // pred_fallthru
    _
  // Predicated region
  $region90: #{upsampler_forward.15} parent=0 // pred_check
    _
  $region91: #{upsampler_forward.15} parent=0 // pred_check_branch
    %897 = sbr.rel (0) target = $region93
  $region92: #{upsampler_forward.15} parent=0 // pred_region
    _
  $region93: #{upsampler_forward.15} parent=0 // pred_fallthru
    _
  // Predicated region
  $region94: #{upsampler_forward.15} parent=0 // pred_check
    _
  $region95: #{upsampler_forward.15} parent=0 // pred_check_branch
    %899 = sbr.rel (0) target = $region97
  $region96: #{upsampler_forward.15} parent=0 // pred_region
    _
  $region97: #{upsampler_forward.15} parent=0 // pred_fallthru
    _
  // Predicated region
  $region98: #{upsampler_forward.15} parent=0 // pred_check
    _
  $region99: #{upsampler_forward.15} parent=0 // pred_check_branch
    %901 = sbr.rel (0) target = $region101
  $region100: #{upsampler_forward.15} parent=0 // pred_region
    _
  $region101: #{upsampler_forward.15} parent=0 // pred_fallthru
    _
  // Predicated region
  $region102: #{upsampler_forward.15} parent=0 // pred_check
    _
  $region103: #{upsampler_forward.15} parent=0 // pred_check_branch
    %903 = sbr.rel (0) target = $region105
  $region104: #{upsampler_forward.15} parent=0 // pred_region
    _
  $region105: #{upsampler_forward.15} parent=0 // pred_fallthru
    _
  // Predicated region
  $region106: #{upsampler_forward.15} parent=0 // pred_check
    _
  $region107: #{upsampler_forward.15} parent=0 // pred_check_branch
    %905 = sbr.rel (0) target = $region109
  $region108: #{upsampler_forward.15} parent=0 // pred_region
    _
  $region109: #{upsampler_forward.15} parent=0 // pred_fallthru
    _
  // Predicated region
  $region110: #{upsampler_forward.15} parent=0 // pred_check
    _
  $region111: #{upsampler_forward.15} parent=0 // pred_check_branch
    %907 = sbr.rel (0) target = $region113
  $region112: #{upsampler_forward.15} parent=0 // pred_region
    _
  $region113: #{upsampler_forward.15} parent=0 // pred_fallthru
    _
  // Predicated region
  $region114: #{upsampler_forward.15} parent=0 // pred_check
    _
  $region115: #{upsampler_forward.15} parent=0 // pred_check_branch
    %909 = sbr.rel (0) target = $region117
  $region116: #{upsampler_forward.15} parent=0 // pred_region
    _
  $region117: #{upsampler_forward.15} parent=0 // pred_fallthru
    _

// kernel: upsampler_forward.16
$region0: #{upsampler_forward.16}
  #allocation0 [shape = 'u32[]', space=smem, size = 0x4, offset = 0x4, fixed_abs, tag = 'smem constant byte address 0x4 - core index']
  #allocation1 [shape = 'u32[144,128]{1,0:T(1,128)}', space=vmem, size = 0x12000, scoped, tag = 'internal scratch']
  %s0 = inlined_call_operand.vmem [shape: bf16[2,16,32], index: 0, kind: input, shape index: {}]
  %s1 = inlined_call_operand.vmem [shape: bf16[2,4,16,32], index: 1, kind: input, shape index: {}]
  %s2 = inlined_call_operand.vmem [shape: bf16[2,4,16,32], index: 2, kind: input, shape index: {}]
  %s3 = inlined_call_operand.vmem [shape: bf16[2,4,16,32], index: 3, kind: input, shape index: {}]
  %s4 = inlined_call_operand.vmem [shape: f32[2,4,16,3], index: 4, kind: input, shape index: {}]
  %s5 = inlined_call_operand.vmem [shape: f32[2,16,3], index: 5, kind: input, shape index: {}]
  %s6 = inlined_call_operand.vmem [shape: bf16[2,16,32], index: 6, kind: input, shape index: {}]
  %s7 = inlined_call_operand.vmem [shape: bf16[2,16,32], index: 7, kind: input, shape index: {}]
  %s8 = inlined_call_operand.vmem [shape: bf16[3,32], index: 8, kind: input, shape index: {}]
  %s9 = inlined_call_operand.vmem [shape: f32[1,32], index: 9, kind: input, shape index: {}]
  %s10 = inlined_call_operand.vmem [shape: bf16[32,32], index: 10, kind: input, shape index: {}]
  %s11 = inlined_call_operand.vmem [shape: f32[1,32], index: 11, kind: input, shape index: {}]
  %s12 = inlined_call_operand.vmem [shape: bf16[32,128], index: 12, kind: input, shape index: {}]
  %s13 = inlined_call_operand.vmem [shape: f32[1,128], index: 13, kind: input, shape index: {}]
  %s14 = inlined_call_operand.vmem [shape: bf16[128,32], index: 14, kind: input, shape index: {}]
  %s15 = inlined_call_operand.vmem [shape: f32[1,32], index: 15, kind: input, shape index: {}]
  %s16 = inlined_call_operand.vmem [shape: bf16[32,32], index: 16, kind: input, shape index: {}]
  %s17 = inlined_call_operand.vmem [shape: f32[1,32], index: 17, kind: input, shape index: {}]
  %s18 = inlined_call_operand.vmem [shape: bf16[2,16,32], index: 18, kind: output, shape index: {}]
  %s19 = sld [smem:[#allocation0]]
  $region105: #{upsampler_forward.16} parent=0
    _
  %s21 = ssub.s32 1, %s19
  %s22 = scalar_select 0, %s21, %s19
  loop: start=0, step=1, limit=4
  $region2: #{upsampler_forward.16} parent=0 // loop_pre_header
    _
  $region3: #{upsampler_forward.16} parent=0 // loop_header
    %s24 = sphi 0, %s28
    %p25 = scmp.ge.s32.totalorder %s24, 4
    %s31 = sphi 0, %s43
    %s32 = sphi 0, %s39
    %s33 = sphi 0, %s31
    %s34 = sphi 0, %s32
    %s35 = sphi 0, %s33
    %s36 = sphi 0, %s34
    %s48 = sphi 0, %s50
    %s51 = sphi 0, %s48
    %s52 = sphi 0, %s51
    %s68 = sphi 0, %s52
    %s76 = sphi 0, %s78
    %s79 = sphi 0, %s76
    %s80 = sphi 0, %s79
    %s96 = sphi 0, %s80
    %s104 = sphi 0, %s106
    %s107 = sphi 0, %s104
    %s108 = sphi 0, %s107
    %s124 = sphi 0, %s108
    %s132 = sphi 0, %s134
    %s135 = sphi 0, %s132
    %s136 = sphi 0, %s135
    %s152 = sphi 0, %s136
    %s160 = sphi 0, %s162
    %s163 = sphi 0, %s160
    %s164 = sphi 0, %s163
    %s180 = sphi 0, %s164
    %s188 = sphi 0, %s190
    %s191 = sphi 0, %s188
    %s192 = sphi 0, %s191
    %s208 = sphi 0, %s192
    %s216 = sphi 0, %s218
    %s219 = sphi 0, %s216
    %s220 = sphi 0, %s219
    %s236 = sphi 0, %s220
    %s244 = sphi 0, %s246
    %s247 = sphi 0, %s244
    %s248 = sphi 0, %s247
    %s264 = sphi 0, %s248
    %s268 = sphi 0, %s268
    %s270 = sphi 0, %s268
    %s271 = sphi 0, %s270
    %s285 = sphi 0, %s271
    %s289 = sphi 0, %s289
    %s291 = sphi 0, %s289
    %s292 = sphi 0, %s291
    %s306 = sphi 0, %s292
    %s310 = sphi 0, %s310
    %s312 = sphi 0, %s310
    %s313 = sphi 0, %s312
    %s327 = sphi 0, %s313
    %s331 = sphi 0, %s331
    %s333 = sphi 0, %s331
    %s334 = sphi 0, %s333
    %s348 = sphi 0, %s334
    %s352 = sphi 0, %s352
    %s354 = sphi 0, %s352
    %s355 = sphi 0, %s354
    %s369 = sphi 0, %s355
    %s373 = sphi 0, %s373
    %s375 = sphi 0, %s373
    %s376 = sphi 0, %s375
    %s390 = sphi 0, %s376
    %s394 = sphi 0, %s394
    %s396 = sphi 0, %s394
    %s397 = sphi 0, %s396
    %s411 = sphi 0, %s397
    %s415 = sphi 0, %s415
    %s417 = sphi 0, %s415
    %s418 = sphi 0, %s417
    %s432 = sphi 0, %s418
    %s436 = sphi 0, %s436
    %s438 = sphi 0, %s436
    %s439 = sphi 0, %s438
    %s453 = sphi 0, %s439
    %s457 = sphi 0, %s457
    %s459 = sphi 0, %s457
    %s460 = sphi 0, %s459
    %s474 = sphi 0, %s460
    %s482 = sphi 0, %s484
    %s485 = sphi 0, %s482
    %s486 = sphi 0, %s485
    %s502 = sphi 0, %s486
  $region4: #{upsampler_forward.16} parent=0 // loop_header_branch
    %27 = sbr.rel (%p25) target = $region8
  $region5: #{upsampler_forward.16} parent=0 // loop_body
    %s29 = ssub.s32 %s24, 1
    %s30 = ssub.s32 %s24, 2
    %s37 = sadd.s32 1, %s32
    %p38 = scmp.ge.s32.totalorder %s37, 1
    %s39 = scalar_select %p38, 0, %s37
    %s40 = sadd.s32 1, %s31
    %s41 = scalar_select %p38, %s40, %s31
    %p42 = scmp.ge.s32.totalorder %s41, 2
    %s43 = scalar_select %p42, 0, %s41
    %s44 = ssub.s32 %s31, %s43
    %s45 = ssub.s32 %s32, %s39
    %s46 = sor.u32 %s44, %s45
    %p47 = scmp.eq.s32.totalorder %s46, 0
    %s49 = sadd.s32 %s48, 1
    %s50 = scalar_select %p47, %s48, %s49
    %p53 = pneg %p47
    %p54 = scmp.eq.s32.totalorder %s24, 1
    %p55 = por %p53, %p54
    %p56 = scmp.ne.s32.totalorder %s48, %s51
    %p57 = scmp.eq.s32.totalorder %s24, 0
    %p58 = por %p56, %p57
    %p59 = scmp.ne.s32.totalorder %s48, %s51
    %p60 = scmp.eq.s32.totalorder %s29, 1
    %p61 = por %p59, %p60
    %p62 = scmp.ne.s32.totalorder %s51, %s52
    %p63 = scmp.eq.s32.totalorder %s29, 0
    %p64 = por %p62, %p63
    %p65 = scmp.ne.s32.totalorder %s51, %s52
    %p66 = scmp.eq.s32.totalorder %s30, 1
    %p67 = por %p65, %p66
    %p69 = scmp.ne.s32.totalorder %s52, %s68
    %p70 = scmp.eq.s32.totalorder %s30, 0
    %p71 = por %p69, %p70
    %s72 = ssub.s32 %s31, %s43
    %s73 = ssub.s32 %s32, %s39
    %s74 = sor.u32 %s72, %s73
    %p75 = scmp.eq.s32.totalorder %s74, 0
    %s77 = sadd.s32 %s76, 1
    %s78 = scalar_select %p75, %s76, %s77
    %p81 = pneg %p75
    %p82 = scmp.eq.s32.totalorder %s24, 1
    %p83 = por %p81, %p82
    %p84 = scmp.ne.s32.totalorder %s76, %s79
    %p85 = scmp.eq.s32.totalorder %s24, 0
    %p86 = por %p84, %p85
    %p87 = scmp.ne.s32.totalorder %s76, %s79
    %p88 = scmp.eq.s32.totalorder %s29, 1
    %p89 = por %p87, %p88
    %p90 = scmp.ne.s32.totalorder %s79, %s80
    %p91 = scmp.eq.s32.totalorder %s29, 0
    %p92 = por %p90, %p91
    %p93 = scmp.ne.s32.totalorder %s79, %s80
    %p94 = scmp.eq.s32.totalorder %s30, 1
    %p95 = por %p93, %p94
    %p97 = scmp.ne.s32.totalorder %s80, %s96
    %p98 = scmp.eq.s32.totalorder %s30, 0
    %p99 = por %p97, %p98
    %s100 = ssub.s32 %s31, %s43
    %s101 = ssub.s32 %s32, %s39
    %s102 = sor.u32 %s100, %s101
    %p103 = scmp.eq.s32.totalorder %s102, 0
    %s105 = sadd.s32 %s104, 1
    %s106 = scalar_select %p103, %s104, %s105
    %p109 = pneg %p103
    %p110 = scmp.eq.s32.totalorder %s24, 1
    %p111 = por %p109, %p110
    %p112 = scmp.ne.s32.totalorder %s104, %s107
    %p113 = scmp.eq.s32.totalorder %s24, 0
    %p114 = por %p112, %p113
    %p115 = scmp.ne.s32.totalorder %s104, %s107
    %p116 = scmp.eq.s32.totalorder %s29, 1
    %p117 = por %p115, %p116
    %p118 = scmp.ne.s32.totalorder %s107, %s108
    %p119 = scmp.eq.s32.totalorder %s29, 0
    %p120 = por %p118, %p119
    %p121 = scmp.ne.s32.totalorder %s107, %s108
    %p122 = scmp.eq.s32.totalorder %s30, 1
    %p123 = por %p121, %p122
    %p125 = scmp.ne.s32.totalorder %s108, %s124
    %p126 = scmp.eq.s32.totalorder %s30, 0
    %p127 = por %p125, %p126
    %s128 = ssub.s32 %s31, %s43
    %s129 = ssub.s32 %s32, %s39
    %s130 = sor.u32 %s128, %s129
    %p131 = scmp.eq.s32.totalorder %s130, 0
    %s133 = sadd.s32 %s132, 1
    %s134 = scalar_select %p131, %s132, %s133
    %p137 = pneg %p131
    %p138 = scmp.eq.s32.totalorder %s24, 1
    %p139 = por %p137, %p138
    %p140 = scmp.ne.s32.totalorder %s132, %s135
    %p141 = scmp.eq.s32.totalorder %s24, 0
    %p142 = por %p140, %p141
    %p143 = scmp.ne.s32.totalorder %s132, %s135
    %p144 = scmp.eq.s32.totalorder %s29, 1
    %p145 = por %p143, %p144
    %p146 = scmp.ne.s32.totalorder %s135, %s136
    %p147 = scmp.eq.s32.totalorder %s29, 0
    %p148 = por %p146, %p147
    %p149 = scmp.ne.s32.totalorder %s135, %s136
    %p150 = scmp.eq.s32.totalorder %s30, 1
    %p151 = por %p149, %p150
    %p153 = scmp.ne.s32.totalorder %s136, %s152
    %p154 = scmp.eq.s32.totalorder %s30, 0
    %p155 = por %p153, %p154
    %s156 = ssub.s32 %s31, %s43
    %s157 = ssub.s32 %s32, %s39
    %s158 = sor.u32 %s156, %s157
    %p159 = scmp.eq.s32.totalorder %s158, 0
    %s161 = sadd.s32 %s160, 1
    %s162 = scalar_select %p159, %s160, %s161
    %p165 = pneg %p159
    %p166 = scmp.eq.s32.totalorder %s24, 1
    %p167 = por %p165, %p166
    %p168 = scmp.ne.s32.totalorder %s160, %s163
    %p169 = scmp.eq.s32.totalorder %s24, 0
    %p170 = por %p168, %p169
    %p171 = scmp.ne.s32.totalorder %s160, %s163
    %p172 = scmp.eq.s32.totalorder %s29, 1
    %p173 = por %p171, %p172
    %p174 = scmp.ne.s32.totalorder %s163, %s164
    %p175 = scmp.eq.s32.totalorder %s29, 0
    %p176 = por %p174, %p175
    %p177 = scmp.ne.s32.totalorder %s163, %s164
    %p178 = scmp.eq.s32.totalorder %s30, 1
    %p179 = por %p177, %p178
    %p181 = scmp.ne.s32.totalorder %s164, %s180
    %p182 = scmp.eq.s32.totalorder %s30, 0
    %p183 = por %p181, %p182
    %s184 = ssub.s32 %s31, %s43
    %s185 = ssub.s32 %s32, %s39
    %s186 = sor.u32 %s184, %s185
    %p187 = scmp.eq.s32.totalorder %s186, 0
    %s189 = sadd.s32 %s188, 1
    %s190 = scalar_select %p187, %s188, %s189
    %p193 = pneg %p187
    %p194 = scmp.eq.s32.totalorder %s24, 1
    %p195 = por %p193, %p194
    %p196 = scmp.ne.s32.totalorder %s188, %s191
    %p197 = scmp.eq.s32.totalorder %s24, 0
    %p198 = por %p196, %p197
    %p199 = scmp.ne.s32.totalorder %s188, %s191
    %p200 = scmp.eq.s32.totalorder %s29, 1
    %p201 = por %p199, %p200
    %p202 = scmp.ne.s32.totalorder %s191, %s192
    %p203 = scmp.eq.s32.totalorder %s29, 0
    %p204 = por %p202, %p203
    %p205 = scmp.ne.s32.totalorder %s191, %s192
    %p206 = scmp.eq.s32.totalorder %s30, 1
    %p207 = por %p205, %p206
    %p209 = scmp.ne.s32.totalorder %s192, %s208
    %p210 = scmp.eq.s32.totalorder %s30, 0
    %p211 = por %p209, %p210
    %s212 = ssub.s32 %s31, %s43
    %s213 = ssub.s32 %s32, %s39
    %s214 = sor.u32 %s212, %s213
    %p215 = scmp.eq.s32.totalorder %s214, 0
    %s217 = sadd.s32 %s216, 1
    %s218 = scalar_select %p215, %s216, %s217
    %p221 = pneg %p215
    %p222 = scmp.eq.s32.totalorder %s24, 1
    %p223 = por %p221, %p222
    %p224 = scmp.ne.s32.totalorder %s216, %s219
    %p225 = scmp.eq.s32.totalorder %s24, 0
    %p226 = por %p224, %p225
    %p227 = scmp.ne.s32.totalorder %s216, %s219
    %p228 = scmp.eq.s32.totalorder %s29, 1
    %p229 = por %p227, %p228
    %p230 = scmp.ne.s32.totalorder %s219, %s220
    %p231 = scmp.eq.s32.totalorder %s29, 0
    %p232 = por %p230, %p231
    %p233 = scmp.ne.s32.totalorder %s219, %s220
    %p234 = scmp.eq.s32.totalorder %s30, 1
    %p235 = por %p233, %p234
    %p237 = scmp.ne.s32.totalorder %s220, %s236
    %p238 = scmp.eq.s32.totalorder %s30, 0
    %p239 = por %p237, %p238
    %s240 = ssub.s32 %s31, %s43
    %s241 = ssub.s32 %s32, %s39
    %s242 = sor.u32 %s240, %s241
    %p243 = scmp.eq.s32.totalorder %s242, 0
    %s245 = sadd.s32 %s244, 1
    %s246 = scalar_select %p243, %s244, %s245
    %p249 = pneg %p243
    %p250 = scmp.eq.s32.totalorder %s24, 1
    %p251 = por %p249, %p250
    %p252 = scmp.ne.s32.totalorder %s244, %s247
    %p253 = scmp.eq.s32.totalorder %s24, 0
    %p254 = por %p252, %p253
    %p255 = scmp.ne.s32.totalorder %s244, %s247
    %p256 = scmp.eq.s32.totalorder %s29, 1
    %p257 = por %p255, %p256
    %p258 = scmp.ne.s32.totalorder %s247, %s248
    %p259 = scmp.eq.s32.totalorder %s29, 0
    %p260 = por %p258, %p259
    %p261 = scmp.ne.s32.totalorder %s247, %s248
    %p262 = scmp.eq.s32.totalorder %s30, 1
    %p263 = por %p261, %p262
    %p265 = scmp.ne.s32.totalorder %s248, %s264
    %p266 = scmp.eq.s32.totalorder %s30, 0
    %p267 = por %p265, %p266
    %s269 = sadd.s32 %s268, 1
    %p272 = scmp.eq.s32.totalorder %s24, 1
    %p273 = scmp.ne.s32.totalorder %s268, %s270
    %p274 = scmp.eq.s32.totalorder %s24, 0
    %p275 = por %p273, %p274
    %p276 = scmp.ne.s32.totalorder %s268, %s270
    %p277 = scmp.eq.s32.totalorder %s29, 1
    %p278 = por %p276, %p277
    %p279 = scmp.ne.s32.totalorder %s270, %s271
    %p280 = scmp.eq.s32.totalorder %s29, 0
    %p281 = por %p279, %p280
    %p282 = scmp.ne.s32.totalorder %s270, %s271
    %p283 = scmp.eq.s32.totalorder %s30, 1
    %p284 = por %p282, %p283
    %p286 = scmp.ne.s32.totalorder %s271, %s285
    %p287 = scmp.eq.s32.totalorder %s30, 0
    %p288 = por %p286, %p287
    %s290 = sadd.s32 %s289, 1
    %p293 = scmp.eq.s32.totalorder %s24, 1
    %p294 = scmp.ne.s32.totalorder %s289, %s291
    %p295 = scmp.eq.s32.totalorder %s24, 0
    %p296 = por %p294, %p295
    %p297 = scmp.ne.s32.totalorder %s289, %s291
    %p298 = scmp.eq.s32.totalorder %s29, 1
    %p299 = por %p297, %p298
    %p300 = scmp.ne.s32.totalorder %s291, %s292
    %p301 = scmp.eq.s32.totalorder %s29, 0
    %p302 = por %p300, %p301
    %p303 = scmp.ne.s32.totalorder %s291, %s292
    %p304 = scmp.eq.s32.totalorder %s30, 1
    %p305 = por %p303, %p304
    %p307 = scmp.ne.s32.totalorder %s292, %s306
    %p308 = scmp.eq.s32.totalorder %s30, 0
    %p309 = por %p307, %p308
    %s311 = sadd.s32 %s310, 1
    %p314 = scmp.eq.s32.totalorder %s24, 1
    %p315 = scmp.ne.s32.totalorder %s310, %s312
    %p316 = scmp.eq.s32.totalorder %s24, 0
    %p317 = por %p315, %p316
    %p318 = scmp.ne.s32.totalorder %s310, %s312
    %p319 = scmp.eq.s32.totalorder %s29, 1
    %p320 = por %p318, %p319
    %p321 = scmp.ne.s32.totalorder %s312, %s313
    %p322 = scmp.eq.s32.totalorder %s29, 0
    %p323 = por %p321, %p322
    %p324 = scmp.ne.s32.totalorder %s312, %s313
    %p325 = scmp.eq.s32.totalorder %s30, 1
    %p326 = por %p324, %p325
    %p328 = scmp.ne.s32.totalorder %s313, %s327
    %p329 = scmp.eq.s32.totalorder %s30, 0
    %p330 = por %p328, %p329
    %s332 = sadd.s32 %s331, 1
    %p335 = scmp.eq.s32.totalorder %s24, 1
    %p336 = scmp.ne.s32.totalorder %s331, %s333
    %p337 = scmp.eq.s32.totalorder %s24, 0
    %p338 = por %p336, %p337
    %p339 = scmp.ne.s32.totalorder %s331, %s333
    %p340 = scmp.eq.s32.totalorder %s29, 1
    %p341 = por %p339, %p340
    %p342 = scmp.ne.s32.totalorder %s333, %s334
    %p343 = scmp.eq.s32.totalorder %s29, 0
    %p344 = por %p342, %p343
    %p345 = scmp.ne.s32.totalorder %s333, %s334
    %p346 = scmp.eq.s32.totalorder %s30, 1
    %p347 = por %p345, %p346
    %p349 = scmp.ne.s32.totalorder %s334, %s348
    %p350 = scmp.eq.s32.totalorder %s30, 0
    %p351 = por %p349, %p350
    %s353 = sadd.s32 %s352, 1
    %p356 = scmp.eq.s32.totalorder %s24, 1
    %p357 = scmp.ne.s32.totalorder %s352, %s354
    %p358 = scmp.eq.s32.totalorder %s24, 0
    %p359 = por %p357, %p358
    %p360 = scmp.ne.s32.totalorder %s352, %s354
    %p361 = scmp.eq.s32.totalorder %s29, 1
    %p362 = por %p360, %p361
    %p363 = scmp.ne.s32.totalorder %s354, %s355
    %p364 = scmp.eq.s32.totalorder %s29, 0
    %p365 = por %p363, %p364
    %p366 = scmp.ne.s32.totalorder %s354, %s355
    %p367 = scmp.eq.s32.totalorder %s30, 1
    %p368 = por %p366, %p367
    %p370 = scmp.ne.s32.totalorder %s355, %s369
    %p371 = scmp.eq.s32.totalorder %s30, 0
    %p372 = por %p370, %p371
    %s374 = sadd.s32 %s373, 1
    %p377 = scmp.eq.s32.totalorder %s24, 1
    %p378 = scmp.ne.s32.totalorder %s373, %s375
    %p379 = scmp.eq.s32.totalorder %s24, 0
    %p380 = por %p378, %p379
    %p381 = scmp.ne.s32.totalorder %s373, %s375
    %p382 = scmp.eq.s32.totalorder %s29, 1
    %p383 = por %p381, %p382
    %p384 = scmp.ne.s32.totalorder %s375, %s376
    %p385 = scmp.eq.s32.totalorder %s29, 0
    %p386 = por %p384, %p385
    %p387 = scmp.ne.s32.totalorder %s375, %s376
    %p388 = scmp.eq.s32.totalorder %s30, 1
    %p389 = por %p387, %p388
    %p391 = scmp.ne.s32.totalorder %s376, %s390
    %p392 = scmp.eq.s32.totalorder %s30, 0
    %p393 = por %p391, %p392
    %s395 = sadd.s32 %s394, 1
    %p398 = scmp.eq.s32.totalorder %s24, 1
    %p399 = scmp.ne.s32.totalorder %s394, %s396
    %p400 = scmp.eq.s32.totalorder %s24, 0
    %p401 = por %p399, %p400
    %p402 = scmp.ne.s32.totalorder %s394, %s396
    %p403 = scmp.eq.s32.totalorder %s29, 1
    %p404 = por %p402, %p403
    %p405 = scmp.ne.s32.totalorder %s396, %s397
    %p406 = scmp.eq.s32.totalorder %s29, 0
    %p407 = por %p405, %p406
    %p408 = scmp.ne.s32.totalorder %s396, %s397
    %p409 = scmp.eq.s32.totalorder %s30, 1
    %p410 = por %p408, %p409
    %p412 = scmp.ne.s32.totalorder %s397, %s411
    %p413 = scmp.eq.s32.totalorder %s30, 0
    %p414 = por %p412, %p413
    %s416 = sadd.s32 %s415, 1
    %p419 = scmp.eq.s32.totalorder %s24, 1
    %p420 = scmp.ne.s32.totalorder %s415, %s417
    %p421 = scmp.eq.s32.totalorder %s24, 0
    %p422 = por %p420, %p421
    %p423 = scmp.ne.s32.totalorder %s415, %s417
    %p424 = scmp.eq.s32.totalorder %s29, 1
    %p425 = por %p423, %p424
    %p426 = scmp.ne.s32.totalorder %s417, %s418
    %p427 = scmp.eq.s32.totalorder %s29, 0
    %p428 = por %p426, %p427
    %p429 = scmp.ne.s32.totalorder %s417, %s418
    %p430 = scmp.eq.s32.totalorder %s30, 1
    %p431 = por %p429, %p430
    %p433 = scmp.ne.s32.totalorder %s418, %s432
    %p434 = scmp.eq.s32.totalorder %s30, 0
    %p435 = por %p433, %p434
    %s437 = sadd.s32 %s436, 1
    %p440 = scmp.eq.s32.totalorder %s24, 1
    %p441 = scmp.ne.s32.totalorder %s436, %s438
    %p442 = scmp.eq.s32.totalorder %s24, 0
    %p443 = por %p441, %p442
    %p444 = scmp.ne.s32.totalorder %s436, %s438
    %p445 = scmp.eq.s32.totalorder %s29, 1
    %p446 = por %p444, %p445
    %p447 = scmp.ne.s32.totalorder %s438, %s439
    %p448 = scmp.eq.s32.totalorder %s29, 0
    %p449 = por %p447, %p448
    %p450 = scmp.ne.s32.totalorder %s438, %s439
    %p451 = scmp.eq.s32.totalorder %s30, 1
    %p452 = por %p450, %p451
    %p454 = scmp.ne.s32.totalorder %s439, %s453
    %p455 = scmp.eq.s32.totalorder %s30, 0
    %p456 = por %p454, %p455
    %s458 = sadd.s32 %s457, 1
    %p461 = scmp.eq.s32.totalorder %s24, 1
    %p462 = scmp.ne.s32.totalorder %s457, %s459
    %p463 = scmp.eq.s32.totalorder %s24, 0
    %p464 = por %p462, %p463
    %p465 = scmp.ne.s32.totalorder %s457, %s459
    %p466 = scmp.eq.s32.totalorder %s29, 1
    %p467 = por %p465, %p466
    %p468 = scmp.ne.s32.totalorder %s459, %s460
    %p469 = scmp.eq.s32.totalorder %s29, 0
    %p470 = por %p468, %p469
    %p471 = scmp.ne.s32.totalorder %s459, %s460
    %p472 = scmp.eq.s32.totalorder %s30, 1
    %p473 = por %p471, %p472
    %p475 = scmp.ne.s32.totalorder %s460, %s474
    %p476 = scmp.eq.s32.totalorder %s30, 0
    %p477 = por %p475, %p476
    %s478 = ssub.s32 %s31, %s43
    %s479 = ssub.s32 %s32, %s39
    %s480 = sor.u32 %s478, %s479
    %p481 = scmp.eq.s32.totalorder %s480, 0
    %s483 = sadd.s32 %s482, 1
    %s484 = scalar_select %p481, %s482, %s483
    %p487 = pneg %p481
    %p488 = scmp.eq.s32.totalorder %s24, 1
    %p489 = por %p487, %p488
    %p490 = scmp.ne.s32.totalorder %s482, %s485
    %p491 = scmp.eq.s32.totalorder %s24, 0
    %p492 = por %p490, %p491
    %p493 = scmp.ne.s32.totalorder %s482, %s485
    %p494 = scmp.eq.s32.totalorder %s29, 1
    %p495 = por %p493, %p494
    %p496 = scmp.ne.s32.totalorder %s485, %s486
    %p497 = scmp.eq.s32.totalorder %s29, 0
    %p498 = por %p496, %p497
    %p499 = scmp.ne.s32.totalorder %s485, %s486
    %p500 = scmp.eq.s32.totalorder %s30, 1
    %p501 = por %p499, %p500
    %p503 = scmp.ne.s32.totalorder %s486, %s502
    %p504 = scmp.eq.s32.totalorder %s30, 0
    %p505 = por %p503, %p504
    %p506 = scmp.le.s32.totalorder 1, %s24
    %p507 = scmp.lt.s32.totalorder %s24, 3
    %p508 = pnand %p506, %p507
    %p509 = pneg %p508
    // Predicated region
    $region9: #{upsampler_forward.16} parent=5 // pred_check
      _
    $region10: #{upsampler_forward.16} parent=5 // pred_check_branch
      %511 = sbr.rel (%p508) target = $region12
    $region11: #{upsampler_forward.16} parent=5 // pred_region
      %s512 = ssub.s32 %s24, 1
      // Predicated region
      $region13: #{upsampler_forward.16} parent=11 // pred_check
        %p513 = pneg %p281
      $region14: #{upsampler_forward.16} parent=11 // pred_check_branch
        %515 = sbr.rel (%p513) target = $region16
      $region15: #{upsampler_forward.16} parent=11 // pred_region
        _
      $region16: #{upsampler_forward.16} parent=11 // pred_fallthru
        _
      // Predicated region
      $region17: #{upsampler_forward.16} parent=11 // pred_check
        %p516 = pneg %p302
      $region18: #{upsampler_forward.16} parent=11 // pred_check_branch
        %518 = sbr.rel (%p516) target = $region20
      $region19: #{upsampler_forward.16} parent=11 // pred_region
        _
      $region20: #{upsampler_forward.16} parent=11 // pred_fallthru
        _
      // Predicated region
      $region21: #{upsampler_forward.16} parent=11 // pred_check
        %p519 = pneg %p323
      $region22: #{upsampler_forward.16} parent=11 // pred_check_branch
        %521 = sbr.rel (%p519) target = $region24
      $region23: #{upsampler_forward.16} parent=11 // pred_region
        _
      $region24: #{upsampler_forward.16} parent=11 // pred_fallthru
        _
      // Predicated region
      $region25: #{upsampler_forward.16} parent=11 // pred_check
        %p522 = pneg %p344
      $region26: #{upsampler_forward.16} parent=11 // pred_check_branch
        %524 = sbr.rel (%p522) target = $region28
      $region27: #{upsampler_forward.16} parent=11 // pred_region
        _
      $region28: #{upsampler_forward.16} parent=11 // pred_fallthru
        _
      // Predicated region
      $region29: #{upsampler_forward.16} parent=11 // pred_check
        %p525 = pneg %p365
      $region30: #{upsampler_forward.16} parent=11 // pred_check_branch
        %527 = sbr.rel (%p525) target = $region32
      $region31: #{upsampler_forward.16} parent=11 // pred_region
        _
      $region32: #{upsampler_forward.16} parent=11 // pred_fallthru
        _
      // Predicated region
      $region33: #{upsampler_forward.16} parent=11 // pred_check
        %p528 = pneg %p386
      $region34: #{upsampler_forward.16} parent=11 // pred_check_branch
        %530 = sbr.rel (%p528) target = $region36
      $region35: #{upsampler_forward.16} parent=11 // pred_region
        _
      $region36: #{upsampler_forward.16} parent=11 // pred_fallthru
        _
      // Predicated region
      $region37: #{upsampler_forward.16} parent=11 // pred_check
        %p531 = pneg %p407
      $region38: #{upsampler_forward.16} parent=11 // pred_check_branch
        %533 = sbr.rel (%p531) target = $region40
      $region39: #{upsampler_forward.16} parent=11 // pred_region
        _
      $region40: #{upsampler_forward.16} parent=11 // pred_fallthru
        _
      // Predicated region
      $region41: #{upsampler_forward.16} parent=11 // pred_check
        %p534 = pneg %p428
      $region42: #{upsampler_forward.16} parent=11 // pred_check_branch
        %536 = sbr.rel (%p534) target = $region44
      $region43: #{upsampler_forward.16} parent=11 // pred_region
        _
      $region44: #{upsampler_forward.16} parent=11 // pred_fallthru
        _
      // Predicated region
      $region45: #{upsampler_forward.16} parent=11 // pred_check
        %p537 = pneg %p449
      $region46: #{upsampler_forward.16} parent=11 // pred_check_branch
        %539 = sbr.rel (%p537) target = $region48
      $region47: #{upsampler_forward.16} parent=11 // pred_region
        _
      $region48: #{upsampler_forward.16} parent=11 // pred_fallthru
        _
      // Predicated region
      $region49: #{upsampler_forward.16} parent=11 // pred_check
        %p540 = pneg %p470
      $region50: #{upsampler_forward.16} parent=11 // pred_check_branch
        %542 = sbr.rel (%p540) target = $region52
      $region51: #{upsampler_forward.16} parent=11 // pred_region
        _
      $region52: #{upsampler_forward.16} parent=11 // pred_fallthru
        _
    $region12: #{upsampler_forward.16} parent=5 // pred_fallthru
      _
    %p543 = scmp.lt.s32.totalorder %s24, 2
    // Predicated region
    $region53: #{upsampler_forward.16} parent=5 // pred_check
      %p544 = pneg %p543
    $region54: #{upsampler_forward.16} parent=5 // pred_check_branch
      %546 = sbr.rel (%p544) target = $region56
    $region55: #{upsampler_forward.16} parent=5 // pred_region
      // Predicated region
      $region57: #{upsampler_forward.16} parent=55 // pred_check
        %p547 = pneg %p58
      $region58: #{upsampler_forward.16} parent=55 // pred_check_branch
        %549 = sbr.rel (%p547) target = $region60
      $region59: #{upsampler_forward.16} parent=55 // pred_region
        %s550 = smul.u32 2, %s32
        %p551 = scmp.lt.s32.totalorder %s31, 1
        %s552 = scalar_select %p551, %s31, 1
        %p553 = scmp.lt.s32.totalorder %s550, 1
        %s554 = scalar_select %p553, %s550, 1
        %s555 = smul.addr %s552, 2
        %s556 = sadd.s32 %s554, %s555
        %s557 = smul.addr %s556, 4
        %s558 = scalar_lea.vmem %s0, %s557
        %s559 = smul.u32 2, %s32
      $region60: #{upsampler_forward.16} parent=55 // pred_fallthru
        _
      // Predicated region
      $region61: #{upsampler_forward.16} parent=55 // pred_check
        %p560 = pneg %p86
      $region62: #{upsampler_forward.16} parent=55 // pred_check_branch
        %562 = sbr.rel (%p560) target = $region64
      $region63: #{upsampler_forward.16} parent=55 // pred_region
        %s563 = smul.u32 2, %s32
        %p564 = scmp.lt.s32.totalorder %s31, 1
        %s565 = scalar_select %p564, %s31, 1
        %p566 = scmp.lt.s32.totalorder %s563, 1
        %s567 = scalar_select %p566, %s563, 1
        %s568 = smul.addr %s565, 8
        %s569 = sadd.s32 %s567, %s568
        %s570 = smul.addr %s569, 4
        %s571 = scalar_lea.vmem %s1, %s570
        %s572 = smul.u32 2, %s32
      $region64: #{upsampler_forward.16} parent=55 // pred_fallthru
        _
      // Predicated region
      $region65: #{upsampler_forward.16} parent=55 // pred_check
        %p573 = pneg %p114
      $region66: #{upsampler_forward.16} parent=55 // pred_check_branch
        %575 = sbr.rel (%p573) target = $region68
      $region67: #{upsampler_forward.16} parent=55 // pred_region
        %s576 = smul.u32 2, %s32
        %p577 = scmp.lt.s32.totalorder %s31, 1
        %s578 = scalar_select %p577, %s31, 1
        %p579 = scmp.lt.s32.totalorder %s576, 1
        %s580 = scalar_select %p579, %s576, 1
        %s581 = smul.addr %s578, 8
        %s582 = sadd.s32 %s580, %s581
        %s583 = smul.addr %s582, 4
        %s584 = scalar_lea.vmem %s2, %s583
        %s585 = smul.u32 2, %s32
      $region68: #{upsampler_forward.16} parent=55 // pred_fallthru
        _
      // Predicated region
      $region69: #{upsampler_forward.16} parent=55 // pred_check
        %p586 = pneg %p142
      $region70: #{upsampler_forward.16} parent=55 // pred_check_branch
        %588 = sbr.rel (%p586) target = $region72
      $region71: #{upsampler_forward.16} parent=55 // pred_region
        %s589 = smul.u32 2, %s32
        %p590 = scmp.lt.s32.totalorder %s31, 1
        %s591 = scalar_select %p590, %s31, 1
        %p592 = scmp.lt.s32.totalorder %s589, 1
        %s593 = scalar_select %p592, %s589, 1
        %s594 = smul.addr %s591, 8
        %s595 = sadd.s32 %s593, %s594
        %s596 = smul.addr %s595, 4
        %s597 = scalar_lea.vmem %s3, %s596
        %s598 = smul.u32 2, %s32
      $region72: #{upsampler_forward.16} parent=55 // pred_fallthru
        _
      // Predicated region
      $region73: #{upsampler_forward.16} parent=55 // pred_check
        %p599 = pneg %p170
      $region74: #{upsampler_forward.16} parent=55 // pred_check_branch
        %601 = sbr.rel (%p599) target = $region76
      $region75: #{upsampler_forward.16} parent=55 // pred_region
        %s602 = smul.u32 2, %s32
        %p603 = scmp.lt.s32.totalorder %s31, 1
        %s604 = scalar_select %p603, %s31, 1
        %p605 = scmp.lt.s32.totalorder %s602, 1
        %s606 = scalar_select %p605, %s602, 1
        %s607 = smul.addr %s604, 8
        %s608 = sadd.s32 %s606, %s607
        %s609 = smul.addr %s608, 8
        %s610 = scalar_lea.vmem %s4, %s609
        %s611 = smul.u32 2, %s32
      $region76: #{upsampler_forward.16} parent=55 // pred_fallthru
        _
      // Predicated region
      $region77: #{upsampler_forward.16} parent=55 // pred_check
        %p612 = pneg %p198
      $region78: #{upsampler_forward.16} parent=55 // pred_check_branch
        %614 = sbr.rel (%p612) target = $region80
      $region79: #{upsampler_forward.16} parent=55 // pred_region
        %s615 = smul.u32 2, %s32
        %p616 = scmp.lt.s32.totalorder %s31, 1
        %s617 = scalar_select %p616, %s31, 1
        %p618 = scmp.lt.s32.totalorder %s615, 1
        %s619 = scalar_select %p618, %s615, 1
        %s620 = smul.addr %s617, 2
        %s621 = sadd.s32 %s619, %s620
        %s622 = smul.addr %s621, 8
        %s623 = scalar_lea.vmem %s5, %s622
        %s624 = smul.u32 2, %s32
      $region80: #{upsampler_forward.16} parent=55 // pred_fallthru
        _
      // Predicated region
      $region81: #{upsampler_forward.16} parent=55 // pred_check
        %p625 = pneg %p226
      $region82: #{upsampler_forward.16} parent=55 // pred_check_branch
        %627 = sbr.rel (%p625) target = $region84
      $region83: #{upsampler_forward.16} parent=55 // pred_region
        %s628 = smul.u32 2, %s32
        %p629 = scmp.lt.s32.totalorder %s31, 1
        %s630 = scalar_select %p629, %s31, 1
        %p631 = scmp.lt.s32.totalorder %s628, 1
        %s632 = scalar_select %p631, %s628, 1
        %s633 = smul.addr %s630, 2
        %s634 = sadd.s32 %s632, %s633
        %s635 = smul.addr %s634, 4
        %s636 = scalar_lea.vmem %s6, %s635
        %s637 = smul.u32 2, %s32
      $region84: #{upsampler_forward.16} parent=55 // pred_fallthru
        _
      // Predicated region
      $region85: #{upsampler_forward.16} parent=55 // pred_check
        %p638 = pneg %p254
      $region86: #{upsampler_forward.16} parent=55 // pred_check_branch
        %640 = sbr.rel (%p638) target = $region88
      $region87: #{upsampler_forward.16} parent=55 // pred_region
        %s641 = smul.u32 2, %s32
        %p642 = scmp.lt.s32.totalorder %s31, 1
        %s643 = scalar_select %p642, %s31, 1
        %p644 = scmp.lt.s32.totalorder %s641, 1
        %s645 = scalar_select %p644, %s641, 1
        %s646 = smul.addr %s643, 2
        %s647 = sadd.s32 %s645, %s646
        %s648 = smul.addr %s647, 4
        %s649 = scalar_lea.vmem %s7, %s648
        %s650 = smul.u32 2, %s32
      $region88: #{upsampler_forward.16} parent=55 // pred_fallthru
        _
    $region56: #{upsampler_forward.16} parent=5 // pred_fallthru
      _
    %p651 = scmp.le.s32.totalorder 1, %s24
    %p652 = scmp.lt.s32.totalorder %s24, 3
    %p653 = pnand %p651, %p652
    %p654 = pneg %p653
    // Predicated region
    $region89: #{upsampler_forward.16} parent=5 // pred_check
      _
    $region90: #{upsampler_forward.16} parent=5 // pred_check_branch
      %656 = sbr.rel (%p653) target = $region92
    $region91: #{upsampler_forward.16} parent=5 // pred_region
      %s657 = ssub.s32 %s24, 1
      %s658 = smul.u32 2, %s34
      %p659 = scmp.lt.s32.totalorder %s33, 1
      %s660 = scalar_select %p659, %s33, 1
      %p661 = scmp.lt.s32.totalorder %s658, 1
      %s662 = scalar_select %p661, %s658, 1
      %s663 = smul.addr %s660, 2
      %s664 = sadd.s32 %s662, %s663
      %s665 = smul.addr %s664, 4
      %s666 = scalar_lea.vmem %s0, %s665
      %p667 = pneg %p64
      %p668 = pneg %p61
      %s669 = smul.u32 2, %s34
      %p670 = scmp.lt.s32.totalorder %s33, 1
      %s671 = scalar_select %p670, %s33, 1
      %p672 = scmp.lt.s32.totalorder %s669, 1
      %s673 = scalar_select %p672, %s669, 1
      %s674 = smul.addr %s671, 8
      %s675 = sadd.s32 %s673, %s674
      %s676 = smul.addr %s675, 4
      %s677 = scalar_lea.vmem %s1, %s676
      %p678 = pneg %p92
      %p679 = pneg %p89
      %s680 = smul.u32 2, %s34
      %p681 = scmp.lt.s32.totalorder %s33, 1
      %s682 = scalar_select %p681, %s33, 1
      %p683 = scmp.lt.s32.totalorder %s680, 1
      %s684 = scalar_select %p683, %s680, 1
      %s685 = smul.addr %s682, 8
      %s686 = sadd.s32 %s684, %s685
      %s687 = smul.addr %s686, 4
      %s688 = scalar_lea.vmem %s2, %s687
      %p689 = pneg %p120
      %p690 = pneg %p117
      %s691 = smul.u32 2, %s34
      %p692 = scmp.lt.s32.totalorder %s33, 1
      %s693 = scalar_select %p692, %s33, 1
      %p694 = scmp.lt.s32.totalorder %s691, 1
      %s695 = scalar_select %p694, %s691, 1
      %s696 = smul.addr %s693, 8
      %s697 = sadd.s32 %s695, %s696
      %s698 = smul.addr %s697, 4
      %s699 = scalar_lea.vmem %s3, %s698
      %p700 = pneg %p148
      %p701 = pneg %p145
      %s702 = smul.u32 2, %s34
      %p703 = scmp.lt.s32.totalorder %s33, 1
      %s704 = scalar_select %p703, %s33, 1
      %p705 = scmp.lt.s32.totalorder %s702, 1
      %s706 = scalar_select %p705, %s702, 1
      %s707 = smul.addr %s704, 8
      %s708 = sadd.s32 %s706, %s707
      %s709 = smul.addr %s708, 8
      %s710 = scalar_lea.vmem %s4, %s709
      %p711 = pneg %p176
      %p712 = pneg %p173
      %s713 = smul.u32 2, %s34
      %p714 = scmp.lt.s32.totalorder %s33, 1
      %s715 = scalar_select %p714, %s33, 1
      %p716 = scmp.lt.s32.totalorder %s713, 1
      %s717 = scalar_select %p716, %s713, 1
      %s718 = smul.addr %s715, 2
      %s719 = sadd.s32 %s717, %s718
      %s720 = smul.addr %s719, 8
      %s721 = scalar_lea.vmem %s5, %s720
      %p722 = pneg %p204
      %p723 = pneg %p201
      %s724 = smul.u32 2, %s34
      %p725 = scmp.lt.s32.totalorder %s33, 1
      %s726 = scalar_select %p725, %s33, 1
      %p727 = scmp.lt.s32.totalorder %s724, 1
      %s728 = scalar_select %p727, %s724, 1
      %s729 = smul.addr %s726, 2
      %s730 = sadd.s32 %s728, %s729
      %s731 = smul.addr %s730, 4
      %s732 = scalar_lea.vmem %s6, %s731
      %p733 = pneg %p232
      %p734 = pneg %p229
      %s735 = smul.u32 2, %s34
      %p736 = scmp.lt.s32.totalorder %s33, 1
      %s737 = scalar_select %p736, %s33, 1
      %p738 = scmp.lt.s32.totalorder %s735, 1
      %s739 = scalar_select %p738, %s735, 1
      %s740 = smul.addr %s737, 2
      %s741 = sadd.s32 %s739, %s740
      %s742 = smul.addr %s741, 4
      %s743 = scalar_lea.vmem %s7, %s742
      %p744 = pneg %p260
      %p745 = pneg %p257
      %p746 = pneg %p281
      %p747 = pneg %p278
      %p748 = pneg %p302
      %p749 = pneg %p299
      %p750 = pneg %p323
      %p751 = pneg %p320
      %p752 = pneg %p344
      %p753 = pneg %p341
      %p754 = pneg %p365
      %p755 = pneg %p362
      %p756 = pneg %p386
      %p757 = pneg %p383
      %p758 = pneg %p407
      %p759 = pneg %p404
      %p760 = pneg %p428
      %p761 = pneg %p425
      %p762 = pneg %p449
      %p763 = pneg %p446
      %p764 = pneg %p470
      %p765 = pneg %p467
      %p766 = pneg %p498
      %p767 = pneg %p495
      %s768 = smul.u32 2, %s34
      %p769 = scmp.lt.s32.totalorder %s33, 1
      %s770 = scalar_select %p769, %s33, 1
      %p771 = scmp.lt.s32.totalorder %s768, 1
      %s772 = scalar_select %p771, %s768, 1
      %s773 = smul.addr %s770, 2
      %s774 = sadd.s32 %s772, %s773
      %s775 = smul.addr %s774, 4
      %s776 = scalar_lea.vmem %s18, %s775
      %s777 = smul.u32 2, %s34
      %p778 = scmp.lt.s32.totalorder %s33, 1
      %s779 = scalar_select %p778, %s33, 1
      %p780 = scmp.lt.s32.totalorder %s777, 1
      %s781 = scalar_select %p780, %s777, 1
      %s782 = smul.addr %s779, 2
      %s783 = sadd.s32 %s781, %s782
      %s784 = smul.addr %s783, 4
      %s785 = scalar_lea.vmem %s0, %s784
      %s786 = smul.u32 2, %s34
      %s787 = smul.u32 2, %s34
      %p788 = scmp.lt.s32.totalorder %s33, 1
      %s789 = scalar_select %p788, %s33, 1
      %p790 = scmp.lt.s32.totalorder %s787, 1
      %s791 = scalar_select %p790, %s787, 1
      %s792 = smul.addr %s789, 8
      %s793 = sadd.s32 %s791, %s792
      %s794 = smul.addr %s793, 4
      %s795 = scalar_lea.vmem %s1, %s794
      %s796 = smul.u32 2, %s34
      %s797 = smul.u32 2, %s34
      %p798 = scmp.lt.s32.totalorder %s33, 1
      %s799 = scalar_select %p798, %s33, 1
      %p800 = scmp.lt.s32.totalorder %s797, 1
      %s801 = scalar_select %p800, %s797, 1
      %s802 = smul.addr %s799, 8
      %s803 = sadd.s32 %s801, %s802
      %s804 = smul.addr %s803, 4
      %s805 = scalar_lea.vmem %s2, %s804
      %s806 = smul.u32 2, %s34
      %s807 = smul.u32 2, %s34
      %p808 = scmp.lt.s32.totalorder %s33, 1
      %s809 = scalar_select %p808, %s33, 1
      %p810 = scmp.lt.s32.totalorder %s807, 1
      %s811 = scalar_select %p810, %s807, 1
      %s812 = smul.addr %s809, 8
      %s813 = sadd.s32 %s811, %s812
      %s814 = smul.addr %s813, 4
      %s815 = scalar_lea.vmem %s3, %s814
      %s816 = smul.u32 2, %s34
      %s817 = smul.u32 2, %s34
      %p818 = scmp.lt.s32.totalorder %s33, 1
      %s819 = scalar_select %p818, %s33, 1
      %p820 = scmp.lt.s32.totalorder %s817, 1
      %s821 = scalar_select %p820, %s817, 1
      %s822 = smul.addr %s819, 8
      %s823 = sadd.s32 %s821, %s822
      %s824 = smul.addr %s823, 8
      %s825 = scalar_lea.vmem %s4, %s824
      %s826 = smul.u32 2, %s34
      %s827 = smul.u32 2, %s34
      %p828 = scmp.lt.s32.totalorder %s33, 1
      %s829 = scalar_select %p828, %s33, 1
      %p830 = scmp.lt.s32.totalorder %s827, 1
      %s831 = scalar_select %p830, %s827, 1
      %s832 = smul.addr %s829, 2
      %s833 = sadd.s32 %s831, %s832
      %s834 = smul.addr %s833, 8
      %s835 = scalar_lea.vmem %s5, %s834
      %s836 = smul.u32 2, %s34
      %s837 = smul.u32 2, %s34
      %p838 = scmp.lt.s32.totalorder %s33, 1
      %s839 = scalar_select %p838, %s33, 1
      %p840 = scmp.lt.s32.totalorder %s837, 1
      %s841 = scalar_select %p840, %s837, 1
      %s842 = smul.addr %s839, 2
      %s843 = sadd.s32 %s841, %s842
      %s844 = smul.addr %s843, 4
      %s845 = scalar_lea.vmem %s6, %s844
      %s846 = smul.u32 2, %s34
      %s847 = smul.u32 2, %s34
      %p848 = scmp.lt.s32.totalorder %s33, 1
      %s849 = scalar_select %p848, %s33, 1
      %p850 = scmp.lt.s32.totalorder %s847, 1
      %s851 = scalar_select %p850, %s847, 1
      %s852 = smul.addr %s849, 2
      %s853 = sadd.s32 %s851, %s852
      %s854 = smul.addr %s853, 4
      %s855 = scalar_lea.vmem %s7, %s854
      %s856 = smul.u32 2, %s34
      %s857 = smul.u32 2, %s34
      %p858 = scmp.lt.s32.totalorder %s33, 1
      %s859 = scalar_select %p858, %s33, 1
      %p860 = scmp.lt.s32.totalorder %s857, 1
      %s861 = scalar_select %p860, %s857, 1
      %s862 = smul.addr %s859, 2
      %s863 = sadd.s32 %s861, %s862
      %s864 = smul.addr %s863, 4
      %s865 = scalar_lea.vmem %s18, %s864
      %s866 = smul.u32 2, %s34
      %v868 = vld [vmem:[%s785] sm:$0xf]
      %v869 = vld [vmem:[%s785 + $0x4] sm:$0xf]
      %v870 = vunpack.c.l.bf16 %v868
      %v871 = vunpack.c.l.bf16 %v869
      %v872 = vld [vmem:[%s835] sm:$0xff]
      %v873 = vld [vmem:[%s835 + $0x8] sm:$0xff]
      %v874 = vld [vmem:[%s845] sm:$0xf]
      %v875 = vld [vmem:[%s845 + $0x4] sm:$0xf]
      %v876 = vunpack.c.l.bf16 %v874
      %v877 = vunpack.c.l.bf16 %v875
      %v878 = vld [vmem:[%s855] sm:$0xf]
      %v879 = vld [vmem:[%s855 + $0x4] sm:$0xf]
      %v880 = vunpack.c.l.bf16 %v878
      %v881 = vunpack.c.l.bf16 %v879
      %v882 = vld [vmem:[%s795] sm:$0xf]
      %v883 = vld [vmem:[%s795 + $0x4] sm:$0xf]
      %v884 = vld [vmem:[%s795 + $0x8] sm:$0xf]
      %v885 = vld [vmem:[%s795 + $0xc] sm:$0xf]
      %v886 = vld [vmem:[%s795 + $0x10] sm:$0xf]
      %v887 = vld [vmem:[%s795 + $0x14] sm:$0xf]
      %v888 = vld [vmem:[%s795 + $0x18] sm:$0xf]
      %v889 = vld [vmem:[%s795 + $0x1c] sm:$0xf]
      %v890 = vunpack.c.l.bf16 %v882
      %v891 = vunpack.c.l.bf16 %v883
      %v892 = vunpack.c.l.bf16 %v884
      %v893 = vunpack.c.l.bf16 %v885
      %v894 = vunpack.c.l.bf16 %v886
      %v895 = vunpack.c.l.bf16 %v887
      %v896 = vunpack.c.l.bf16 %v888
      %v897 = vunpack.c.l.bf16 %v889
      %v898 = vld [vmem:[%s805] sm:$0xf]
      %v899 = vld [vmem:[%s805 + $0x4] sm:$0xf]
      %v900 = vld [vmem:[%s805 + $0x8] sm:$0xf]
      %v901 = vld [vmem:[%s805 + $0xc] sm:$0xf]
      %v902 = vld [vmem:[%s805 + $0x10] sm:$0xf]
      %v903 = vld [vmem:[%s805 + $0x14] sm:$0xf]
      %v904 = vld [vmem:[%s805 + $0x18] sm:$0xf]
      %v905 = vld [vmem:[%s805 + $0x1c] sm:$0xf]
      %v906 = vunpack.c.l.bf16 %v898
      %v907 = vunpack.c.l.bf16 %v899
      %v908 = vunpack.c.l.bf16 %v900
      %v909 = vunpack.c.l.bf16 %v901
      %v910 = vunpack.c.l.bf16 %v902
      %v911 = vunpack.c.l.bf16 %v903
      %v912 = vunpack.c.l.bf16 %v904
      %v913 = vunpack.c.l.bf16 %v905
      %v914 = vld [vmem:[%s815] sm:$0xf]
      %v915 = vld [vmem:[%s815 + $0x4] sm:$0xf]
      %v916 = vld [vmem:[%s815 + $0x8] sm:$0xf]
      %v917 = vld [vmem:[%s815 + $0xc] sm:$0xf]
      %v918 = vld [vmem:[%s815 + $0x10] sm:$0xf]
      %v919 = vld [vmem:[%s815 + $0x14] sm:$0xf]
      %v920 = vld [vmem:[%s815 + $0x18] sm:$0xf]
      %v921 = vld [vmem:[%s815 + $0x1c] sm:$0xf]
      %v922 = vunpack.c.l.bf16 %v914
      %v923 = vunpack.c.l.bf16 %v915
      %v924 = vunpack.c.l.bf16 %v916
      %v925 = vunpack.c.l.bf16 %v917
      %v926 = vunpack.c.l.bf16 %v918
      %v927 = vunpack.c.l.bf16 %v919
      %v928 = vunpack.c.l.bf16 %v920
      %v929 = vunpack.c.l.bf16 %v921
      %v930 = vld [vmem:[%s825] sm:$0xff]
      %v931 = vld [vmem:[%s825 + $0x8] sm:$0xff]
      %v932 = vld [vmem:[%s825 + $0x10] sm:$0xff]
      %v933 = vld [vmem:[%s825 + $0x18] sm:$0xff]
      %v934 = vld [vmem:[%s825 + $0x20] sm:$0xff]
      %v935 = vld [vmem:[%s825 + $0x28] sm:$0xff]
      %v936 = vld [vmem:[%s825 + $0x30] sm:$0xff]
      %v937 = vld [vmem:[%s825 + $0x38] sm:$0xff]
      %v938 = vsub.f32 %v872, %v930
      %v939 = vsub.f32 %v873, %v931
      %v940 = vsub.f32 %v872, %v932
      %v941 = vsub.f32 %v873, %v933
      %v942 = vsub.f32 %v872, %v934
      %v943 = vsub.f32 %v873, %v935
      %v944 = vsub.f32 %v872, %v936
      %v945 = vsub.f32 %v873, %v937
      %v946 = vsub.f32 %v876, %v922
      %v947 = vsub.f32 %v877, %v923
      %v948 = vsub.f32 %v876, %v924
      %v949 = vsub.f32 %v877, %v925
      %v950 = vsub.f32 %v876, %v926
      %v951 = vsub.f32 %v877, %v927
      %v952 = vsub.f32 %v876, %v928
      %v953 = vsub.f32 %v877, %v929
      %v954 = vld [vmem:[%s8] sm:$0x3]
      %v955 = vpack.c.bf16 %v939, %v938
      %v956 = vpack.c.bf16 %v941, %v940
      %v957 = vpack.c.bf16 %v943, %v942
      %v958 = vpack.c.bf16 %v945, %v944
      %v959 = vld [vmem:[%s9] sm:$0x1]
      %v961 = vlaneseq
      %v962 = vshrl.u32 %v961, 7
      %v963 = vsub.s32 0, %v962
      %v964 = vrot.slane %v959, %v963
      %vm966 = vcmask 23552
      %v968 = vsel %vm966, %v955, 0
      %v971 = vsel %vm966, %v956, 0
      %v974 = vsel %vm966, %v957, 0
      %v977 = vsel %vm966, %v958, 0
      %vm979 = vcmask 1040384
      %vm980 = vcmask 1041408
      %v981 = vsel %vm979, 4294967295, 65535
      %v982 = vsel %vm980, %v981, 0
      %v984 = vand.u32 %v954, %v982
      %986 = vmatprep.subr.bf16.mxu0 0
      %987 = vmatpush1.bf16.msra.mxu0 0
      %988 = vmatprep.subr.bf16.mxu0 0
      %989 = vmatpush1.bf16.msra.mxu0 0
      %990 = vmatprep.subr.bf16.mxu0 0
      %991 = vmatpush1.bf16.msra.mxu0 0
      %992 = vmatprep.subr.bf16.mxu0 0
      %993 = vmatpush1.bf16.msra.mxu0 0
      %994 = vmatprep.subr.bf16.mxu0 0
      %995 = vmatpush1.bf16.msra.mxu0 0
      %996 = vmatprep.subr.bf16.mxu0 0
      %997 = vmatpush1.bf16.msra.mxu0 0
      %998 = vmatprep.subr.bf16.mxu0 0
      %999 = vmatpush1.bf16.msra.mxu0 0
      %1000 = vmatprep.subr.bf16.mxu0 0
      %1001 = vmatpush1.bf16.msra.mxu0 %v984
      %1002 = vmatprep.subr.bf16.mxu0 0
      %1003 = vmatpush2.bf16.msra.mxu0 0
      %1004 = vmatprep.subr.bf16.mxu0 0
      %1005 = vmatpush2.bf16.msra.mxu0 0
      %1006 = vmatprep.subr.bf16.mxu0 0
      %1007 = vmatpush2.bf16.msra.mxu0 0
      %1008 = vmatprep.subr.bf16.mxu0 0
      %1009 = vmatpush2.bf16.msra.mxu0 0
      %1010 = vmatprep.subr.bf16.mxu0 0
      %1011 = vmatpush2.bf16.msra.mxu0 0
      %1012 = vmatprep.subr.bf16.mxu0 0
      %1013 = vmatpush2.bf16.msra.mxu0 0
      %1014 = vmatprep.subr.bf16.mxu0 0
      %1015 = vmatpush2.bf16.msra.mxu0 0
      %1016 = vmatprep.subr.bf16.mxu0 0
      %1017 = vmatpush2.bf16.msra.mxu0 0
      %1018 = vmatprep.mubr.bf16.mxu0 0
      %1019 = vmatmul.mubr.bf16.gmra.mxu0 %v968
      %v1020 = vpop.f32.mrf.mxu0
      %v1021 = vadd.f32 %v964, %v1020
      %v1022 = vpop.f32.mrf.mxu0
      %v1023 = vpop.f32.mrf.mxu0
      %v1024 = vadd.f32 %v964, %v1023
      %v1025 = vpop.f32.mrf.mxu0
      %1026 = vmatprep.mubr.bf16.mxu0 0
      %1027 = vmatmul.mubr.bf16.gmra.mxu0 %v971
      %v1028 = vpop.f32.mrf.mxu0
      %v1029 = vadd.f32 %v964, %v1028
      %v1030 = vpop.f32.mrf.mxu0
      %v1031 = vpop.f32.mrf.mxu0
      %v1032 = vadd.f32 %v964, %v1031
      %v1033 = vpop.f32.mrf.mxu0
      %1034 = vmatprep.mubr.bf16.mxu0 0
      %1035 = vmatmul.mubr.bf16.gmra.mxu0 %v974
      %v1036 = vpop.f32.mrf.mxu0
      %v1037 = vadd.f32 %v964, %v1036
      %v1038 = vpop.f32.mrf.mxu0
      %v1039 = vpop.f32.mrf.mxu0
      %v1040 = vadd.f32 %v964, %v1039
      %v1041 = vpop.f32.mrf.mxu0
      %1042 = vmatprep.mubr.bf16.mxu0 0
      %1043 = vmatmul.mubr.bf16.gmra.mxu0 %v977
      %v1044 = vpop.f32.mrf.mxu0
      %v1045 = vadd.f32 %v964, %v1044
      %v1046 = vpop.f32.mrf.mxu0
      %v1047 = vpop.f32.mrf.mxu0
      %v1048 = vadd.f32 %v964, %v1047
      %v1049 = vpop.f32.mrf.mxu0
      %1050 = vdwg.mxu0
      %v1051 = vmax.f32 %v1021, 0.0
      %v1052 = vmax.f32 %v1024, 0.0
      %v1053 = vmax.f32 %v1029, 0.0
      %v1054 = vmax.f32 %v1032, 0.0
      %v1055 = vmax.f32 %v1037, 0.0
      %v1056 = vmax.f32 %v1040, 0.0
      %v1057 = vmax.f32 %v1045, 0.0
      %v1058 = vmax.f32 %v1048, 0.0
      %v1059 = vld [vmem:[%s10] sm:$0xf]
      %v1060 = vld [vmem:[%s10 + $0x4] sm:$0xf]
      %v1061 = vld [vmem:[%s10 + $0x8] sm:$0xf]
      %v1062 = vld [vmem:[%s10 + $0xc] sm:$0xf]
      %v1063 = vpack.c.bf16 %v1052, %v1051
      %v1064 = vpack.c.bf16 %v1054, %v1053
      %v1065 = vpack.c.bf16 %v1056, %v1055
      %v1066 = vpack.c.bf16 %v1058, %v1057
      %v1067 = vld [vmem:[%s11] sm:$0x1]
      %v1069 = vlaneseq
      %v1070 = vshrl.u32 %v1069, 7
      %v1071 = vsub.s32 0, %v1070
      %v1072 = vrot.slane %v1067, %v1071
      %v1078 = vunpack.c.l.b16 %v1059
      %v1079 = vunpack.c.l.b16 %v1060
      %v1080 = vunpack.c.l.b16 %v1061
      %v1081 = vunpack.c.l.b16 %v1062
      %v1082 = vpack.c.b16 %v1079, %v1078
      %v1083 = vpack.c.b16 %v1081, %v1080
      %vm1086 = vcmask 261120
      %v1088 = vsel %vm1086, %v1063, 0
      %v1091 = vsel %vm1086, %v1064, 0
      %v1094 = vsel %vm1086, %v1065, 0
      %v1097 = vsel %vm1086, %v1066, 0
      %1099 = vmatprep.subr.bf16.mxu0 0
      %1100 = vmatpush1.bf16.msra.mxu0 0
      %1101 = vmatprep.subr.bf16.mxu0 0
      %1102 = vmatpush1.bf16.msra.mxu0 0
      %1103 = vmatprep.subr.bf16.mxu0 0
      %1104 = vmatpush1.bf16.msra.mxu0 0
      %1105 = vmatprep.subr.bf16.mxu0 0
      %1106 = vmatpush1.bf16.msra.mxu0 0
      %1107 = vmatprep.subr.bf16.mxu0 0
      %1108 = vmatpush1.bf16.msra.mxu0 0
      %1109 = vmatprep.subr.bf16.mxu0 0
      %1110 = vmatpush1.bf16.msra.mxu0 0
      %1111 = vmatprep.subr.bf16.mxu0 0
      %1112 = vmatpush1.bf16.msra.mxu0 %v1083
      %1113 = vmatprep.subr.bf16.mxu0 0
      %1114 = vmatpush1.bf16.msra.mxu0 %v1082
      %1115 = vmatprep.subr.bf16.mxu0 0
      %1116 = vmatpush2.bf16.msra.mxu0 0
      %1117 = vmatprep.subr.bf16.mxu0 0
      %1118 = vmatpush2.bf16.msra.mxu0 0
      %1119 = vmatprep.subr.bf16.mxu0 0
      %1120 = vmatpush2.bf16.msra.mxu0 0
      %1121 = vmatprep.subr.bf16.mxu0 0
      %1122 = vmatpush2.bf16.msra.mxu0 0
      %1123 = vmatprep.subr.bf16.mxu0 0
      %1124 = vmatpush2.bf16.msra.mxu0 0
      %1125 = vmatprep.subr.bf16.mxu0 0
      %1126 = vmatpush2.bf16.msra.mxu0 0
      %1127 = vmatprep.subr.bf16.mxu0 0
      %1128 = vmatpush2.bf16.msra.mxu0 0
      %1129 = vmatprep.subr.bf16.mxu0 0
      %1130 = vmatpush2.bf16.msra.mxu0 0
      %1131 = vmatprep.mubr.bf16.mxu0 0
      %1132 = vmatmul.mubr.bf16.gmra.mxu0 %v1088
      %v1133 = vpop.f32.mrf.mxu0
      %v1134 = vadd.f32 %v1072, %v1133
      %v1135 = vpop.f32.mrf.mxu0
      %v1136 = vpop.f32.mrf.mxu0
      %v1137 = vadd.f32 %v1072, %v1136
      %v1138 = vpop.f32.mrf.mxu0
      %1139 = vmatprep.mubr.bf16.mxu0 0
      %1140 = vmatmul.mubr.bf16.gmra.mxu0 %v1091
      %v1141 = vpop.f32.mrf.mxu0
      %v1142 = vadd.f32 %v1072, %v1141
      %v1143 = vpop.f32.mrf.mxu0
      %v1144 = vpop.f32.mrf.mxu0
      %v1145 = vadd.f32 %v1072, %v1144
      %v1146 = vpop.f32.mrf.mxu0
      %1147 = vmatprep.mubr.bf16.mxu0 0
      %1148 = vmatmul.mubr.bf16.gmra.mxu0 %v1094
      %v1149 = vpop.f32.mrf.mxu0
      %v1150 = vadd.f32 %v1072, %v1149
      %v1151 = vpop.f32.mrf.mxu0
      %v1152 = vpop.f32.mrf.mxu0
      %v1153 = vadd.f32 %v1072, %v1152
      %v1154 = vpop.f32.mrf.mxu0
      %1155 = vmatprep.mubr.bf16.mxu0 0
      %1156 = vmatmul.mubr.bf16.gmra.mxu0 %v1097
      %v1157 = vpop.f32.mrf.mxu0
      %v1158 = vadd.f32 %v1072, %v1157
      %v1159 = vpop.f32.mrf.mxu0
      %v1160 = vpop.f32.mrf.mxu0
      %v1161 = vadd.f32 %v1072, %v1160
      %v1162 = vpop.f32.mrf.mxu0
      %1163 = vdwg.mxu0
      %v1164 = vadd.f32 %v1134, %v946
      %v1165 = vadd.f32 %v1137, %v947
      %v1166 = vadd.f32 %v1142, %v948
      %v1167 = vadd.f32 %v1145, %v949
      %v1168 = vadd.f32 %v1150, %v950
      %v1169 = vadd.f32 %v1153, %v951
      %v1170 = vadd.f32 %v1158, %v952
      %v1171 = vadd.f32 %v1161, %v953
      %v1172 = vsub.f32 %v870, %v890
      %v1173 = vsub.f32 %v871, %v891
      %v1174 = vsub.f32 %v870, %v892
      %v1175 = vsub.f32 %v871, %v893
      %v1176 = vsub.f32 %v870, %v894
      %v1177 = vsub.f32 %v871, %v895
      %v1178 = vsub.f32 %v870, %v896
      %v1179 = vsub.f32 %v871, %v897
      %v1180 = vadd.f32 %v1172, %v1164
      %v1181 = vadd.f32 %v1173, %v1165
      %v1182 = vadd.f32 %v1174, %v1166
      %v1183 = vadd.f32 %v1175, %v1167
      %v1184 = vadd.f32 %v1176, %v1168
      %v1185 = vadd.f32 %v1177, %v1169
      %v1186 = vadd.f32 %v1178, %v1170
      %v1187 = vadd.f32 %v1179, %v1171
      %v1188 = vld [vmem:[%s12] sm:$0xf]
      %v1189 = vld [vmem:[%s12 + $0x4] sm:$0xf]
      %v1190 = vld [vmem:[%s12 + $0x8] sm:$0xf]
      %v1191 = vld [vmem:[%s12 + $0xc] sm:$0xf]
      %v1192 = vpack.c.bf16 %v1181, %v1180
      %v1193 = vpack.c.bf16 %v1183, %v1182
      %v1194 = vpack.c.bf16 %v1185, %v1184
      %v1195 = vpack.c.bf16 %v1187, %v1186
      %v1196 = vld [vmem:[%s13] sm:$0x1]
      %v1198 = vlaneseq
      %v1199 = vshrl.u32 %v1198, 7
      %v1200 = vsub.s32 0, %v1199
      %v1201 = vrot.slane %v1196, %v1200
      %v1207 = vunpack.c.l.b16 %v1188
      %v1208 = vunpack.c.l.b16 %v1189
      %v1209 = vunpack.c.l.b16 %v1190
      %v1210 = vunpack.c.l.b16 %v1191
      %v1211 = vpack.c.b16 %v1208, %v1207
      %v1212 = vpack.c.b16 %v1210, %v1209
      %v1216 = vsel %vm1086, %v1192, 0
      %v1219 = vsel %vm1086, %v1193, 0
      %v1222 = vsel %vm1086, %v1194, 0
      %v1225 = vsel %vm1086, %v1195, 0
      %1227 = vmatprep.subr.bf16.mxu0 0
      %1228 = vmatpush1.bf16.msra.mxu0 0
      %1229 = vmatprep.subr.bf16.mxu0 0
      %1230 = vmatpush1.bf16.msra.mxu0 0
      %1231 = vmatprep.subr.bf16.mxu0 0
      %1232 = vmatpush1.bf16.msra.mxu0 0
      %1233 = vmatprep.subr.bf16.mxu0 0
      %1234 = vmatpush1.bf16.msra.mxu0 0
      %1235 = vmatprep.subr.bf16.mxu0 0
      %1236 = vmatpush1.bf16.msra.mxu0 0
      %1237 = vmatprep.subr.bf16.mxu0 0
      %1238 = vmatpush1.bf16.msra.mxu0 0
      %1239 = vmatprep.subr.bf16.mxu0 0
      %1240 = vmatpush1.bf16.msra.mxu0 %v1212
      %1241 = vmatprep.subr.bf16.mxu0 0
      %1242 = vmatpush1.bf16.msra.mxu0 %v1211
      %1243 = vmatprep.subr.bf16.mxu0 0
      %1244 = vmatpush2.bf16.msra.mxu0 0
      %1245 = vmatprep.subr.bf16.mxu0 0
      %1246 = vmatpush2.bf16.msra.mxu0 0
      %1247 = vmatprep.subr.bf16.mxu0 0
      %1248 = vmatpush2.bf16.msra.mxu0 0
      %1249 = vmatprep.subr.bf16.mxu0 0
      %1250 = vmatpush2.bf16.msra.mxu0 0
      %1251 = vmatprep.subr.bf16.mxu0 0
      %1252 = vmatpush2.bf16.msra.mxu0 0
      %1253 = vmatprep.subr.bf16.mxu0 0
      %1254 = vmatpush2.bf16.msra.mxu0 0
      %1255 = vmatprep.subr.bf16.mxu0 0
      %1256 = vmatpush2.bf16.msra.mxu0 0
      %1257 = vmatprep.subr.bf16.mxu0 0
      %1258 = vmatpush2.bf16.msra.mxu0 0
      %1259 = vmatprep.mubr.bf16.mxu0 0
      %1260 = vmatmul.mubr.bf16.gmra.mxu0 %v1216
      %v1261 = vpop.f32.mrf.mxu0
      %v1262 = vadd.f32 %v1201, %v1261
      %v1263 = vpop.f32.mrf.mxu0
      %v1264 = vpop.f32.mrf.mxu0
      %v1265 = vadd.f32 %v1201, %v1264
      %v1266 = vpop.f32.mrf.mxu0
      %1267 = vmatprep.mubr.bf16.mxu0 0
      %1268 = vmatmul.mubr.bf16.gmra.mxu0 %v1219
      %v1269 = vpop.f32.mrf.mxu0
      %v1270 = vadd.f32 %v1201, %v1269
      %v1271 = vpop.f32.mrf.mxu0
      %v1272 = vpop.f32.mrf.mxu0
      %v1273 = vadd.f32 %v1201, %v1272
      %v1274 = vpop.f32.mrf.mxu0
      %1275 = vmatprep.mubr.bf16.mxu0 0
      %1276 = vmatmul.mubr.bf16.gmra.mxu0 %v1222
      %v1277 = vpop.f32.mrf.mxu0
      %v1278 = vadd.f32 %v1201, %v1277
      %v1279 = vpop.f32.mrf.mxu0
      %v1280 = vpop.f32.mrf.mxu0
      %v1281 = vadd.f32 %v1201, %v1280
      %v1282 = vpop.f32.mrf.mxu0
      %1283 = vmatprep.mubr.bf16.mxu0 0
      %1284 = vmatmul.mubr.bf16.gmra.mxu0 %v1225
      %v1285 = vpop.f32.mrf.mxu0
      %v1286 = vadd.f32 %v1201, %v1285
      %v1287 = vpop.f32.mrf.mxu0
      %v1288 = vpop.f32.mrf.mxu0
      %v1289 = vadd.f32 %v1201, %v1288
      %v1290 = vpop.f32.mrf.mxu0
      %1291 = vdwg.mxu0
      %v1292 = vmax.f32 %v1262, 0.0
      %v1293 = vmax.f32 %v1265, 0.0
      %v1294 = vmax.f32 %v1270, 0.0
      %v1295 = vmax.f32 %v1273, 0.0
      %v1296 = vmax.f32 %v1278, 0.0
      %v1297 = vmax.f32 %v1281, 0.0
      %v1298 = vmax.f32 %v1286, 0.0
      %v1299 = vmax.f32 %v1289, 0.0
      %v1300 = vld [vmem:[%s14] sm:$0xf]
      %v1301 = vld [vmem:[%s14 + $0x4] sm:$0xf]
      %v1302 = vld [vmem:[%s14 + $0x8] sm:$0xf]
      %v1303 = vld [vmem:[%s14 + $0xc] sm:$0xf]
      %v1304 = vld [vmem:[%s14 + $0x10] sm:$0xf]
      %v1305 = vld [vmem:[%s14 + $0x14] sm:$0xf]
      %v1306 = vld [vmem:[%s14 + $0x18] sm:$0xf]
      %v1307 = vld [vmem:[%s14 + $0x1c] sm:$0xf]
      %v1308 = vld [vmem:[%s14 + $0x20] sm:$0xf]
      %v1309 = vld [vmem:[%s14 + $0x24] sm:$0xf]
      %v1310 = vld [vmem:[%s14 + $0x28] sm:$0xf]
      %v1311 = vld [vmem:[%s14 + $0x2c] sm:$0xf]
      %v1312 = vld [vmem:[%s14 + $0x30] sm:$0xf]
      %v1313 = vld [vmem:[%s14 + $0x34] sm:$0xf]
      %v1314 = vld [vmem:[%s14 + $0x38] sm:$0xf]
      %v1315 = vld [vmem:[%s14 + $0x3c] sm:$0xf]
      %v1316 = vpack.c.bf16 %v1293, %v1292
      %v1317 = vpack.c.bf16 %v1295, %v1294
      %v1318 = vpack.c.bf16 %v1297, %v1296
      %v1319 = vpack.c.bf16 %v1299, %v1298
      %v1320 = vld [vmem:[%s15] sm:$0x1]
      %v1322 = vlaneseq
      %v1323 = vshrl.u32 %v1322, 7
      %v1324 = vsub.s32 0, %v1323
      %v1325 = vrot.slane %v1320, %v1324
      %v1343 = vunpack.c.l.b16 %v1300
      %v1344 = vunpack.c.l.b16 %v1301
      %v1345 = vunpack.c.l.b16 %v1302
      %v1346 = vunpack.c.l.b16 %v1303
      %v1347 = vunpack.c.l.b16 %v1304
      %v1348 = vunpack.c.l.b16 %v1305
      %v1349 = vunpack.c.l.b16 %v1306
      %v1350 = vunpack.c.l.b16 %v1307
      %v1351 = vunpack.c.l.b16 %v1308
      %v1352 = vunpack.c.l.b16 %v1309
      %v1353 = vunpack.c.l.b16 %v1310
      %v1354 = vunpack.c.l.b16 %v1311
      %v1355 = vunpack.c.l.b16 %v1312
      %v1356 = vunpack.c.l.b16 %v1313
      %v1357 = vunpack.c.l.b16 %v1314
      %v1358 = vunpack.c.l.b16 %v1315
      %v1359 = vpack.c.b16 %v1344, %v1343
      %v1360 = vpack.c.b16 %v1346, %v1345
      %v1361 = vpack.c.b16 %v1348, %v1347
      %v1362 = vpack.c.b16 %v1350, %v1349
      %v1363 = vpack.c.b16 %v1352, %v1351
      %v1364 = vpack.c.b16 %v1354, %v1353
      %v1365 = vpack.c.b16 %v1356, %v1355
      %v1366 = vpack.c.b16 %v1358, %v1357
      %1375 = vmatprep.subr.bf16.mxu0 0
      %1376 = vmatpush1.bf16.msra.mxu0 %v1366
      %1377 = vmatprep.subr.bf16.mxu0 0
      %1378 = vmatpush1.bf16.msra.mxu0 %v1365
      %1379 = vmatprep.subr.bf16.mxu0 0
      %1380 = vmatpush1.bf16.msra.mxu0 %v1364
      %1381 = vmatprep.subr.bf16.mxu0 0
      %1382 = vmatpush1.bf16.msra.mxu0 %v1363
      %1383 = vmatprep.subr.bf16.mxu0 0
      %1384 = vmatpush1.bf16.msra.mxu0 %v1362
      %1385 = vmatprep.subr.bf16.mxu0 0
      %1386 = vmatpush1.bf16.msra.mxu0 %v1361
      %1387 = vmatprep.subr.bf16.mxu0 0
      %1388 = vmatpush1.bf16.msra.mxu0 %v1360
      %1389 = vmatprep.subr.bf16.mxu0 0
      %1390 = vmatpush1.bf16.msra.mxu0 %v1359
      %1391 = vmatprep.subr.bf16.mxu0 0
      %1392 = vmatpush2.bf16.msra.mxu0 0
      %1393 = vmatprep.subr.bf16.mxu0 0
      %1394 = vmatpush2.bf16.msra.mxu0 0
      %1395 = vmatprep.subr.bf16.mxu0 0
      %1396 = vmatpush2.bf16.msra.mxu0 0
      %1397 = vmatprep.subr.bf16.mxu0 0
      %1398 = vmatpush2.bf16.msra.mxu0 0
      %1399 = vmatprep.subr.bf16.mxu0 0
      %1400 = vmatpush2.bf16.msra.mxu0 0
      %1401 = vmatprep.subr.bf16.mxu0 0
      %1402 = vmatpush2.bf16.msra.mxu0 0
      %1403 = vmatprep.subr.bf16.mxu0 0
      %1404 = vmatpush2.bf16.msra.mxu0 0
      %1405 = vmatprep.subr.bf16.mxu0 0
      %1406 = vmatpush2.bf16.msra.mxu0 0
      %1407 = vmatprep.mubr.bf16.mxu0 0
      %1408 = vmatmul.mubr.bf16.gmra.mxu0 %v1316
      %v1409 = vpop.f32.mrf.mxu0
      %v1410 = vadd.f32 %v1325, %v1409
      %v1411 = vpop.f32.mrf.mxu0
      %v1412 = vpop.f32.mrf.mxu0
      %v1413 = vadd.f32 %v1325, %v1412
      %v1414 = vpop.f32.mrf.mxu0
      %1415 = vmatprep.mubr.bf16.mxu0 0
      %1416 = vmatmul.mubr.bf16.gmra.mxu0 %v1317
      %v1417 = vpop.f32.mrf.mxu0
      %v1418 = vadd.f32 %v1325, %v1417
      %v1419 = vpop.f32.mrf.mxu0
      %v1420 = vpop.f32.mrf.mxu0
      %v1421 = vadd.f32 %v1325, %v1420
      %v1422 = vpop.f32.mrf.mxu0
      %1423 = vmatprep.mubr.bf16.mxu0 0
      %1424 = vmatmul.mubr.bf16.gmra.mxu0 %v1318
      %v1425 = vpop.f32.mrf.mxu0
      %v1426 = vadd.f32 %v1325, %v1425
      %v1427 = vpop.f32.mrf.mxu0
      %v1428 = vpop.f32.mrf.mxu0
      %v1429 = vadd.f32 %v1325, %v1428
      %v1430 = vpop.f32.mrf.mxu0
      %1431 = vmatprep.mubr.bf16.mxu0 0
      %1432 = vmatmul.mubr.bf16.gmra.mxu0 %v1319
      %v1433 = vpop.f32.mrf.mxu0
      %v1434 = vadd.f32 %v1325, %v1433
      %v1435 = vpop.f32.mrf.mxu0
      %v1436 = vpop.f32.mrf.mxu0
      %v1437 = vadd.f32 %v1325, %v1436
      %v1438 = vpop.f32.mrf.mxu0
      %1439 = vdwg.mxu0
      %v1440 = vadd.f32 %v906, %v1164
      %v1441 = vadd.f32 %v907, %v1165
      %v1442 = vadd.f32 %v908, %v1166
      %v1443 = vadd.f32 %v909, %v1167
      %v1444 = vadd.f32 %v910, %v1168
      %v1445 = vadd.f32 %v911, %v1169
      %v1446 = vadd.f32 %v912, %v1170
      %v1447 = vadd.f32 %v913, %v1171
      %v1448 = vsel %vm1086, %v1410, -inf
      %v1449 = vsel %vm1086, %v1418, -inf
      %v1450 = vsel %vm1086, %v1426, -inf
      %v1451 = vmax.f32 %v1448, %v1450
      %v1452 = vsel %vm1086, %v1434, -inf
      %v1453 = vmax.f32 %v1449, %v1452
      %v1454 = vmax.f32 %v1451, %v1453
      %v1455 = vsel %vm1086, %v1413, -inf
      %v1456 = vsel %vm1086, %v1421, -inf
      %v1457 = vsel %vm1086, %v1429, -inf
      %v1458 = vmax.f32 %v1455, %v1457
      %v1459 = vsel %vm1086, %v1437, -inf
      %v1460 = vmax.f32 %v1456, %v1459
      %v1461 = vmax.f32 %v1458, %v1460
      %v1462 = vsub.f32 %v1410, %v1454
      %v1463 = vsub.f32 %v1413, %v1461
      %v1464 = vsub.f32 %v1418, %v1454
      %v1465 = vsub.f32 %v1421, %v1461
      %v1466 = vsub.f32 %v1426, %v1454
      %v1467 = vsub.f32 %v1429, %v1461
      %v1468 = vsub.f32 %v1434, %v1454
      %v1469 = vsub.f32 %v1437, %v1461
      %v1470 = vmul.f32 %v1462, 1.442695
      %v1471 = vpow.pop %v1470
      %v1472 = vmul.f32 %v1463, 1.442695
      %v1473 = vpow.pop %v1472
      %v1474 = vmul.f32 %v1464, 1.442695
      %v1475 = vpow.pop %v1474
      %v1476 = vmul.f32 %v1465, 1.442695
      %v1477 = vpow.pop %v1476
      %v1478 = vmul.f32 %v1466, 1.442695
      %v1479 = vpow.pop %v1478
      %v1480 = vmul.f32 %v1467, 1.442695
      %v1481 = vpow.pop %v1480
      %v1482 = vmul.f32 %v1468, 1.442695
      %v1483 = vpow.pop %v1482
      %v1484 = vmul.f32 %v1469, 1.442695
      %v1485 = vpow.pop %v1484
      %v1486 = vsel %vm1086, %v1471, 0.0
      %v1487 = vsel %vm1086, %v1475, 0.0
      %v1488 = vadd.f32 %v1486, %v1487
      %v1489 = vsel %vm1086, %v1479, 0.0
      %v1490 = vadd.f32 %v1488, %v1489
      %v1491 = vsel %vm1086, %v1483, 0.0
      %v1492 = vadd.f32 %v1490, %v1491
      %v1493 = vsel %vm1086, %v1473, 0.0
      %v1494 = vsel %vm1086, %v1477, 0.0
      %v1495 = vadd.f32 %v1493, %v1494
      %v1496 = vsel %vm1086, %v1481, 0.0
      %v1497 = vadd.f32 %v1495, %v1496
      %v1498 = vsel %vm1086, %v1485, 0.0
      %v1499 = vadd.f32 %v1497, %v1498
      %v1500 = vrcp.pop %v1492
      %v1501 = vrcp.pop %v1499
      %v1502 = vmul.f32 %v1471, %v1440
      %v1503 = vmul.f32 %v1473, %v1441
      %v1504 = vmul.f32 %v1475, %v1442
      %v1505 = vmul.f32 %v1477, %v1443
      %v1506 = vmul.f32 %v1479, %v1444
      %v1507 = vmul.f32 %v1481, %v1445
      %v1508 = vmul.f32 %v1483, %v1446
      %v1509 = vmul.f32 %v1485, %v1447
      %v1510 = vsel %vm1086, %v1502, 0.0
      %v1511 = vsel %vm1086, %v1504, 0.0
      %v1512 = vadd.f32 %v1510, %v1511
      %v1513 = vsel %vm1086, %v1506, 0.0
      %v1514 = vadd.f32 %v1512, %v1513
      %v1515 = vsel %vm1086, %v1508, 0.0
      %v1516 = vadd.f32 %v1514, %v1515
      %v1517 = vsel %vm1086, %v1503, 0.0
      %v1518 = vsel %vm1086, %v1505, 0.0
      %v1519 = vadd.f32 %v1517, %v1518
      %v1520 = vsel %vm1086, %v1507, 0.0
      %v1521 = vadd.f32 %v1519, %v1520
      %v1522 = vsel %vm1086, %v1509, 0.0
      %v1523 = vadd.f32 %v1521, %v1522
      %v1524 = vmul.f32 %v1516, %v1500
      %v1525 = vmul.f32 %v1523, %v1501
      %v1526 = vld [vmem:[%s16] sm:$0xf]
      %v1527 = vld [vmem:[%s16 + $0x4] sm:$0xf]
      %v1528 = vld [vmem:[%s16 + $0x8] sm:$0xf]
      %v1529 = vld [vmem:[%s16 + $0xc] sm:$0xf]
      %v1530 = vpack.c.bf16 %v1525, %v1524
      %v1531 = vld [vmem:[%s17] sm:$0x1]
      %v1533 = vlaneseq
      %v1534 = vshrl.u32 %v1533, 7
      %v1535 = vsub.s32 0, %v1534
      %v1536 = vrot.slane %v1531, %v1535
      %v1542 = vunpack.c.l.b16 %v1526
      %v1543 = vunpack.c.l.b16 %v1527
      %v1544 = vunpack.c.l.b16 %v1528
      %v1545 = vunpack.c.l.b16 %v1529
      %v1546 = vpack.c.b16 %v1543, %v1542
      %v1547 = vpack.c.b16 %v1545, %v1544
      %v1551 = vsel %vm1086, %v1530, 0
      %1553 = vmatprep.subr.bf16.mxu0 0
      %1554 = vmatpush1.bf16.msra.mxu0 0
      %1555 = vmatprep.subr.bf16.mxu0 0
      %1556 = vmatpush1.bf16.msra.mxu0 0
      %1557 = vmatprep.subr.bf16.mxu0 0
      %1558 = vmatpush1.bf16.msra.mxu0 0
      %1559 = vmatprep.subr.bf16.mxu0 0
      %1560 = vmatpush1.bf16.msra.mxu0 0
      %1561 = vmatprep.subr.bf16.mxu0 0
      %1562 = vmatpush1.bf16.msra.mxu0 0
      %1563 = vmatprep.subr.bf16.mxu0 0
      %1564 = vmatpush1.bf16.msra.mxu0 0
      %1565 = vmatprep.subr.bf16.mxu0 0
      %1566 = vmatpush1.bf16.msra.mxu0 %v1547
      %1567 = vmatprep.subr.bf16.mxu0 0
      %1568 = vmatpush1.bf16.msra.mxu0 %v1546
      %1569 = vmatprep.subr.bf16.mxu0 0
      %1570 = vmatpush2.bf16.msra.mxu0 0
      %1571 = vmatprep.subr.bf16.mxu0 0
      %1572 = vmatpush2.bf16.msra.mxu0 0
      %1573 = vmatprep.subr.bf16.mxu0 0
      %1574 = vmatpush2.bf16.msra.mxu0 0
      %1575 = vmatprep.subr.bf16.mxu0 0
      %1576 = vmatpush2.bf16.msra.mxu0 0
      %1577 = vmatprep.subr.bf16.mxu0 0
      %1578 = vmatpush2.bf16.msra.mxu0 0
      %1579 = vmatprep.subr.bf16.mxu0 0
      %1580 = vmatpush2.bf16.msra.mxu0 0
      %1581 = vmatprep.subr.bf16.mxu0 0
      %1582 = vmatpush2.bf16.msra.mxu0 0
      %1583 = vmatprep.subr.bf16.mxu0 0
      %1584 = vmatpush2.bf16.msra.mxu0 0
      %1585 = vmatprep.mubr.bf16.mxu0 0
      %1586 = vmatmul.mubr.bf16.gmra.mxu0 %v1551
      %v1587 = vpop.f32.mrf.mxu0
      %v1588 = vadd.f32 %v1536, %v1587
      %v1589 = vpop.f32.mrf.mxu0
      %v1590 = vpop.f32.mrf.mxu0
      %v1591 = vadd.f32 %v1536, %v1590
      %v1592 = vpop.f32.mrf.mxu0
      %1593 = vdwg.mxu0
      %v1594 = vadd.f32 %v1588, %v880
      %v1595 = vadd.f32 %v1591, %v881
      %v1596 = vpack.c.bf16 %v1595, %v1594
      %v1598 = vunpack.c.l.b16 %v1596
      %v1599 = vunpack.c.h.b16 %v1596
      %v1600 = vpack.c.b16 %v1598, %v1598
      %v1601 = vpack.c.b16 %v1599, %v1599
      %vm1604 = vcmask 257024
      %1605 = vst.msk [vmem:[%s865] sm:$0xf] %vm1604, %v1600
      %1606 = vst.msk [vmem:[%s865 + $0x4] sm:$0xf] %vm1604, %v1601
      %s1607 = smul.u32 2, %s34
      %p1608 = scmp.lt.s32.totalorder %s33, 1
      %s1609 = scalar_select %p1608, %s33, 1
      %p1610 = scmp.lt.s32.totalorder %s1607, 1
      %s1611 = scalar_select %p1610, %s1607, 1
      %s1612 = smul.addr %s1609, 2
      %s1613 = sadd.s32 %s1611, %s1612
      %s1614 = smul.addr %s1613, 4
      %s1615 = scalar_lea.vmem %s18, %s1614
      // Predicated region
      $region93: #{upsampler_forward.16} parent=91 // pred_check
        %p1616 = pneg %p495
      $region94: #{upsampler_forward.16} parent=91 // pred_check_branch
        %1618 = sbr.rel (%p1616) target = $region96
      $region95: #{upsampler_forward.16} parent=91 // pred_region
        %s1619 = smul.u32 2, %s34
      $region96: #{upsampler_forward.16} parent=91 // pred_fallthru
        _
    $region92: #{upsampler_forward.16} parent=5 // pred_fallthru
      _
    %p1620 = scmp.le.s32.totalorder 2, %s24
    // Predicated region
    $region97: #{upsampler_forward.16} parent=5 // pred_check
      %p1621 = pneg %p1620
    $region98: #{upsampler_forward.16} parent=5 // pred_check_branch
      %1623 = sbr.rel (%p1621) target = $region100
    $region99: #{upsampler_forward.16} parent=5 // pred_region
      %s1624 = ssub.s32 %s24, 2
      // Predicated region
      $region101: #{upsampler_forward.16} parent=99 // pred_check
        %p1625 = pneg %p501
      $region102: #{upsampler_forward.16} parent=99 // pred_check_branch
        %1627 = sbr.rel (%p1625) target = $region104
      $region103: #{upsampler_forward.16} parent=99 // pred_region
        %s1628 = smul.u32 2, %s36
        %p1629 = scmp.lt.s32.totalorder %s35, 1
        %s1630 = scalar_select %p1629, %s35, 1
        %p1631 = scmp.lt.s32.totalorder %s1628, 1
        %s1632 = scalar_select %p1631, %s1628, 1
        %s1633 = smul.addr %s1630, 2
        %s1634 = sadd.s32 %s1632, %s1633
        %s1635 = smul.addr %s1634, 4
        %s1636 = scalar_lea.vmem %s18, %s1635
      $region104: #{upsampler_forward.16} parent=99 // pred_fallthru
        _
    $region100: #{upsampler_forward.16} parent=5 // pred_fallthru
      _
  $region6: #{upsampler_forward.16} parent=0 // loop_footer
    %s28 = sadd.s32 1, %s24
  $region7: #{upsampler_forward.16} parent=0 // loop_footer_branch
    %23 = sbr.rel target = $region3
  $region8: #{upsampler_forward.16} parent=0 // loop_exit
    _

// kernel: upsampler_forward.18
$region0: #{upsampler_forward.18}
  #allocation0 [shape = 'u32[]', space=smem, size = 0x4, offset = 0x4, fixed_abs, tag = 'smem constant byte address 0x4 - core index']
  #allocation1 [shape = 'u32[144,128]{1,0:T(1,128)}', space=vmem, size = 0x12000, scoped, tag = 'internal scratch']
  %s0 = inlined_call_operand.vmem [shape: bf16[2,16,32], index: 0, kind: input, shape index: {}]
  %s1 = inlined_call_operand.vmem [shape: bf16[2,4,16,32], index: 1, kind: input, shape index: {}]
  %s2 = inlined_call_operand.vmem [shape: bf16[2,4,16,32], index: 2, kind: input, shape index: {}]
  %s3 = inlined_call_operand.vmem [shape: bf16[2,4,16,32], index: 3, kind: input, shape index: {}]
  %s4 = inlined_call_operand.vmem [shape: f32[2,4,16,3], index: 4, kind: input, shape index: {}]
  %s5 = inlined_call_operand.vmem [shape: f32[2,16,3], index: 5, kind: input, shape index: {}]
  %s6 = inlined_call_operand.vmem [shape: bf16[2,16,32], index: 6, kind: input, shape index: {}]
  %s7 = inlined_call_operand.vmem [shape: bf16[2,16,32], index: 7, kind: input, shape index: {}]
  %s8 = inlined_call_operand.vmem [shape: bf16[3,32], index: 8, kind: input, shape index: {}]
  %s9 = inlined_call_operand.vmem [shape: f32[1,32], index: 9, kind: input, shape index: {}]
  %s10 = inlined_call_operand.vmem [shape: bf16[32,32], index: 10, kind: input, shape index: {}]
  %s11 = inlined_call_operand.vmem [shape: f32[1,32], index: 11, kind: input, shape index: {}]
  %s12 = inlined_call_operand.vmem [shape: bf16[32,128], index: 12, kind: input, shape index: {}]
  %s13 = inlined_call_operand.vmem [shape: f32[1,128], index: 13, kind: input, shape index: {}]
  %s14 = inlined_call_operand.vmem [shape: bf16[128,64], index: 14, kind: input, shape index: {}]
  %s15 = inlined_call_operand.vmem [shape: f32[1,64], index: 15, kind: input, shape index: {}]
  %s16 = inlined_call_operand.vmem [shape: bf16[32,32], index: 16, kind: input, shape index: {}]
  %s17 = inlined_call_operand.vmem [shape: f32[1,32], index: 17, kind: input, shape index: {}]
  %s18 = inlined_call_operand.vmem [shape: bf16[2,16,64], index: 18, kind: output, shape index: {}]
  %s19 = sld [smem:[#allocation0]]
  $region105: #{upsampler_forward.18} parent=0
    _
  %s21 = ssub.s32 1, %s19
  %s22 = scalar_select 0, %s21, %s19
  loop: start=0, step=1, limit=4
  $region2: #{upsampler_forward.18} parent=0 // loop_pre_header
    _
  $region3: #{upsampler_forward.18} parent=0 // loop_header
    %s24 = sphi 0, %s28
    %p25 = scmp.ge.s32.totalorder %s24, 4
    %s31 = sphi 0, %s43
    %s32 = sphi 0, %s39
    %s33 = sphi 0, %s31
    %s34 = sphi 0, %s32
    %s35 = sphi 0, %s33
    %s36 = sphi 0, %s34
    %s48 = sphi 0, %s50
    %s51 = sphi 0, %s48
    %s52 = sphi 0, %s51
    %s68 = sphi 0, %s52
    %s76 = sphi 0, %s78
    %s79 = sphi 0, %s76
    %s80 = sphi 0, %s79
    %s96 = sphi 0, %s80
    %s104 = sphi 0, %s106
    %s107 = sphi 0, %s104
    %s108 = sphi 0, %s107
    %s124 = sphi 0, %s108
    %s132 = sphi 0, %s134
    %s135 = sphi 0, %s132
    %s136 = sphi 0, %s135
    %s152 = sphi 0, %s136
    %s160 = sphi 0, %s162
    %s163 = sphi 0, %s160
    %s164 = sphi 0, %s163
    %s180 = sphi 0, %s164
    %s188 = sphi 0, %s190
    %s191 = sphi 0, %s188
    %s192 = sphi 0, %s191
    %s208 = sphi 0, %s192
    %s216 = sphi 0, %s218
    %s219 = sphi 0, %s216
    %s220 = sphi 0, %s219
    %s236 = sphi 0, %s220
    %s244 = sphi 0, %s246
    %s247 = sphi 0, %s244
    %s248 = sphi 0, %s247
    %s264 = sphi 0, %s248
    %s268 = sphi 0, %s268
    %s270 = sphi 0, %s268
    %s271 = sphi 0, %s270
    %s285 = sphi 0, %s271
    %s289 = sphi 0, %s289
    %s291 = sphi 0, %s289
    %s292 = sphi 0, %s291
    %s306 = sphi 0, %s292
    %s310 = sphi 0, %s310
    %s312 = sphi 0, %s310
    %s313 = sphi 0, %s312
    %s327 = sphi 0, %s313
    %s331 = sphi 0, %s331
    %s333 = sphi 0, %s331
    %s334 = sphi 0, %s333
    %s348 = sphi 0, %s334
    %s352 = sphi 0, %s352
    %s354 = sphi 0, %s352
    %s355 = sphi 0, %s354
    %s369 = sphi 0, %s355
    %s373 = sphi 0, %s373
    %s375 = sphi 0, %s373
    %s376 = sphi 0, %s375
    %s390 = sphi 0, %s376
    %s394 = sphi 0, %s394
    %s396 = sphi 0, %s394
    %s397 = sphi 0, %s396
    %s411 = sphi 0, %s397
    %s415 = sphi 0, %s415
    %s417 = sphi 0, %s415
    %s418 = sphi 0, %s417
    %s432 = sphi 0, %s418
    %s436 = sphi 0, %s436
    %s438 = sphi 0, %s436
    %s439 = sphi 0, %s438
    %s453 = sphi 0, %s439
    %s457 = sphi 0, %s457
    %s459 = sphi 0, %s457
    %s460 = sphi 0, %s459
    %s474 = sphi 0, %s460
    %s482 = sphi 0, %s484
    %s485 = sphi 0, %s482
    %s486 = sphi 0, %s485
    %s502 = sphi 0, %s486
  $region4: #{upsampler_forward.18} parent=0 // loop_header_branch
    %27 = sbr.rel (%p25) target = $region8
  $region5: #{upsampler_forward.18} parent=0 // loop_body
    %s29 = ssub.s32 %s24, 1
    %s30 = ssub.s32 %s24, 2
    %s37 = sadd.s32 1, %s32
    %p38 = scmp.ge.s32.totalorder %s37, 1
    %s39 = scalar_select %p38, 0, %s37
    %s40 = sadd.s32 1, %s31
    %s41 = scalar_select %p38, %s40, %s31
    %p42 = scmp.ge.s32.totalorder %s41, 2
    %s43 = scalar_select %p42, 0, %s41
    %s44 = ssub.s32 %s31, %s43
    %s45 = ssub.s32 %s32, %s39
    %s46 = sor.u32 %s44, %s45
    %p47 = scmp.eq.s32.totalorder %s46, 0
    %s49 = sadd.s32 %s48, 1
    %s50 = scalar_select %p47, %s48, %s49
    %p53 = pneg %p47
    %p54 = scmp.eq.s32.totalorder %s24, 1
    %p55 = por %p53, %p54
    %p56 = scmp.ne.s32.totalorder %s48, %s51
    %p57 = scmp.eq.s32.totalorder %s24, 0
    %p58 = por %p56, %p57
    %p59 = scmp.ne.s32.totalorder %s48, %s51
    %p60 = scmp.eq.s32.totalorder %s29, 1
    %p61 = por %p59, %p60
    %p62 = scmp.ne.s32.totalorder %s51, %s52
    %p63 = scmp.eq.s32.totalorder %s29, 0
    %p64 = por %p62, %p63
    %p65 = scmp.ne.s32.totalorder %s51, %s52
    %p66 = scmp.eq.s32.totalorder %s30, 1
    %p67 = por %p65, %p66
    %p69 = scmp.ne.s32.totalorder %s52, %s68
    %p70 = scmp.eq.s32.totalorder %s30, 0
    %p71 = por %p69, %p70
    %s72 = ssub.s32 %s31, %s43
    %s73 = ssub.s32 %s32, %s39
    %s74 = sor.u32 %s72, %s73
    %p75 = scmp.eq.s32.totalorder %s74, 0
    %s77 = sadd.s32 %s76, 1
    %s78 = scalar_select %p75, %s76, %s77
    %p81 = pneg %p75
    %p82 = scmp.eq.s32.totalorder %s24, 1
    %p83 = por %p81, %p82
    %p84 = scmp.ne.s32.totalorder %s76, %s79
    %p85 = scmp.eq.s32.totalorder %s24, 0
    %p86 = por %p84, %p85
    %p87 = scmp.ne.s32.totalorder %s76, %s79
    %p88 = scmp.eq.s32.totalorder %s29, 1
    %p89 = por %p87, %p88
    %p90 = scmp.ne.s32.totalorder %s79, %s80
    %p91 = scmp.eq.s32.totalorder %s29, 0
    %p92 = por %p90, %p91
    %p93 = scmp.ne.s32.totalorder %s79, %s80
    %p94 = scmp.eq.s32.totalorder %s30, 1
    %p95 = por %p93, %p94
    %p97 = scmp.ne.s32.totalorder %s80, %s96
    %p98 = scmp.eq.s32.totalorder %s30, 0
    %p99 = por %p97, %p98
    %s100 = ssub.s32 %s31, %s43
    %s101 = ssub.s32 %s32, %s39
    %s102 = sor.u32 %s100, %s101
    %p103 = scmp.eq.s32.totalorder %s102, 0
    %s105 = sadd.s32 %s104, 1
    %s106 = scalar_select %p103, %s104, %s105
    %p109 = pneg %p103
    %p110 = scmp.eq.s32.totalorder %s24, 1
    %p111 = por %p109, %p110
    %p112 = scmp.ne.s32.totalorder %s104, %s107
    %p113 = scmp.eq.s32.totalorder %s24, 0
    %p114 = por %p112, %p113
    %p115 = scmp.ne.s32.totalorder %s104, %s107
    %p116 = scmp.eq.s32.totalorder %s29, 1
    %p117 = por %p115, %p116
    %p118 = scmp.ne.s32.totalorder %s107, %s108
    %p119 = scmp.eq.s32.totalorder %s29, 0
    %p120 = por %p118, %p119
    %p121 = scmp.ne.s32.totalorder %s107, %s108
    %p122 = scmp.eq.s32.totalorder %s30, 1
    %p123 = por %p121, %p122
    %p125 = scmp.ne.s32.totalorder %s108, %s124
    %p126 = scmp.eq.s32.totalorder %s30, 0
    %p127 = por %p125, %p126
    %s128 = ssub.s32 %s31, %s43
    %s129 = ssub.s32 %s32, %s39
    %s130 = sor.u32 %s128, %s129
    %p131 = scmp.eq.s32.totalorder %s130, 0
    %s133 = sadd.s32 %s132, 1
    %s134 = scalar_select %p131, %s132, %s133
    %p137 = pneg %p131
    %p138 = scmp.eq.s32.totalorder %s24, 1
    %p139 = por %p137, %p138
    %p140 = scmp.ne.s32.totalorder %s132, %s135
    %p141 = scmp.eq.s32.totalorder %s24, 0
    %p142 = por %p140, %p141
    %p143 = scmp.ne.s32.totalorder %s132, %s135
    %p144 = scmp.eq.s32.totalorder %s29, 1
    %p145 = por %p143, %p144
    %p146 = scmp.ne.s32.totalorder %s135, %s136
    %p147 = scmp.eq.s32.totalorder %s29, 0
    %p148 = por %p146, %p147
    %p149 = scmp.ne.s32.totalorder %s135, %s136
    %p150 = scmp.eq.s32.totalorder %s30, 1
    %p151 = por %p149, %p150
    %p153 = scmp.ne.s32.totalorder %s136, %s152
    %p154 = scmp.eq.s32.totalorder %s30, 0
    %p155 = por %p153, %p154
    %s156 = ssub.s32 %s31, %s43
    %s157 = ssub.s32 %s32, %s39
    %s158 = sor.u32 %s156, %s157
    %p159 = scmp.eq.s32.totalorder %s158, 0
    %s161 = sadd.s32 %s160, 1
    %s162 = scalar_select %p159, %s160, %s161
    %p165 = pneg %p159
    %p166 = scmp.eq.s32.totalorder %s24, 1
    %p167 = por %p165, %p166
    %p168 = scmp.ne.s32.totalorder %s160, %s163
    %p169 = scmp.eq.s32.totalorder %s24, 0
    %p170 = por %p168, %p169
    %p171 = scmp.ne.s32.totalorder %s160, %s163
    %p172 = scmp.eq.s32.totalorder %s29, 1
    %p173 = por %p171, %p172
    %p174 = scmp.ne.s32.totalorder %s163, %s164
    %p175 = scmp.eq.s32.totalorder %s29, 0
    %p176 = por %p174, %p175
    %p177 = scmp.ne.s32.totalorder %s163, %s164
    %p178 = scmp.eq.s32.totalorder %s30, 1
    %p179 = por %p177, %p178
    %p181 = scmp.ne.s32.totalorder %s164, %s180
    %p182 = scmp.eq.s32.totalorder %s30, 0
    %p183 = por %p181, %p182
    %s184 = ssub.s32 %s31, %s43
    %s185 = ssub.s32 %s32, %s39
    %s186 = sor.u32 %s184, %s185
    %p187 = scmp.eq.s32.totalorder %s186, 0
    %s189 = sadd.s32 %s188, 1
    %s190 = scalar_select %p187, %s188, %s189
    %p193 = pneg %p187
    %p194 = scmp.eq.s32.totalorder %s24, 1
    %p195 = por %p193, %p194
    %p196 = scmp.ne.s32.totalorder %s188, %s191
    %p197 = scmp.eq.s32.totalorder %s24, 0
    %p198 = por %p196, %p197
    %p199 = scmp.ne.s32.totalorder %s188, %s191
    %p200 = scmp.eq.s32.totalorder %s29, 1
    %p201 = por %p199, %p200
    %p202 = scmp.ne.s32.totalorder %s191, %s192
    %p203 = scmp.eq.s32.totalorder %s29, 0
    %p204 = por %p202, %p203
    %p205 = scmp.ne.s32.totalorder %s191, %s192
    %p206 = scmp.eq.s32.totalorder %s30, 1
    %p207 = por %p205, %p206
    %p209 = scmp.ne.s32.totalorder %s192, %s208
    %p210 = scmp.eq.s32.totalorder %s30, 0
    %p211 = por %p209, %p210
    %s212 = ssub.s32 %s31, %s43
    %s213 = ssub.s32 %s32, %s39
    %s214 = sor.u32 %s212, %s213
    %p215 = scmp.eq.s32.totalorder %s214, 0
    %s217 = sadd.s32 %s216, 1
    %s218 = scalar_select %p215, %s216, %s217
    %p221 = pneg %p215
    %p222 = scmp.eq.s32.totalorder %s24, 1
    %p223 = por %p221, %p222
    %p224 = scmp.ne.s32.totalorder %s216, %s219
    %p225 = scmp.eq.s32.totalorder %s24, 0
    %p226 = por %p224, %p225
    %p227 = scmp.ne.s32.totalorder %s216, %s219
    %p228 = scmp.eq.s32.totalorder %s29, 1
    %p229 = por %p227, %p228
    %p230 = scmp.ne.s32.totalorder %s219, %s220
    %p231 = scmp.eq.s32.totalorder %s29, 0
    %p232 = por %p230, %p231
    %p233 = scmp.ne.s32.totalorder %s219, %s220
    %p234 = scmp.eq.s32.totalorder %s30, 1
    %p235 = por %p233, %p234
    %p237 = scmp.ne.s32.totalorder %s220, %s236
    %p238 = scmp.eq.s32.totalorder %s30, 0
    %p239 = por %p237, %p238
    %s240 = ssub.s32 %s31, %s43
    %s241 = ssub.s32 %s32, %s39
    %s242 = sor.u32 %s240, %s241
    %p243 = scmp.eq.s32.totalorder %s242, 0
    %s245 = sadd.s32 %s244, 1
    %s246 = scalar_select %p243, %s244, %s245
    %p249 = pneg %p243
    %p250 = scmp.eq.s32.totalorder %s24, 1
    %p251 = por %p249, %p250
    %p252 = scmp.ne.s32.totalorder %s244, %s247
    %p253 = scmp.eq.s32.totalorder %s24, 0
    %p254 = por %p252, %p253
    %p255 = scmp.ne.s32.totalorder %s244, %s247
    %p256 = scmp.eq.s32.totalorder %s29, 1
    %p257 = por %p255, %p256
    %p258 = scmp.ne.s32.totalorder %s247, %s248
    %p259 = scmp.eq.s32.totalorder %s29, 0
    %p260 = por %p258, %p259
    %p261 = scmp.ne.s32.totalorder %s247, %s248
    %p262 = scmp.eq.s32.totalorder %s30, 1
    %p263 = por %p261, %p262
    %p265 = scmp.ne.s32.totalorder %s248, %s264
    %p266 = scmp.eq.s32.totalorder %s30, 0
    %p267 = por %p265, %p266
    %s269 = sadd.s32 %s268, 1
    %p272 = scmp.eq.s32.totalorder %s24, 1
    %p273 = scmp.ne.s32.totalorder %s268, %s270
    %p274 = scmp.eq.s32.totalorder %s24, 0
    %p275 = por %p273, %p274
    %p276 = scmp.ne.s32.totalorder %s268, %s270
    %p277 = scmp.eq.s32.totalorder %s29, 1
    %p278 = por %p276, %p277
    %p279 = scmp.ne.s32.totalorder %s270, %s271
    %p280 = scmp.eq.s32.totalorder %s29, 0
    %p281 = por %p279, %p280
    %p282 = scmp.ne.s32.totalorder %s270, %s271
    %p283 = scmp.eq.s32.totalorder %s30, 1
    %p284 = por %p282, %p283
    %p286 = scmp.ne.s32.totalorder %s271, %s285
    %p287 = scmp.eq.s32.totalorder %s30, 0
    %p288 = por %p286, %p287
    %s290 = sadd.s32 %s289, 1
    %p293 = scmp.eq.s32.totalorder %s24, 1
    %p294 = scmp.ne.s32.totalorder %s289, %s291
    %p295 = scmp.eq.s32.totalorder %s24, 0
    %p296 = por %p294, %p295
    %p297 = scmp.ne.s32.totalorder %s289, %s291
    %p298 = scmp.eq.s32.totalorder %s29, 1
    %p299 = por %p297, %p298
    %p300 = scmp.ne.s32.totalorder %s291, %s292
    %p301 = scmp.eq.s32.totalorder %s29, 0
    %p302 = por %p300, %p301
    %p303 = scmp.ne.s32.totalorder %s291, %s292
    %p304 = scmp.eq.s32.totalorder %s30, 1
    %p305 = por %p303, %p304
    %p307 = scmp.ne.s32.totalorder %s292, %s306
    %p308 = scmp.eq.s32.totalorder %s30, 0
    %p309 = por %p307, %p308
    %s311 = sadd.s32 %s310, 1
    %p314 = scmp.eq.s32.totalorder %s24, 1
    %p315 = scmp.ne.s32.totalorder %s310, %s312
    %p316 = scmp.eq.s32.totalorder %s24, 0
    %p317 = por %p315, %p316
    %p318 = scmp.ne.s32.totalorder %s310, %s312
    %p319 = scmp.eq.s32.totalorder %s29, 1
    %p320 = por %p318, %p319
    %p321 = scmp.ne.s32.totalorder %s312, %s313
    %p322 = scmp.eq.s32.totalorder %s29, 0
    %p323 = por %p321, %p322
    %p324 = scmp.ne.s32.totalorder %s312, %s313
    %p325 = scmp.eq.s32.totalorder %s30, 1
    %p326 = por %p324, %p325
    %p328 = scmp.ne.s32.totalorder %s313, %s327
    %p329 = scmp.eq.s32.totalorder %s30, 0
    %p330 = por %p328, %p329
    %s332 = sadd.s32 %s331, 1
    %p335 = scmp.eq.s32.totalorder %s24, 1
    %p336 = scmp.ne.s32.totalorder %s331, %s333
    %p337 = scmp.eq.s32.totalorder %s24, 0
    %p338 = por %p336, %p337
    %p339 = scmp.ne.s32.totalorder %s331, %s333
    %p340 = scmp.eq.s32.totalorder %s29, 1
    %p341 = por %p339, %p340
    %p342 = scmp.ne.s32.totalorder %s333, %s334
    %p343 = scmp.eq.s32.totalorder %s29, 0
    %p344 = por %p342, %p343
    %p345 = scmp.ne.s32.totalorder %s333, %s334
    %p346 = scmp.eq.s32.totalorder %s30, 1
    %p347 = por %p345, %p346
    %p349 = scmp.ne.s32.totalorder %s334, %s348
    %p350 = scmp.eq.s32.totalorder %s30, 0
    %p351 = por %p349, %p350
    %s353 = sadd.s32 %s352, 1
    %p356 = scmp.eq.s32.totalorder %s24, 1
    %p357 = scmp.ne.s32.totalorder %s352, %s354
    %p358 = scmp.eq.s32.totalorder %s24, 0
    %p359 = por %p357, %p358
    %p360 = scmp.ne.s32.totalorder %s352, %s354
    %p361 = scmp.eq.s32.totalorder %s29, 1
    %p362 = por %p360, %p361
    %p363 = scmp.ne.s32.totalorder %s354, %s355
    %p364 = scmp.eq.s32.totalorder %s29, 0
    %p365 = por %p363, %p364
    %p366 = scmp.ne.s32.totalorder %s354, %s355
    %p367 = scmp.eq.s32.totalorder %s30, 1
    %p368 = por %p366, %p367
    %p370 = scmp.ne.s32.totalorder %s355, %s369
    %p371 = scmp.eq.s32.totalorder %s30, 0
    %p372 = por %p370, %p371
    %s374 = sadd.s32 %s373, 1
    %p377 = scmp.eq.s32.totalorder %s24, 1
    %p378 = scmp.ne.s32.totalorder %s373, %s375
    %p379 = scmp.eq.s32.totalorder %s24, 0
    %p380 = por %p378, %p379
    %p381 = scmp.ne.s32.totalorder %s373, %s375
    %p382 = scmp.eq.s32.totalorder %s29, 1
    %p383 = por %p381, %p382
    %p384 = scmp.ne.s32.totalorder %s375, %s376
    %p385 = scmp.eq.s32.totalorder %s29, 0
    %p386 = por %p384, %p385
    %p387 = scmp.ne.s32.totalorder %s375, %s376
    %p388 = scmp.eq.s32.totalorder %s30, 1
    %p389 = por %p387, %p388
    %p391 = scmp.ne.s32.totalorder %s376, %s390
    %p392 = scmp.eq.s32.totalorder %s30, 0
    %p393 = por %p391, %p392
    %s395 = sadd.s32 %s394, 1
    %p398 = scmp.eq.s32.totalorder %s24, 1
    %p399 = scmp.ne.s32.totalorder %s394, %s396
    %p400 = scmp.eq.s32.totalorder %s24, 0
    %p401 = por %p399, %p400
    %p402 = scmp.ne.s32.totalorder %s394, %s396
    %p403 = scmp.eq.s32.totalorder %s29, 1
    %p404 = por %p402, %p403
    %p405 = scmp.ne.s32.totalorder %s396, %s397
    %p406 = scmp.eq.s32.totalorder %s29, 0
    %p407 = por %p405, %p406
    %p408 = scmp.ne.s32.totalorder %s396, %s397
    %p409 = scmp.eq.s32.totalorder %s30, 1
    %p410 = por %p408, %p409
    %p412 = scmp.ne.s32.totalorder %s397, %s411
    %p413 = scmp.eq.s32.totalorder %s30, 0
    %p414 = por %p412, %p413
    %s416 = sadd.s32 %s415, 1
    %p419 = scmp.eq.s32.totalorder %s24, 1
    %p420 = scmp.ne.s32.totalorder %s415, %s417
    %p421 = scmp.eq.s32.totalorder %s24, 0
    %p422 = por %p420, %p421
    %p423 = scmp.ne.s32.totalorder %s415, %s417
    %p424 = scmp.eq.s32.totalorder %s29, 1
    %p425 = por %p423, %p424
    %p426 = scmp.ne.s32.totalorder %s417, %s418
    %p427 = scmp.eq.s32.totalorder %s29, 0
    %p428 = por %p426, %p427
    %p429 = scmp.ne.s32.totalorder %s417, %s418
    %p430 = scmp.eq.s32.totalorder %s30, 1
    %p431 = por %p429, %p430
    %p433 = scmp.ne.s32.totalorder %s418, %s432
    %p434 = scmp.eq.s32.totalorder %s30, 0
    %p435 = por %p433, %p434
    %s437 = sadd.s32 %s436, 1
    %p440 = scmp.eq.s32.totalorder %s24, 1
    %p441 = scmp.ne.s32.totalorder %s436, %s438
    %p442 = scmp.eq.s32.totalorder %s24, 0
    %p443 = por %p441, %p442
    %p444 = scmp.ne.s32.totalorder %s436, %s438
    %p445 = scmp.eq.s32.totalorder %s29, 1
    %p446 = por %p444, %p445
    %p447 = scmp.ne.s32.totalorder %s438, %s439
    %p448 = scmp.eq.s32.totalorder %s29, 0
    %p449 = por %p447, %p448
    %p450 = scmp.ne.s32.totalorder %s438, %s439
    %p451 = scmp.eq.s32.totalorder %s30, 1
    %p452 = por %p450, %p451
    %p454 = scmp.ne.s32.totalorder %s439, %s453
    %p455 = scmp.eq.s32.totalorder %s30, 0
    %p456 = por %p454, %p455
    %s458 = sadd.s32 %s457, 1
    %p461 = scmp.eq.s32.totalorder %s24, 1
    %p462 = scmp.ne.s32.totalorder %s457, %s459
    %p463 = scmp.eq.s32.totalorder %s24, 0
    %p464 = por %p462, %p463
    %p465 = scmp.ne.s32.totalorder %s457, %s459
    %p466 = scmp.eq.s32.totalorder %s29, 1
    %p467 = por %p465, %p466
    %p468 = scmp.ne.s32.totalorder %s459, %s460
    %p469 = scmp.eq.s32.totalorder %s29, 0
    %p470 = por %p468, %p469
    %p471 = scmp.ne.s32.totalorder %s459, %s460
    %p472 = scmp.eq.s32.totalorder %s30, 1
    %p473 = por %p471, %p472
    %p475 = scmp.ne.s32.totalorder %s460, %s474
    %p476 = scmp.eq.s32.totalorder %s30, 0
    %p477 = por %p475, %p476
    %s478 = ssub.s32 %s31, %s43
    %s479 = ssub.s32 %s32, %s39
    %s480 = sor.u32 %s478, %s479
    %p481 = scmp.eq.s32.totalorder %s480, 0
    %s483 = sadd.s32 %s482, 1
    %s484 = scalar_select %p481, %s482, %s483
    %p487 = pneg %p481
    %p488 = scmp.eq.s32.totalorder %s24, 1
    %p489 = por %p487, %p488
    %p490 = scmp.ne.s32.totalorder %s482, %s485
    %p491 = scmp.eq.s32.totalorder %s24, 0
    %p492 = por %p490, %p491
    %p493 = scmp.ne.s32.totalorder %s482, %s485
    %p494 = scmp.eq.s32.totalorder %s29, 1
    %p495 = por %p493, %p494
    %p496 = scmp.ne.s32.totalorder %s485, %s486
    %p497 = scmp.eq.s32.totalorder %s29, 0
    %p498 = por %p496, %p497
    %p499 = scmp.ne.s32.totalorder %s485, %s486
    %p500 = scmp.eq.s32.totalorder %s30, 1
    %p501 = por %p499, %p500
    %p503 = scmp.ne.s32.totalorder %s486, %s502
    %p504 = scmp.eq.s32.totalorder %s30, 0
    %p505 = por %p503, %p504
    %p506 = scmp.le.s32.totalorder 1, %s24
    %p507 = scmp.lt.s32.totalorder %s24, 3
    %p508 = pnand %p506, %p507
    %p509 = pneg %p508
    // Predicated region
    $region9: #{upsampler_forward.18} parent=5 // pred_check
      _
    $region10: #{upsampler_forward.18} parent=5 // pred_check_branch
      %511 = sbr.rel (%p508) target = $region12
    $region11: #{upsampler_forward.18} parent=5 // pred_region
      %s512 = ssub.s32 %s24, 1
      // Predicated region
      $region13: #{upsampler_forward.18} parent=11 // pred_check
        %p513 = pneg %p281
      $region14: #{upsampler_forward.18} parent=11 // pred_check_branch
        %515 = sbr.rel (%p513) target = $region16
      $region15: #{upsampler_forward.18} parent=11 // pred_region
        _
      $region16: #{upsampler_forward.18} parent=11 // pred_fallthru
        _
      // Predicated region
      $region17: #{upsampler_forward.18} parent=11 // pred_check
        %p516 = pneg %p302
      $region18: #{upsampler_forward.18} parent=11 // pred_check_branch
        %518 = sbr.rel (%p516) target = $region20
      $region19: #{upsampler_forward.18} parent=11 // pred_region
        _
      $region20: #{upsampler_forward.18} parent=11 // pred_fallthru
        _
      // Predicated region
      $region21: #{upsampler_forward.18} parent=11 // pred_check
        %p519 = pneg %p323
      $region22: #{upsampler_forward.18} parent=11 // pred_check_branch
        %521 = sbr.rel (%p519) target = $region24
      $region23: #{upsampler_forward.18} parent=11 // pred_region
        _
      $region24: #{upsampler_forward.18} parent=11 // pred_fallthru
        _
      // Predicated region
      $region25: #{upsampler_forward.18} parent=11 // pred_check
        %p522 = pneg %p344
      $region26: #{upsampler_forward.18} parent=11 // pred_check_branch
        %524 = sbr.rel (%p522) target = $region28
      $region27: #{upsampler_forward.18} parent=11 // pred_region
        _
      $region28: #{upsampler_forward.18} parent=11 // pred_fallthru
        _
      // Predicated region
      $region29: #{upsampler_forward.18} parent=11 // pred_check
        %p525 = pneg %p365
      $region30: #{upsampler_forward.18} parent=11 // pred_check_branch
        %527 = sbr.rel (%p525) target = $region32
      $region31: #{upsampler_forward.18} parent=11 // pred_region
        _
      $region32: #{upsampler_forward.18} parent=11 // pred_fallthru
        _
      // Predicated region
      $region33: #{upsampler_forward.18} parent=11 // pred_check
        %p528 = pneg %p386
      $region34: #{upsampler_forward.18} parent=11 // pred_check_branch
        %530 = sbr.rel (%p528) target = $region36
      $region35: #{upsampler_forward.18} parent=11 // pred_region
        _
      $region36: #{upsampler_forward.18} parent=11 // pred_fallthru
        _
      // Predicated region
      $region37: #{upsampler_forward.18} parent=11 // pred_check
        %p531 = pneg %p407
      $region38: #{upsampler_forward.18} parent=11 // pred_check_branch
        %533 = sbr.rel (%p531) target = $region40
      $region39: #{upsampler_forward.18} parent=11 // pred_region
        _
      $region40: #{upsampler_forward.18} parent=11 // pred_fallthru
        _
      // Predicated region
      $region41: #{upsampler_forward.18} parent=11 // pred_check
        %p534 = pneg %p428
      $region42: #{upsampler_forward.18} parent=11 // pred_check_branch
        %536 = sbr.rel (%p534) target = $region44
      $region43: #{upsampler_forward.18} parent=11 // pred_region
        _
      $region44: #{upsampler_forward.18} parent=11 // pred_fallthru
        _
      // Predicated region
      $region45: #{upsampler_forward.18} parent=11 // pred_check
        %p537 = pneg %p449
      $region46: #{upsampler_forward.18} parent=11 // pred_check_branch
        %539 = sbr.rel (%p537) target = $region48
      $region47: #{upsampler_forward.18} parent=11 // pred_region
        _
      $region48: #{upsampler_forward.18} parent=11 // pred_fallthru
        _
      // Predicated region
      $region49: #{upsampler_forward.18} parent=11 // pred_check
        %p540 = pneg %p470
      $region50: #{upsampler_forward.18} parent=11 // pred_check_branch
        %542 = sbr.rel (%p540) target = $region52
      $region51: #{upsampler_forward.18} parent=11 // pred_region
        _
      $region52: #{upsampler_forward.18} parent=11 // pred_fallthru
        _
    $region12: #{upsampler_forward.18} parent=5 // pred_fallthru
      _
    %p543 = scmp.lt.s32.totalorder %s24, 2
    // Predicated region
    $region53: #{upsampler_forward.18} parent=5 // pred_check
      %p544 = pneg %p543
    $region54: #{upsampler_forward.18} parent=5 // pred_check_branch
      %546 = sbr.rel (%p544) target = $region56
    $region55: #{upsampler_forward.18} parent=5 // pred_region
      // Predicated region
      $region57: #{upsampler_forward.18} parent=55 // pred_check
        %p547 = pneg %p58
      $region58: #{upsampler_forward.18} parent=55 // pred_check_branch
        %549 = sbr.rel (%p547) target = $region60
      $region59: #{upsampler_forward.18} parent=55 // pred_region
        %s550 = smul.u32 2, %s32
        %p551 = scmp.lt.s32.totalorder %s31, 1
        %s552 = scalar_select %p551, %s31, 1
        %p553 = scmp.lt.s32.totalorder %s550, 1
        %s554 = scalar_select %p553, %s550, 1
        %s555 = smul.addr %s552, 2
        %s556 = sadd.s32 %s554, %s555
        %s557 = smul.addr %s556, 4
        %s558 = scalar_lea.vmem %s0, %s557
        %s559 = smul.u32 2, %s32
      $region60: #{upsampler_forward.18} parent=55 // pred_fallthru
        _
      // Predicated region
      $region61: #{upsampler_forward.18} parent=55 // pred_check
        %p560 = pneg %p86
      $region62: #{upsampler_forward.18} parent=55 // pred_check_branch
        %562 = sbr.rel (%p560) target = $region64
      $region63: #{upsampler_forward.18} parent=55 // pred_region
        %s563 = smul.u32 2, %s32
        %p564 = scmp.lt.s32.totalorder %s31, 1
        %s565 = scalar_select %p564, %s31, 1
        %p566 = scmp.lt.s32.totalorder %s563, 1
        %s567 = scalar_select %p566, %s563, 1
        %s568 = smul.addr %s565, 8
        %s569 = sadd.s32 %s567, %s568
        %s570 = smul.addr %s569, 4
        %s571 = scalar_lea.vmem %s1, %s570
        %s572 = smul.u32 2, %s32
      $region64: #{upsampler_forward.18} parent=55 // pred_fallthru
        _
      // Predicated region
      $region65: #{upsampler_forward.18} parent=55 // pred_check
        %p573 = pneg %p114
      $region66: #{upsampler_forward.18} parent=55 // pred_check_branch
        %575 = sbr.rel (%p573) target = $region68
      $region67: #{upsampler_forward.18} parent=55 // pred_region
        %s576 = smul.u32 2, %s32
        %p577 = scmp.lt.s32.totalorder %s31, 1
        %s578 = scalar_select %p577, %s31, 1
        %p579 = scmp.lt.s32.totalorder %s576, 1
        %s580 = scalar_select %p579, %s576, 1
        %s581 = smul.addr %s578, 8
        %s582 = sadd.s32 %s580, %s581
        %s583 = smul.addr %s582, 4
        %s584 = scalar_lea.vmem %s2, %s583
        %s585 = smul.u32 2, %s32
      $region68: #{upsampler_forward.18} parent=55 // pred_fallthru
        _
      // Predicated region
      $region69: #{upsampler_forward.18} parent=55 // pred_check
        %p586 = pneg %p142
      $region70: #{upsampler_forward.18} parent=55 // pred_check_branch
        %588 = sbr.rel (%p586) target = $region72
      $region71: #{upsampler_forward.18} parent=55 // pred_region
        %s589 = smul.u32 2, %s32
        %p590 = scmp.lt.s32.totalorder %s31, 1
        %s591 = scalar_select %p590, %s31, 1
        %p592 = scmp.lt.s32.totalorder %s589, 1
        %s593 = scalar_select %p592, %s589, 1
        %s594 = smul.addr %s591, 8
        %s595 = sadd.s32 %s593, %s594
        %s596 = smul.addr %s595, 4
        %s597 = scalar_lea.vmem %s3, %s596
        %s598 = smul.u32 2, %s32
      $region72: #{upsampler_forward.18} parent=55 // pred_fallthru
        _
      // Predicated region
      $region73: #{upsampler_forward.18} parent=55 // pred_check
        %p599 = pneg %p170
      $region74: #{upsampler_forward.18} parent=55 // pred_check_branch
        %601 = sbr.rel (%p599) target = $region76
      $region75: #{upsampler_forward.18} parent=55 // pred_region
        %s602 = smul.u32 2, %s32
        %p603 = scmp.lt.s32.totalorder %s31, 1
        %s604 = scalar_select %p603, %s31, 1
        %p605 = scmp.lt.s32.totalorder %s602, 1
        %s606 = scalar_select %p605, %s602, 1
        %s607 = smul.addr %s604, 8
        %s608 = sadd.s32 %s606, %s607
        %s609 = smul.addr %s608, 8
        %s610 = scalar_lea.vmem %s4, %s609
        %s611 = smul.u32 2, %s32
      $region76: #{upsampler_forward.18} parent=55 // pred_fallthru
        _
      // Predicated region
      $region77: #{upsampler_forward.18} parent=55 // pred_check
        %p612 = pneg %p198
      $region78: #{upsampler_forward.18} parent=55 // pred_check_branch
        %614 = sbr.rel (%p612) target = $region80
      $region79: #{upsampler_forward.18} parent=55 // pred_region
        %s615 = smul.u32 2, %s32
        %p616 = scmp.lt.s32.totalorder %s31, 1
        %s617 = scalar_select %p616, %s31, 1
        %p618 = scmp.lt.s32.totalorder %s615, 1
        %s619 = scalar_select %p618, %s615, 1
        %s620 = smul.addr %s617, 2
        %s621 = sadd.s32 %s619, %s620
        %s622 = smul.addr %s621, 8
        %s623 = scalar_lea.vmem %s5, %s622
        %s624 = smul.u32 2, %s32
      $region80: #{upsampler_forward.18} parent=55 // pred_fallthru
        _
      // Predicated region
      $region81: #{upsampler_forward.18} parent=55 // pred_check
        %p625 = pneg %p226
      $region82: #{upsampler_forward.18} parent=55 // pred_check_branch
        %627 = sbr.rel (%p625) target = $region84
      $region83: #{upsampler_forward.18} parent=55 // pred_region
        %s628 = smul.u32 2, %s32
        %p629 = scmp.lt.s32.totalorder %s31, 1
        %s630 = scalar_select %p629, %s31, 1
        %p631 = scmp.lt.s32.totalorder %s628, 1
        %s632 = scalar_select %p631, %s628, 1
        %s633 = smul.addr %s630, 2
        %s634 = sadd.s32 %s632, %s633
        %s635 = smul.addr %s634, 4
        %s636 = scalar_lea.vmem %s6, %s635
        %s637 = smul.u32 2, %s32
      $region84: #{upsampler_forward.18} parent=55 // pred_fallthru
        _
      // Predicated region
      $region85: #{upsampler_forward.18} parent=55 // pred_check
        %p638 = pneg %p254
      $region86: #{upsampler_forward.18} parent=55 // pred_check_branch
        %640 = sbr.rel (%p638) target = $region88
      $region87: #{upsampler_forward.18} parent=55 // pred_region
        %s641 = smul.u32 2, %s32
        %p642 = scmp.lt.s32.totalorder %s31, 1
        %s643 = scalar_select %p642, %s31, 1
        %p644 = scmp.lt.s32.totalorder %s641, 1
        %s645 = scalar_select %p644, %s641, 1
        %s646 = smul.addr %s643, 2
        %s647 = sadd.s32 %s645, %s646
        %s648 = smul.addr %s647, 4
        %s649 = scalar_lea.vmem %s7, %s648
        %s650 = smul.u32 2, %s32
      $region88: #{upsampler_forward.18} parent=55 // pred_fallthru
        _
    $region56: #{upsampler_forward.18} parent=5 // pred_fallthru
      _
    %p651 = scmp.le.s32.totalorder 1, %s24
    %p652 = scmp.lt.s32.totalorder %s24, 3
    %p653 = pnand %p651, %p652
    %p654 = pneg %p653
    // Predicated region
    $region89: #{upsampler_forward.18} parent=5 // pred_check
      _
    $region90: #{upsampler_forward.18} parent=5 // pred_check_branch
      %656 = sbr.rel (%p653) target = $region92
    $region91: #{upsampler_forward.18} parent=5 // pred_region
      %s657 = ssub.s32 %s24, 1
      %s658 = smul.u32 2, %s34
      %p659 = scmp.lt.s32.totalorder %s33, 1
      %s660 = scalar_select %p659, %s33, 1
      %p661 = scmp.lt.s32.totalorder %s658, 1
      %s662 = scalar_select %p661, %s658, 1
      %s663 = smul.addr %s660, 2
      %s664 = sadd.s32 %s662, %s663
      %s665 = smul.addr %s664, 4
      %s666 = scalar_lea.vmem %s0, %s665
      %p667 = pneg %p64
      %p668 = pneg %p61
      %s669 = smul.u32 2, %s34
      %p670 = scmp.lt.s32.totalorder %s33, 1
      %s671 = scalar_select %p670, %s33, 1
      %p672 = scmp.lt.s32.totalorder %s669, 1
      %s673 = scalar_select %p672, %s669, 1
      %s674 = smul.addr %s671, 8
      %s675 = sadd.s32 %s673, %s674
      %s676 = smul.addr %s675, 4
      %s677 = scalar_lea.vmem %s1, %s676
      %p678 = pneg %p92
      %p679 = pneg %p89
      %s680 = smul.u32 2, %s34
      %p681 = scmp.lt.s32.totalorder %s33, 1
      %s682 = scalar_select %p681, %s33, 1
      %p683 = scmp.lt.s32.totalorder %s680, 1
      %s684 = scalar_select %p683, %s680, 1
      %s685 = smul.addr %s682, 8
      %s686 = sadd.s32 %s684, %s685
      %s687 = smul.addr %s686, 4
      %s688 = scalar_lea.vmem %s2, %s687
      %p689 = pneg %p120
      %p690 = pneg %p117
      %s691 = smul.u32 2, %s34
      %p692 = scmp.lt.s32.totalorder %s33, 1
      %s693 = scalar_select %p692, %s33, 1
      %p694 = scmp.lt.s32.totalorder %s691, 1
      %s695 = scalar_select %p694, %s691, 1
      %s696 = smul.addr %s693, 8
      %s697 = sadd.s32 %s695, %s696
      %s698 = smul.addr %s697, 4
      %s699 = scalar_lea.vmem %s3, %s698
      %p700 = pneg %p148
      %p701 = pneg %p145
      %s702 = smul.u32 2, %s34
      %p703 = scmp.lt.s32.totalorder %s33, 1
      %s704 = scalar_select %p703, %s33, 1
      %p705 = scmp.lt.s32.totalorder %s702, 1
      %s706 = scalar_select %p705, %s702, 1
      %s707 = smul.addr %s704, 8
      %s708 = sadd.s32 %s706, %s707
      %s709 = smul.addr %s708, 8
      %s710 = scalar_lea.vmem %s4, %s709
      %p711 = pneg %p176
      %p712 = pneg %p173
      %s713 = smul.u32 2, %s34
      %p714 = scmp.lt.s32.totalorder %s33, 1
      %s715 = scalar_select %p714, %s33, 1
      %p716 = scmp.lt.s32.totalorder %s713, 1
      %s717 = scalar_select %p716, %s713, 1
      %s718 = smul.addr %s715, 2
      %s719 = sadd.s32 %s717, %s718
      %s720 = smul.addr %s719, 8
      %s721 = scalar_lea.vmem %s5, %s720
      %p722 = pneg %p204
      %p723 = pneg %p201
      %s724 = smul.u32 2, %s34
      %p725 = scmp.lt.s32.totalorder %s33, 1
      %s726 = scalar_select %p725, %s33, 1
      %p727 = scmp.lt.s32.totalorder %s724, 1
      %s728 = scalar_select %p727, %s724, 1
      %s729 = smul.addr %s726, 2
      %s730 = sadd.s32 %s728, %s729
      %s731 = smul.addr %s730, 4
      %s732 = scalar_lea.vmem %s6, %s731
      %p733 = pneg %p232
      %p734 = pneg %p229
      %s735 = smul.u32 2, %s34
      %p736 = scmp.lt.s32.totalorder %s33, 1
      %s737 = scalar_select %p736, %s33, 1
      %p738 = scmp.lt.s32.totalorder %s735, 1
      %s739 = scalar_select %p738, %s735, 1
      %s740 = smul.addr %s737, 2
      %s741 = sadd.s32 %s739, %s740
      %s742 = smul.addr %s741, 4
      %s743 = scalar_lea.vmem %s7, %s742
      %p744 = pneg %p260
      %p745 = pneg %p257
      %p746 = pneg %p281
      %p747 = pneg %p278
      %p748 = pneg %p302
      %p749 = pneg %p299
      %p750 = pneg %p323
      %p751 = pneg %p320
      %p752 = pneg %p344
      %p753 = pneg %p341
      %p754 = pneg %p365
      %p755 = pneg %p362
      %p756 = pneg %p386
      %p757 = pneg %p383
      %p758 = pneg %p407
      %p759 = pneg %p404
      %p760 = pneg %p428
      %p761 = pneg %p425
      %p762 = pneg %p449
      %p763 = pneg %p446
      %p764 = pneg %p470
      %p765 = pneg %p467
      %p766 = pneg %p498
      %p767 = pneg %p495
      %s768 = smul.u32 2, %s34
      %p769 = scmp.lt.s32.totalorder %s33, 1
      %s770 = scalar_select %p769, %s33, 1
      %p771 = scmp.lt.s32.totalorder %s768, 1
      %s772 = scalar_select %p771, %s768, 1
      %s773 = smul.addr %s770, 2
      %s774 = sadd.s32 %s772, %s773
      %s775 = smul.addr %s774, 4
      %s776 = scalar_lea.vmem %s18, %s775
      %s777 = smul.u32 2, %s34
      %p778 = scmp.lt.s32.totalorder %s33, 1
      %s779 = scalar_select %p778, %s33, 1
      %p780 = scmp.lt.s32.totalorder %s777, 1
      %s781 = scalar_select %p780, %s777, 1
      %s782 = smul.addr %s779, 2
      %s783 = sadd.s32 %s781, %s782
      %s784 = smul.addr %s783, 4
      %s785 = scalar_lea.vmem %s0, %s784
      %s786 = smul.u32 2, %s34
      %s787 = smul.u32 2, %s34
      %p788 = scmp.lt.s32.totalorder %s33, 1
      %s789 = scalar_select %p788, %s33, 1
      %p790 = scmp.lt.s32.totalorder %s787, 1
      %s791 = scalar_select %p790, %s787, 1
      %s792 = smul.addr %s789, 8
      %s793 = sadd.s32 %s791, %s792
      %s794 = smul.addr %s793, 4
      %s795 = scalar_lea.vmem %s1, %s794
      %s796 = smul.u32 2, %s34
      %s797 = smul.u32 2, %s34
      %p798 = scmp.lt.s32.totalorder %s33, 1
      %s799 = scalar_select %p798, %s33, 1
      %p800 = scmp.lt.s32.totalorder %s797, 1
      %s801 = scalar_select %p800, %s797, 1
      %s802 = smul.addr %s799, 8
      %s803 = sadd.s32 %s801, %s802
      %s804 = smul.addr %s803, 4
      %s805 = scalar_lea.vmem %s2, %s804
      %s806 = smul.u32 2, %s34
      %s807 = smul.u32 2, %s34
      %p808 = scmp.lt.s32.totalorder %s33, 1
      %s809 = scalar_select %p808, %s33, 1
      %p810 = scmp.lt.s32.totalorder %s807, 1
      %s811 = scalar_select %p810, %s807, 1
      %s812 = smul.addr %s809, 8
      %s813 = sadd.s32 %s811, %s812
      %s814 = smul.addr %s813, 4
      %s815 = scalar_lea.vmem %s3, %s814
      %s816 = smul.u32 2, %s34
      %s817 = smul.u32 2, %s34
      %p818 = scmp.lt.s32.totalorder %s33, 1
      %s819 = scalar_select %p818, %s33, 1
      %p820 = scmp.lt.s32.totalorder %s817, 1
      %s821 = scalar_select %p820, %s817, 1
      %s822 = smul.addr %s819, 8
      %s823 = sadd.s32 %s821, %s822
      %s824 = smul.addr %s823, 8
      %s825 = scalar_lea.vmem %s4, %s824
      %s826 = smul.u32 2, %s34
      %s827 = smul.u32 2, %s34
      %p828 = scmp.lt.s32.totalorder %s33, 1
      %s829 = scalar_select %p828, %s33, 1
      %p830 = scmp.lt.s32.totalorder %s827, 1
      %s831 = scalar_select %p830, %s827, 1
      %s832 = smul.addr %s829, 2
      %s833 = sadd.s32 %s831, %s832
      %s834 = smul.addr %s833, 8
      %s835 = scalar_lea.vmem %s5, %s834
      %s836 = smul.u32 2, %s34
      %s837 = smul.u32 2, %s34
      %p838 = scmp.lt.s32.totalorder %s33, 1
      %s839 = scalar_select %p838, %s33, 1
      %p840 = scmp.lt.s32.totalorder %s837, 1
      %s841 = scalar_select %p840, %s837, 1
      %s842 = smul.addr %s839, 2
      %s843 = sadd.s32 %s841, %s842
      %s844 = smul.addr %s843, 4
      %s845 = scalar_lea.vmem %s6, %s844
      %s846 = smul.u32 2, %s34
      %s847 = smul.u32 2, %s34
      %p848 = scmp.lt.s32.totalorder %s33, 1
      %s849 = scalar_select %p848, %s33, 1
      %p850 = scmp.lt.s32.totalorder %s847, 1
      %s851 = scalar_select %p850, %s847, 1
      %s852 = smul.addr %s849, 2
      %s853 = sadd.s32 %s851, %s852
      %s854 = smul.addr %s853, 4
      %s855 = scalar_lea.vmem %s7, %s854
      %s856 = smul.u32 2, %s34
      %s857 = smul.u32 2, %s34
      %p858 = scmp.lt.s32.totalorder %s33, 1
      %s859 = scalar_select %p858, %s33, 1
      %p860 = scmp.lt.s32.totalorder %s857, 1
      %s861 = scalar_select %p860, %s857, 1
      %s862 = smul.addr %s859, 2
      %s863 = sadd.s32 %s861, %s862
      %s864 = smul.addr %s863, 4
      %s865 = scalar_lea.vmem %s18, %s864
      %s866 = smul.u32 2, %s34
      %v868 = vld [vmem:[%s785] sm:$0xf]
      %v869 = vld [vmem:[%s785 + $0x4] sm:$0xf]
      %v870 = vunpack.c.l.bf16 %v868
      %v871 = vunpack.c.l.bf16 %v869
      %v872 = vld [vmem:[%s835] sm:$0xff]
      %v873 = vld [vmem:[%s835 + $0x8] sm:$0xff]
      %v874 = vld [vmem:[%s845] sm:$0xf]
      %v875 = vld [vmem:[%s845 + $0x4] sm:$0xf]
      %v876 = vunpack.c.l.bf16 %v874
      %v877 = vunpack.c.l.bf16 %v875
      %v878 = vld [vmem:[%s855] sm:$0xf]
      %v879 = vld [vmem:[%s855 + $0x4] sm:$0xf]
      %v880 = vunpack.c.l.bf16 %v878
      %v881 = vunpack.c.l.bf16 %v879
      %v882 = vld [vmem:[%s795] sm:$0xf]
      %v883 = vld [vmem:[%s795 + $0x4] sm:$0xf]
      %v884 = vld [vmem:[%s795 + $0x8] sm:$0xf]
      %v885 = vld [vmem:[%s795 + $0xc] sm:$0xf]
      %v886 = vld [vmem:[%s795 + $0x10] sm:$0xf]
      %v887 = vld [vmem:[%s795 + $0x14] sm:$0xf]
      %v888 = vld [vmem:[%s795 + $0x18] sm:$0xf]
      %v889 = vld [vmem:[%s795 + $0x1c] sm:$0xf]
      %v890 = vunpack.c.l.bf16 %v882
      %v891 = vunpack.c.l.bf16 %v883
      %v892 = vunpack.c.l.bf16 %v884
      %v893 = vunpack.c.l.bf16 %v885
      %v894 = vunpack.c.l.bf16 %v886
      %v895 = vunpack.c.l.bf16 %v887
      %v896 = vunpack.c.l.bf16 %v888
      %v897 = vunpack.c.l.bf16 %v889
      %v898 = vld [vmem:[%s805] sm:$0xf]
      %v899 = vld [vmem:[%s805 + $0x4] sm:$0xf]
      %v900 = vld [vmem:[%s805 + $0x8] sm:$0xf]
      %v901 = vld [vmem:[%s805 + $0xc] sm:$0xf]
      %v902 = vld [vmem:[%s805 + $0x10] sm:$0xf]
      %v903 = vld [vmem:[%s805 + $0x14] sm:$0xf]
      %v904 = vld [vmem:[%s805 + $0x18] sm:$0xf]
      %v905 = vld [vmem:[%s805 + $0x1c] sm:$0xf]
      %v906 = vunpack.c.l.bf16 %v898
      %v907 = vunpack.c.l.bf16 %v899
      %v908 = vunpack.c.l.bf16 %v900
      %v909 = vunpack.c.l.bf16 %v901
      %v910 = vunpack.c.l.bf16 %v902
      %v911 = vunpack.c.l.bf16 %v903
      %v912 = vunpack.c.l.bf16 %v904
      %v913 = vunpack.c.l.bf16 %v905
      %v914 = vld [vmem:[%s815] sm:$0xf]
      %v915 = vld [vmem:[%s815 + $0x4] sm:$0xf]
      %v916 = vld [vmem:[%s815 + $0x8] sm:$0xf]
      %v917 = vld [vmem:[%s815 + $0xc] sm:$0xf]
      %v918 = vld [vmem:[%s815 + $0x10] sm:$0xf]
      %v919 = vld [vmem:[%s815 + $0x14] sm:$0xf]
      %v920 = vld [vmem:[%s815 + $0x18] sm:$0xf]
      %v921 = vld [vmem:[%s815 + $0x1c] sm:$0xf]
      %v922 = vunpack.c.l.bf16 %v914
      %v923 = vunpack.c.l.bf16 %v915
      %v924 = vunpack.c.l.bf16 %v916
      %v925 = vunpack.c.l.bf16 %v917
      %v926 = vunpack.c.l.bf16 %v918
      %v927 = vunpack.c.l.bf16 %v919
      %v928 = vunpack.c.l.bf16 %v920
      %v929 = vunpack.c.l.bf16 %v921
      %v930 = vld [vmem:[%s825] sm:$0xff]
      %v931 = vld [vmem:[%s825 + $0x8] sm:$0xff]
      %v932 = vld [vmem:[%s825 + $0x10] sm:$0xff]
      %v933 = vld [vmem:[%s825 + $0x18] sm:$0xff]
      %v934 = vld [vmem:[%s825 + $0x20] sm:$0xff]
      %v935 = vld [vmem:[%s825 + $0x28] sm:$0xff]
      %v936 = vld [vmem:[%s825 + $0x30] sm:$0xff]
      %v937 = vld [vmem:[%s825 + $0x38] sm:$0xff]
      %v938 = vsub.f32 %v872, %v930
      %v939 = vsub.f32 %v873, %v931
      %v940 = vsub.f32 %v872, %v932
      %v941 = vsub.f32 %v873, %v933
      %v942 = vsub.f32 %v872, %v934
      %v943 = vsub.f32 %v873, %v935
      %v944 = vsub.f32 %v872, %v936
      %v945 = vsub.f32 %v873, %v937
      %v946 = vsub.f32 %v876, %v922
      %v947 = vsub.f32 %v877, %v923
      %v948 = vsub.f32 %v876, %v924
      %v949 = vsub.f32 %v877, %v925
      %v950 = vsub.f32 %v876, %v926
      %v951 = vsub.f32 %v877, %v927
      %v952 = vsub.f32 %v876, %v928
      %v953 = vsub.f32 %v877, %v929
      %v954 = vld [vmem:[%s8] sm:$0x3]
      %v955 = vpack.c.bf16 %v939, %v938
      %v956 = vpack.c.bf16 %v941, %v940
      %v957 = vpack.c.bf16 %v943, %v942
      %v958 = vpack.c.bf16 %v945, %v944
      %v959 = vld [vmem:[%s9] sm:$0x1]
      %v961 = vlaneseq
      %v962 = vshrl.u32 %v961, 7
      %v963 = vsub.s32 0, %v962
      %v964 = vrot.slane %v959, %v963
      %vm966 = vcmask 23552
      %v968 = vsel %vm966, %v955, 0
      %v971 = vsel %vm966, %v956, 0
      %v974 = vsel %vm966, %v957, 0
      %v977 = vsel %vm966, %v958, 0
      %vm979 = vcmask 1040384
      %vm980 = vcmask 1041408
      %v981 = vsel %vm979, 4294967295, 65535
      %v982 = vsel %vm980, %v981, 0
      %v984 = vand.u32 %v954, %v982
      %986 = vmatprep.subr.bf16.mxu0 0
      %987 = vmatpush1.bf16.msra.mxu0 0
      %988 = vmatprep.subr.bf16.mxu0 0
      %989 = vmatpush1.bf16.msra.mxu0 0
      %990 = vmatprep.subr.bf16.mxu0 0
      %991 = vmatpush1.bf16.msra.mxu0 0
      %992 = vmatprep.subr.bf16.mxu0 0
      %993 = vmatpush1.bf16.msra.mxu0 0
      %994 = vmatprep.subr.bf16.mxu0 0
      %995 = vmatpush1.bf16.msra.mxu0 0
      %996 = vmatprep.subr.bf16.mxu0 0
      %997 = vmatpush1.bf16.msra.mxu0 0
      %998 = vmatprep.subr.bf16.mxu0 0
      %999 = vmatpush1.bf16.msra.mxu0 0
      %1000 = vmatprep.subr.bf16.mxu0 0
      %1001 = vmatpush1.bf16.msra.mxu0 %v984
      %1002 = vmatprep.subr.bf16.mxu0 0
      %1003 = vmatpush2.bf16.msra.mxu0 0
      %1004 = vmatprep.subr.bf16.mxu0 0
      %1005 = vmatpush2.bf16.msra.mxu0 0
      %1006 = vmatprep.subr.bf16.mxu0 0
      %1007 = vmatpush2.bf16.msra.mxu0 0
      %1008 = vmatprep.subr.bf16.mxu0 0
      %1009 = vmatpush2.bf16.msra.mxu0 0
      %1010 = vmatprep.subr.bf16.mxu0 0
      %1011 = vmatpush2.bf16.msra.mxu0 0
      %1012 = vmatprep.subr.bf16.mxu0 0
      %1013 = vmatpush2.bf16.msra.mxu0 0
      %1014 = vmatprep.subr.bf16.mxu0 0
      %1015 = vmatpush2.bf16.msra.mxu0 0
      %1016 = vmatprep.subr.bf16.mxu0 0
      %1017 = vmatpush2.bf16.msra.mxu0 0
      %1018 = vmatprep.mubr.bf16.mxu0 0
      %1019 = vmatmul.mubr.bf16.gmra.mxu0 %v968
      %v1020 = vpop.f32.mrf.mxu0
      %v1021 = vadd.f32 %v964, %v1020
      %v1022 = vpop.f32.mrf.mxu0
      %v1023 = vpop.f32.mrf.mxu0
      %v1024 = vadd.f32 %v964, %v1023
      %v1025 = vpop.f32.mrf.mxu0
      %1026 = vmatprep.mubr.bf16.mxu0 0
      %1027 = vmatmul.mubr.bf16.gmra.mxu0 %v971
      %v1028 = vpop.f32.mrf.mxu0
      %v1029 = vadd.f32 %v964, %v1028
      %v1030 = vpop.f32.mrf.mxu0
      %v1031 = vpop.f32.mrf.mxu0
      %v1032 = vadd.f32 %v964, %v1031
      %v1033 = vpop.f32.mrf.mxu0
      %1034 = vmatprep.mubr.bf16.mxu0 0
      %1035 = vmatmul.mubr.bf16.gmra.mxu0 %v974
      %v1036 = vpop.f32.mrf.mxu0
      %v1037 = vadd.f32 %v964, %v1036
      %v1038 = vpop.f32.mrf.mxu0
      %v1039 = vpop.f32.mrf.mxu0
      %v1040 = vadd.f32 %v964, %v1039
      %v1041 = vpop.f32.mrf.mxu0
      %1042 = vmatprep.mubr.bf16.mxu0 0
      %1043 = vmatmul.mubr.bf16.gmra.mxu0 %v977
      %v1044 = vpop.f32.mrf.mxu0
      %v1045 = vadd.f32 %v964, %v1044
      %v1046 = vpop.f32.mrf.mxu0
      %v1047 = vpop.f32.mrf.mxu0
      %v1048 = vadd.f32 %v964, %v1047
      %v1049 = vpop.f32.mrf.mxu0
      %1050 = vdwg.mxu0
      %v1051 = vmax.f32 %v1021, 0.0
      %v1052 = vmax.f32 %v1024, 0.0
      %v1053 = vmax.f32 %v1029, 0.0
      %v1054 = vmax.f32 %v1032, 0.0
      %v1055 = vmax.f32 %v1037, 0.0
      %v1056 = vmax.f32 %v1040, 0.0
      %v1057 = vmax.f32 %v1045, 0.0
      %v1058 = vmax.f32 %v1048, 0.0
      %v1059 = vld [vmem:[%s10] sm:$0xf]
      %v1060 = vld [vmem:[%s10 + $0x4] sm:$0xf]
      %v1061 = vld [vmem:[%s10 + $0x8] sm:$0xf]
      %v1062 = vld [vmem:[%s10 + $0xc] sm:$0xf]
      %v1063 = vpack.c.bf16 %v1052, %v1051
      %v1064 = vpack.c.bf16 %v1054, %v1053
      %v1065 = vpack.c.bf16 %v1056, %v1055
      %v1066 = vpack.c.bf16 %v1058, %v1057
      %v1067 = vld [vmem:[%s11] sm:$0x1]
      %v1069 = vlaneseq
      %v1070 = vshrl.u32 %v1069, 7
      %v1071 = vsub.s32 0, %v1070
      %v1072 = vrot.slane %v1067, %v1071
      %v1078 = vunpack.c.l.b16 %v1059
      %v1079 = vunpack.c.l.b16 %v1060
      %v1080 = vunpack.c.l.b16 %v1061
      %v1081 = vunpack.c.l.b16 %v1062
      %v1082 = vpack.c.b16 %v1079, %v1078
      %v1083 = vpack.c.b16 %v1081, %v1080
      %vm1086 = vcmask 261120
      %v1088 = vsel %vm1086, %v1063, 0
      %v1091 = vsel %vm1086, %v1064, 0
      %v1094 = vsel %vm1086, %v1065, 0
      %v1097 = vsel %vm1086, %v1066, 0
      %1099 = vmatprep.subr.bf16.mxu0 0
      %1100 = vmatpush1.bf16.msra.mxu0 0
      %1101 = vmatprep.subr.bf16.mxu0 0
      %1102 = vmatpush1.bf16.msra.mxu0 0
      %1103 = vmatprep.subr.bf16.mxu0 0
      %1104 = vmatpush1.bf16.msra.mxu0 0
      %1105 = vmatprep.subr.bf16.mxu0 0
      %1106 = vmatpush1.bf16.msra.mxu0 0
      %1107 = vmatprep.subr.bf16.mxu0 0
      %1108 = vmatpush1.bf16.msra.mxu0 0
      %1109 = vmatprep.subr.bf16.mxu0 0
      %1110 = vmatpush1.bf16.msra.mxu0 0
      %1111 = vmatprep.subr.bf16.mxu0 0
      %1112 = vmatpush1.bf16.msra.mxu0 %v1083
      %1113 = vmatprep.subr.bf16.mxu0 0
      %1114 = vmatpush1.bf16.msra.mxu0 %v1082
      %1115 = vmatprep.subr.bf16.mxu0 0
      %1116 = vmatpush2.bf16.msra.mxu0 0
      %1117 = vmatprep.subr.bf16.mxu0 0
      %1118 = vmatpush2.bf16.msra.mxu0 0
      %1119 = vmatprep.subr.bf16.mxu0 0
      %1120 = vmatpush2.bf16.msra.mxu0 0
      %1121 = vmatprep.subr.bf16.mxu0 0
      %1122 = vmatpush2.bf16.msra.mxu0 0
      %1123 = vmatprep.subr.bf16.mxu0 0
      %1124 = vmatpush2.bf16.msra.mxu0 0
      %1125 = vmatprep.subr.bf16.mxu0 0
      %1126 = vmatpush2.bf16.msra.mxu0 0
      %1127 = vmatprep.subr.bf16.mxu0 0
      %1128 = vmatpush2.bf16.msra.mxu0 0
      %1129 = vmatprep.subr.bf16.mxu0 0
      %1130 = vmatpush2.bf16.msra.mxu0 0
      %1131 = vmatprep.mubr.bf16.mxu0 0
      %1132 = vmatmul.mubr.bf16.gmra.mxu0 %v1088
      %v1133 = vpop.f32.mrf.mxu0
      %v1134 = vadd.f32 %v1072, %v1133
      %v1135 = vpop.f32.mrf.mxu0
      %v1136 = vpop.f32.mrf.mxu0
      %v1137 = vadd.f32 %v1072, %v1136
      %v1138 = vpop.f32.mrf.mxu0
      %1139 = vmatprep.mubr.bf16.mxu0 0
      %1140 = vmatmul.mubr.bf16.gmra.mxu0 %v1091
      %v1141 = vpop.f32.mrf.mxu0
      %v1142 = vadd.f32 %v1072, %v1141
      %v1143 = vpop.f32.mrf.mxu0
      %v1144 = vpop.f32.mrf.mxu0
      %v1145 = vadd.f32 %v1072, %v1144
      %v1146 = vpop.f32.mrf.mxu0
      %1147 = vmatprep.mubr.bf16.mxu0 0
      %1148 = vmatmul.mubr.bf16.gmra.mxu0 %v1094
      %v1149 = vpop.f32.mrf.mxu0
      %v1150 = vadd.f32 %v1072, %v1149
      %v1151 = vpop.f32.mrf.mxu0
      %v1152 = vpop.f32.mrf.mxu0
      %v1153 = vadd.f32 %v1072, %v1152
      %v1154 = vpop.f32.mrf.mxu0
      %1155 = vmatprep.mubr.bf16.mxu0 0
      %1156 = vmatmul.mubr.bf16.gmra.mxu0 %v1097
      %v1157 = vpop.f32.mrf.mxu0
      %v1158 = vadd.f32 %v1072, %v1157
      %v1159 = vpop.f32.mrf.mxu0
      %v1160 = vpop.f32.mrf.mxu0
      %v1161 = vadd.f32 %v1072, %v1160
      %v1162 = vpop.f32.mrf.mxu0
      %1163 = vdwg.mxu0
      %v1164 = vadd.f32 %v1134, %v946
      %v1165 = vadd.f32 %v1137, %v947
      %v1166 = vadd.f32 %v1142, %v948
      %v1167 = vadd.f32 %v1145, %v949
      %v1168 = vadd.f32 %v1150, %v950
      %v1169 = vadd.f32 %v1153, %v951
      %v1170 = vadd.f32 %v1158, %v952
      %v1171 = vadd.f32 %v1161, %v953
      %v1172 = vsub.f32 %v870, %v890
      %v1173 = vsub.f32 %v871, %v891
      %v1174 = vsub.f32 %v870, %v892
      %v1175 = vsub.f32 %v871, %v893
      %v1176 = vsub.f32 %v870, %v894
      %v1177 = vsub.f32 %v871, %v895
      %v1178 = vsub.f32 %v870, %v896
      %v1179 = vsub.f32 %v871, %v897
      %v1180 = vadd.f32 %v1172, %v1164
      %v1181 = vadd.f32 %v1173, %v1165
      %v1182 = vadd.f32 %v1174, %v1166
      %v1183 = vadd.f32 %v1175, %v1167
      %v1184 = vadd.f32 %v1176, %v1168
      %v1185 = vadd.f32 %v1177, %v1169
      %v1186 = vadd.f32 %v1178, %v1170
      %v1187 = vadd.f32 %v1179, %v1171
      %v1188 = vld [vmem:[%s12] sm:$0xf]
      %v1189 = vld [vmem:[%s12 + $0x4] sm:$0xf]
      %v1190 = vld [vmem:[%s12 + $0x8] sm:$0xf]
      %v1191 = vld [vmem:[%s12 + $0xc] sm:$0xf]
      %v1192 = vpack.c.bf16 %v1181, %v1180
      %v1193 = vpack.c.bf16 %v1183, %v1182
      %v1194 = vpack.c.bf16 %v1185, %v1184
      %v1195 = vpack.c.bf16 %v1187, %v1186
      %v1196 = vld [vmem:[%s13] sm:$0x1]
      %v1198 = vlaneseq
      %v1199 = vshrl.u32 %v1198, 7
      %v1200 = vsub.s32 0, %v1199
      %v1201 = vrot.slane %v1196, %v1200
      %v1207 = vunpack.c.l.b16 %v1188
      %v1208 = vunpack.c.l.b16 %v1189
      %v1209 = vunpack.c.l.b16 %v1190
      %v1210 = vunpack.c.l.b16 %v1191
      %v1211 = vpack.c.b16 %v1208, %v1207
      %v1212 = vpack.c.b16 %v1210, %v1209
      %v1216 = vsel %vm1086, %v1192, 0
      %v1219 = vsel %vm1086, %v1193, 0
      %v1222 = vsel %vm1086, %v1194, 0
      %v1225 = vsel %vm1086, %v1195, 0
      %1227 = vmatprep.subr.bf16.mxu0 0
      %1228 = vmatpush1.bf16.msra.mxu0 0
      %1229 = vmatprep.subr.bf16.mxu0 0
      %1230 = vmatpush1.bf16.msra.mxu0 0
      %1231 = vmatprep.subr.bf16.mxu0 0
      %1232 = vmatpush1.bf16.msra.mxu0 0
      %1233 = vmatprep.subr.bf16.mxu0 0
      %1234 = vmatpush1.bf16.msra.mxu0 0
      %1235 = vmatprep.subr.bf16.mxu0 0
      %1236 = vmatpush1.bf16.msra.mxu0 0
      %1237 = vmatprep.subr.bf16.mxu0 0
      %1238 = vmatpush1.bf16.msra.mxu0 0
      %1239 = vmatprep.subr.bf16.mxu0 0
      %1240 = vmatpush1.bf16.msra.mxu0 %v1212
      %1241 = vmatprep.subr.bf16.mxu0 0
      %1242 = vmatpush1.bf16.msra.mxu0 %v1211
      %1243 = vmatprep.subr.bf16.mxu0 0
      %1244 = vmatpush2.bf16.msra.mxu0 0
      %1245 = vmatprep.subr.bf16.mxu0 0
      %1246 = vmatpush2.bf16.msra.mxu0 0
      %1247 = vmatprep.subr.bf16.mxu0 0
      %1248 = vmatpush2.bf16.msra.mxu0 0
      %1249 = vmatprep.subr.bf16.mxu0 0
      %1250 = vmatpush2.bf16.msra.mxu0 0
      %1251 = vmatprep.subr.bf16.mxu0 0
      %1252 = vmatpush2.bf16.msra.mxu0 0
      %1253 = vmatprep.subr.bf16.mxu0 0
      %1254 = vmatpush2.bf16.msra.mxu0 0
      %1255 = vmatprep.subr.bf16.mxu0 0
      %1256 = vmatpush2.bf16.msra.mxu0 0
      %1257 = vmatprep.subr.bf16.mxu0 0
      %1258 = vmatpush2.bf16.msra.mxu0 0
      %1259 = vmatprep.mubr.bf16.mxu0 0
      %1260 = vmatmul.mubr.bf16.gmra.mxu0 %v1216
      %v1261 = vpop.f32.mrf.mxu0
      %v1262 = vadd.f32 %v1201, %v1261
      %v1263 = vpop.f32.mrf.mxu0
      %v1264 = vpop.f32.mrf.mxu0
      %v1265 = vadd.f32 %v1201, %v1264
      %v1266 = vpop.f32.mrf.mxu0
      %1267 = vmatprep.mubr.bf16.mxu0 0
      %1268 = vmatmul.mubr.bf16.gmra.mxu0 %v1219
      %v1269 = vpop.f32.mrf.mxu0
      %v1270 = vadd.f32 %v1201, %v1269
      %v1271 = vpop.f32.mrf.mxu0
      %v1272 = vpop.f32.mrf.mxu0
      %v1273 = vadd.f32 %v1201, %v1272
      %v1274 = vpop.f32.mrf.mxu0
      %1275 = vmatprep.mubr.bf16.mxu0 0
      %1276 = vmatmul.mubr.bf16.gmra.mxu0 %v1222
      %v1277 = vpop.f32.mrf.mxu0
      %v1278 = vadd.f32 %v1201, %v1277
      %v1279 = vpop.f32.mrf.mxu0
      %v1280 = vpop.f32.mrf.mxu0
      %v1281 = vadd.f32 %v1201, %v1280
      %v1282 = vpop.f32.mrf.mxu0
      %1283 = vmatprep.mubr.bf16.mxu0 0
      %1284 = vmatmul.mubr.bf16.gmra.mxu0 %v1225
      %v1285 = vpop.f32.mrf.mxu0
      %v1286 = vadd.f32 %v1201, %v1285
      %v1287 = vpop.f32.mrf.mxu0
      %v1288 = vpop.f32.mrf.mxu0
      %v1289 = vadd.f32 %v1201, %v1288
      %v1290 = vpop.f32.mrf.mxu0
      %1291 = vdwg.mxu0
      %v1292 = vmax.f32 %v1262, 0.0
      %v1293 = vmax.f32 %v1265, 0.0
      %v1294 = vmax.f32 %v1270, 0.0
      %v1295 = vmax.f32 %v1273, 0.0
      %v1296 = vmax.f32 %v1278, 0.0
      %v1297 = vmax.f32 %v1281, 0.0
      %v1298 = vmax.f32 %v1286, 0.0
      %v1299 = vmax.f32 %v1289, 0.0
      %v1300 = vld [vmem:[%s14] sm:$0xf]
      %v1301 = vld [vmem:[%s14 + $0x4] sm:$0xf]
      %v1302 = vld [vmem:[%s14 + $0x8] sm:$0xf]
      %v1303 = vld [vmem:[%s14 + $0xc] sm:$0xf]
      %v1304 = vld [vmem:[%s14 + $0x10] sm:$0xf]
      %v1305 = vld [vmem:[%s14 + $0x14] sm:$0xf]
      %v1306 = vld [vmem:[%s14 + $0x18] sm:$0xf]
      %v1307 = vld [vmem:[%s14 + $0x1c] sm:$0xf]
      %v1308 = vld [vmem:[%s14 + $0x20] sm:$0xf]
      %v1309 = vld [vmem:[%s14 + $0x24] sm:$0xf]
      %v1310 = vld [vmem:[%s14 + $0x28] sm:$0xf]
      %v1311 = vld [vmem:[%s14 + $0x2c] sm:$0xf]
      %v1312 = vld [vmem:[%s14 + $0x30] sm:$0xf]
      %v1313 = vld [vmem:[%s14 + $0x34] sm:$0xf]
      %v1314 = vld [vmem:[%s14 + $0x38] sm:$0xf]
      %v1315 = vld [vmem:[%s14 + $0x3c] sm:$0xf]
      %v1316 = vpack.c.bf16 %v1293, %v1292
      %v1317 = vpack.c.bf16 %v1295, %v1294
      %v1318 = vpack.c.bf16 %v1297, %v1296
      %v1319 = vpack.c.bf16 %v1299, %v1298
      %v1320 = vld [vmem:[%s15] sm:$0x1]
      %v1322 = vlaneseq
      %v1323 = vshrl.u32 %v1322, 7
      %v1324 = vsub.s32 0, %v1323
      %v1325 = vrot.slane %v1320, %v1324
      %v1343 = vunpack.c.l.b16 %v1300
      %v1344 = vunpack.c.l.b16 %v1301
      %v1345 = vunpack.c.l.b16 %v1302
      %v1346 = vunpack.c.l.b16 %v1303
      %v1347 = vunpack.c.l.b16 %v1304
      %v1348 = vunpack.c.l.b16 %v1305
      %v1349 = vunpack.c.l.b16 %v1306
      %v1350 = vunpack.c.l.b16 %v1307
      %v1351 = vunpack.c.l.b16 %v1308
      %v1352 = vunpack.c.l.b16 %v1309
      %v1353 = vunpack.c.l.b16 %v1310
      %v1354 = vunpack.c.l.b16 %v1311
      %v1355 = vunpack.c.l.b16 %v1312
      %v1356 = vunpack.c.l.b16 %v1313
      %v1357 = vunpack.c.l.b16 %v1314
      %v1358 = vunpack.c.l.b16 %v1315
      %v1359 = vpack.c.b16 %v1344, %v1343
      %v1360 = vpack.c.b16 %v1346, %v1345
      %v1361 = vpack.c.b16 %v1348, %v1347
      %v1362 = vpack.c.b16 %v1350, %v1349
      %v1363 = vpack.c.b16 %v1352, %v1351
      %v1364 = vpack.c.b16 %v1354, %v1353
      %v1365 = vpack.c.b16 %v1356, %v1355
      %v1366 = vpack.c.b16 %v1358, %v1357
      %1375 = vmatprep.subr.bf16.mxu0 0
      %1376 = vmatpush1.bf16.msra.mxu0 %v1366
      %1377 = vmatprep.subr.bf16.mxu0 0
      %1378 = vmatpush1.bf16.msra.mxu0 %v1365
      %1379 = vmatprep.subr.bf16.mxu0 0
      %1380 = vmatpush1.bf16.msra.mxu0 %v1364
      %1381 = vmatprep.subr.bf16.mxu0 0
      %1382 = vmatpush1.bf16.msra.mxu0 %v1363
      %1383 = vmatprep.subr.bf16.mxu0 0
      %1384 = vmatpush1.bf16.msra.mxu0 %v1362
      %1385 = vmatprep.subr.bf16.mxu0 0
      %1386 = vmatpush1.bf16.msra.mxu0 %v1361
      %1387 = vmatprep.subr.bf16.mxu0 0
      %1388 = vmatpush1.bf16.msra.mxu0 %v1360
      %1389 = vmatprep.subr.bf16.mxu0 0
      %1390 = vmatpush1.bf16.msra.mxu0 %v1359
      %1391 = vmatprep.subr.bf16.mxu0 0
      %1392 = vmatpush2.bf16.msra.mxu0 0
      %1393 = vmatprep.subr.bf16.mxu0 0
      %1394 = vmatpush2.bf16.msra.mxu0 0
      %1395 = vmatprep.subr.bf16.mxu0 0
      %1396 = vmatpush2.bf16.msra.mxu0 0
      %1397 = vmatprep.subr.bf16.mxu0 0
      %1398 = vmatpush2.bf16.msra.mxu0 0
      %1399 = vmatprep.subr.bf16.mxu0 0
      %1400 = vmatpush2.bf16.msra.mxu0 0
      %1401 = vmatprep.subr.bf16.mxu0 0
      %1402 = vmatpush2.bf16.msra.mxu0 0
      %1403 = vmatprep.subr.bf16.mxu0 0
      %1404 = vmatpush2.bf16.msra.mxu0 0
      %1405 = vmatprep.subr.bf16.mxu0 0
      %1406 = vmatpush2.bf16.msra.mxu0 0
      %1407 = vmatprep.mubr.bf16.mxu0 0
      %1408 = vmatmul.mubr.bf16.gmra.mxu0 %v1316
      %v1409 = vpop.f32.mrf.mxu0
      %v1410 = vadd.f32 %v1325, %v1409
      %v1411 = vpop.f32.mrf.mxu0
      %v1412 = vpop.f32.mrf.mxu0
      %v1413 = vadd.f32 %v1325, %v1412
      %v1414 = vpop.f32.mrf.mxu0
      %1415 = vmatprep.mubr.bf16.mxu0 0
      %1416 = vmatmul.mubr.bf16.gmra.mxu0 %v1317
      %v1417 = vpop.f32.mrf.mxu0
      %v1418 = vadd.f32 %v1325, %v1417
      %v1419 = vpop.f32.mrf.mxu0
      %v1420 = vpop.f32.mrf.mxu0
      %v1421 = vadd.f32 %v1325, %v1420
      %v1422 = vpop.f32.mrf.mxu0
      %1423 = vmatprep.mubr.bf16.mxu0 0
      %1424 = vmatmul.mubr.bf16.gmra.mxu0 %v1318
      %v1425 = vpop.f32.mrf.mxu0
      %v1426 = vadd.f32 %v1325, %v1425
      %v1427 = vpop.f32.mrf.mxu0
      %v1428 = vpop.f32.mrf.mxu0
      %v1429 = vadd.f32 %v1325, %v1428
      %v1430 = vpop.f32.mrf.mxu0
      %1431 = vmatprep.mubr.bf16.mxu0 0
      %1432 = vmatmul.mubr.bf16.gmra.mxu0 %v1319
      %v1433 = vpop.f32.mrf.mxu0
      %v1434 = vadd.f32 %v1325, %v1433
      %v1435 = vpop.f32.mrf.mxu0
      %v1436 = vpop.f32.mrf.mxu0
      %v1437 = vadd.f32 %v1325, %v1436
      %v1438 = vpop.f32.mrf.mxu0
      %1439 = vdwg.mxu0
      %v1440 = vadd.f32 %v906, %v1164
      %v1441 = vadd.f32 %v907, %v1165
      %v1442 = vadd.f32 %v908, %v1166
      %v1443 = vadd.f32 %v909, %v1167
      %v1444 = vadd.f32 %v910, %v1168
      %v1445 = vadd.f32 %v911, %v1169
      %v1446 = vadd.f32 %v912, %v1170
      %v1447 = vadd.f32 %v913, %v1171
      %vm1448 = vcmask 523264
      %v1449 = vsel %vm1448, %v1410, -inf
      %v1450 = vsel %vm1448, %v1418, -inf
      %v1451 = vsel %vm1448, %v1426, -inf
      %v1452 = vmax.f32 %v1449, %v1451
      %v1453 = vsel %vm1448, %v1434, -inf
      %v1454 = vmax.f32 %v1450, %v1453
      %v1455 = vmax.f32 %v1452, %v1454
      %v1456 = vsel %vm1448, %v1413, -inf
      %v1457 = vsel %vm1448, %v1421, -inf
      %v1458 = vsel %vm1448, %v1429, -inf
      %v1459 = vmax.f32 %v1456, %v1458
      %v1460 = vsel %vm1448, %v1437, -inf
      %v1461 = vmax.f32 %v1457, %v1460
      %v1462 = vmax.f32 %v1459, %v1461
      %v1463 = vsub.f32 %v1410, %v1455
      %v1464 = vsub.f32 %v1413, %v1462
      %v1465 = vsub.f32 %v1418, %v1455
      %v1466 = vsub.f32 %v1421, %v1462
      %v1467 = vsub.f32 %v1426, %v1455
      %v1468 = vsub.f32 %v1429, %v1462
      %v1469 = vsub.f32 %v1434, %v1455
      %v1470 = vsub.f32 %v1437, %v1462
      %v1471 = vmul.f32 %v1463, 1.442695
      %v1472 = vpow.pop %v1471
      %v1473 = vmul.f32 %v1464, 1.442695
      %v1474 = vpow.pop %v1473
      %v1475 = vmul.f32 %v1465, 1.442695
      %v1476 = vpow.pop %v1475
      %v1477 = vmul.f32 %v1466, 1.442695
      %v1478 = vpow.pop %v1477
      %v1479 = vmul.f32 %v1467, 1.442695
      %v1480 = vpow.pop %v1479
      %v1481 = vmul.f32 %v1468, 1.442695
      %v1482 = vpow.pop %v1481
      %v1483 = vmul.f32 %v1469, 1.442695
      %v1484 = vpow.pop %v1483
      %v1485 = vmul.f32 %v1470, 1.442695
      %v1486 = vpow.pop %v1485
      %v1487 = vsel %vm1448, %v1472, 0.0
      %v1488 = vsel %vm1448, %v1476, 0.0
      %v1489 = vadd.f32 %v1487, %v1488
      %v1490 = vsel %vm1448, %v1480, 0.0
      %v1491 = vadd.f32 %v1489, %v1490
      %v1492 = vsel %vm1448, %v1484, 0.0
      %v1493 = vadd.f32 %v1491, %v1492
      %v1494 = vsel %vm1448, %v1474, 0.0
      %v1495 = vsel %vm1448, %v1478, 0.0
      %v1496 = vadd.f32 %v1494, %v1495
      %v1497 = vsel %vm1448, %v1482, 0.0
      %v1498 = vadd.f32 %v1496, %v1497
      %v1499 = vsel %vm1448, %v1486, 0.0
      %v1500 = vadd.f32 %v1498, %v1499
      %v1501 = vrcp.pop %v1493
      %v1502 = vrcp.pop %v1500
      %v1503 = vmul.f32 %v1472, %v1440
      %v1504 = vmul.f32 %v1474, %v1441
      %v1505 = vmul.f32 %v1476, %v1442
      %v1506 = vmul.f32 %v1478, %v1443
      %v1507 = vmul.f32 %v1480, %v1444
      %v1508 = vmul.f32 %v1482, %v1445
      %v1509 = vmul.f32 %v1484, %v1446
      %v1510 = vmul.f32 %v1486, %v1447
      %v1511 = vsel %vm1086, %v1503, 0.0
      %v1512 = vsel %vm1086, %v1505, 0.0
      %v1513 = vadd.f32 %v1511, %v1512
      %v1514 = vsel %vm1086, %v1507, 0.0
      %v1515 = vadd.f32 %v1513, %v1514
      %v1516 = vsel %vm1086, %v1509, 0.0
      %v1517 = vadd.f32 %v1515, %v1516
      %v1518 = vsel %vm1086, %v1504, 0.0
      %v1519 = vsel %vm1086, %v1506, 0.0
      %v1520 = vadd.f32 %v1518, %v1519
      %v1521 = vsel %vm1086, %v1508, 0.0
      %v1522 = vadd.f32 %v1520, %v1521
      %v1523 = vsel %vm1086, %v1510, 0.0
      %v1524 = vadd.f32 %v1522, %v1523
      %v1525 = vmul.f32 %v1517, %v1501
      %v1526 = vmul.f32 %v1524, %v1502
      %v1527 = vld [vmem:[%s16] sm:$0xf]
      %v1528 = vld [vmem:[%s16 + $0x4] sm:$0xf]
      %v1529 = vld [vmem:[%s16 + $0x8] sm:$0xf]
      %v1530 = vld [vmem:[%s16 + $0xc] sm:$0xf]
      %v1531 = vpack.c.bf16 %v1526, %v1525
      %v1532 = vld [vmem:[%s17] sm:$0x1]
      %v1534 = vlaneseq
      %v1535 = vshrl.u32 %v1534, 7
      %v1536 = vsub.s32 0, %v1535
      %v1537 = vrot.slane %v1532, %v1536
      %v1543 = vunpack.c.l.b16 %v1527
      %v1544 = vunpack.c.l.b16 %v1528
      %v1545 = vunpack.c.l.b16 %v1529
      %v1546 = vunpack.c.l.b16 %v1530
      %v1547 = vpack.c.b16 %v1544, %v1543
      %v1548 = vpack.c.b16 %v1546, %v1545
      %v1552 = vsel %vm1086, %v1531, 0
      %1554 = vmatprep.subr.bf16.mxu0 0
      %1555 = vmatpush1.bf16.msra.mxu0 0
      %1556 = vmatprep.subr.bf16.mxu0 0
      %1557 = vmatpush1.bf16.msra.mxu0 0
      %1558 = vmatprep.subr.bf16.mxu0 0
      %1559 = vmatpush1.bf16.msra.mxu0 0
      %1560 = vmatprep.subr.bf16.mxu0 0
      %1561 = vmatpush1.bf16.msra.mxu0 0
      %1562 = vmatprep.subr.bf16.mxu0 0
      %1563 = vmatpush1.bf16.msra.mxu0 0
      %1564 = vmatprep.subr.bf16.mxu0 0
      %1565 = vmatpush1.bf16.msra.mxu0 0
      %1566 = vmatprep.subr.bf16.mxu0 0
      %1567 = vmatpush1.bf16.msra.mxu0 %v1548
      %1568 = vmatprep.subr.bf16.mxu0 0
      %1569 = vmatpush1.bf16.msra.mxu0 %v1547
      %1570 = vmatprep.subr.bf16.mxu0 0
      %1571 = vmatpush2.bf16.msra.mxu0 0
      %1572 = vmatprep.subr.bf16.mxu0 0
      %1573 = vmatpush2.bf16.msra.mxu0 0
      %1574 = vmatprep.subr.bf16.mxu0 0
      %1575 = vmatpush2.bf16.msra.mxu0 0
      %1576 = vmatprep.subr.bf16.mxu0 0
      %1577 = vmatpush2.bf16.msra.mxu0 0
      %1578 = vmatprep.subr.bf16.mxu0 0
      %1579 = vmatpush2.bf16.msra.mxu0 0
      %1580 = vmatprep.subr.bf16.mxu0 0
      %1581 = vmatpush2.bf16.msra.mxu0 0
      %1582 = vmatprep.subr.bf16.mxu0 0
      %1583 = vmatpush2.bf16.msra.mxu0 0
      %1584 = vmatprep.subr.bf16.mxu0 0
      %1585 = vmatpush2.bf16.msra.mxu0 0
      %1586 = vmatprep.mubr.bf16.mxu0 0
      %1587 = vmatmul.mubr.bf16.gmra.mxu0 %v1552
      %v1588 = vpop.f32.mrf.mxu0
      %v1589 = vadd.f32 %v1537, %v1588
      %v1590 = vpop.f32.mrf.mxu0
      %v1591 = vpop.f32.mrf.mxu0
      %v1592 = vadd.f32 %v1537, %v1591
      %v1593 = vpop.f32.mrf.mxu0
      %1594 = vdwg.mxu0
      %v1595 = vadd.f32 %v1589, %v880
      %v1596 = vadd.f32 %v1592, %v881
      %1605 = vrot.lane.b32.xlu0 %v1440, 32
      %v1606 = vpop.permute.xlu0 %1605
      %1607 = vrot.lane.b32.xlu0 %v1441, 32
      %v1608 = vpop.permute.xlu0 %1607
      %1609 = vrot.lane.b32.xlu0 %v1442, 32
      %v1610 = vpop.permute.xlu0 %1609
      %1611 = vrot.lane.b32.xlu0 %v1443, 32
      %v1612 = vpop.permute.xlu0 %1611
      %1613 = vrot.lane.b32.xlu0 %v1444, 32
      %v1614 = vpop.permute.xlu0 %1613
      %1615 = vrot.lane.b32.xlu0 %v1445, 32
      %v1616 = vpop.permute.xlu0 %1615
      %1617 = vrot.lane.b32.xlu0 %v1446, 32
      %v1618 = vpop.permute.xlu0 %1617
      %1619 = vrot.lane.b32.xlu0 %v1447, 32
      %v1620 = vpop.permute.xlu0 %1619
      %v1629 = vmul.f32 %v1472, %v1606
      %v1630 = vmul.f32 %v1474, %v1608
      %v1631 = vmul.f32 %v1476, %v1610
      %v1632 = vmul.f32 %v1478, %v1612
      %v1633 = vmul.f32 %v1480, %v1614
      %v1634 = vmul.f32 %v1482, %v1616
      %v1635 = vmul.f32 %v1484, %v1618
      %v1636 = vmul.f32 %v1486, %v1620
      %vm1637 = vcmask 523520
      %v1638 = vsel %vm1637, %v1629, 0.0
      %v1639 = vsel %vm1637, %v1631, 0.0
      %v1640 = vadd.f32 %v1638, %v1639
      %v1641 = vsel %vm1637, %v1633, 0.0
      %v1642 = vadd.f32 %v1640, %v1641
      %v1643 = vsel %vm1637, %v1635, 0.0
      %v1644 = vadd.f32 %v1642, %v1643
      %v1645 = vsel %vm1637, %v1630, 0.0
      %v1646 = vsel %vm1637, %v1632, 0.0
      %v1647 = vadd.f32 %v1645, %v1646
      %v1648 = vsel %vm1637, %v1634, 0.0
      %v1649 = vadd.f32 %v1647, %v1648
      %v1650 = vsel %vm1637, %v1636, 0.0
      %v1651 = vadd.f32 %v1649, %v1650
      %v1652 = vmul.f32 %v1644, %v1501
      %v1653 = vmul.f32 %v1651, %v1502
      %v1654 = vpack.c.bf16 %v1653, %v1652
      %1656 = vrot.lane.b32.xlu0 %v1654, 96
      %v1657 = vpop.permute.xlu0 %1656
      %v1659 = vsel %vm1086, %v1657, 0
      %1661 = vmatprep.subr.bf16.mxu0 0
      %1662 = vmatpush1.bf16.msra.mxu0 0
      %1663 = vmatprep.subr.bf16.mxu0 0
      %1664 = vmatpush1.bf16.msra.mxu0 0
      %1665 = vmatprep.subr.bf16.mxu0 0
      %1666 = vmatpush1.bf16.msra.mxu0 0
      %1667 = vmatprep.subr.bf16.mxu0 0
      %1668 = vmatpush1.bf16.msra.mxu0 0
      %1669 = vmatprep.subr.bf16.mxu0 0
      %1670 = vmatpush1.bf16.msra.mxu0 0
      %1671 = vmatprep.subr.bf16.mxu0 0
      %1672 = vmatpush1.bf16.msra.mxu0 0
      %1673 = vmatprep.subr.bf16.mxu0 0
      %1674 = vmatpush1.bf16.msra.mxu0 %v1548
      %1675 = vmatprep.subr.bf16.mxu0 0
      %1676 = vmatpush1.bf16.msra.mxu0 %v1547
      %1677 = vmatprep.subr.bf16.mxu0 0
      %1678 = vmatpush2.bf16.msra.mxu0 0
      %1679 = vmatprep.subr.bf16.mxu0 0
      %1680 = vmatpush2.bf16.msra.mxu0 0
      %1681 = vmatprep.subr.bf16.mxu0 0
      %1682 = vmatpush2.bf16.msra.mxu0 0
      %1683 = vmatprep.subr.bf16.mxu0 0
      %1684 = vmatpush2.bf16.msra.mxu0 0
      %1685 = vmatprep.subr.bf16.mxu0 0
      %1686 = vmatpush2.bf16.msra.mxu0 0
      %1687 = vmatprep.subr.bf16.mxu0 0
      %1688 = vmatpush2.bf16.msra.mxu0 0
      %1689 = vmatprep.subr.bf16.mxu0 0
      %1690 = vmatpush2.bf16.msra.mxu0 0
      %1691 = vmatprep.subr.bf16.mxu0 0
      %1692 = vmatpush2.bf16.msra.mxu0 0
      %1693 = vmatprep.mubr.bf16.mxu0 0
      %1694 = vmatmul.mubr.bf16.gmra.mxu0 %v1659
      %v1695 = vpop.f32.mrf.mxu0
      %v1696 = vadd.f32 %v1537, %v1695
      %v1697 = vpop.f32.mrf.mxu0
      %v1698 = vpop.f32.mrf.mxu0
      %v1699 = vadd.f32 %v1537, %v1698
      %v1700 = vpop.f32.mrf.mxu0
      %1701 = vdwg.mxu0
      %v1702 = vadd.f32 %v1696, %v880
      %v1703 = vadd.f32 %v1699, %v881
      %1706 = vrot.lane.b32.xlu0 %v1702, 32
      %v1707 = vpop.permute.xlu0 %1706
      %1708 = vrot.lane.b32.xlu0 %v1703, 32
      %v1709 = vpop.permute.xlu0 %1708
      %v1712 = vsel %vm1086, %v1595, %v1707
      %v1713 = vsel %vm1086, %v1596, %v1709
      %v1714 = vpack.c.bf16 %v1713, %v1712
      %v1716 = vunpack.c.l.b16 %v1714
      %v1717 = vunpack.c.h.b16 %v1714
      %v1718 = vpack.c.b16 %v1716, %v1716
      %v1719 = vpack.c.b16 %v1717, %v1717
      %vm1722 = vcmask 519168
      %1723 = vst.msk [vmem:[%s865] sm:$0xf] %vm1722, %v1718
      %1724 = vst.msk [vmem:[%s865 + $0x4] sm:$0xf] %vm1722, %v1719
      %s1725 = smul.u32 2, %s34
      %p1726 = scmp.lt.s32.totalorder %s33, 1
      %s1727 = scalar_select %p1726, %s33, 1
      %p1728 = scmp.lt.s32.totalorder %s1725, 1
      %s1729 = scalar_select %p1728, %s1725, 1
      %s1730 = smul.addr %s1727, 2
      %s1731 = sadd.s32 %s1729, %s1730
      %s1732 = smul.addr %s1731, 4
      %s1733 = scalar_lea.vmem %s18, %s1732
      // Predicated region
      $region93: #{upsampler_forward.18} parent=91 // pred_check
        %p1734 = pneg %p495
      $region94: #{upsampler_forward.18} parent=91 // pred_check_branch
        %1736 = sbr.rel (%p1734) target = $region96
      $region95: #{upsampler_forward.18} parent=91 // pred_region
        %s1737 = smul.u32 2, %s34
      $region96: #{upsampler_forward.18} parent=91 // pred_fallthru
        _
    $region92: #{upsampler_forward.18} parent=5 // pred_fallthru
      _
    %p1738 = scmp.le.s32.totalorder 2, %s24
    // Predicated region
    $region97: #{upsampler_forward.18} parent=5 // pred_check
      %p1739 = pneg %p1738
    $region98: #{upsampler_forward.18} parent=5 // pred_check_branch
      %1741 = sbr.rel (%p1739) target = $region100
    $region99: #{upsampler_forward.18} parent=5 // pred_region
      %s1742 = ssub.s32 %s24, 2
      // Predicated region
      $region101: #{upsampler_forward.18} parent=99 // pred_check
        %p1743 = pneg %p501
      $region102: #{upsampler_forward.18} parent=99 // pred_check_branch
        %1745 = sbr.rel (%p1743) target = $region104
      $region103: #{upsampler_forward.18} parent=99 // pred_region
        %s1746 = smul.u32 2, %s36
        %p1747 = scmp.lt.s32.totalorder %s35, 1
        %s1748 = scalar_select %p1747, %s35, 1
        %p1749 = scmp.lt.s32.totalorder %s1746, 1
        %s1750 = scalar_select %p1749, %s1746, 1
        %s1751 = smul.addr %s1748, 2
        %s1752 = sadd.s32 %s1750, %s1751
        %s1753 = smul.addr %s1752, 4
        %s1754 = scalar_lea.vmem %s18, %s1753
      $region104: #{upsampler_forward.18} parent=99 // pred_fallthru
        _
    $region100: #{upsampler_forward.18} parent=5 // pred_fallthru
      _
  $region6: #{upsampler_forward.18} parent=0 // loop_footer
    %s28 = sadd.s32 1, %s24
  $region7: #{upsampler_forward.18} parent=0 // loop_footer_branch
    %23 = sbr.rel target = $region3
  $region8: #{upsampler_forward.18} parent=0 // loop_exit
    _

// kernel: upsampler_forward.19
$region0: #{upsampler_forward.19}
  #allocation0 [shape = 'u32[]', space=smem, size = 0x4, offset = 0x4, fixed_abs, tag = 'smem constant byte address 0x4 - core index']
  #allocation1 [shape = 'u32[144,128]{1,0:T(1,128)}', space=vmem, size = 0x12000, scoped, tag = 'internal scratch']
  %s0 = inlined_call_operand.vmem [shape: bf16[2,16,64], index: 0, kind: input, shape index: {}]
  %s1 = inlined_call_operand.vmem [shape: bf16[2,16,32], index: 1, kind: input, shape index: {}]
  %s2 = inlined_call_operand.vmem [shape: f32[2,16,3], index: 2, kind: input, shape index: {}]
  %s3 = inlined_call_operand.vmem [shape: bf16[32,32], index: 3, kind: input, shape index: {}]
  %s4 = inlined_call_operand.vmem [shape: bf16[32,32], index: 4, kind: input, shape index: {}]
  %s5 = inlined_call_operand.vmem [shape: f32[1,32], index: 5, kind: input, shape index: {}]
  %s6 = inlined_call_operand.vmem [shape: bf16[32,32], index: 6, kind: input, shape index: {}]
  %s7 = inlined_call_operand.vmem [shape: f32[1,32], index: 7, kind: input, shape index: {}]
  %s8 = inlined_call_operand.vmem [shape: bf16[32,32], index: 8, kind: input, shape index: {}]
  %s9 = inlined_call_operand.vmem [shape: bf16[32,32], index: 9, kind: input, shape index: {}]
  %s10 = inlined_call_operand.vmem [shape: f32[1,32], index: 10, kind: input, shape index: {}]
  %s11 = inlined_call_operand.vmem [shape: bf16[32,16], index: 11, kind: input, shape index: {}]
  %s12 = inlined_call_operand.vmem [shape: f32[1,16], index: 12, kind: input, shape index: {}]
  %s13 = inlined_call_operand.vmem [shape: bf16[16,3], index: 13, kind: input, shape index: {}]
  %s14 = inlined_call_operand.vmem [shape: f32[1,3], index: 14, kind: input, shape index: {}]
  %s15 = inlined_call_operand.vmem [shape: f32[2,16,64], index: 15, kind: output, shape index: {0}]
  %s16 = inlined_call_operand.vmem [shape: f32[2,16,6], index: 16, kind: output, shape index: {1}]
  %17 = xla_tuple %s15, %s16
  %s18 = sld [smem:[#allocation0]]
  $region101: #{upsampler_forward.19} parent=0
    _
  %s20 = ssub.s32 1, %s18
  %s21 = scalar_select 0, %s20, %s18
  loop: start=0, step=1, limit=4
  $region2: #{upsampler_forward.19} parent=0 // loop_pre_header
    _
  $region3: #{upsampler_forward.19} parent=0 // loop_header
    %s23 = sphi 0, %s27
    %p24 = scmp.ge.s32.totalorder %s23, 4
    %s30 = sphi 0, %s42
    %s31 = sphi 0, %s38
    %s32 = sphi 0, %s30
    %s33 = sphi 0, %s31
    %s34 = sphi 0, %s32
    %s35 = sphi 0, %s33
    %s47 = sphi 0, %s49
    %s50 = sphi 0, %s47
    %s51 = sphi 0, %s50
    %s67 = sphi 0, %s51
    %s75 = sphi 0, %s77
    %s78 = sphi 0, %s75
    %s79 = sphi 0, %s78
    %s95 = sphi 0, %s79
    %s103 = sphi 0, %s105
    %s106 = sphi 0, %s103
    %s107 = sphi 0, %s106
    %s123 = sphi 0, %s107
    %s127 = sphi 0, %s127
    %s129 = sphi 0, %s127
    %s130 = sphi 0, %s129
    %s144 = sphi 0, %s130
    %s148 = sphi 0, %s148
    %s150 = sphi 0, %s148
    %s151 = sphi 0, %s150
    %s165 = sphi 0, %s151
    %s169 = sphi 0, %s169
    %s171 = sphi 0, %s169
    %s172 = sphi 0, %s171
    %s186 = sphi 0, %s172
    %s190 = sphi 0, %s190
    %s192 = sphi 0, %s190
    %s193 = sphi 0, %s192
    %s207 = sphi 0, %s193
    %s211 = sphi 0, %s211
    %s213 = sphi 0, %s211
    %s214 = sphi 0, %s213
    %s228 = sphi 0, %s214
    %s232 = sphi 0, %s232
    %s234 = sphi 0, %s232
    %s235 = sphi 0, %s234
    %s249 = sphi 0, %s235
    %s253 = sphi 0, %s253
    %s255 = sphi 0, %s253
    %s256 = sphi 0, %s255
    %s270 = sphi 0, %s256
    %s274 = sphi 0, %s274
    %s276 = sphi 0, %s274
    %s277 = sphi 0, %s276
    %s291 = sphi 0, %s277
    %s295 = sphi 0, %s295
    %s297 = sphi 0, %s295
    %s298 = sphi 0, %s297
    %s312 = sphi 0, %s298
    %s316 = sphi 0, %s316
    %s318 = sphi 0, %s316
    %s319 = sphi 0, %s318
    %s333 = sphi 0, %s319
    %s337 = sphi 0, %s337
    %s339 = sphi 0, %s337
    %s340 = sphi 0, %s339
    %s354 = sphi 0, %s340
    %s358 = sphi 0, %s358
    %s360 = sphi 0, %s358
    %s361 = sphi 0, %s360
    %s375 = sphi 0, %s361
    %s383 = sphi 0, %s385
    %s386 = sphi 0, %s383
    %s387 = sphi 0, %s386
    %s403 = sphi 0, %s387
    %s411 = sphi 0, %s413
    %s414 = sphi 0, %s411
    %s415 = sphi 0, %s414
    %s431 = sphi 0, %s415
  $region4: #{upsampler_forward.19} parent=0 // loop_header_branch
    %26 = sbr.rel (%p24) target = $region8
  $region5: #{upsampler_forward.19} parent=0 // loop_body
    %s28 = ssub.s32 %s23, 1
    %s29 = ssub.s32 %s23, 2
    %s36 = sadd.s32 1, %s31
    %p37 = scmp.ge.s32.totalorder %s36, 1
    %s38 = scalar_select %p37, 0, %s36
    %s39 = sadd.s32 1, %s30
    %s40 = scalar_select %p37, %s39, %s30
    %p41 = scmp.ge.s32.totalorder %s40, 2
    %s42 = scalar_select %p41, 0, %s40
    %s43 = ssub.s32 %s30, %s42
    %s44 = ssub.s32 %s31, %s38
    %s45 = sor.u32 %s43, %s44
    %p46 = scmp.eq.s32.totalorder %s45, 0
    %s48 = sadd.s32 %s47, 1
    %s49 = scalar_select %p46, %s47, %s48
    %p52 = pneg %p46
    %p53 = scmp.eq.s32.totalorder %s23, 1
    %p54 = por %p52, %p53
    %p55 = scmp.ne.s32.totalorder %s47, %s50
    %p56 = scmp.eq.s32.totalorder %s23, 0
    %p57 = por %p55, %p56
    %p58 = scmp.ne.s32.totalorder %s47, %s50
    %p59 = scmp.eq.s32.totalorder %s28, 1
    %p60 = por %p58, %p59
    %p61 = scmp.ne.s32.totalorder %s50, %s51
    %p62 = scmp.eq.s32.totalorder %s28, 0
    %p63 = por %p61, %p62
    %p64 = scmp.ne.s32.totalorder %s50, %s51
    %p65 = scmp.eq.s32.totalorder %s29, 1
    %p66 = por %p64, %p65
    %p68 = scmp.ne.s32.totalorder %s51, %s67
    %p69 = scmp.eq.s32.totalorder %s29, 0
    %p70 = por %p68, %p69
    %s71 = ssub.s32 %s30, %s42
    %s72 = ssub.s32 %s31, %s38
    %s73 = sor.u32 %s71, %s72
    %p74 = scmp.eq.s32.totalorder %s73, 0
    %s76 = sadd.s32 %s75, 1
    %s77 = scalar_select %p74, %s75, %s76
    %p80 = pneg %p74
    %p81 = scmp.eq.s32.totalorder %s23, 1
    %p82 = por %p80, %p81
    %p83 = scmp.ne.s32.totalorder %s75, %s78
    %p84 = scmp.eq.s32.totalorder %s23, 0
    %p85 = por %p83, %p84
    %p86 = scmp.ne.s32.totalorder %s75, %s78
    %p87 = scmp.eq.s32.totalorder %s28, 1
    %p88 = por %p86, %p87
    %p89 = scmp.ne.s32.totalorder %s78, %s79
    %p90 = scmp.eq.s32.totalorder %s28, 0
    %p91 = por %p89, %p90
    %p92 = scmp.ne.s32.totalorder %s78, %s79
    %p93 = scmp.eq.s32.totalorder %s29, 1
    %p94 = por %p92, %p93
    %p96 = scmp.ne.s32.totalorder %s79, %s95
    %p97 = scmp.eq.s32.totalorder %s29, 0
    %p98 = por %p96, %p97
    %s99 = ssub.s32 %s30, %s42
    %s100 = ssub.s32 %s31, %s38
    %s101 = sor.u32 %s99, %s100
    %p102 = scmp.eq.s32.totalorder %s101, 0
    %s104 = sadd.s32 %s103, 1
    %s105 = scalar_select %p102, %s103, %s104
    %p108 = pneg %p102
    %p109 = scmp.eq.s32.totalorder %s23, 1
    %p110 = por %p108, %p109
    %p111 = scmp.ne.s32.totalorder %s103, %s106
    %p112 = scmp.eq.s32.totalorder %s23, 0
    %p113 = por %p111, %p112
    %p114 = scmp.ne.s32.totalorder %s103, %s106
    %p115 = scmp.eq.s32.totalorder %s28, 1
    %p116 = por %p114, %p115
    %p117 = scmp.ne.s32.totalorder %s106, %s107
    %p118 = scmp.eq.s32.totalorder %s28, 0
    %p119 = por %p117, %p118
    %p120 = scmp.ne.s32.totalorder %s106, %s107
    %p121 = scmp.eq.s32.totalorder %s29, 1
    %p122 = por %p120, %p121
    %p124 = scmp.ne.s32.totalorder %s107, %s123
    %p125 = scmp.eq.s32.totalorder %s29, 0
    %p126 = por %p124, %p125
    %s128 = sadd.s32 %s127, 1
    %p131 = scmp.eq.s32.totalorder %s23, 1
    %p132 = scmp.ne.s32.totalorder %s127, %s129
    %p133 = scmp.eq.s32.totalorder %s23, 0
    %p134 = por %p132, %p133
    %p135 = scmp.ne.s32.totalorder %s127, %s129
    %p136 = scmp.eq.s32.totalorder %s28, 1
    %p137 = por %p135, %p136
    %p138 = scmp.ne.s32.totalorder %s129, %s130
    %p139 = scmp.eq.s32.totalorder %s28, 0
    %p140 = por %p138, %p139
    %p141 = scmp.ne.s32.totalorder %s129, %s130
    %p142 = scmp.eq.s32.totalorder %s29, 1
    %p143 = por %p141, %p142
    %p145 = scmp.ne.s32.totalorder %s130, %s144
    %p146 = scmp.eq.s32.totalorder %s29, 0
    %p147 = por %p145, %p146
    %s149 = sadd.s32 %s148, 1
    %p152 = scmp.eq.s32.totalorder %s23, 1
    %p153 = scmp.ne.s32.totalorder %s148, %s150
    %p154 = scmp.eq.s32.totalorder %s23, 0
    %p155 = por %p153, %p154
    %p156 = scmp.ne.s32.totalorder %s148, %s150
    %p157 = scmp.eq.s32.totalorder %s28, 1
    %p158 = por %p156, %p157
    %p159 = scmp.ne.s32.totalorder %s150, %s151
    %p160 = scmp.eq.s32.totalorder %s28, 0
    %p161 = por %p159, %p160
    %p162 = scmp.ne.s32.totalorder %s150, %s151
    %p163 = scmp.eq.s32.totalorder %s29, 1
    %p164 = por %p162, %p163
    %p166 = scmp.ne.s32.totalorder %s151, %s165
    %p167 = scmp.eq.s32.totalorder %s29, 0
    %p168 = por %p166, %p167
    %s170 = sadd.s32 %s169, 1
    %p173 = scmp.eq.s32.totalorder %s23, 1
    %p174 = scmp.ne.s32.totalorder %s169, %s171
    %p175 = scmp.eq.s32.totalorder %s23, 0
    %p176 = por %p174, %p175
    %p177 = scmp.ne.s32.totalorder %s169, %s171
    %p178 = scmp.eq.s32.totalorder %s28, 1
    %p179 = por %p177, %p178
    %p180 = scmp.ne.s32.totalorder %s171, %s172
    %p181 = scmp.eq.s32.totalorder %s28, 0
    %p182 = por %p180, %p181
    %p183 = scmp.ne.s32.totalorder %s171, %s172
    %p184 = scmp.eq.s32.totalorder %s29, 1
    %p185 = por %p183, %p184
    %p187 = scmp.ne.s32.totalorder %s172, %s186
    %p188 = scmp.eq.s32.totalorder %s29, 0
    %p189 = por %p187, %p188
    %s191 = sadd.s32 %s190, 1
    %p194 = scmp.eq.s32.totalorder %s23, 1
    %p195 = scmp.ne.s32.totalorder %s190, %s192
    %p196 = scmp.eq.s32.totalorder %s23, 0
    %p197 = por %p195, %p196
    %p198 = scmp.ne.s32.totalorder %s190, %s192
    %p199 = scmp.eq.s32.totalorder %s28, 1
    %p200 = por %p198, %p199
    %p201 = scmp.ne.s32.totalorder %s192, %s193
    %p202 = scmp.eq.s32.totalorder %s28, 0
    %p203 = por %p201, %p202
    %p204 = scmp.ne.s32.totalorder %s192, %s193
    %p205 = scmp.eq.s32.totalorder %s29, 1
    %p206 = por %p204, %p205
    %p208 = scmp.ne.s32.totalorder %s193, %s207
    %p209 = scmp.eq.s32.totalorder %s29, 0
    %p210 = por %p208, %p209
    %s212 = sadd.s32 %s211, 1
    %p215 = scmp.eq.s32.totalorder %s23, 1
    %p216 = scmp.ne.s32.totalorder %s211, %s213
    %p217 = scmp.eq.s32.totalorder %s23, 0
    %p218 = por %p216, %p217
    %p219 = scmp.ne.s32.totalorder %s211, %s213
    %p220 = scmp.eq.s32.totalorder %s28, 1
    %p221 = por %p219, %p220
    %p222 = scmp.ne.s32.totalorder %s213, %s214
    %p223 = scmp.eq.s32.totalorder %s28, 0
    %p224 = por %p222, %p223
    %p225 = scmp.ne.s32.totalorder %s213, %s214
    %p226 = scmp.eq.s32.totalorder %s29, 1
    %p227 = por %p225, %p226
    %p229 = scmp.ne.s32.totalorder %s214, %s228
    %p230 = scmp.eq.s32.totalorder %s29, 0
    %p231 = por %p229, %p230
    %s233 = sadd.s32 %s232, 1
    %p236 = scmp.eq.s32.totalorder %s23, 1
    %p237 = scmp.ne.s32.totalorder %s232, %s234
    %p238 = scmp.eq.s32.totalorder %s23, 0
    %p239 = por %p237, %p238
    %p240 = scmp.ne.s32.totalorder %s232, %s234
    %p241 = scmp.eq.s32.totalorder %s28, 1
    %p242 = por %p240, %p241
    %p243 = scmp.ne.s32.totalorder %s234, %s235
    %p244 = scmp.eq.s32.totalorder %s28, 0
    %p245 = por %p243, %p244
    %p246 = scmp.ne.s32.totalorder %s234, %s235
    %p247 = scmp.eq.s32.totalorder %s29, 1
    %p248 = por %p246, %p247
    %p250 = scmp.ne.s32.totalorder %s235, %s249
    %p251 = scmp.eq.s32.totalorder %s29, 0
    %p252 = por %p250, %p251
    %s254 = sadd.s32 %s253, 1
    %p257 = scmp.eq.s32.totalorder %s23, 1
    %p258 = scmp.ne.s32.totalorder %s253, %s255
    %p259 = scmp.eq.s32.totalorder %s23, 0
    %p260 = por %p258, %p259
    %p261 = scmp.ne.s32.totalorder %s253, %s255
    %p262 = scmp.eq.s32.totalorder %s28, 1
    %p263 = por %p261, %p262
    %p264 = scmp.ne.s32.totalorder %s255, %s256
    %p265 = scmp.eq.s32.totalorder %s28, 0
    %p266 = por %p264, %p265
    %p267 = scmp.ne.s32.totalorder %s255, %s256
    %p268 = scmp.eq.s32.totalorder %s29, 1
    %p269 = por %p267, %p268
    %p271 = scmp.ne.s32.totalorder %s256, %s270
    %p272 = scmp.eq.s32.totalorder %s29, 0
    %p273 = por %p271, %p272
    %s275 = sadd.s32 %s274, 1
    %p278 = scmp.eq.s32.totalorder %s23, 1
    %p279 = scmp.ne.s32.totalorder %s274, %s276
    %p280 = scmp.eq.s32.totalorder %s23, 0
    %p281 = por %p279, %p280
    %p282 = scmp.ne.s32.totalorder %s274, %s276
    %p283 = scmp.eq.s32.totalorder %s28, 1
    %p284 = por %p282, %p283
    %p285 = scmp.ne.s32.totalorder %s276, %s277
    %p286 = scmp.eq.s32.totalorder %s28, 0
    %p287 = por %p285, %p286
    %p288 = scmp.ne.s32.totalorder %s276, %s277
    %p289 = scmp.eq.s32.totalorder %s29, 1
    %p290 = por %p288, %p289
    %p292 = scmp.ne.s32.totalorder %s277, %s291
    %p293 = scmp.eq.s32.totalorder %s29, 0
    %p294 = por %p292, %p293
    %s296 = sadd.s32 %s295, 1
    %p299 = scmp.eq.s32.totalorder %s23, 1
    %p300 = scmp.ne.s32.totalorder %s295, %s297
    %p301 = scmp.eq.s32.totalorder %s23, 0
    %p302 = por %p300, %p301
    %p303 = scmp.ne.s32.totalorder %s295, %s297
    %p304 = scmp.eq.s32.totalorder %s28, 1
    %p305 = por %p303, %p304
    %p306 = scmp.ne.s32.totalorder %s297, %s298
    %p307 = scmp.eq.s32.totalorder %s28, 0
    %p308 = por %p306, %p307
    %p309 = scmp.ne.s32.totalorder %s297, %s298
    %p310 = scmp.eq.s32.totalorder %s29, 1
    %p311 = por %p309, %p310
    %p313 = scmp.ne.s32.totalorder %s298, %s312
    %p314 = scmp.eq.s32.totalorder %s29, 0
    %p315 = por %p313, %p314
    %s317 = sadd.s32 %s316, 1
    %p320 = scmp.eq.s32.totalorder %s23, 1
    %p321 = scmp.ne.s32.totalorder %s316, %s318
    %p322 = scmp.eq.s32.totalorder %s23, 0
    %p323 = por %p321, %p322
    %p324 = scmp.ne.s32.totalorder %s316, %s318
    %p325 = scmp.eq.s32.totalorder %s28, 1
    %p326 = por %p324, %p325
    %p327 = scmp.ne.s32.totalorder %s318, %s319
    %p328 = scmp.eq.s32.totalorder %s28, 0
    %p329 = por %p327, %p328
    %p330 = scmp.ne.s32.totalorder %s318, %s319
    %p331 = scmp.eq.s32.totalorder %s29, 1
    %p332 = por %p330, %p331
    %p334 = scmp.ne.s32.totalorder %s319, %s333
    %p335 = scmp.eq.s32.totalorder %s29, 0
    %p336 = por %p334, %p335
    %s338 = sadd.s32 %s337, 1
    %p341 = scmp.eq.s32.totalorder %s23, 1
    %p342 = scmp.ne.s32.totalorder %s337, %s339
    %p343 = scmp.eq.s32.totalorder %s23, 0
    %p344 = por %p342, %p343
    %p345 = scmp.ne.s32.totalorder %s337, %s339
    %p346 = scmp.eq.s32.totalorder %s28, 1
    %p347 = por %p345, %p346
    %p348 = scmp.ne.s32.totalorder %s339, %s340
    %p349 = scmp.eq.s32.totalorder %s28, 0
    %p350 = por %p348, %p349
    %p351 = scmp.ne.s32.totalorder %s339, %s340
    %p352 = scmp.eq.s32.totalorder %s29, 1
    %p353 = por %p351, %p352
    %p355 = scmp.ne.s32.totalorder %s340, %s354
    %p356 = scmp.eq.s32.totalorder %s29, 0
    %p357 = por %p355, %p356
    %s359 = sadd.s32 %s358, 1
    %p362 = scmp.eq.s32.totalorder %s23, 1
    %p363 = scmp.ne.s32.totalorder %s358, %s360
    %p364 = scmp.eq.s32.totalorder %s23, 0
    %p365 = por %p363, %p364
    %p366 = scmp.ne.s32.totalorder %s358, %s360
    %p367 = scmp.eq.s32.totalorder %s28, 1
    %p368 = por %p366, %p367
    %p369 = scmp.ne.s32.totalorder %s360, %s361
    %p370 = scmp.eq.s32.totalorder %s28, 0
    %p371 = por %p369, %p370
    %p372 = scmp.ne.s32.totalorder %s360, %s361
    %p373 = scmp.eq.s32.totalorder %s29, 1
    %p374 = por %p372, %p373
    %p376 = scmp.ne.s32.totalorder %s361, %s375
    %p377 = scmp.eq.s32.totalorder %s29, 0
    %p378 = por %p376, %p377
    %s379 = ssub.s32 %s30, %s42
    %s380 = ssub.s32 %s31, %s38
    %s381 = sor.u32 %s379, %s380
    %p382 = scmp.eq.s32.totalorder %s381, 0
    %s384 = sadd.s32 %s383, 1
    %s385 = scalar_select %p382, %s383, %s384
    %p388 = pneg %p382
    %p389 = scmp.eq.s32.totalorder %s23, 1
    %p390 = por %p388, %p389
    %p391 = scmp.ne.s32.totalorder %s383, %s386
    %p392 = scmp.eq.s32.totalorder %s23, 0
    %p393 = por %p391, %p392
    %p394 = scmp.ne.s32.totalorder %s383, %s386
    %p395 = scmp.eq.s32.totalorder %s28, 1
    %p396 = por %p394, %p395
    %p397 = scmp.ne.s32.totalorder %s386, %s387
    %p398 = scmp.eq.s32.totalorder %s28, 0
    %p399 = por %p397, %p398
    %p400 = scmp.ne.s32.totalorder %s386, %s387
    %p401 = scmp.eq.s32.totalorder %s29, 1
    %p402 = por %p400, %p401
    %p404 = scmp.ne.s32.totalorder %s387, %s403
    %p405 = scmp.eq.s32.totalorder %s29, 0
    %p406 = por %p404, %p405
    %s407 = ssub.s32 %s30, %s42
    %s408 = ssub.s32 %s31, %s38
    %s409 = sor.u32 %s407, %s408
    %p410 = scmp.eq.s32.totalorder %s409, 0
    %s412 = sadd.s32 %s411, 1
    %s413 = scalar_select %p410, %s411, %s412
    %p416 = pneg %p410
    %p417 = scmp.eq.s32.totalorder %s23, 1
    %p418 = por %p416, %p417
    %p419 = scmp.ne.s32.totalorder %s411, %s414
    %p420 = scmp.eq.s32.totalorder %s23, 0
    %p421 = por %p419, %p420
    %p422 = scmp.ne.s32.totalorder %s411, %s414
    %p423 = scmp.eq.s32.totalorder %s28, 1
    %p424 = por %p422, %p423
    %p425 = scmp.ne.s32.totalorder %s414, %s415
    %p426 = scmp.eq.s32.totalorder %s28, 0
    %p427 = por %p425, %p426
    %p428 = scmp.ne.s32.totalorder %s414, %s415
    %p429 = scmp.eq.s32.totalorder %s29, 1
    %p430 = por %p428, %p429
    %p432 = scmp.ne.s32.totalorder %s415, %s431
    %p433 = scmp.eq.s32.totalorder %s29, 0
    %p434 = por %p432, %p433
    %p435 = scmp.le.s32.totalorder 1, %s23
    %p436 = scmp.lt.s32.totalorder %s23, 3
    %p437 = pnand %p435, %p436
    %p438 = pneg %p437
    // Predicated region
    $region9: #{upsampler_forward.19} parent=5 // pred_check
      _
    $region10: #{upsampler_forward.19} parent=5 // pred_check_branch
      %440 = sbr.rel (%p437) target = $region12
    $region11: #{upsampler_forward.19} parent=5 // pred_region
      %s441 = ssub.s32 %s23, 1
      // Predicated region
      $region13: #{upsampler_forward.19} parent=11 // pred_check
        %p442 = pneg %p140
      $region14: #{upsampler_forward.19} parent=11 // pred_check_branch
        %444 = sbr.rel (%p442) target = $region16
      $region15: #{upsampler_forward.19} parent=11 // pred_region
        _
      $region16: #{upsampler_forward.19} parent=11 // pred_fallthru
        _
      // Predicated region
      $region17: #{upsampler_forward.19} parent=11 // pred_check
        %p445 = pneg %p161
      $region18: #{upsampler_forward.19} parent=11 // pred_check_branch
        %447 = sbr.rel (%p445) target = $region20
      $region19: #{upsampler_forward.19} parent=11 // pred_region
        _
      $region20: #{upsampler_forward.19} parent=11 // pred_fallthru
        _
      // Predicated region
      $region21: #{upsampler_forward.19} parent=11 // pred_check
        %p448 = pneg %p182
      $region22: #{upsampler_forward.19} parent=11 // pred_check_branch
        %450 = sbr.rel (%p448) target = $region24
      $region23: #{upsampler_forward.19} parent=11 // pred_region
        _
      $region24: #{upsampler_forward.19} parent=11 // pred_fallthru
        _
      // Predicated region
      $region25: #{upsampler_forward.19} parent=11 // pred_check
        %p451 = pneg %p203
      $region26: #{upsampler_forward.19} parent=11 // pred_check_branch
        %453 = sbr.rel (%p451) target = $region28
      $region27: #{upsampler_forward.19} parent=11 // pred_region
        _
      $region28: #{upsampler_forward.19} parent=11 // pred_fallthru
        _
      // Predicated region
      $region29: #{upsampler_forward.19} parent=11 // pred_check
        %p454 = pneg %p224
      $region30: #{upsampler_forward.19} parent=11 // pred_check_branch
        %456 = sbr.rel (%p454) target = $region32
      $region31: #{upsampler_forward.19} parent=11 // pred_region
        _
      $region32: #{upsampler_forward.19} parent=11 // pred_fallthru
        _
      // Predicated region
      $region33: #{upsampler_forward.19} parent=11 // pred_check
        %p457 = pneg %p245
      $region34: #{upsampler_forward.19} parent=11 // pred_check_branch
        %459 = sbr.rel (%p457) target = $region36
      $region35: #{upsampler_forward.19} parent=11 // pred_region
        _
      $region36: #{upsampler_forward.19} parent=11 // pred_fallthru
        _
      // Predicated region
      $region37: #{upsampler_forward.19} parent=11 // pred_check
        %p460 = pneg %p266
      $region38: #{upsampler_forward.19} parent=11 // pred_check_branch
        %462 = sbr.rel (%p460) target = $region40
      $region39: #{upsampler_forward.19} parent=11 // pred_region
        _
      $region40: #{upsampler_forward.19} parent=11 // pred_fallthru
        _
      // Predicated region
      $region41: #{upsampler_forward.19} parent=11 // pred_check
        %p463 = pneg %p287
      $region42: #{upsampler_forward.19} parent=11 // pred_check_branch
        %465 = sbr.rel (%p463) target = $region44
      $region43: #{upsampler_forward.19} parent=11 // pred_region
        _
      $region44: #{upsampler_forward.19} parent=11 // pred_fallthru
        _
      // Predicated region
      $region45: #{upsampler_forward.19} parent=11 // pred_check
        %p466 = pneg %p308
      $region46: #{upsampler_forward.19} parent=11 // pred_check_branch
        %468 = sbr.rel (%p466) target = $region48
      $region47: #{upsampler_forward.19} parent=11 // pred_region
        _
      $region48: #{upsampler_forward.19} parent=11 // pred_fallthru
        _
      // Predicated region
      $region49: #{upsampler_forward.19} parent=11 // pred_check
        %p469 = pneg %p329
      $region50: #{upsampler_forward.19} parent=11 // pred_check_branch
        %471 = sbr.rel (%p469) target = $region52
      $region51: #{upsampler_forward.19} parent=11 // pred_region
        _
      $region52: #{upsampler_forward.19} parent=11 // pred_fallthru
        _
      // Predicated region
      $region53: #{upsampler_forward.19} parent=11 // pred_check
        %p472 = pneg %p350
      $region54: #{upsampler_forward.19} parent=11 // pred_check_branch
        %474 = sbr.rel (%p472) target = $region56
      $region55: #{upsampler_forward.19} parent=11 // pred_region
        _
      $region56: #{upsampler_forward.19} parent=11 // pred_fallthru
        _
      // Predicated region
      $region57: #{upsampler_forward.19} parent=11 // pred_check
        %p475 = pneg %p371
      $region58: #{upsampler_forward.19} parent=11 // pred_check_branch
        %477 = sbr.rel (%p475) target = $region60
      $region59: #{upsampler_forward.19} parent=11 // pred_region
        _
      $region60: #{upsampler_forward.19} parent=11 // pred_fallthru
        _
    $region12: #{upsampler_forward.19} parent=5 // pred_fallthru
      _
    %p478 = scmp.lt.s32.totalorder %s23, 2
    // Predicated region
    $region61: #{upsampler_forward.19} parent=5 // pred_check
      %p479 = pneg %p478
    $region62: #{upsampler_forward.19} parent=5 // pred_check_branch
      %481 = sbr.rel (%p479) target = $region64
    $region63: #{upsampler_forward.19} parent=5 // pred_region
      // Predicated region
      $region65: #{upsampler_forward.19} parent=63 // pred_check
        %p482 = pneg %p57
      $region66: #{upsampler_forward.19} parent=63 // pred_check_branch
        %484 = sbr.rel (%p482) target = $region68
      $region67: #{upsampler_forward.19} parent=63 // pred_region
        %s485 = smul.u32 2, %s31
        %p486 = scmp.lt.s32.totalorder %s30, 1
        %s487 = scalar_select %p486, %s30, 1
        %p488 = scmp.lt.s32.totalorder %s485, 1
        %s489 = scalar_select %p488, %s485, 1
        %s490 = smul.addr %s487, 2
        %s491 = sadd.s32 %s489, %s490
        %s492 = smul.addr %s491, 4
        %s493 = scalar_lea.vmem %s0, %s492
        %s494 = smul.u32 2, %s31
      $region68: #{upsampler_forward.19} parent=63 // pred_fallthru
        _
      // Predicated region
      $region69: #{upsampler_forward.19} parent=63 // pred_check
        %p495 = pneg %p85
      $region70: #{upsampler_forward.19} parent=63 // pred_check_branch
        %497 = sbr.rel (%p495) target = $region72
      $region71: #{upsampler_forward.19} parent=63 // pred_region
        %s498 = smul.u32 2, %s31
        %p499 = scmp.lt.s32.totalorder %s30, 1
        %s500 = scalar_select %p499, %s30, 1
        %p501 = scmp.lt.s32.totalorder %s498, 1
        %s502 = scalar_select %p501, %s498, 1
        %s503 = smul.addr %s500, 2
        %s504 = sadd.s32 %s502, %s503
        %s505 = smul.addr %s504, 4
        %s506 = scalar_lea.vmem %s1, %s505
        %s507 = smul.u32 2, %s31
      $region72: #{upsampler_forward.19} parent=63 // pred_fallthru
        _
      // Predicated region
      $region73: #{upsampler_forward.19} parent=63 // pred_check
        %p508 = pneg %p113
      $region74: #{upsampler_forward.19} parent=63 // pred_check_branch
        %510 = sbr.rel (%p508) target = $region76
      $region75: #{upsampler_forward.19} parent=63 // pred_region
        %s511 = smul.u32 2, %s31
        %p512 = scmp.lt.s32.totalorder %s30, 1
        %s513 = scalar_select %p512, %s30, 1
        %p514 = scmp.lt.s32.totalorder %s511, 1
        %s515 = scalar_select %p514, %s511, 1
        %s516 = smul.addr %s513, 2
        %s517 = sadd.s32 %s515, %s516
        %s518 = smul.addr %s517, 8
        %s519 = scalar_lea.vmem %s2, %s518
        %s520 = smul.u32 2, %s31
      $region76: #{upsampler_forward.19} parent=63 // pred_fallthru
        _
    $region64: #{upsampler_forward.19} parent=5 // pred_fallthru
      _
    %p521 = scmp.le.s32.totalorder 1, %s23
    %p522 = scmp.lt.s32.totalorder %s23, 3
    %p523 = pnand %p521, %p522
    %p524 = pneg %p523
    // Predicated region
    $region77: #{upsampler_forward.19} parent=5 // pred_check
      _
    $region78: #{upsampler_forward.19} parent=5 // pred_check_branch
      %526 = sbr.rel (%p523) target = $region80
    $region79: #{upsampler_forward.19} parent=5 // pred_region
      %s527 = ssub.s32 %s23, 1
      %s528 = smul.u32 2, %s33
      %p529 = scmp.lt.s32.totalorder %s32, 1
      %s530 = scalar_select %p529, %s32, 1
      %p531 = scmp.lt.s32.totalorder %s528, 1
      %s532 = scalar_select %p531, %s528, 1
      %s533 = smul.addr %s530, 2
      %s534 = sadd.s32 %s532, %s533
      %s535 = smul.addr %s534, 4
      %s536 = scalar_lea.vmem %s0, %s535
      %p537 = pneg %p63
      %p538 = pneg %p60
      %s539 = smul.u32 2, %s33
      %p540 = scmp.lt.s32.totalorder %s32, 1
      %s541 = scalar_select %p540, %s32, 1
      %p542 = scmp.lt.s32.totalorder %s539, 1
      %s543 = scalar_select %p542, %s539, 1
      %s544 = smul.addr %s541, 2
      %s545 = sadd.s32 %s543, %s544
      %s546 = smul.addr %s545, 4
      %s547 = scalar_lea.vmem %s1, %s546
      %p548 = pneg %p91
      %p549 = pneg %p88
      %s550 = smul.u32 2, %s33
      %p551 = scmp.lt.s32.totalorder %s32, 1
      %s552 = scalar_select %p551, %s32, 1
      %p553 = scmp.lt.s32.totalorder %s550, 1
      %s554 = scalar_select %p553, %s550, 1
      %s555 = smul.addr %s552, 2
      %s556 = sadd.s32 %s554, %s555
      %s557 = smul.addr %s556, 8
      %s558 = scalar_lea.vmem %s2, %s557
      %p559 = pneg %p119
      %p560 = pneg %p116
      %p561 = pneg %p140
      %p562 = pneg %p137
      %p563 = pneg %p161
      %p564 = pneg %p158
      %p565 = pneg %p182
      %p566 = pneg %p179
      %p567 = pneg %p203
      %p568 = pneg %p200
      %p569 = pneg %p224
      %p570 = pneg %p221
      %p571 = pneg %p245
      %p572 = pneg %p242
      %p573 = pneg %p266
      %p574 = pneg %p263
      %p575 = pneg %p287
      %p576 = pneg %p284
      %p577 = pneg %p308
      %p578 = pneg %p305
      %p579 = pneg %p329
      %p580 = pneg %p326
      %p581 = pneg %p350
      %p582 = pneg %p347
      %p583 = pneg %p371
      %p584 = pneg %p368
      %p585 = pneg %p399
      %p586 = pneg %p396
      %s587 = smul.u32 2, %s33
      %p588 = scmp.lt.s32.totalorder %s32, 1
      %s589 = scalar_select %p588, %s32, 1
      %p590 = scmp.lt.s32.totalorder %s587, 1
      %s591 = scalar_select %p590, %s587, 1
      %s592 = smul.addr %s589, 2
      %s593 = sadd.s32 %s591, %s592
      %s594 = smul.addr %s593, 8
      %s595 = scalar_lea.vmem %s15, %s594
      %p596 = pneg %p427
      %p597 = pneg %p424
      %s598 = smul.u32 2, %s33
      %p599 = scmp.lt.s32.totalorder %s32, 1
      %s600 = scalar_select %p599, %s32, 1
      %p601 = scmp.lt.s32.totalorder %s598, 1
      %s602 = scalar_select %p601, %s598, 1
      %s603 = smul.addr %s600, 2
      %s604 = sadd.s32 %s602, %s603
      %s605 = smul.addr %s604, 8
      %s606 = scalar_lea.vmem %s16, %s605
      %s607 = smul.u32 2, %s33
      %p608 = scmp.lt.s32.totalorder %s32, 1
      %s609 = scalar_select %p608, %s32, 1
      %p610 = scmp.lt.s32.totalorder %s607, 1
      %s611 = scalar_select %p610, %s607, 1
      %s612 = smul.addr %s609, 2
      %s613 = sadd.s32 %s611, %s612
      %s614 = smul.addr %s613, 4
      %s615 = scalar_lea.vmem %s0, %s614
      %s616 = smul.u32 2, %s33
      %s617 = smul.u32 2, %s33
      %p618 = scmp.lt.s32.totalorder %s32, 1
      %s619 = scalar_select %p618, %s32, 1
      %p620 = scmp.lt.s32.totalorder %s617, 1
      %s621 = scalar_select %p620, %s617, 1
      %s622 = smul.addr %s619, 2
      %s623 = sadd.s32 %s621, %s622
      %s624 = smul.addr %s623, 4
      %s625 = scalar_lea.vmem %s1, %s624
      %s626 = smul.u32 2, %s33
      %s627 = smul.u32 2, %s33
      %p628 = scmp.lt.s32.totalorder %s32, 1
      %s629 = scalar_select %p628, %s32, 1
      %p630 = scmp.lt.s32.totalorder %s627, 1
      %s631 = scalar_select %p630, %s627, 1
      %s632 = smul.addr %s629, 2
      %s633 = sadd.s32 %s631, %s632
      %s634 = smul.addr %s633, 8
      %s635 = scalar_lea.vmem %s2, %s634
      %s636 = smul.u32 2, %s33
      %s637 = smul.u32 2, %s33
      %p638 = scmp.lt.s32.totalorder %s32, 1
      %s639 = scalar_select %p638, %s32, 1
      %p640 = scmp.lt.s32.totalorder %s637, 1
      %s641 = scalar_select %p640, %s637, 1
      %s642 = smul.addr %s639, 2
      %s643 = sadd.s32 %s641, %s642
      %s644 = smul.addr %s643, 8
      %s645 = scalar_lea.vmem %s15, %s644
      %s646 = smul.u32 2, %s33
      %s647 = smul.u32 2, %s33
      %p648 = scmp.lt.s32.totalorder %s32, 1
      %s649 = scalar_select %p648, %s32, 1
      %p650 = scmp.lt.s32.totalorder %s647, 1
      %s651 = scalar_select %p650, %s647, 1
      %s652 = smul.addr %s649, 2
      %s653 = sadd.s32 %s651, %s652
      %s654 = smul.addr %s653, 8
      %s655 = scalar_lea.vmem %s16, %s654
      %s656 = smul.u32 2, %s33
      %v658 = vld [vmem:[%s615] sm:$0xf]
      %v659 = vld [vmem:[%s615 + $0x4] sm:$0xf]
      %v660 = vld [vmem:[%s625] sm:$0xf]
      %v661 = vld [vmem:[%s625 + $0x4] sm:$0xf]
      %v662 = vld [vmem:[%s635] sm:$0xff]
      %v663 = vld [vmem:[%s635 + $0x8] sm:$0xff]
      %v664 = vld [vmem:[%s4] sm:$0xf]
      %v665 = vld [vmem:[%s4 + $0x4] sm:$0xf]
      %v666 = vld [vmem:[%s4 + $0x8] sm:$0xf]
      %v667 = vld [vmem:[%s4 + $0xc] sm:$0xf]
      %v670 = vunpack.c.l.b16 %v660
      %v671 = vunpack.c.l.b16 %v661
      %v672 = vpack.c.b16 %v671, %v670
      %v677 = vunpack.c.l.b16 %v664
      %v678 = vunpack.c.l.b16 %v665
      %v679 = vunpack.c.l.b16 %v666
      %v680 = vunpack.c.l.b16 %v667
      %v681 = vpack.c.b16 %v678, %v677
      %v682 = vpack.c.b16 %v680, %v679
      %vm685 = vcmask 261120
      %v687 = vsel %vm685, %v672, 0
      %689 = vmatprep.subr.bf16.mxu0 0
      %690 = vmatpush1.bf16.msra.mxu0 0
      %691 = vmatprep.subr.bf16.mxu0 0
      %692 = vmatpush1.bf16.msra.mxu0 0
      %693 = vmatprep.subr.bf16.mxu0 0
      %694 = vmatpush1.bf16.msra.mxu0 0
      %695 = vmatprep.subr.bf16.mxu0 0
      %696 = vmatpush1.bf16.msra.mxu0 0
      %697 = vmatprep.subr.bf16.mxu0 0
      %698 = vmatpush1.bf16.msra.mxu0 0
      %699 = vmatprep.subr.bf16.mxu0 0
      %700 = vmatpush1.bf16.msra.mxu0 0
      %701 = vmatprep.subr.bf16.mxu0 0
      %702 = vmatpush1.bf16.msra.mxu0 %v682
      %703 = vmatprep.subr.bf16.mxu0 0
      %704 = vmatpush1.bf16.msra.mxu0 %v681
      %705 = vmatprep.subr.bf16.mxu0 0
      %706 = vmatpush2.bf16.msra.mxu0 0
      %707 = vmatprep.subr.bf16.mxu0 0
      %708 = vmatpush2.bf16.msra.mxu0 0
      %709 = vmatprep.subr.bf16.mxu0 0
      %710 = vmatpush2.bf16.msra.mxu0 0
      %711 = vmatprep.subr.bf16.mxu0 0
      %712 = vmatpush2.bf16.msra.mxu0 0
      %713 = vmatprep.subr.bf16.mxu0 0
      %714 = vmatpush2.bf16.msra.mxu0 0
      %715 = vmatprep.subr.bf16.mxu0 0
      %716 = vmatpush2.bf16.msra.mxu0 0
      %717 = vmatprep.subr.bf16.mxu0 0
      %718 = vmatpush2.bf16.msra.mxu0 0
      %719 = vmatprep.subr.bf16.mxu0 0
      %720 = vmatpush2.bf16.msra.mxu0 0
      %721 = vmatprep.mubr.bf16.mxu0 0
      %722 = vmatmul.mubr.bf16.gmra.mxu0 %v687
      %v723 = vpop.f32.mrf.mxu0
      %v724 = vadd.f32 0.0, %v723
      %v725 = vpop.f32.mrf.mxu0
      %v726 = vpop.f32.mrf.mxu0
      %v727 = vadd.f32 0.0, %v726
      %v728 = vpop.f32.mrf.mxu0
      %729 = vdwg.mxu0
      %v730 = vld [vmem:[%s9] sm:$0xf]
      %v731 = vld [vmem:[%s9 + $0x4] sm:$0xf]
      %v732 = vld [vmem:[%s9 + $0x8] sm:$0xf]
      %v733 = vld [vmem:[%s9 + $0xc] sm:$0xf]
      %v738 = vunpack.c.l.b16 %v730
      %v739 = vunpack.c.l.b16 %v731
      %v740 = vunpack.c.l.b16 %v732
      %v741 = vunpack.c.l.b16 %v733
      %v742 = vpack.c.b16 %v739, %v738
      %v743 = vpack.c.b16 %v741, %v740
      %746 = vmatprep.subr.bf16.mxu0 0
      %747 = vmatpush1.bf16.msra.mxu0 0
      %748 = vmatprep.subr.bf16.mxu0 0
      %749 = vmatpush1.bf16.msra.mxu0 0
      %750 = vmatprep.subr.bf16.mxu0 0
      %751 = vmatpush1.bf16.msra.mxu0 0
      %752 = vmatprep.subr.bf16.mxu0 0
      %753 = vmatpush1.bf16.msra.mxu0 0
      %754 = vmatprep.subr.bf16.mxu0 0
      %755 = vmatpush1.bf16.msra.mxu0 0
      %756 = vmatprep.subr.bf16.mxu0 0
      %757 = vmatpush1.bf16.msra.mxu0 0
      %758 = vmatprep.subr.bf16.mxu0 0
      %759 = vmatpush1.bf16.msra.mxu0 %v743
      %760 = vmatprep.subr.bf16.mxu0 0
      %761 = vmatpush1.bf16.msra.mxu0 %v742
      %762 = vmatprep.subr.bf16.mxu0 0
      %763 = vmatpush2.bf16.msra.mxu0 0
      %764 = vmatprep.subr.bf16.mxu0 0
      %765 = vmatpush2.bf16.msra.mxu0 0
      %766 = vmatprep.subr.bf16.mxu0 0
      %767 = vmatpush2.bf16.msra.mxu0 0
      %768 = vmatprep.subr.bf16.mxu0 0
      %769 = vmatpush2.bf16.msra.mxu0 0
      %770 = vmatprep.subr.bf16.mxu0 0
      %771 = vmatpush2.bf16.msra.mxu0 0
      %772 = vmatprep.subr.bf16.mxu0 0
      %773 = vmatpush2.bf16.msra.mxu0 0
      %774 = vmatprep.subr.bf16.mxu0 0
      %775 = vmatpush2.bf16.msra.mxu0 0
      %776 = vmatprep.subr.bf16.mxu0 0
      %777 = vmatpush2.bf16.msra.mxu0 0
      %778 = vmatprep.mubr.bf16.mxu0 0
      %779 = vmatmul.mubr.bf16.gmra.mxu0 %v687
      %v780 = vpop.f32.mrf.mxu0
      %v781 = vadd.f32 0.0, %v780
      %v782 = vpop.f32.mrf.mxu0
      %v783 = vpop.f32.mrf.mxu0
      %v784 = vadd.f32 0.0, %v783
      %v785 = vpop.f32.mrf.mxu0
      %786 = vdwg.mxu0
      %v787 = vld [vmem:[%s3] sm:$0xf]
      %v788 = vld [vmem:[%s3 + $0x4] sm:$0xf]
      %v789 = vld [vmem:[%s3 + $0x8] sm:$0xf]
      %v790 = vld [vmem:[%s3 + $0xc] sm:$0xf]
      %v793 = vunpack.c.l.b16 %v658
      %v794 = vunpack.c.l.b16 %v659
      %v795 = vpack.c.b16 %v794, %v793
      %v800 = vunpack.c.l.b16 %v787
      %v801 = vunpack.c.l.b16 %v788
      %v802 = vunpack.c.l.b16 %v789
      %v803 = vunpack.c.l.b16 %v790
      %v804 = vpack.c.b16 %v801, %v800
      %v805 = vpack.c.b16 %v803, %v802
      %v809 = vsel %vm685, %v795, 0
      %811 = vmatprep.subr.bf16.mxu0 0
      %812 = vmatpush1.bf16.msra.mxu0 0
      %813 = vmatprep.subr.bf16.mxu0 0
      %814 = vmatpush1.bf16.msra.mxu0 0
      %815 = vmatprep.subr.bf16.mxu0 0
      %816 = vmatpush1.bf16.msra.mxu0 0
      %817 = vmatprep.subr.bf16.mxu0 0
      %818 = vmatpush1.bf16.msra.mxu0 0
      %819 = vmatprep.subr.bf16.mxu0 0
      %820 = vmatpush1.bf16.msra.mxu0 0
      %821 = vmatprep.subr.bf16.mxu0 0
      %822 = vmatpush1.bf16.msra.mxu0 0
      %823 = vmatprep.subr.bf16.mxu0 0
      %824 = vmatpush1.bf16.msra.mxu0 %v805
      %825 = vmatprep.subr.bf16.mxu0 0
      %826 = vmatpush1.bf16.msra.mxu0 %v804
      %827 = vmatprep.subr.bf16.mxu0 0
      %828 = vmatpush2.bf16.msra.mxu0 0
      %829 = vmatprep.subr.bf16.mxu0 0
      %830 = vmatpush2.bf16.msra.mxu0 0
      %831 = vmatprep.subr.bf16.mxu0 0
      %832 = vmatpush2.bf16.msra.mxu0 0
      %833 = vmatprep.subr.bf16.mxu0 0
      %834 = vmatpush2.bf16.msra.mxu0 0
      %835 = vmatprep.subr.bf16.mxu0 0
      %836 = vmatpush2.bf16.msra.mxu0 0
      %837 = vmatprep.subr.bf16.mxu0 0
      %838 = vmatpush2.bf16.msra.mxu0 0
      %839 = vmatprep.subr.bf16.mxu0 0
      %840 = vmatpush2.bf16.msra.mxu0 0
      %841 = vmatprep.subr.bf16.mxu0 0
      %842 = vmatpush2.bf16.msra.mxu0 0
      %843 = vmatprep.mubr.bf16.mxu0 0
      %844 = vmatmul.mubr.bf16.gmra.mxu0 %v809
      %v845 = vpop.f32.mrf.mxu0
      %v846 = vadd.f32 %v724, %v845
      %v847 = vpop.f32.mrf.mxu0
      %v848 = vpop.f32.mrf.mxu0
      %v849 = vadd.f32 %v727, %v848
      %v850 = vpop.f32.mrf.mxu0
      %851 = vdwg.mxu0
      %v852 = vld [vmem:[%s5] sm:$0x1]
      %v854 = vlaneseq
      %v855 = vshrl.u32 %v854, 7
      %v856 = vsub.s32 0, %v855
      %v857 = vrot.slane %v852, %v856
      %v859 = vadd.f32 %v846, %v857
      %v860 = vadd.f32 %v849, %v857
      %v861 = vmax.f32 %v859, 0.0
      %v862 = vmax.f32 %v860, 0.0
      %v863 = vld [vmem:[%s6] sm:$0xf]
      %v864 = vld [vmem:[%s6 + $0x4] sm:$0xf]
      %v865 = vld [vmem:[%s6 + $0x8] sm:$0xf]
      %v866 = vld [vmem:[%s6 + $0xc] sm:$0xf]
      %v867 = vpack.c.bf16 %v862, %v861
      %v868 = vld [vmem:[%s7] sm:$0x1]
      %v870 = vlaneseq
      %v871 = vshrl.u32 %v870, 7
      %v872 = vsub.s32 0, %v871
      %v873 = vrot.slane %v868, %v872
      %v879 = vunpack.c.l.b16 %v863
      %v880 = vunpack.c.l.b16 %v864
      %v881 = vunpack.c.l.b16 %v865
      %v882 = vunpack.c.l.b16 %v866
      %v883 = vpack.c.b16 %v880, %v879
      %v884 = vpack.c.b16 %v882, %v881
      %v888 = vsel %vm685, %v867, 0
      %890 = vmatprep.subr.bf16.mxu0 0
      %891 = vmatpush1.bf16.msra.mxu0 0
      %892 = vmatprep.subr.bf16.mxu0 0
      %893 = vmatpush1.bf16.msra.mxu0 0
      %894 = vmatprep.subr.bf16.mxu0 0
      %895 = vmatpush1.bf16.msra.mxu0 0
      %896 = vmatprep.subr.bf16.mxu0 0
      %897 = vmatpush1.bf16.msra.mxu0 0
      %898 = vmatprep.subr.bf16.mxu0 0
      %899 = vmatpush1.bf16.msra.mxu0 0
      %900 = vmatprep.subr.bf16.mxu0 0
      %901 = vmatpush1.bf16.msra.mxu0 0
      %902 = vmatprep.subr.bf16.mxu0 0
      %903 = vmatpush1.bf16.msra.mxu0 %v884
      %904 = vmatprep.subr.bf16.mxu0 0
      %905 = vmatpush1.bf16.msra.mxu0 %v883
      %906 = vmatprep.subr.bf16.mxu0 0
      %907 = vmatpush2.bf16.msra.mxu0 0
      %908 = vmatprep.subr.bf16.mxu0 0
      %909 = vmatpush2.bf16.msra.mxu0 0
      %910 = vmatprep.subr.bf16.mxu0 0
      %911 = vmatpush2.bf16.msra.mxu0 0
      %912 = vmatprep.subr.bf16.mxu0 0
      %913 = vmatpush2.bf16.msra.mxu0 0
      %914 = vmatprep.subr.bf16.mxu0 0
      %915 = vmatpush2.bf16.msra.mxu0 0
      %916 = vmatprep.subr.bf16.mxu0 0
      %917 = vmatpush2.bf16.msra.mxu0 0
      %918 = vmatprep.subr.bf16.mxu0 0
      %919 = vmatpush2.bf16.msra.mxu0 0
      %920 = vmatprep.subr.bf16.mxu0 0
      %921 = vmatpush2.bf16.msra.mxu0 0
      %922 = vmatprep.mubr.bf16.mxu0 0
      %923 = vmatmul.mubr.bf16.gmra.mxu0 %v888
      %v924 = vpop.f32.mrf.mxu0
      %v925 = vadd.f32 %v873, %v924
      %v926 = vpop.f32.mrf.mxu0
      %v927 = vpop.f32.mrf.mxu0
      %v928 = vadd.f32 %v873, %v927
      %v929 = vpop.f32.mrf.mxu0
      %930 = vdwg.mxu0
      %v931 = vld [vmem:[%s8] sm:$0xf]
      %v932 = vld [vmem:[%s8 + $0x4] sm:$0xf]
      %v933 = vld [vmem:[%s8 + $0x8] sm:$0xf]
      %v934 = vld [vmem:[%s8 + $0xc] sm:$0xf]
      %v939 = vunpack.c.l.b16 %v931
      %v940 = vunpack.c.l.b16 %v932
      %v941 = vunpack.c.l.b16 %v933
      %v942 = vunpack.c.l.b16 %v934
      %v943 = vpack.c.b16 %v940, %v939
      %v944 = vpack.c.b16 %v942, %v941
      %947 = vmatprep.subr.bf16.mxu0 0
      %948 = vmatpush1.bf16.msra.mxu0 0
      %949 = vmatprep.subr.bf16.mxu0 0
      %950 = vmatpush1.bf16.msra.mxu0 0
      %951 = vmatprep.subr.bf16.mxu0 0
      %952 = vmatpush1.bf16.msra.mxu0 0
      %953 = vmatprep.subr.bf16.mxu0 0
      %954 = vmatpush1.bf16.msra.mxu0 0
      %955 = vmatprep.subr.bf16.mxu0 0
      %956 = vmatpush1.bf16.msra.mxu0 0
      %957 = vmatprep.subr.bf16.mxu0 0
      %958 = vmatpush1.bf16.msra.mxu0 0
      %959 = vmatprep.subr.bf16.mxu0 0
      %960 = vmatpush1.bf16.msra.mxu0 %v944
      %961 = vmatprep.subr.bf16.mxu0 0
      %962 = vmatpush1.bf16.msra.mxu0 %v943
      %963 = vmatprep.subr.bf16.mxu0 0
      %964 = vmatpush2.bf16.msra.mxu0 0
      %965 = vmatprep.subr.bf16.mxu0 0
      %966 = vmatpush2.bf16.msra.mxu0 0
      %967 = vmatprep.subr.bf16.mxu0 0
      %968 = vmatpush2.bf16.msra.mxu0 0
      %969 = vmatprep.subr.bf16.mxu0 0
      %970 = vmatpush2.bf16.msra.mxu0 0
      %971 = vmatprep.subr.bf16.mxu0 0
      %972 = vmatpush2.bf16.msra.mxu0 0
      %973 = vmatprep.subr.bf16.mxu0 0
      %974 = vmatpush2.bf16.msra.mxu0 0
      %975 = vmatprep.subr.bf16.mxu0 0
      %976 = vmatpush2.bf16.msra.mxu0 0
      %977 = vmatprep.subr.bf16.mxu0 0
      %978 = vmatpush2.bf16.msra.mxu0 0
      %979 = vmatprep.mubr.bf16.mxu0 0
      %980 = vmatmul.mubr.bf16.gmra.mxu0 %v809
      %v981 = vpop.f32.mrf.mxu0
      %v982 = vadd.f32 0.0, %v981
      %v983 = vpop.f32.mrf.mxu0
      %v984 = vpop.f32.mrf.mxu0
      %v985 = vadd.f32 0.0, %v984
      %v986 = vpop.f32.mrf.mxu0
      %987 = vdwg.mxu0
      %v988 = vadd.f32 %v925, %v982
      %v989 = vadd.f32 %v928, %v985
      %v990 = vadd.f32 %v988, %v781
      %v991 = vadd.f32 %v989, %v784
      %v992 = vld [vmem:[%s10] sm:$0x1]
      %v994 = vlaneseq
      %v995 = vshrl.u32 %v994, 7
      %v996 = vsub.s32 0, %v995
      %v997 = vrot.slane %v992, %v996
      %v999 = vadd.f32 %v990, %v997
      %v1000 = vadd.f32 %v991, %v997
      %vm1001 = vcmp.gt.f32.partialorder %v999, 0.0
      %vm1002 = vcmp.gt.f32.partialorder %v1000, 0.0
      %v1003 = vmul.f32 %v999, 0.2
      %v1004 = vmul.f32 %v1000, 0.2
      %v1005 = vsel %vm1001, %v999, %v1003
      %v1006 = vsel %vm1002, %v1000, %v1004
      %v1007 = vld [vmem:[%s11] sm:$0xf]
      %v1008 = vld [vmem:[%s11 + $0x4] sm:$0xf]
      %v1009 = vld [vmem:[%s11 + $0x8] sm:$0xf]
      %v1010 = vld [vmem:[%s11 + $0xc] sm:$0xf]
      %v1011 = vpack.c.bf16 %v1006, %v1005
      %v1012 = vld [vmem:[%s12] sm:$0x1]
      %v1014 = vlaneseq
      %v1015 = vshrl.u32 %v1014, 7
      %v1016 = vsub.s32 0, %v1015
      %v1017 = vrot.slane %v1012, %v1016
      %v1023 = vunpack.c.l.b16 %v1007
      %v1024 = vunpack.c.l.b16 %v1008
      %v1025 = vunpack.c.l.b16 %v1009
      %v1026 = vunpack.c.l.b16 %v1010
      %v1027 = vpack.c.b16 %v1024, %v1023
      %v1028 = vpack.c.b16 %v1026, %v1025
      %v1032 = vsel %vm685, %v1011, 0
      %1034 = vmatprep.subr.bf16.mxu0 0
      %1035 = vmatpush1.bf16.msra.mxu0 0
      %1036 = vmatprep.subr.bf16.mxu0 0
      %1037 = vmatpush1.bf16.msra.mxu0 0
      %1038 = vmatprep.subr.bf16.mxu0 0
      %1039 = vmatpush1.bf16.msra.mxu0 0
      %1040 = vmatprep.subr.bf16.mxu0 0
      %1041 = vmatpush1.bf16.msra.mxu0 0
      %1042 = vmatprep.subr.bf16.mxu0 0
      %1043 = vmatpush1.bf16.msra.mxu0 0
      %1044 = vmatprep.subr.bf16.mxu0 0
      %1045 = vmatpush1.bf16.msra.mxu0 0
      %1046 = vmatprep.subr.bf16.mxu0 0
      %1047 = vmatpush1.bf16.msra.mxu0 %v1028
      %1048 = vmatprep.subr.bf16.mxu0 0
      %1049 = vmatpush1.bf16.msra.mxu0 %v1027
      %1050 = vmatprep.subr.bf16.mxu0 0
      %1051 = vmatpush2.bf16.msra.mxu0 0
      %1052 = vmatprep.subr.bf16.mxu0 0
      %1053 = vmatpush2.bf16.msra.mxu0 0
      %1054 = vmatprep.subr.bf16.mxu0 0
      %1055 = vmatpush2.bf16.msra.mxu0 0
      %1056 = vmatprep.subr.bf16.mxu0 0
      %1057 = vmatpush2.bf16.msra.mxu0 0
      %1058 = vmatprep.subr.bf16.mxu0 0
      %1059 = vmatpush2.bf16.msra.mxu0 0
      %1060 = vmatprep.subr.bf16.mxu0 0
      %1061 = vmatpush2.bf16.msra.mxu0 0
      %1062 = vmatprep.subr.bf16.mxu0 0
      %1063 = vmatpush2.bf16.msra.mxu0 0
      %1064 = vmatprep.subr.bf16.mxu0 0
      %1065 = vmatpush2.bf16.msra.mxu0 0
      %1066 = vmatprep.mubr.bf16.mxu0 0
      %1067 = vmatmul.mubr.bf16.gmra.mxu0 %v1032
      %v1068 = vpop.f32.mrf.mxu0
      %v1069 = vadd.f32 %v1017, %v1068
      %v1070 = vpop.f32.mrf.mxu0
      %v1071 = vpop.f32.mrf.mxu0
      %v1072 = vadd.f32 %v1017, %v1071
      %v1073 = vpop.f32.mrf.mxu0
      %1074 = vdwg.mxu0
      %v1075 = vmax.f32 %v1069, 0.0
      %v1076 = vmax.f32 %v1072, 0.0
      %v1077 = vld [vmem:[%s13] sm:$0xf]
      %v1078 = vld [vmem:[%s13 + $0x4] sm:$0xf]
      %v1079 = vpack.c.bf16 %v1076, %v1075
      %v1080 = vld [vmem:[%s14] sm:$0x1]
      %v1082 = vlaneseq
      %v1083 = vshrl.u32 %v1082, 7
      %v1084 = vsub.s32 0, %v1083
      %v1085 = vrot.slane %v1080, %v1084
      %v1089 = vunpack.c.l.b16 %v1077
      %v1090 = vunpack.c.l.b16 %v1078
      %v1091 = vpack.c.b16 %v1090, %v1089
      %vm1093 = vcmask 130048
      %v1095 = vsel %vm1093, %v1079, 0
      %1097 = vmatprep.subr.bf16.mxu0 0
      %1098 = vmatpush1.bf16.msra.mxu0 0
      %1099 = vmatprep.subr.bf16.mxu0 0
      %1100 = vmatpush1.bf16.msra.mxu0 0
      %1101 = vmatprep.subr.bf16.mxu0 0
      %1102 = vmatpush1.bf16.msra.mxu0 0
      %1103 = vmatprep.subr.bf16.mxu0 0
      %1104 = vmatpush1.bf16.msra.mxu0 0
      %1105 = vmatprep.subr.bf16.mxu0 0
      %1106 = vmatpush1.bf16.msra.mxu0 0
      %1107 = vmatprep.subr.bf16.mxu0 0
      %1108 = vmatpush1.bf16.msra.mxu0 0
      %1109 = vmatprep.subr.bf16.mxu0 0
      %1110 = vmatpush1.bf16.msra.mxu0 0
      %1111 = vmatprep.subr.bf16.mxu0 0
      %1112 = vmatpush1.bf16.msra.mxu0 %v1091
      %1113 = vmatprep.subr.bf16.mxu0 0
      %1114 = vmatpush2.bf16.msra.mxu0 0
      %1115 = vmatprep.subr.bf16.mxu0 0
      %1116 = vmatpush2.bf16.msra.mxu0 0
      %1117 = vmatprep.subr.bf16.mxu0 0
      %1118 = vmatpush2.bf16.msra.mxu0 0
      %1119 = vmatprep.subr.bf16.mxu0 0
      %1120 = vmatpush2.bf16.msra.mxu0 0
      %1121 = vmatprep.subr.bf16.mxu0 0
      %1122 = vmatpush2.bf16.msra.mxu0 0
      %1123 = vmatprep.subr.bf16.mxu0 0
      %1124 = vmatpush2.bf16.msra.mxu0 0
      %1125 = vmatprep.subr.bf16.mxu0 0
      %1126 = vmatpush2.bf16.msra.mxu0 0
      %1127 = vmatprep.subr.bf16.mxu0 0
      %1128 = vmatpush2.bf16.msra.mxu0 0
      %1129 = vmatprep.mubr.bf16.mxu0 0
      %1130 = vmatmul.mubr.bf16.gmra.mxu0 %v1095
      %v1131 = vpop.f32.mrf.mxu0
      %v1132 = vadd.f32 %v1085, %v1131
      %v1133 = vpop.f32.mrf.mxu0
      %v1134 = vpop.f32.mrf.mxu0
      %v1135 = vadd.f32 %v1085, %v1134
      %v1136 = vpop.f32.mrf.mxu0
      %1137 = vdwg.mxu0
      %v1138 = vtanh.pop %v1132
      %v1139 = vtanh.pop %v1135
      %v1140 = vadd.f32 %v662, %v1138
      %v1141 = vadd.f32 %v663, %v1139
      %1142 = vrot.lane.b32.xlu0 %v795, 96
      %v1143 = vpop.permute.xlu0 %1142
      %v1145 = vsel %vm685, %v1143, 0
      %1147 = vmatprep.subr.bf16.mxu0 0
      %1148 = vmatpush1.bf16.msra.mxu0 0
      %1149 = vmatprep.subr.bf16.mxu0 0
      %1150 = vmatpush1.bf16.msra.mxu0 0
      %1151 = vmatprep.subr.bf16.mxu0 0
      %1152 = vmatpush1.bf16.msra.mxu0 0
      %1153 = vmatprep.subr.bf16.mxu0 0
      %1154 = vmatpush1.bf16.msra.mxu0 0
      %1155 = vmatprep.subr.bf16.mxu0 0
      %1156 = vmatpush1.bf16.msra.mxu0 0
      %1157 = vmatprep.subr.bf16.mxu0 0
      %1158 = vmatpush1.bf16.msra.mxu0 0
      %1159 = vmatprep.subr.bf16.mxu0 0
      %1160 = vmatpush1.bf16.msra.mxu0 %v805
      %1161 = vmatprep.subr.bf16.mxu0 0
      %1162 = vmatpush1.bf16.msra.mxu0 %v804
      %1163 = vmatprep.subr.bf16.mxu0 0
      %1164 = vmatpush2.bf16.msra.mxu0 0
      %1165 = vmatprep.subr.bf16.mxu0 0
      %1166 = vmatpush2.bf16.msra.mxu0 0
      %1167 = vmatprep.subr.bf16.mxu0 0
      %1168 = vmatpush2.bf16.msra.mxu0 0
      %1169 = vmatprep.subr.bf16.mxu0 0
      %1170 = vmatpush2.bf16.msra.mxu0 0
      %1171 = vmatprep.subr.bf16.mxu0 0
      %1172 = vmatpush2.bf16.msra.mxu0 0
      %1173 = vmatprep.subr.bf16.mxu0 0
      %1174 = vmatpush2.bf16.msra.mxu0 0
      %1175 = vmatprep.subr.bf16.mxu0 0
      %1176 = vmatpush2.bf16.msra.mxu0 0
      %1177 = vmatprep.subr.bf16.mxu0 0
      %1178 = vmatpush2.bf16.msra.mxu0 0
      %1179 = vmatprep.mubr.bf16.mxu0 0
      %1180 = vmatmul.mubr.bf16.gmra.mxu0 %v1145
      %v1181 = vpop.f32.mrf.mxu0
      %v1182 = vadd.f32 %v724, %v1181
      %v1183 = vpop.f32.mrf.mxu0
      %v1184 = vpop.f32.mrf.mxu0
      %v1185 = vadd.f32 %v727, %v1184
      %v1186 = vpop.f32.mrf.mxu0
      %1187 = vdwg.mxu0
      %v1188 = vadd.f32 %v1182, %v857
      %v1189 = vadd.f32 %v1185, %v857
      %v1190 = vmax.f32 %v1188, 0.0
      %v1191 = vmax.f32 %v1189, 0.0
      %v1192 = vpack.c.bf16 %v1191, %v1190
      %v1194 = vsel %vm685, %v1192, 0
      %1196 = vmatprep.subr.bf16.mxu0 0
      %1197 = vmatpush1.bf16.msra.mxu0 0
      %1198 = vmatprep.subr.bf16.mxu0 0
      %1199 = vmatpush1.bf16.msra.mxu0 0
      %1200 = vmatprep.subr.bf16.mxu0 0
      %1201 = vmatpush1.bf16.msra.mxu0 0
      %1202 = vmatprep.subr.bf16.mxu0 0
      %1203 = vmatpush1.bf16.msra.mxu0 0
      %1204 = vmatprep.subr.bf16.mxu0 0
      %1205 = vmatpush1.bf16.msra.mxu0 0
      %1206 = vmatprep.subr.bf16.mxu0 0
      %1207 = vmatpush1.bf16.msra.mxu0 0
      %1208 = vmatprep.subr.bf16.mxu0 0
      %1209 = vmatpush1.bf16.msra.mxu0 %v884
      %1210 = vmatprep.subr.bf16.mxu0 0
      %1211 = vmatpush1.bf16.msra.mxu0 %v883
      %1212 = vmatprep.subr.bf16.mxu0 0
      %1213 = vmatpush2.bf16.msra.mxu0 0
      %1214 = vmatprep.subr.bf16.mxu0 0
      %1215 = vmatpush2.bf16.msra.mxu0 0
      %1216 = vmatprep.subr.bf16.mxu0 0
      %1217 = vmatpush2.bf16.msra.mxu0 0
      %1218 = vmatprep.subr.bf16.mxu0 0
      %1219 = vmatpush2.bf16.msra.mxu0 0
      %1220 = vmatprep.subr.bf16.mxu0 0
      %1221 = vmatpush2.bf16.msra.mxu0 0
      %1222 = vmatprep.subr.bf16.mxu0 0
      %1223 = vmatpush2.bf16.msra.mxu0 0
      %1224 = vmatprep.subr.bf16.mxu0 0
      %1225 = vmatpush2.bf16.msra.mxu0 0
      %1226 = vmatprep.subr.bf16.mxu0 0
      %1227 = vmatpush2.bf16.msra.mxu0 0
      %1228 = vmatprep.mubr.bf16.mxu0 0
      %1229 = vmatmul.mubr.bf16.gmra.mxu0 %v1194
      %v1230 = vpop.f32.mrf.mxu0
      %v1231 = vadd.f32 %v873, %v1230
      %v1232 = vpop.f32.mrf.mxu0
      %v1233 = vpop.f32.mrf.mxu0
      %v1234 = vadd.f32 %v873, %v1233
      %v1235 = vpop.f32.mrf.mxu0
      %1236 = vdwg.mxu0
      %1237 = vmatprep.subr.bf16.mxu0 0
      %1238 = vmatpush1.bf16.msra.mxu0 0
      %1239 = vmatprep.subr.bf16.mxu0 0
      %1240 = vmatpush1.bf16.msra.mxu0 0
      %1241 = vmatprep.subr.bf16.mxu0 0
      %1242 = vmatpush1.bf16.msra.mxu0 0
      %1243 = vmatprep.subr.bf16.mxu0 0
      %1244 = vmatpush1.bf16.msra.mxu0 0
      %1245 = vmatprep.subr.bf16.mxu0 0
      %1246 = vmatpush1.bf16.msra.mxu0 0
      %1247 = vmatprep.subr.bf16.mxu0 0
      %1248 = vmatpush1.bf16.msra.mxu0 0
      %1249 = vmatprep.subr.bf16.mxu0 0
      %1250 = vmatpush1.bf16.msra.mxu0 %v944
      %1251 = vmatprep.subr.bf16.mxu0 0
      %1252 = vmatpush1.bf16.msra.mxu0 %v943
      %1253 = vmatprep.subr.bf16.mxu0 0
      %1254 = vmatpush2.bf16.msra.mxu0 0
      %1255 = vmatprep.subr.bf16.mxu0 0
      %1256 = vmatpush2.bf16.msra.mxu0 0
      %1257 = vmatprep.subr.bf16.mxu0 0
      %1258 = vmatpush2.bf16.msra.mxu0 0
      %1259 = vmatprep.subr.bf16.mxu0 0
      %1260 = vmatpush2.bf16.msra.mxu0 0
      %1261 = vmatprep.subr.bf16.mxu0 0
      %1262 = vmatpush2.bf16.msra.mxu0 0
      %1263 = vmatprep.subr.bf16.mxu0 0
      %1264 = vmatpush2.bf16.msra.mxu0 0
      %1265 = vmatprep.subr.bf16.mxu0 0
      %1266 = vmatpush2.bf16.msra.mxu0 0
      %1267 = vmatprep.subr.bf16.mxu0 0
      %1268 = vmatpush2.bf16.msra.mxu0 0
      %1269 = vmatprep.mubr.bf16.mxu0 0
      %1270 = vmatmul.mubr.bf16.gmra.mxu0 %v1145
      %v1271 = vpop.f32.mrf.mxu0
      %v1272 = vadd.f32 0.0, %v1271
      %v1273 = vpop.f32.mrf.mxu0
      %v1274 = vpop.f32.mrf.mxu0
      %v1275 = vadd.f32 0.0, %v1274
      %v1276 = vpop.f32.mrf.mxu0
      %1277 = vdwg.mxu0
      %v1278 = vadd.f32 %v1231, %v1272
      %v1279 = vadd.f32 %v1234, %v1275
      %v1280 = vadd.f32 %v1278, %v781
      %v1281 = vadd.f32 %v1279, %v784
      %v1282 = vadd.f32 %v1280, %v997
      %v1283 = vadd.f32 %v1281, %v997
      %vm1284 = vcmp.gt.f32.partialorder %v1282, 0.0
      %vm1285 = vcmp.gt.f32.partialorder %v1283, 0.0
      %v1286 = vmul.f32 %v1282, 0.2
      %v1287 = vmul.f32 %v1283, 0.2
      %v1288 = vsel %vm1284, %v1282, %v1286
      %v1289 = vsel %vm1285, %v1283, %v1287
      %v1290 = vpack.c.bf16 %v1289, %v1288
      %v1292 = vsel %vm685, %v1290, 0
      %1294 = vmatprep.subr.bf16.mxu0 0
      %1295 = vmatpush1.bf16.msra.mxu0 0
      %1296 = vmatprep.subr.bf16.mxu0 0
      %1297 = vmatpush1.bf16.msra.mxu0 0
      %1298 = vmatprep.subr.bf16.mxu0 0
      %1299 = vmatpush1.bf16.msra.mxu0 0
      %1300 = vmatprep.subr.bf16.mxu0 0
      %1301 = vmatpush1.bf16.msra.mxu0 0
      %1302 = vmatprep.subr.bf16.mxu0 0
      %1303 = vmatpush1.bf16.msra.mxu0 0
      %1304 = vmatprep.subr.bf16.mxu0 0
      %1305 = vmatpush1.bf16.msra.mxu0 0
      %1306 = vmatprep.subr.bf16.mxu0 0
      %1307 = vmatpush1.bf16.msra.mxu0 %v1028
      %1308 = vmatprep.subr.bf16.mxu0 0
      %1309 = vmatpush1.bf16.msra.mxu0 %v1027
      %1310 = vmatprep.subr.bf16.mxu0 0
      %1311 = vmatpush2.bf16.msra.mxu0 0
      %1312 = vmatprep.subr.bf16.mxu0 0
      %1313 = vmatpush2.bf16.msra.mxu0 0
      %1314 = vmatprep.subr.bf16.mxu0 0
      %1315 = vmatpush2.bf16.msra.mxu0 0
      %1316 = vmatprep.subr.bf16.mxu0 0
      %1317 = vmatpush2.bf16.msra.mxu0 0
      %1318 = vmatprep.subr.bf16.mxu0 0
      %1319 = vmatpush2.bf16.msra.mxu0 0
      %1320 = vmatprep.subr.bf16.mxu0 0
      %1321 = vmatpush2.bf16.msra.mxu0 0
      %1322 = vmatprep.subr.bf16.mxu0 0
      %1323 = vmatpush2.bf16.msra.mxu0 0
      %1324 = vmatprep.subr.bf16.mxu0 0
      %1325 = vmatpush2.bf16.msra.mxu0 0
      %1326 = vmatprep.mubr.bf16.mxu0 0
      %1327 = vmatmul.mubr.bf16.gmra.mxu0 %v1292
      %v1328 = vpop.f32.mrf.mxu0
      %v1329 = vadd.f32 %v1017, %v1328
      %v1330 = vpop.f32.mrf.mxu0
      %v1331 = vpop.f32.mrf.mxu0
      %v1332 = vadd.f32 %v1017, %v1331
      %v1333 = vpop.f32.mrf.mxu0
      %1334 = vdwg.mxu0
      %v1335 = vmax.f32 %v1329, 0.0
      %v1336 = vmax.f32 %v1332, 0.0
      %v1337 = vpack.c.bf16 %v1336, %v1335
      %v1339 = vsel %vm1093, %v1337, 0
      %1341 = vmatprep.subr.bf16.mxu0 0
      %1342 = vmatpush1.bf16.msra.mxu0 0
      %1343 = vmatprep.subr.bf16.mxu0 0
      %1344 = vmatpush1.bf16.msra.mxu0 0
      %1345 = vmatprep.subr.bf16.mxu0 0
      %1346 = vmatpush1.bf16.msra.mxu0 0
      %1347 = vmatprep.subr.bf16.mxu0 0
      %1348 = vmatpush1.bf16.msra.mxu0 0
      %1349 = vmatprep.subr.bf16.mxu0 0
      %1350 = vmatpush1.bf16.msra.mxu0 0
      %1351 = vmatprep.subr.bf16.mxu0 0
      %1352 = vmatpush1.bf16.msra.mxu0 0
      %1353 = vmatprep.subr.bf16.mxu0 0
      %1354 = vmatpush1.bf16.msra.mxu0 0
      %1355 = vmatprep.subr.bf16.mxu0 0
      %1356 = vmatpush1.bf16.msra.mxu0 %v1091
      %1357 = vmatprep.subr.bf16.mxu0 0
      %1358 = vmatpush2.bf16.msra.mxu0 0
      %1359 = vmatprep.subr.bf16.mxu0 0
      %1360 = vmatpush2.bf16.msra.mxu0 0
      %1361 = vmatprep.subr.bf16.mxu0 0
      %1362 = vmatpush2.bf16.msra.mxu0 0
      %1363 = vmatprep.subr.bf16.mxu0 0
      %1364 = vmatpush2.bf16.msra.mxu0 0
      %1365 = vmatprep.subr.bf16.mxu0 0
      %1366 = vmatpush2.bf16.msra.mxu0 0
      %1367 = vmatprep.subr.bf16.mxu0 0
      %1368 = vmatpush2.bf16.msra.mxu0 0
      %1369 = vmatprep.subr.bf16.mxu0 0
      %1370 = vmatpush2.bf16.msra.mxu0 0
      %1371 = vmatprep.subr.bf16.mxu0 0
      %1372 = vmatpush2.bf16.msra.mxu0 0
      %1373 = vmatprep.mubr.bf16.mxu0 0
      %1374 = vmatmul.mubr.bf16.gmra.mxu0 %v1339
      %v1375 = vpop.f32.mrf.mxu0
      %v1376 = vadd.f32 %v1085, %v1375
      %v1377 = vpop.f32.mrf.mxu0
      %v1378 = vpop.f32.mrf.mxu0
      %v1379 = vadd.f32 %v1085, %v1378
      %v1380 = vpop.f32.mrf.mxu0
      %1381 = vdwg.mxu0
      %v1382 = vtanh.pop %v1376
      %v1383 = vtanh.pop %v1379
      %v1384 = vadd.f32 %v662, %v1382
      %v1385 = vadd.f32 %v663, %v1383
      %1388 = vrot.lane.b32.xlu0 %v1282, 32
      %v1389 = vpop.permute.xlu0 %1388
      %1390 = vrot.lane.b32.xlu0 %v1283, 32
      %v1391 = vpop.permute.xlu0 %1390
      %v1394 = vsel %vm685, %v999, %v1389
      %v1395 = vsel %vm685, %v1000, %v1391
      %vm1396 = vcmask 523264
      %1397 = vst.msk [vmem:[%s645] sm:$0xff] %vm1396, %v1394
      %1398 = vst.msk [vmem:[%s645 + $0x8] sm:$0xff] %vm1396, %v1395
      %1401 = vrot.lane.b32.xlu0 %v1384, 3
      %v1402 = vpop.permute.xlu0 %1401
      %1403 = vrot.lane.b32.xlu0 %v1385, 3
      %v1404 = vpop.permute.xlu0 %1403
      %vm1407 = vcmask 23552
      %v1408 = vsel %vm1407, %v1140, %v1402
      %v1409 = vsel %vm1407, %v1141, %v1404
      %vm1410 = vcmask 48128
      %1411 = vst.msk [vmem:[%s655] sm:$0xff] %vm1410, %v1408
      %1412 = vst.msk [vmem:[%s655 + $0x8] sm:$0xff] %vm1410, %v1409
      %s1413 = smul.u32 2, %s33
      %p1414 = scmp.lt.s32.totalorder %s32, 1
      %s1415 = scalar_select %p1414, %s32, 1
      %p1416 = scmp.lt.s32.totalorder %s1413, 1
      %s1417 = scalar_select %p1416, %s1413, 1
      %s1418 = smul.addr %s1415, 2
      %s1419 = sadd.s32 %s1417, %s1418
      %s1420 = smul.addr %s1419, 8
      %s1421 = scalar_lea.vmem %s15, %s1420
      %s1422 = smul.u32 2, %s33
      %p1423 = scmp.lt.s32.totalorder %s32, 1
      %s1424 = scalar_select %p1423, %s32, 1
      %p1425 = scmp.lt.s32.totalorder %s1422, 1
      %s1426 = scalar_select %p1425, %s1422, 1
      %s1427 = smul.addr %s1424, 2
      %s1428 = sadd.s32 %s1426, %s1427
      %s1429 = smul.addr %s1428, 8
      %s1430 = scalar_lea.vmem %s16, %s1429
      // Predicated region
      $region81: #{upsampler_forward.19} parent=79 // pred_check
        %p1431 = pneg %p396
      $region82: #{upsampler_forward.19} parent=79 // pred_check_branch
        %1433 = sbr.rel (%p1431) target = $region84
      $region83: #{upsampler_forward.19} parent=79 // pred_region
        %s1434 = smul.u32 2, %s33
      $region84: #{upsampler_forward.19} parent=79 // pred_fallthru
        _
      // Predicated region
      $region85: #{upsampler_forward.19} parent=79 // pred_check
        %p1435 = pneg %p424
      $region86: #{upsampler_forward.19} parent=79 // pred_check_branch
        %1437 = sbr.rel (%p1435) target = $region88
      $region87: #{upsampler_forward.19} parent=79 // pred_region
        %s1438 = smul.u32 2, %s33
      $region88: #{upsampler_forward.19} parent=79 // pred_fallthru
        _
    $region80: #{upsampler_forward.19} parent=5 // pred_fallthru
      _
    %p1439 = scmp.le.s32.totalorder 2, %s23
    // Predicated region
    $region89: #{upsampler_forward.19} parent=5 // pred_check
      %p1440 = pneg %p1439
    $region90: #{upsampler_forward.19} parent=5 // pred_check_branch
      %1442 = sbr.rel (%p1440) target = $region92
    $region91: #{upsampler_forward.19} parent=5 // pred_region
      %s1443 = ssub.s32 %s23, 2
      // Predicated region
      $region93: #{upsampler_forward.19} parent=91 // pred_check
        %p1444 = pneg %p402
      $region94: #{upsampler_forward.19} parent=91 // pred_check_branch
        %1446 = sbr.rel (%p1444) target = $region96
      $region95: #{upsampler_forward.19} parent=91 // pred_region
        %s1447 = smul.u32 2, %s35
        %p1448 = scmp.lt.s32.totalorder %s34, 1
        %s1449 = scalar_select %p1448, %s34, 1
        %p1450 = scmp.lt.s32.totalorder %s1447, 1
        %s1451 = scalar_select %p1450, %s1447, 1
        %s1452 = smul.addr %s1449, 2
        %s1453 = sadd.s32 %s1451, %s1452
        %s1454 = smul.addr %s1453, 8
        %s1455 = scalar_lea.vmem %s15, %s1454
      $region96: #{upsampler_forward.19} parent=91 // pred_fallthru
        _
      // Predicated region
      $region97: #{upsampler_forward.19} parent=91 // pred_check
        %p1456 = pneg %p430
      $region98: #{upsampler_forward.19} parent=91 // pred_check_branch
        %1458 = sbr.rel (%p1456) target = $region100
      $region99: #{upsampler_forward.19} parent=91 // pred_region
        %s1459 = smul.u32 2, %s35
        %p1460 = scmp.lt.s32.totalorder %s34, 1
        %s1461 = scalar_select %p1460, %s34, 1
        %p1462 = scmp.lt.s32.totalorder %s1459, 1
        %s1463 = scalar_select %p1462, %s1459, 1
        %s1464 = smul.addr %s1461, 2
        %s1465 = sadd.s32 %s1463, %s1464
        %s1466 = smul.addr %s1465, 8
        %s1467 = scalar_lea.vmem %s16, %s1466
      $region100: #{upsampler_forward.19} parent=91 // pred_fallthru
        _
    $region92: #{upsampler_forward.19} parent=5 // pred_fallthru
      _
  $region6: #{upsampler_forward.19} parent=0 // loop_footer
    %s27 = sadd.s32 1, %s23
  $region7: #{upsampler_forward.19} parent=0 // loop_footer_branch
    %22 = sbr.rel target = $region3
  $region8: #{upsampler_forward.19} parent=0 // loop_exit
    _

</llo_original>
